<compile_context>
chip_gen: v6e
topology: v6e:2x2x1
jax: 0.10.0
libtpu: 0.0.40
codegen_flags: <defaults>
</compile_context>

<pallas_src>
import numpy as np

import jax
import jax.numpy as jnp
from jax import lax
from jax.experimental import pallas as pl
from jax.experimental.pallas import tpu as pltpu


TB = 32          # images per grid step (batch block) -- tunable, keep multiple of 8
H1 = 7 * TB      # rows per row-parity half of the pooled conv1 map


# --------------------------------------------------------------------------
# Fused kernel: conv1+relu+pool1 + conv2+relu+pool2 + fc1+fc2+fc3, TB images/step
# --------------------------------------------------------------------------

def _fused_cnn_kernel(x1e_ref, x1o_ref,      # (1, 14*TB, 480) bf16 im2col (even/odd rows)
                      w1_ref, b1_ref,        # (2, 480, 84) bf16, (1, 84) f32
                      w2_ref, b2_ref,        # (2, 5, 84, 80) bf16, (1, 80) f32
                      wf1_ref, bf1_ref,      # (5, 80, 120) bf16, (1, 120) f32
                      wf2_ref, bf2_ref,      # (120, 84) bf16, (1, 84) f32
                      wf3_ref, bf3_ref,      # (84, 128) bf16, (1, 128) f32
                      out_ref,               # (1, TB, 128) f32
                      p1_s, p2_s):           # VMEM scratch (14*TB,84) bf16, (5*TB,80) bf16
    f32 = jnp.float32
    bf16 = jnp.bfloat16

    # ---- conv1 + bias + ReLU + 2x2 maxpool (fused) --------------------------
    # x1{e,o} rows are ordered (row-parity q, pooled-row t, image b); w1[dx]
    # produces pooled columns directly, so the max over the 4 (dy,dx) matmuls
    # IS the 2x2 pool.  Done per parity half to bound live-value size.
    for q in range(2):
        xe = x1e_ref[0, q * H1:(q + 1) * H1, :]           # (7*TB, 480) bf16
        xo = x1o_ref[0, q * H1:(q + 1) * H1, :]
        z = jnp.dot(xe, w1_ref[0], preferred_element_type=f32)
        z = jnp.maximum(z, jnp.dot(xe, w1_ref[1], preferred_element_type=f32))
        z = jnp.maximum(z, jnp.dot(xo, w1_ref[0], preferred_element_type=f32))
        z = jnp.maximum(z, jnp.dot(xo, w1_ref[1], preferred_element_type=f32))
        p1_s[q * H1:(q + 1) * H1, :] = (
            jnp.maximum(z + b1_ref[...], 0.0).astype(bf16))

    # ---- conv2 + bias + ReLU + 2x2 maxpool (fused) --------------------------
    # p1_s row = q*7*TB + t*TB + b  (pooled conv1 row = 2t+q).  Each conv2 tap
    # (dy, i) is a contiguous, aligned slice of p1_s; K is accumulated over the
    # 5 taps; the max over (dy, dx) is the pool.
    z2 = None
    for dy in range(2):
        taps = []
        for i in range(5):
            s = dy + i
            base = (s % 2) * H1 + (s // 2) * TB
            taps.append(p1_s[base:base + 5 * TB, :])       # (5*TB, 84) bf16
        for dx in range(2):
            a = jnp.dot(taps[0], w2_ref[dx, 0], preferred_element_type=f32)
            for i in range(1, 5):
                a = a + jnp.dot(taps[i], w2_ref[dx, i],
                                preferred_element_type=f32)
            z2 = a if z2 is None else jnp.maximum(z2, a)    # (5*TB, 80) f32
    p2_s[...] = jnp.maximum(z2 + b2_ref[...], 0.0).astype(bf16)

    # ---- fc1 (+ReLU): flatten folded into wf1; p2_s rows are (ph2, b) --------
    h = bf1_ref[...]                                        # (1, 120)
    for r in range(5):
        h = h + jnp.dot(p2_s[r * TB:(r + 1) * TB, :], wf1_ref[r],
                        preferred_element_type=f32)         # (TB, 120)
    h = jnp.maximum(h, 0.0)

    # ---- fc2 (+ReLU), fc3 (lane-padded to 128) -------------------------------
    h = jnp.maximum(jnp.dot(h.astype(bf16), wf2_ref[...],
                            preferred_element_type=f32) + bf2_ref[...], 0.0)
    out_ref[0] = (jnp.dot(h.astype(bf16), wf3_ref[...],
                          preferred_element_type=f32) + bf3_ref[...])


# --------------------------------------------------------------------------
# Parameter preparation (done once, outside the jitted forward)
# --------------------------------------------------------------------------

def prepare_params(p):
    """Fold conv+pool structure, flatten permutation and transposes into weights."""
    w1 = np.asarray(p["c1_w"], np.float32)   # (6, 3, 5, 5)
    b1 = np.asarray(p["c1_b"], np.float32)
    w2 = np.asarray(p["c2_w"], np.float32)   # (16, 6, 5, 5)
    b2 = np.asarray(p["c2_b"], np.float32)
    l1w = np.asarray(p["l1_w"], np.float32)
    l1b = np.asarray(p["l1_b"], np.float32)
    l2w = np.asarray(p["l2_w"], np.float32)
    l2b = np.asarray(p["l2_b"], np.float32)
    l3w = np.asarray(p["l3_w"], np.float32)
    l3b = np.asarray(p["l3_b"], np.float32)

    # conv1 fused conv+pool weights: W1[dx][i*96 + c*32 + (2*pw+dx+j), o*14+pw]
    W1 = np.zeros((2, 5 * 96, 6 * 14), np.float32)
    pw = np.arange(14)
    for dx in range(2):
        for o in range(6):
            for c in range(3):
                for i in range(5):
                    for j in range(5):
                        v = 2 * pw + dx + j
                        W1[dx, i * 96 + c * 32 + v, o * 14 + pw] = w1[o, c, i, j]
    b1_84 = np.repeat(b1, 14).reshape(1, 84)

    # conv2 fused conv+pool weights: W2[dx,i][c*14 + (2*pw2+dx+j), o*5+pw2]
    W2 = np.zeros((2, 5, 6 * 14, 16 * 5), np.float32)
    pw2 = np.arange(5)
    for dx in range(2):
        for i in range(5):
            for o in range(16):
                for c in range(6):
                    for j in range(5):
                        v = 2 * pw2 + dx + j
                        W2[dx, i, c * 14 + v, o * 5 + pw2] = w2[o, c, i, j]
    b2_80 = np.repeat(b2, 5).reshape(1, 80)

    # fc1: fold nn.Flatten's (c, h, w) order; kernel feeds rows r=ph2 of (o*5+pw2).
    Wf1 = l1w.reshape(120, 16, 5, 5).transpose(2, 1, 3, 0).reshape(5, 80, 120)
    # fc2 / fc3 pre-transposed; fc3 lane-padded to 128.
    Wf2 = l2w.T
    Wf3 = np.zeros((84, 128), np.float32)
    Wf3[:, :10] = l3w.T
    bf3 = np.zeros((1, 128), np.float32)
    bf3[:, :10] = l3b

    return dict(
        W1=jnp.asarray(W1, jnp.bfloat16), b1=jnp.asarray(b1_84, jnp.float32),
        W2=jnp.asarray(W2, jnp.bfloat16), b2=jnp.asarray(b2_80, jnp.float32),
        Wf1=jnp.asarray(Wf1, jnp.bfloat16),
        bf1=jnp.asarray(l1b.reshape(1, 120), jnp.float32),
        Wf2=jnp.asarray(Wf2, jnp.bfloat16),
        bf2=jnp.asarray(l2b.reshape(1, 84), jnp.float32),
        Wf3=jnp.asarray(Wf3, jnp.bfloat16), bf3=jnp.asarray(bf3, jnp.float32),
    )


# --------------------------------------------------------------------------
# Forward pass
# --------------------------------------------------------------------------

@jax.jit
def cnn_cifar_forward(kp, x_nchw):
    """x_nchw: (N, 3, 32, 32) float32 -> logits (N, 10)."""
    N = x_nchw.shape[0]
    NB = (N + TB - 1) // TB
    n_pad = NB * TB
    x = jnp.pad(x_nchw, ((0, n_pad - N), (0, 0), (0, 0), (0, 0)))
    # (N, C, H, W) -> (N, H, C*W); lane index = c*32 + w.
    x_l = jnp.transpose(x, (0, 2, 1, 3)).reshape(n_pad, 32, 96)

    def conv1_operand(dy):
        # im2col rows ordered (block, q, t, b); columns (tap i, c*32+w).
        q = np.arange(2)[:, None, None]
        t = np.arange(7)[None, :, None]
        i = np.arange(5)[None, None, :]
        idx = 4 * t + 2 * q + dy + i                        # (2, 7, 5), max 31
        g = x_l[:, idx, :]                                  # (n_pad, 2, 7, 5, 96)
        g = g.reshape(NB, TB, 2, 7, 5, 96)
        g = jnp.transpose(g, (0, 2, 3, 1, 4, 5))            # (NB, 2, 7, TB, 5, 96)
        return g.reshape(NB, 14 * TB, 480).astype(jnp.bfloat16)

    x1e = conv1_operand(0)
    x1o = conv1_operand(1)

    c2 = lambda n: (0, 0)
    c3 = lambda n: (0, 0, 0)
    c4 = lambda n: (0, 0, 0, 0)

    out = pl.pallas_call(
        _fused_cnn_kernel,
        out_shape=jax.ShapeDtypeStruct((NB, TB, 128), jnp.float32),
        grid_spec=pltpu.PrefetchScalarGridSpec(
            num_scalar_prefetch=0,
            grid=(NB,),
            in_specs=[
                pl.BlockSpec((1, 14 * TB, 480), lambda n: (n, 0, 0)),  # x1e
                pl.BlockSpec((1, 14 * TB, 480), lambda n: (n, 0, 0)),  # x1o
                pl.BlockSpec((2, 480, 84), c3),                        # W1
                pl.BlockSpec((1, 84), c2),                             # b1
                pl.BlockSpec((2, 5, 84, 80), c4),                      # W2
                pl.BlockSpec((1, 80), c2),                             # b2
                pl.BlockSpec((5, 80, 120), c3),                        # Wf1
                pl.BlockSpec((1, 120), c2),                            # bf1
                pl.BlockSpec((120, 84), c2),                           # Wf2
                pl.BlockSpec((1, 84), c2),                             # bf2
                pl.BlockSpec((84, 128), c2),                           # Wf3
                pl.BlockSpec((1, 128), c2),                            # bf3
            ],
            out_specs=pl.BlockSpec((1, TB, 128), lambda n: (n, 0, 0)),
            scratch_shapes=[
                pltpu.VMEM((14 * TB, 84), jnp.bfloat16),   # pooled conv1 map
                pltpu.VMEM((5 * TB, 80), jnp.bfloat16),    # pooled conv2 map
            ],
        ),
        compiler_params=pltpu.CompilerParams(
            dimension_semantics=("parallel",),
        ),
    )(x1e, x1o,
      kp["W1"], kp["b1"], kp["W2"], kp["b2"],
      kp["Wf1"], kp["bf1"], kp["Wf2"], kp["bf2"], kp["Wf3"], kp["bf3"])

    return out.reshape(n_pad, 128)[:N, :10]


# --------------------------------------------------------------------------
# Parameters (PyTorch default-init layout) and pure-JAX reference
# --------------------------------------------------------------------------

def _uniform(key, shape, fan_in):
    bound = 1.0 / np.sqrt(float(fan_in))
    return jax.random.uniform(key, shape, jnp.float32, -bound, bound)


def init_params(key):
    ks = jax.random.split(key, 10)
    p = {}
    p["c1_w"] = _uniform(ks[0], (6, 3, 5, 5), 3 * 5 * 5)
    p["c1_b"] = _uniform(ks[1], (6,), 3 * 5 * 5)
    p["c2_w"] = _uniform(ks[2], (16, 6, 5, 5), 6 * 5 * 5)
    p["c2_b"] = _uniform(ks[3], (16,), 6 * 5 * 5)
    p["l1_w"] = _uniform(ks[4], (120, 400), 400)
    p["l1_b"] = _uniform(ks[5], (120,), 400)
    p["l2_w"] = _uniform(ks[6], (84, 120), 120)
    p["l2_b"] = _uniform(ks[7], (84,), 120)
    p["l3_w"] = _uniform(ks[8], (10, 84), 84)
    p["l3_b"] = _uniform(ks[9], (10,), 84)
    return p


def reference_forward(p, x):
    """Pure-JAX reference matching the PyTorch module (for self-checking)."""
    dn = ("NCHW", "OIHW", "NCHW")
    y = lax.conv_general_dilated(x, p["c1_w"], (1, 1), "VALID",
                                 dimension_numbers=dn)
    y = jax.nn.relu(y + p["c1_b"][None, :, None, None])
    y = lax.reduce_window(y, -jnp.inf, lax.max, (1, 1, 2, 2), (1, 1, 2, 2),
                          "VALID")
    y = lax.conv_general_dilated(y, p["c2_w"], (1, 1), "VALID",
                                 dimension_numbers=dn)
    y = jax.nn.relu(y + p["c2_b"][None, :, None, None])
    y = lax.reduce_window(y, -jnp.inf, lax.max, (1, 1, 2, 2), (1, 1, 2, 2),
                          "VALID")
    y = y.reshape(y.shape[0], -1)
    y = jax.nn.relu(y @ p["l1_w"].T + p["l1_b"])
    y = jax.nn.relu(y @ p["l2_w"].T + p["l2_b"])
    return y @ p["l3_w"].T + p["l3_b"]


# --------------------------------------------------------------------------

if __name__ == "__main__":
    key = jax.random.PRNGKey(0)
    pkey, xkey = jax.random.split(key)
    raw_params = init_params(pkey)
    kparams = prepare_params(raw_params)            # one-time layout folding

    # CIFAR geometry is required by the 16*5*5 flatten: 3x32x32 input.
    x = jax.random.normal(xkey, (2, 3, 32, 32), jnp.float32)

    out = cnn_cifar_forward(kparams, x)
    out = jax.block_until_ready(out)
    assert out.shape == (2, 10), out.shape

    ref = reference_forward(raw_params, x)
    err = float(jnp.max(jnp.abs(out - ref)))
    assert err < 5e-2, f"mismatch vs reference: {err}"

    print("KERNEL_OK")
</pallas_src>

<mosaic_0001>
module attributes {stable_mosaic.version = 11 : i64} {
  func.func @_fused_cnn_kernel(%arg0: i32, %arg1: memref<1x448x480xbf16, #tpu.memory_space<vmem>>, %arg2: memref<1x448x480xbf16, #tpu.memory_space<vmem>>, %arg3: memref<2x480x84xbf16, #tpu.memory_space<vmem>>, %arg4: memref<1x84xf32, #tpu.memory_space<vmem>>, %arg5: memref<2x5x84x80xbf16, #tpu.memory_space<vmem>>, %arg6: memref<1x80xf32, #tpu.memory_space<vmem>>, %arg7: memref<5x80x120xbf16, #tpu.memory_space<vmem>>, %arg8: memref<1x120xf32, #tpu.memory_space<vmem>>, %arg9: memref<120x84xbf16, #tpu.memory_space<vmem>>, %arg10: memref<1x84xf32, #tpu.memory_space<vmem>>, %arg11: memref<84x128xbf16, #tpu.memory_space<vmem>>, %arg12: memref<1x128xf32, #tpu.memory_space<vmem>>, %arg13: memref<1x32x128xf32, #tpu.memory_space<vmem>>, %arg14: memref<448x84xbf16, #tpu.memory_space<vmem>>, %arg15: memref<160x80xbf16, #tpu.memory_space<vmem>>) attributes {dimension_semantics = [#tpu.dimension_semantics<parallel>], iteration_bounds = array<i64: 1>, scalar_prefetch = 0 : i64, scratch_operands = 2 : i64, tpu.core_type = #tpu.core_type<tc>, window_params = [{transform_indices = @transform_0, window_bounds = array<i64: 1, 448, 480>}, {transform_indices = @transform_1, window_bounds = array<i64: 1, 448, 480>}, {pipeline_mode = #tpu.pipeline_mode<synchronous>, transform_indices = @transform_2, window_bounds = array<i64: 2, 480, 84>}, {pipeline_mode = #tpu.pipeline_mode<synchronous>, transform_indices = @transform_3, window_bounds = array<i64: 1, 84>}, {pipeline_mode = #tpu.pipeline_mode<synchronous>, transform_indices = @transform_4, window_bounds = array<i64: 2, 5, 84, 80>}, {pipeline_mode = #tpu.pipeline_mode<synchronous>, transform_indices = @transform_5, window_bounds = array<i64: 1, 80>}, {pipeline_mode = #tpu.pipeline_mode<synchronous>, transform_indices = @transform_6, window_bounds = array<i64: 5, 80, 120>}, {pipeline_mode = #tpu.pipeline_mode<synchronous>, transform_indices = @transform_7, window_bounds = array<i64: 1, 120>}, {pipeline_mode = #tpu.pipeline_mode<synchronous>, transform_indices = @transform_8, window_bounds = array<i64: 120, 84>}, {pipeline_mode = #tpu.pipeline_mode<synchronous>, transform_indices = @transform_9, window_bounds = array<i64: 1, 84>}, {pipeline_mode = #tpu.pipeline_mode<synchronous>, transform_indices = @transform_10, window_bounds = array<i64: 84, 128>}, {pipeline_mode = #tpu.pipeline_mode<synchronous>, transform_indices = @transform_11, window_bounds = array<i64: 1, 128>}, {transform_indices = @transform_12, window_bounds = array<i64: 1, 32, 128>}]} {
    %c0 = arith.constant 0 : index
    %c0_0 = arith.constant 0 : index
    %c0_1 = arith.constant 0 : index
    %0 = vector.load %arg1[%c0, %c0_0, %c0_1] : memref<1x448x480xbf16, #tpu.memory_space<vmem>>, vector<1x224x480xbf16>
    %1 = vector.shape_cast %0 : vector<1x224x480xbf16> to vector<224x480xbf16>
    %c0_2 = arith.constant 0 : index
    %c0_3 = arith.constant 0 : index
    %c0_4 = arith.constant 0 : index
    %2 = vector.load %arg2[%c0_2, %c0_3, %c0_4] : memref<1x448x480xbf16, #tpu.memory_space<vmem>>, vector<1x224x480xbf16>
    %3 = vector.shape_cast %2 : vector<1x224x480xbf16> to vector<224x480xbf16>
    %c0_5 = arith.constant 0 : index
    %c0_6 = arith.constant 0 : index
    %c0_7 = arith.constant 0 : index
    %4 = vector.load %arg3[%c0_5, %c0_6, %c0_7] : memref<2x480x84xbf16, #tpu.memory_space<vmem>>, vector<1x480x84xbf16>
    %5 = vector.shape_cast %4 : vector<1x480x84xbf16> to vector<480x84xbf16>
    %cst = arith.constant dense<0.000000e+00> : vector<224x84xf32>
    %6 = tpu.matmul %1, %5, %cst {dimension_numbers = #tpu.dot_dimension_numbers<[1], [0], [0], [1], [0, 0, 1, 1], [], []>} : vector<224x480xbf16>, vector<480x84xbf16>, vector<224x84xf32> -> vector<224x84xf32>
    %c1 = arith.constant 1 : index
    %c0_8 = arith.constant 0 : index
    %c0_9 = arith.constant 0 : index
    %7 = vector.load %arg3[%c1, %c0_8, %c0_9] : memref<2x480x84xbf16, #tpu.memory_space<vmem>>, vector<1x480x84xbf16>
    %8 = vector.shape_cast %7 : vector<1x480x84xbf16> to vector<480x84xbf16>
    %cst_10 = arith.constant dense<0.000000e+00> : vector<224x84xf32>
    %9 = tpu.matmul %1, %8, %cst_10 {dimension_numbers = #tpu.dot_dimension_numbers<[1], [0], [0], [1], [0, 0, 1, 1], [], []>} : vector<224x480xbf16>, vector<480x84xbf16>, vector<224x84xf32> -> vector<224x84xf32>
    %10 = arith.maximumf %6, %9 : vector<224x84xf32>
    %c0_11 = arith.constant 0 : index
    %c0_12 = arith.constant 0 : index
    %c0_13 = arith.constant 0 : index
    %11 = vector.load %arg3[%c0_11, %c0_12, %c0_13] : memref<2x480x84xbf16, #tpu.memory_space<vmem>>, vector<1x480x84xbf16>
    %12 = vector.shape_cast %11 : vector<1x480x84xbf16> to vector<480x84xbf16>
    %cst_14 = arith.constant dense<0.000000e+00> : vector<224x84xf32>
    %13 = tpu.matmul %3, %12, %cst_14 {dimension_numbers = #tpu.dot_dimension_numbers<[1], [0], [0], [1], [0, 0, 1, 1], [], []>} : vector<224x480xbf16>, vector<480x84xbf16>, vector<224x84xf32> -> vector<224x84xf32>
    %14 = arith.maximumf %10, %13 : vector<224x84xf32>
    %c1_15 = arith.constant 1 : index
    %c0_16 = arith.constant 0 : index
    %c0_17 = arith.constant 0 : index
    %15 = vector.load %arg3[%c1_15, %c0_16, %c0_17] : memref<2x480x84xbf16, #tpu.memory_space<vmem>>, vector<1x480x84xbf16>
    %16 = vector.shape_cast %15 : vector<1x480x84xbf16> to vector<480x84xbf16>
    %cst_18 = arith.constant dense<0.000000e+00> : vector<224x84xf32>
    %17 = tpu.matmul %3, %16, %cst_18 {dimension_numbers = #tpu.dot_dimension_numbers<[1], [0], [0], [1], [0, 0, 1, 1], [], []>} : vector<224x480xbf16>, vector<480x84xbf16>, vector<224x84xf32> -> vector<224x84xf32>
    %18 = arith.maximumf %14, %17 : vector<224x84xf32>
    %c0_19 = arith.constant 0 : index
    %c0_20 = arith.constant 0 : index
    %19 = vector.load %arg4[%c0_19, %c0_20] : memref<1x84xf32, #tpu.memory_space<vmem>>, vector<1x84xf32>
    %20 = vector.broadcast %19 : vector<1x84xf32> to vector<224x84xf32>
    %21 = arith.addf %18, %20 : vector<224x84xf32>
    %cst_21 = arith.constant 0.000000e+00 : f32
    %22 = vector.broadcast %cst_21 : f32 to vector<224x84xf32>
    %23 = arith.maximumf %21, %22 : vector<224x84xf32>
    %24 = arith.truncf %23 : vector<224x84xf32> to vector<224x84xbf16>
    %c0_22 = arith.constant 0 : index
    %c0_23 = arith.constant 0 : index
    %25 = vector.load %arg14[%c0_22, %c0_23] : memref<448x84xbf16, #tpu.memory_space<vmem>>, vector<224x84xbf16>
    tpu.vector_store %arg14[%c0_22, %c0_23], %24 {strides = array<i32>} : memref<448x84xbf16, #tpu.memory_space<vmem>>, vector<224x84xbf16>,
    %c0_24 = arith.constant 0 : index
    %c224 = arith.constant 224 : index
    %c0_25 = arith.constant 0 : index
    %26 = vector.load %arg1[%c0_24, %c224, %c0_25] : memref<1x448x480xbf16, #tpu.memory_space<vmem>>, vector<1x224x480xbf16>
    %27 = vector.shape_cast %26 : vector<1x224x480xbf16> to vector<224x480xbf16>
    %c0_26 = arith.constant 0 : index
    %c224_27 = arith.constant 224 : index
    %c0_28 = arith.constant 0 : index
    %28 = vector.load %arg2[%c0_26, %c224_27, %c0_28] : memref<1x448x480xbf16, #tpu.memory_space<vmem>>, vector<1x224x480xbf16>
    %29 = vector.shape_cast %28 : vector<1x224x480xbf16> to vector<224x480xbf16>
    %c0_29 = arith.constant 0 : index
    %c0_30 = arith.constant 0 : index
    %c0_31 = arith.constant 0 : index
    %30 = vector.load %arg3[%c0_29, %c0_30, %c0_31] : memref<2x480x84xbf16, #tpu.memory_space<vmem>>, vector<1x480x84xbf16>
    %31 = vector.shape_cast %30 : vector<1x480x84xbf16> to vector<480x84xbf16>
    %cst_32 = arith.constant dense<0.000000e+00> : vector<224x84xf32>
    %32 = tpu.matmul %27, %31, %cst_32 {dimension_numbers = #tpu.dot_dimension_numbers<[1], [0], [0], [1], [0, 0, 1, 1], [], []>} : vector<224x480xbf16>, vector<480x84xbf16>, vector<224x84xf32> -> vector<224x84xf32>
    %c1_33 = arith.constant 1 : index
    %c0_34 = arith.constant 0 : index
    %c0_35 = arith.constant 0 : index
    %33 = vector.load %arg3[%c1_33, %c0_34, %c0_35] : memref<2x480x84xbf16, #tpu.memory_space<vmem>>, vector<1x480x84xbf16>
    %34 = vector.shape_cast %33 : vector<1x480x84xbf16> to vector<480x84xbf16>
    %cst_36 = arith.constant dense<0.000000e+00> : vector<224x84xf32>
    %35 = tpu.matmul %27, %34, %cst_36 {dimension_numbers = #tpu.dot_dimension_numbers<[1], [0], [0], [1], [0, 0, 1, 1], [], []>} : vector<224x480xbf16>, vector<480x84xbf16>, vector<224x84xf32> -> vector<224x84xf32>
    %36 = arith.maximumf %32, %35 : vector<224x84xf32>
    %c0_37 = arith.constant 0 : index
    %c0_38 = arith.constant 0 : index
    %c0_39 = arith.constant 0 : index
    %37 = vector.load %arg3[%c0_37, %c0_38, %c0_39] : memref<2x480x84xbf16, #tpu.memory_space<vmem>>, vector<1x480x84xbf16>
    %38 = vector.shape_cast %37 : vector<1x480x84xbf16> to vector<480x84xbf16>
    %cst_40 = arith.constant dense<0.000000e+00> : vector<224x84xf32>
    %39 = tpu.matmul %29, %38, %cst_40 {dimension_numbers = #tpu.dot_dimension_numbers<[1], [0], [0], [1], [0, 0, 1, 1], [], []>} : vector<224x480xbf16>, vector<480x84xbf16>, vector<224x84xf32> -> vector<224x84xf32>
    %40 = arith.maximumf %36, %39 : vector<224x84xf32>
    %c1_41 = arith.constant 1 : index
    %c0_42 = arith.constant 0 : index
    %c0_43 = arith.constant 0 : index
    %41 = vector.load %arg3[%c1_41, %c0_42, %c0_43] : memref<2x480x84xbf16, #tpu.memory_space<vmem>>, vector<1x480x84xbf16>
    %42 = vector.shape_cast %41 : vector<1x480x84xbf16> to vector<480x84xbf16>
    %cst_44 = arith.constant dense<0.000000e+00> : vector<224x84xf32>
    %43 = tpu.matmul %29, %42, %cst_44 {dimension_numbers = #tpu.dot_dimension_numbers<[1], [0], [0], [1], [0, 0, 1, 1], [], []>} : vector<224x480xbf16>, vector<480x84xbf16>, vector<224x84xf32> -> vector<224x84xf32>
    %44 = arith.maximumf %40, %43 : vector<224x84xf32>
    %c0_45 = arith.constant 0 : index
    %c0_46 = arith.constant 0 : index
    %45 = vector.load %arg4[%c0_45, %c0_46] : memref<1x84xf32, #tpu.memory_space<vmem>>, vector<1x84xf32>
    %46 = vector.broadcast %45 : vector<1x84xf32> to vector<224x84xf32>
    %47 = arith.addf %44, %46 : vector<224x84xf32>
    %cst_47 = arith.constant 0.000000e+00 : f32
    %48 = vector.broadcast %cst_47 : f32 to vector<224x84xf32>
    %49 = arith.maximumf %47, %48 : vector<224x84xf32>
    %50 = arith.truncf %49 : vector<224x84xf32> to vector<224x84xbf16>
    %c224_48 = arith.constant 224 : index
    %c0_49 = arith.constant 0 : index
    %51 = vector.load %arg14[%c224_48, %c0_49] : memref<448x84xbf16, #tpu.memory_space<vmem>>, vector<224x84xbf16>
    tpu.vector_store %arg14[%c224_48, %c0_49], %50 {strides = array<i32>} : memref<448x84xbf16, #tpu.memory_space<vmem>>, vector<224x84xbf16>,
    %c0_50 = arith.constant 0 : index
    %c0_51 = arith.constant 0 : index
    %52 = vector.load %arg14[%c0_50, %c0_51] : memref<448x84xbf16, #tpu.memory_space<vmem>>, vector<160x84xbf16>
    %c224_52 = arith.constant 224 : index
    %c0_53 = arith.constant 0 : index
    %53 = vector.load %arg14[%c224_52, %c0_53] : memref<448x84xbf16, #tpu.memory_space<vmem>>, vector<160x84xbf16>
    %c32 = arith.constant 32 : index
    %c0_54 = arith.constant 0 : index
    %54 = vector.load %arg14[%c32, %c0_54] : memref<448x84xbf16, #tpu.memory_space<vmem>>, vector<160x84xbf16>
    %c256 = arith.constant 256 : index
    %c0_55 = arith.constant 0 : index
    %55 = vector.load %arg14[%c256, %c0_55] : memref<448x84xbf16, #tpu.memory_space<vmem>>, vector<160x84xbf16>
    %c64 = arith.constant 64 : index
    %c0_56 = arith.constant 0 : index
    %56 = vector.load %arg14[%c64, %c0_56] : memref<448x84xbf16, #tpu.memory_space<vmem>>, vector<160x84xbf16>
    %c0_57 = arith.constant 0 : index
    %c0_58 = arith.constant 0 : index
    %c0_59 = arith.constant 0 : index
    %c0_60 = arith.constant 0 : index
    %57 = vector.load %arg5[%c0_57, %c0_58, %c0_59, %c0_60] : memref<2x5x84x80xbf16, #tpu.memory_space<vmem>>, vector<1x1x84x80xbf16>
    %58 = vector.shape_cast %57 : vector<1x1x84x80xbf16> to vector<84x80xbf16>
    %cst_61 = arith.constant dense<0.000000e+00> : vector<160x80xf32>
    %59 = tpu.matmul %52, %58, %cst_61 {dimension_numbers = #tpu.dot_dimension_numbers<[1], [0], [0], [1], [0, 0, 1, 1], [], []>} : vector<160x84xbf16>, vector<84x80xbf16>, vector<160x80xf32> -> vector<160x80xf32>
    %c0_62 = arith.constant 0 : index
    %c1_63 = arith.constant 1 : index
    %c0_64 = arith.constant 0 : index
    %c0_65 = arith.constant 0 : index
    %60 = vector.load %arg5[%c0_62, %c1_63, %c0_64, %c0_65] : memref<2x5x84x80xbf16, #tpu.memory_space<vmem>>, vector<1x1x84x80xbf16>
    %61 = vector.shape_cast %60 : vector<1x1x84x80xbf16> to vector<84x80xbf16>
    %cst_66 = arith.constant dense<0.000000e+00> : vector<160x80xf32>
    %62 = tpu.matmul %53, %61, %cst_66 {dimension_numbers = #tpu.dot_dimension_numbers<[1], [0], [0], [1], [0, 0, 1, 1], [], []>} : vector<160x84xbf16>, vector<84x80xbf16>, vector<160x80xf32> -> vector<160x80xf32>
    %63 = arith.addf %59, %62 : vector<160x80xf32>
    %c0_67 = arith.constant 0 : index
    %c2 = arith.constant 2 : index
    %c0_68 = arith.constant 0 : index
    %c0_69 = arith.constant 0 : index
    %64 = vector.load %arg5[%c0_67, %c2, %c0_68, %c0_69] : memref<2x5x84x80xbf16, #tpu.memory_space<vmem>>, vector<1x1x84x80xbf16>
    %65 = vector.shape_cast %64 : vector<1x1x84x80xbf16> to vector<84x80xbf16>
    %cst_70 = arith.constant dense<0.000000e+00> : vector<160x80xf32>
    %66 = tpu.matmul %54, %65, %cst_70 {dimension_numbers = #tpu.dot_dimension_numbers<[1], [0], [0], [1], [0, 0, 1, 1], [], []>} : vector<160x84xbf16>, vector<84x80xbf16>, vector<160x80xf32> -> vector<160x80xf32>
    %67 = arith.addf %63, %66 : vector<160x80xf32>
    %c0_71 = arith.constant 0 : index
    %c3 = arith.constant 3 : index
    %c0_72 = arith.constant 0 : index
    %c0_73 = arith.constant 0 : index
    %68 = vector.load %arg5[%c0_71, %c3, %c0_72, %c0_73] : memref<2x5x84x80xbf16, #tpu.memory_space<vmem>>, vector<1x1x84x80xbf16>
    %69 = vector.shape_cast %68 : vector<1x1x84x80xbf16> to vector<84x80xbf16>
    %cst_74 = arith.constant dense<0.000000e+00> : vector<160x80xf32>
    %70 = tpu.matmul %55, %69, %cst_74 {dimension_numbers = #tpu.dot_dimension_numbers<[1], [0], [0], [1], [0, 0, 1, 1], [], []>} : vector<160x84xbf16>, vector<84x80xbf16>, vector<160x80xf32> -> vector<160x80xf32>
    %71 = arith.addf %67, %70 : vector<160x80xf32>
    %c0_75 = arith.constant 0 : index
    %c4 = arith.constant 4 : index
    %c0_76 = arith.constant 0 : index
    %c0_77 = arith.constant 0 : index
    %72 = vector.load %arg5[%c0_75, %c4, %c0_76, %c0_77] : memref<2x5x84x80xbf16, #tpu.memory_space<vmem>>, vector<1x1x84x80xbf16>
    %73 = vector.shape_cast %72 : vector<1x1x84x80xbf16> to vector<84x80xbf16>
    %cst_78 = arith.constant dense<0.000000e+00> : vector<160x80xf32>
    %74 = tpu.matmul %56, %73, %cst_78 {dimension_numbers = #tpu.dot_dimension_numbers<[1], [0], [0], [1], [0, 0, 1, 1], [], []>} : vector<160x84xbf16>, vector<84x80xbf16>, vector<160x80xf32> -> vector<160x80xf32>
    %75 = arith.addf %71, %74 : vector<160x80xf32>
    %c1_79 = arith.constant 1 : index
    %c0_80 = arith.constant 0 : index
    %c0_81 = arith.constant 0 : index
    %c0_82 = arith.constant 0 : index
    %76 = vector.load %arg5[%c1_79, %c0_80, %c0_81, %c0_82] : memref<2x5x84x80xbf16, #tpu.memory_space<vmem>>, vector<1x1x84x80xbf16>
    %77 = vector.shape_cast %76 : vector<1x1x84x80xbf16> to vector<84x80xbf16>
    %cst_83 = arith.constant dense<0.000000e+00> : vector<160x80xf32>
    %78 = tpu.matmul %52, %77, %cst_83 {dimension_numbers = #tpu.dot_dimension_numbers<[1], [0], [0], [1], [0, 0, 1, 1], [], []>} : vector<160x84xbf16>, vector<84x80xbf16>, vector<160x80xf32> -> vector<160x80xf32>
    %c1_84 = arith.constant 1 : index
    %c1_85 = arith.constant 1 : index
    %c0_86 = arith.constant 0 : index
    %c0_87 = arith.constant 0 : index
    %79 = vector.load %arg5[%c1_84, %c1_85, %c0_86, %c0_87] : memref<2x5x84x80xbf16, #tpu.memory_space<vmem>>, vector<1x1x84x80xbf16>
    %80 = vector.shape_cast %79 : vector<1x1x84x80xbf16> to vector<84x80xbf16>
    %cst_88 = arith.constant dense<0.000000e+00> : vector<160x80xf32>
    %81 = tpu.matmul %53, %80, %cst_88 {dimension_numbers = #tpu.dot_dimension_numbers<[1], [0], [0], [1], [0, 0, 1, 1], [], []>} : vector<160x84xbf16>, vector<84x80xbf16>, vector<160x80xf32> -> vector<160x80xf32>
    %82 = arith.addf %78, %81 : vector<160x80xf32>
    %c1_89 = arith.constant 1 : index
    %c2_90 = arith.constant 2 : index
    %c0_91 = arith.constant 0 : index
    %c0_92 = arith.constant 0 : index
    %83 = vector.load %arg5[%c1_89, %c2_90, %c0_91, %c0_92] : memref<2x5x84x80xbf16, #tpu.memory_space<vmem>>, vector<1x1x84x80xbf16>
    %84 = vector.shape_cast %83 : vector<1x1x84x80xbf16> to vector<84x80xbf16>
    %cst_93 = arith.constant dense<0.000000e+00> : vector<160x80xf32>
    %85 = tpu.matmul %54, %84, %cst_93 {dimension_numbers = #tpu.dot_dimension_numbers<[1], [0], [0], [1], [0, 0, 1, 1], [], []>} : vector<160x84xbf16>, vector<84x80xbf16>, vector<160x80xf32> -> vector<160x80xf32>
    %86 = arith.addf %82, %85 : vector<160x80xf32>
    %c1_94 = arith.constant 1 : index
    %c3_95 = arith.constant 3 : index
    %c0_96 = arith.constant 0 : index
    %c0_97 = arith.constant 0 : index
    %87 = vector.load %arg5[%c1_94, %c3_95, %c0_96, %c0_97] : memref<2x5x84x80xbf16, #tpu.memory_space<vmem>>, vector<1x1x84x80xbf16>
    %88 = vector.shape_cast %87 : vector<1x1x84x80xbf16> to vector<84x80xbf16>
    %cst_98 = arith.constant dense<0.000000e+00> : vector<160x80xf32>
    %89 = tpu.matmul %55, %88, %cst_98 {dimension_numbers = #tpu.dot_dimension_numbers<[1], [0], [0], [1], [0, 0, 1, 1], [], []>} : vector<160x84xbf16>, vector<84x80xbf16>, vector<160x80xf32> -> vector<160x80xf32>
    %90 = arith.addf %86, %89 : vector<160x80xf32>
    %c1_99 = arith.constant 1 : index
    %c4_100 = arith.constant 4 : index
    %c0_101 = arith.constant 0 : index
    %c0_102 = arith.constant 0 : index
    %91 = vector.load %arg5[%c1_99, %c4_100, %c0_101, %c0_102] : memref<2x5x84x80xbf16, #tpu.memory_space<vmem>>, vector<1x1x84x80xbf16>
    %92 = vector.shape_cast %91 : vector<1x1x84x80xbf16> to vector<84x80xbf16>
    %cst_103 = arith.constant dense<0.000000e+00> : vector<160x80xf32>
    %93 = tpu.matmul %56, %92, %cst_103 {dimension_numbers = #tpu.dot_dimension_numbers<[1], [0], [0], [1], [0, 0, 1, 1], [], []>} : vector<160x84xbf16>, vector<84x80xbf16>, vector<160x80xf32> -> vector<160x80xf32>
    %94 = arith.addf %90, %93 : vector<160x80xf32>
    %95 = arith.maximumf %75, %94 : vector<160x80xf32>
    %c224_104 = arith.constant 224 : index
    %c0_105 = arith.constant 0 : index
    %96 = vector.load %arg14[%c224_104, %c0_105] : memref<448x84xbf16, #tpu.memory_space<vmem>>, vector<160x84xbf16>
    %c32_106 = arith.constant 32 : index
    %c0_107 = arith.constant 0 : index
    %97 = vector.load %arg14[%c32_106, %c0_107] : memref<448x84xbf16, #tpu.memory_space<vmem>>, vector<160x84xbf16>
    %c256_108 = arith.constant 256 : index
    %c0_109 = arith.constant 0 : index
    %98 = vector.load %arg14[%c256_108, %c0_109] : memref<448x84xbf16, #tpu.memory_space<vmem>>, vector<160x84xbf16>
    %c64_110 = arith.constant 64 : index
    %c0_111 = arith.constant 0 : index
    %99 = vector.load %arg14[%c64_110, %c0_111] : memref<448x84xbf16, #tpu.memory_space<vmem>>, vector<160x84xbf16>
    %c288 = arith.constant 288 : index
    %c0_112 = arith.constant 0 : index
    %100 = vector.load %arg14[%c288, %c0_112] : memref<448x84xbf16, #tpu.memory_space<vmem>>, vector<160x84xbf16>
    %c0_113 = arith.constant 0 : index
    %c0_114 = arith.constant 0 : index
    %c0_115 = arith.constant 0 : index
    %c0_116 = arith.constant 0 : index
    %101 = vector.load %arg5[%c0_113, %c0_114, %c0_115, %c0_116] : memref<2x5x84x80xbf16, #tpu.memory_space<vmem>>, vector<1x1x84x80xbf16>
    %102 = vector.shape_cast %101 : vector<1x1x84x80xbf16> to vector<84x80xbf16>
    %cst_117 = arith.constant dense<0.000000e+00> : vector<160x80xf32>
    %103 = tpu.matmul %96, %102, %cst_117 {dimension_numbers = #tpu.dot_dimension_numbers<[1], [0], [0], [1], [0, 0, 1, 1], [], []>} : vector<160x84xbf16>, vector<84x80xbf16>, vector<160x80xf32> -> vector<160x80xf32>
    %c0_118 = arith.constant 0 : index
    %c1_119 = arith.constant 1 : index
    %c0_120 = arith.constant 0 : index
    %c0_121 = arith.constant 0 : index
    %104 = vector.load %arg5[%c0_118, %c1_119, %c0_120, %c0_121] : memref<2x5x84x80xbf16, #tpu.memory_space<vmem>>, vector<1x1x84x80xbf16>
    %105 = vector.shape_cast %104 : vector<1x1x84x80xbf16> to vector<84x80xbf16>
    %cst_122 = arith.constant dense<0.000000e+00> : vector<160x80xf32>
    %106 = tpu.matmul %97, %105, %cst_122 {dimension_numbers = #tpu.dot_dimension_numbers<[1], [0], [0], [1], [0, 0, 1, 1], [], []>} : vector<160x84xbf16>, vector<84x80xbf16>, vector<160x80xf32> -> vector<160x80xf32>
    %107 = arith.addf %103, %106 : vector<160x80xf32>
    %c0_123 = arith.constant 0 : index
    %c2_124 = arith.constant 2 : index
    %c0_125 = arith.constant 0 : index
    %c0_126 = arith.constant 0 : index
    %108 = vector.load %arg5[%c0_123, %c2_124, %c0_125, %c0_126] : memref<2x5x84x80xbf16, #tpu.memory_space<vmem>>, vector<1x1x84x80xbf16>
    %109 = vector.shape_cast %108 : vector<1x1x84x80xbf16> to vector<84x80xbf16>
    %cst_127 = arith.constant dense<0.000000e+00> : vector<160x80xf32>
    %110 = tpu.matmul %98, %109, %cst_127 {dimension_numbers = #tpu.dot_dimension_numbers<[1], [0], [0], [1], [0, 0, 1, 1], [], []>} : vector<160x84xbf16>, vector<84x80xbf16>, vector<160x80xf32> -> vector<160x80xf32>
    %111 = arith.addf %107, %110 : vector<160x80xf32>
    %c0_128 = arith.constant 0 : index
    %c3_129 = arith.constant 3 : index
    %c0_130 = arith.constant 0 : index
    %c0_131 = arith.constant 0 : index
    %112 = vector.load %arg5[%c0_128, %c3_129, %c0_130, %c0_131] : memref<2x5x84x80xbf16, #tpu.memory_space<vmem>>, vector<1x1x84x80xbf16>
    %113 = vector.shape_cast %112 : vector<1x1x84x80xbf16> to vector<84x80xbf16>
    %cst_132 = arith.constant dense<0.000000e+00> : vector<160x80xf32>
    %114 = tpu.matmul %99, %113, %cst_132 {dimension_numbers = #tpu.dot_dimension_numbers<[1], [0], [0], [1], [0, 0, 1, 1], [], []>} : vector<160x84xbf16>, vector<84x80xbf16>, vector<160x80xf32> -> vector<160x80xf32>
    %115 = arith.addf %111, %114 : vector<160x80xf32>
    %c0_133 = arith.constant 0 : index
    %c4_134 = arith.constant 4 : index
    %c0_135 = arith.constant 0 : index
    %c0_136 = arith.constant 0 : index
    %116 = vector.load %arg5[%c0_133, %c4_134, %c0_135, %c0_136] : memref<2x5x84x80xbf16, #tpu.memory_space<vmem>>, vector<1x1x84x80xbf16>
    %117 = vector.shape_cast %116 : vector<1x1x84x80xbf16> to vector<84x80xbf16>
    %cst_137 = arith.constant dense<0.000000e+00> : vector<160x80xf32>
    %118 = tpu.matmul %100, %117, %cst_137 {dimension_numbers = #tpu.dot_dimension_numbers<[1], [0], [0], [1], [0, 0, 1, 1], [], []>} : vector<160x84xbf16>, vector<84x80xbf16>, vector<160x80xf32> -> vector<160x80xf32>
    %119 = arith.addf %115, %118 : vector<160x80xf32>
    %120 = arith.maximumf %95, %119 : vector<160x80xf32>
    %c1_138 = arith.constant 1 : index
    %c0_139 = arith.constant 0 : index
    %c0_140 = arith.constant 0 : index
    %c0_141 = arith.constant 0 : index
    %121 = vector.load %arg5[%c1_138, %c0_139, %c0_140, %c0_141] : memref<2x5x84x80xbf16, #tpu.memory_space<vmem>>, vector<1x1x84x80xbf16>
    %122 = vector.shape_cast %121 : vector<1x1x84x80xbf16> to vector<84x80xbf16>
    %cst_142 = arith.constant dense<0.000000e+00> : vector<160x80xf32>
    %123 = tpu.matmul %96, %122, %cst_142 {dimension_numbers = #tpu.dot_dimension_numbers<[1], [0], [0], [1], [0, 0, 1, 1], [], []>} : vector<160x84xbf16>, vector<84x80xbf16>, vector<160x80xf32> -> vector<160x80xf32>
    %c1_143 = arith.constant 1 : index
    %c1_144 = arith.constant 1 : index
    %c0_145 = arith.constant 0 : index
    %c0_146 = arith.constant 0 : index
    %124 = vector.load %arg5[%c1_143, %c1_144, %c0_145, %c0_146] : memref<2x5x84x80xbf16, #tpu.memory_space<vmem>>, vector<1x1x84x80xbf16>
    %125 = vector.shape_cast %124 : vector<1x1x84x80xbf16> to vector<84x80xbf16>
    %cst_147 = arith.constant dense<0.000000e+00> : vector<160x80xf32>
    %126 = tpu.matmul %97, %125, %cst_147 {dimension_numbers = #tpu.dot_dimension_numbers<[1], [0], [0], [1], [0, 0, 1, 1], [], []>} : vector<160x84xbf16>, vector<84x80xbf16>, vector<160x80xf32> -> vector<160x80xf32>
    %127 = arith.addf %123, %126 : vector<160x80xf32>
    %c1_148 = arith.constant 1 : index
    %c2_149 = arith.constant 2 : index
    %c0_150 = arith.constant 0 : index
    %c0_151 = arith.constant 0 : index
    %128 = vector.load %arg5[%c1_148, %c2_149, %c0_150, %c0_151] : memref<2x5x84x80xbf16, #tpu.memory_space<vmem>>, vector<1x1x84x80xbf16>
    %129 = vector.shape_cast %128 : vector<1x1x84x80xbf16> to vector<84x80xbf16>
    %cst_152 = arith.constant dense<0.000000e+00> : vector<160x80xf32>
    %130 = tpu.matmul %98, %129, %cst_152 {dimension_numbers = #tpu.dot_dimension_numbers<[1], [0], [0], [1], [0, 0, 1, 1], [], []>} : vector<160x84xbf16>, vector<84x80xbf16>, vector<160x80xf32> -> vector<160x80xf32>
    %131 = arith.addf %127, %130 : vector<160x80xf32>
    %c1_153 = arith.constant 1 : index
    %c3_154 = arith.constant 3 : index
    %c0_155 = arith.constant 0 : index
    %c0_156 = arith.constant 0 : index
    %132 = vector.load %arg5[%c1_153, %c3_154, %c0_155, %c0_156] : memref<2x5x84x80xbf16, #tpu.memory_space<vmem>>, vector<1x1x84x80xbf16>
    %133 = vector.shape_cast %132 : vector<1x1x84x80xbf16> to vector<84x80xbf16>
    %cst_157 = arith.constant dense<0.000000e+00> : vector<160x80xf32>
    %134 = tpu.matmul %99, %133, %cst_157 {dimension_numbers = #tpu.dot_dimension_numbers<[1], [0], [0], [1], [0, 0, 1, 1], [], []>} : vector<160x84xbf16>, vector<84x80xbf16>, vector<160x80xf32> -> vector<160x80xf32>
    %135 = arith.addf %131, %134 : vector<160x80xf32>
    %c1_158 = arith.constant 1 : index
    %c4_159 = arith.constant 4 : index
    %c0_160 = arith.constant 0 : index
    %c0_161 = arith.constant 0 : index
    %136 = vector.load %arg5[%c1_158, %c4_159, %c0_160, %c0_161] : memref<2x5x84x80xbf16, #tpu.memory_space<vmem>>, vector<1x1x84x80xbf16>
    %137 = vector.shape_cast %136 : vector<1x1x84x80xbf16> to vector<84x80xbf16>
    %cst_162 = arith.constant dense<0.000000e+00> : vector<160x80xf32>
    %138 = tpu.matmul %100, %137, %cst_162 {dimension_numbers = #tpu.dot_dimension_numbers<[1], [0], [0], [1], [0, 0, 1, 1], [], []>} : vector<160x84xbf16>, vector<84x80xbf16>, vector<160x80xf32> -> vector<160x80xf32>
    %139 = arith.addf %135, %138 : vector<160x80xf32>
    %140 = arith.maximumf %120, %139 : vector<160x80xf32>
    %c0_163 = arith.constant 0 : index
    %c0_164 = arith.constant 0 : index
    %141 = vector.load %arg6[%c0_163, %c0_164] : memref<1x80xf32, #tpu.memory_space<vmem>>, vector<1x80xf32>
    %142 = vector.broadcast %141 : vector<1x80xf32> to vector<160x80xf32>
    %143 = arith.addf %140, %142 : vector<160x80xf32>
    %cst_165 = arith.constant 0.000000e+00 : f32
    %144 = vector.broadcast %cst_165 : f32 to vector<160x80xf32>
    %145 = arith.maximumf %143, %144 : vector<160x80xf32>
    %146 = arith.truncf %145 : vector<160x80xf32> to vector<160x80xbf16>
    %c0_166 = arith.constant 0 : index
    %c0_167 = arith.constant 0 : index
    %147 = vector.load %arg15[%c0_166, %c0_167] : memref<160x80xbf16, #tpu.memory_space<vmem>>, vector<160x80xbf16>
    tpu.vector_store %arg15[%c0_166, %c0_167], %146 {strides = array<i32>} : memref<160x80xbf16, #tpu.memory_space<vmem>>, vector<160x80xbf16>,
    %c0_168 = arith.constant 0 : index
    %c0_169 = arith.constant 0 : index
    %148 = vector.load %arg8[%c0_168, %c0_169] : memref<1x120xf32, #tpu.memory_space<vmem>>, vector<1x120xf32>
    %c0_170 = arith.constant 0 : index
    %c0_171 = arith.constant 0 : index
    %149 = vector.load %arg15[%c0_170, %c0_171] : memref<160x80xbf16, #tpu.memory_space<vmem>>, vector<32x80xbf16>
    %c0_172 = arith.constant 0 : index
    %c0_173 = arith.constant 0 : index
    %c0_174 = arith.constant 0 : index
    %150 = vector.load %arg7[%c0_172, %c0_173, %c0_174] : memref<5x80x120xbf16, #tpu.memory_space<vmem>>, vector<1x80x120xbf16>
    %151 = vector.shape_cast %150 : vector<1x80x120xbf16> to vector<80x120xbf16>
    %cst_175 = arith.constant dense<0.000000e+00> : vector<32x120xf32>
    %152 = tpu.matmul %149, %151, %cst_175 {dimension_numbers = #tpu.dot_dimension_numbers<[1], [0], [0], [1], [0, 0, 1, 1], [], []>} : vector<32x80xbf16>, vector<80x120xbf16>, vector<32x120xf32> -> vector<32x120xf32>
    %153 = vector.broadcast %148 : vector<1x120xf32> to vector<32x120xf32>
    %154 = arith.addf %153, %152 : vector<32x120xf32>
    %c32_176 = arith.constant 32 : index
    %c0_177 = arith.constant 0 : index
    %155 = vector.load %arg15[%c32_176, %c0_177] : memref<160x80xbf16, #tpu.memory_space<vmem>>, vector<32x80xbf16>
    %c1_178 = arith.constant 1 : index
    %c0_179 = arith.constant 0 : index
    %c0_180 = arith.constant 0 : index
    %156 = vector.load %arg7[%c1_178, %c0_179, %c0_180] : memref<5x80x120xbf16, #tpu.memory_space<vmem>>, vector<1x80x120xbf16>
    %157 = vector.shape_cast %156 : vector<1x80x120xbf16> to vector<80x120xbf16>
    %cst_181 = arith.constant dense<0.000000e+00> : vector<32x120xf32>
    %158 = tpu.matmul %155, %157, %cst_181 {dimension_numbers = #tpu.dot_dimension_numbers<[1], [0], [0], [1], [0, 0, 1, 1], [], []>} : vector<32x80xbf16>, vector<80x120xbf16>, vector<32x120xf32> -> vector<32x120xf32>
    %159 = arith.addf %154, %158 : vector<32x120xf32>
    %c64_182 = arith.constant 64 : index
    %c0_183 = arith.constant 0 : index
    %160 = vector.load %arg15[%c64_182, %c0_183] : memref<160x80xbf16, #tpu.memory_space<vmem>>, vector<32x80xbf16>
    %c2_184 = arith.constant 2 : index
    %c0_185 = arith.constant 0 : index
    %c0_186 = arith.constant 0 : index
    %161 = vector.load %arg7[%c2_184, %c0_185, %c0_186] : memref<5x80x120xbf16, #tpu.memory_space<vmem>>, vector<1x80x120xbf16>
    %162 = vector.shape_cast %161 : vector<1x80x120xbf16> to vector<80x120xbf16>
    %cst_187 = arith.constant dense<0.000000e+00> : vector<32x120xf32>
    %163 = tpu.matmul %160, %162, %cst_187 {dimension_numbers = #tpu.dot_dimension_numbers<[1], [0], [0], [1], [0, 0, 1, 1], [], []>} : vector<32x80xbf16>, vector<80x120xbf16>, vector<32x120xf32> -> vector<32x120xf32>
    %164 = arith.addf %159, %163 : vector<32x120xf32>
    %c96 = arith.constant 96 : index
    %c0_188 = arith.constant 0 : index
    %165 = vector.load %arg15[%c96, %c0_188] : memref<160x80xbf16, #tpu.memory_space<vmem>>, vector<32x80xbf16>
    %c3_189 = arith.constant 3 : index
    %c0_190 = arith.constant 0 : index
    %c0_191 = arith.constant 0 : index
    %166 = vector.load %arg7[%c3_189, %c0_190, %c0_191] : memref<5x80x120xbf16, #tpu.memory_space<vmem>>, vector<1x80x120xbf16>
    %167 = vector.shape_cast %166 : vector<1x80x120xbf16> to vector<80x120xbf16>
    %cst_192 = arith.constant dense<0.000000e+00> : vector<32x120xf32>
    %168 = tpu.matmul %165, %167, %cst_192 {dimension_numbers = #tpu.dot_dimension_numbers<[1], [0], [0], [1], [0, 0, 1, 1], [], []>} : vector<32x80xbf16>, vector<80x120xbf16>, vector<32x120xf32> -> vector<32x120xf32>
    %169 = arith.addf %164, %168 : vector<32x120xf32>
    %c128 = arith.constant 128 : index
    %c0_193 = arith.constant 0 : index
    %170 = vector.load %arg15[%c128, %c0_193] : memref<160x80xbf16, #tpu.memory_space<vmem>>, vector<32x80xbf16>
    %c4_194 = arith.constant 4 : index
    %c0_195 = arith.constant 0 : index
    %c0_196 = arith.constant 0 : index
    %171 = vector.load %arg7[%c4_194, %c0_195, %c0_196] : memref<5x80x120xbf16, #tpu.memory_space<vmem>>, vector<1x80x120xbf16>
    %172 = vector.shape_cast %171 : vector<1x80x120xbf16> to vector<80x120xbf16>
    %cst_197 = arith.constant dense<0.000000e+00> : vector<32x120xf32>
    %173 = tpu.matmul %170, %172, %cst_197 {dimension_numbers = #tpu.dot_dimension_numbers<[1], [0], [0], [1], [0, 0, 1, 1], [], []>} : vector<32x80xbf16>, vector<80x120xbf16>, vector<32x120xf32> -> vector<32x120xf32>
    %174 = arith.addf %169, %173 : vector<32x120xf32>
    %cst_198 = arith.constant 0.000000e+00 : f32
    %175 = vector.broadcast %cst_198 : f32 to vector<32x120xf32>
    %176 = arith.maximumf %174, %175 : vector<32x120xf32>
    %177 = arith.truncf %176 : vector<32x120xf32> to vector<32x120xbf16>
    %c0_199 = arith.constant 0 : index
    %c0_200 = arith.constant 0 : index
    %178 = vector.load %arg9[%c0_199, %c0_200] : memref<120x84xbf16, #tpu.memory_space<vmem>>, vector<120x84xbf16>
    %cst_201 = arith.constant dense<0.000000e+00> : vector<32x84xf32>
    %179 = tpu.matmul %177, %178, %cst_201 {dimension_numbers = #tpu.dot_dimension_numbers<[1], [0], [0], [1], [0, 0, 1, 1], [], []>} : vector<32x120xbf16>, vector<120x84xbf16>, vector<32x84xf32> -> vector<32x84xf32>
    %c0_202 = arith.constant 0 : index
    %c0_203 = arith.constant 0 : index
    %180 = vector.load %arg10[%c0_202, %c0_203] : memref<1x84xf32, #tpu.memory_space<vmem>>, vector<1x84xf32>
    %181 = vector.broadcast %180 : vector<1x84xf32> to vector<32x84xf32>
    %182 = arith.addf %179, %181 : vector<32x84xf32>
    %cst_204 = arith.constant 0.000000e+00 : f32
    %183 = vector.broadcast %cst_204 : f32 to vector<32x84xf32>
    %184 = arith.maximumf %182, %183 : vector<32x84xf32>
    %185 = arith.truncf %184 : vector<32x84xf32> to vector<32x84xbf16>
    %c0_205 = arith.constant 0 : index
    %c0_206 = arith.constant 0 : index
    %186 = vector.load %arg11[%c0_205, %c0_206] : memref<84x128xbf16, #tpu.memory_space<vmem>>, vector<84x128xbf16>
    %cst_207 = arith.constant dense<0.000000e+00> : vector<32x128xf32>
    %187 = tpu.matmul %185, %186, %cst_207 {dimension_numbers = #tpu.dot_dimension_numbers<[1], [0], [0], [1], [0, 0, 1, 1], [], []>} : vector<32x84xbf16>, vector<84x128xbf16>, vector<32x128xf32> -> vector<32x128xf32>
    %c0_208 = arith.constant 0 : index
    %c0_209 = arith.constant 0 : index
    %188 = vector.load %arg12[%c0_208, %c0_209] : memref<1x128xf32, #tpu.memory_space<vmem>>, vector<1x128xf32>
    %189 = vector.broadcast %188 : vector<1x128xf32> to vector<32x128xf32>
    %190 = arith.addf %187, %189 : vector<32x128xf32>
    %c0_210 = arith.constant 0 : index
    %c0_211 = arith.constant 0 : index
    %c0_212 = arith.constant 0 : index
    %191 = vector.load %arg13[%c0_210, %c0_211, %c0_212] : memref<1x32x128xf32, #tpu.memory_space<vmem>>, vector<1x32x128xf32>
    %192 = vector.shape_cast %191 : vector<1x32x128xf32> to vector<32x128xf32>
    %193 = vector.shape_cast %190 : vector<32x128xf32> to vector<1x32x128xf32>
    tpu.vector_store %arg13[%c0_210, %c0_211, %c0_212], %193 {strides = array<i32>} : memref<1x32x128xf32, #tpu.memory_space<vmem>>, vector<1x32x128xf32>,
    return
  }
  func.func @transform_0(%arg0: i32) -> (i32, i32, i32) {
    %c0_i32 = arith.constant 0 : i32
    %c0_i32_0 = arith.constant 0 : i32
    %c0_i32_1 = arith.constant 0 : i32
    return %arg0, %c0_i32, %c0_i32_0 : i32, i32, i32
  }
  func.func @transform_1(%arg0: i32) -> (i32, i32, i32) {
    %c0_i32 = arith.constant 0 : i32
    %c0_i32_0 = arith.constant 0 : i32
    %c0_i32_1 = arith.constant 0 : i32
    return %arg0, %c0_i32, %c0_i32_0 : i32, i32, i32
  }
  func.func @transform_2(%arg0: i32) -> (i32, i32, i32) {
    %c0_i32 = arith.constant 0 : i32
    %c0_i32_0 = arith.constant 0 : i32
    %c0_i32_1 = arith.constant 0 : i32
    %c0_i32_2 = arith.constant 0 : i32
    return %c0_i32, %c0_i32_0, %c0_i32_1 : i32, i32, i32
  }
  func.func @transform_3(%arg0: i32) -> (i32, i32) {
    %c0_i32 = arith.constant 0 : i32
    %c0_i32_0 = arith.constant 0 : i32
    %c0_i32_1 = arith.constant 0 : i32
    return %c0_i32, %c0_i32_0 : i32, i32
  }
  func.func @transform_4(%arg0: i32) -> (i32, i32, i32, i32) {
    %c0_i32 = arith.constant 0 : i32
    %c0_i32_0 = arith.constant 0 : i32
    %c0_i32_1 = arith.constant 0 : i32
    %c0_i32_2 = arith.constant 0 : i32
    %c0_i32_3 = arith.constant 0 : i32
    return %c0_i32, %c0_i32_0, %c0_i32_1, %c0_i32_2 : i32, i32, i32, i32
  }
  func.func @transform_5(%arg0: i32) -> (i32, i32) {
    %c0_i32 = arith.constant 0 : i32
    %c0_i32_0 = arith.constant 0 : i32
    %c0_i32_1 = arith.constant 0 : i32
    return %c0_i32, %c0_i32_0 : i32, i32
  }
  func.func @transform_6(%arg0: i32) -> (i32, i32, i32) {
    %c0_i32 = arith.constant 0 : i32
    %c0_i32_0 = arith.constant 0 : i32
    %c0_i32_1 = arith.constant 0 : i32
    %c0_i32_2 = arith.constant 0 : i32
    return %c0_i32, %c0_i32_0, %c0_i32_1 : i32, i32, i32
  }
  func.func @transform_7(%arg0: i32) -> (i32, i32) {
    %c0_i32 = arith.constant 0 : i32
    %c0_i32_0 = arith.constant 0 : i32
    %c0_i32_1 = arith.constant 0 : i32
    return %c0_i32, %c0_i32_0 : i32, i32
  }
  func.func @transform_8(%arg0: i32) -> (i32, i32) {
    %c0_i32 = arith.constant 0 : i32
    %c0_i32_0 = arith.constant 0 : i32
    %c0_i32_1 = arith.constant 0 : i32
    return %c0_i32, %c0_i32_0 : i32, i32
  }
  func.func @transform_9(%arg0: i32) -> (i32, i32) {
    %c0_i32 = arith.constant 0 : i32
    %c0_i32_0 = arith.constant 0 : i32
    %c0_i32_1 = arith.constant 0 : i32
    return %c0_i32, %c0_i32_0 : i32, i32
  }
  func.func @transform_10(%arg0: i32) -> (i32, i32) {
    %c0_i32 = arith.constant 0 : i32
    %c0_i32_0 = arith.constant 0 : i32
    %c0_i32_1 = arith.constant 0 : i32
    return %c0_i32, %c0_i32_0 : i32, i32
  }
  func.func @transform_11(%arg0: i32) -> (i32, i32) {
    %c0_i32 = arith.constant 0 : i32
    %c0_i32_0 = arith.constant 0 : i32
    %c0_i32_1 = arith.constant 0 : i32
    return %c0_i32, %c0_i32_0 : i32, i32
  }
  func.func @transform_12(%arg0: i32) -> (i32, i32, i32) {
    %c0_i32 = arith.constant 0 : i32
    %c0_i32_0 = arith.constant 0 : i32
    %c0_i32_1 = arith.constant 0 : i32
    return %arg0, %c0_i32, %c0_i32_0 : i32, i32, i32
  }
}

</mosaic_0001>

<llo_original>
// kernel: cnn_cifar_forward.1
$region0: #{cnn_cifar_forward.1}
  #allocation0 [shape = 'u32[]', space=smem, size = 0x4, offset = 0x4, fixed_abs, tag = 'smem constant byte address 0x4 - core index']
  #allocation1 [shape = 'u32[144,128]{1,0:T(1,128)}', space=vmem, size = 0x12000, scoped, tag = 'internal scratch']
  #allocation2 [shape = 'bf16[448,84]{1,0:T(8,128)(2,1)}', space=vmem, size = 0x1c000, scoped, tag = 'scratch operand']
  #allocation3 [shape = 'bf16[160,80]{1,0:T(8,128)(2,1)}', space=vmem, size = 0xa000, scoped, tag = 'scratch operand']
  %s0 = inlined_call_operand.vmem [shape: bf16[1,448,480], index: 0, kind: input, shape index: {}]
  %s1 = inlined_call_operand.vmem [shape: bf16[1,448,480], index: 1, kind: input, shape index: {}]
  %s2 = inlined_call_operand.vmem [shape: bf16[2,480,84], index: 2, kind: input, shape index: {}]
  %s3 = inlined_call_operand.vmem [shape: f32[1,84], index: 3, kind: input, shape index: {}]
  %s4 = inlined_call_operand.vmem [shape: bf16[2,5,84,80], index: 4, kind: input, shape index: {}]
  %s5 = inlined_call_operand.vmem [shape: f32[1,80], index: 5, kind: input, shape index: {}]
  %s6 = inlined_call_operand.vmem [shape: bf16[5,80,120], index: 6, kind: input, shape index: {}]
  %s7 = inlined_call_operand.vmem [shape: f32[1,120], index: 7, kind: input, shape index: {}]
  %s8 = inlined_call_operand.vmem [shape: bf16[120,84], index: 8, kind: input, shape index: {}]
  %s9 = inlined_call_operand.vmem [shape: f32[1,84], index: 9, kind: input, shape index: {}]
  %s10 = inlined_call_operand.vmem [shape: bf16[84,128], index: 10, kind: input, shape index: {}]
  %s11 = inlined_call_operand.vmem [shape: f32[1,128], index: 11, kind: input, shape index: {}]
  %s12 = inlined_call_operand.vmem [shape: f32[1,32,128], index: 12, kind: output, shape index: {}]
  %s13 = sld [smem:[#allocation0]]
  $region58: #{cnn_cifar_forward.1} parent=0
    _
  %s15 = ssub.s32 1, %s13
  %s16 = scalar_select 0, %s15, %s13
  // Predicated region
  $region2: #{cnn_cifar_forward.1} parent=0 // pred_check
    _
  $region3: #{cnn_cifar_forward.1} parent=0 // pred_check_branch
    %18 = sbr.rel (0) target = $region5
  $region4: #{cnn_cifar_forward.1} parent=0 // pred_region
    _
  $region5: #{cnn_cifar_forward.1} parent=0 // pred_fallthru
    _
  // Predicated region
  $region6: #{cnn_cifar_forward.1} parent=0 // pred_check
    _
  $region7: #{cnn_cifar_forward.1} parent=0 // pred_check_branch
    %20 = sbr.rel (0) target = $region9
  $region8: #{cnn_cifar_forward.1} parent=0 // pred_region
    _
  $region9: #{cnn_cifar_forward.1} parent=0 // pred_fallthru
    _
  // Predicated region
  $region10: #{cnn_cifar_forward.1} parent=0 // pred_check
    _
  $region11: #{cnn_cifar_forward.1} parent=0 // pred_check_branch
    %22 = sbr.rel (0) target = $region13
  $region12: #{cnn_cifar_forward.1} parent=0 // pred_region
    _
  $region13: #{cnn_cifar_forward.1} parent=0 // pred_fallthru
    _
  // Predicated region
  $region14: #{cnn_cifar_forward.1} parent=0 // pred_check
    _
  $region15: #{cnn_cifar_forward.1} parent=0 // pred_check_branch
    %24 = sbr.rel (0) target = $region17
  $region16: #{cnn_cifar_forward.1} parent=0 // pred_region
    _
  $region17: #{cnn_cifar_forward.1} parent=0 // pred_fallthru
    _
  // Predicated region
  $region18: #{cnn_cifar_forward.1} parent=0 // pred_check
    _
  $region19: #{cnn_cifar_forward.1} parent=0 // pred_check_branch
    %26 = sbr.rel (0) target = $region21
  $region20: #{cnn_cifar_forward.1} parent=0 // pred_region
    _
  $region21: #{cnn_cifar_forward.1} parent=0 // pred_fallthru
    _
  // Predicated region
  $region22: #{cnn_cifar_forward.1} parent=0 // pred_check
    _
  $region23: #{cnn_cifar_forward.1} parent=0 // pred_check_branch
    %28 = sbr.rel (0) target = $region25
  $region24: #{cnn_cifar_forward.1} parent=0 // pred_region
    _
  $region25: #{cnn_cifar_forward.1} parent=0 // pred_fallthru
    _
  // Predicated region
  $region26: #{cnn_cifar_forward.1} parent=0 // pred_check
    _
  $region27: #{cnn_cifar_forward.1} parent=0 // pred_check_branch
    %30 = sbr.rel (0) target = $region29
  $region28: #{cnn_cifar_forward.1} parent=0 // pred_region
    _
  $region29: #{cnn_cifar_forward.1} parent=0 // pred_fallthru
    _
  // Predicated region
  $region30: #{cnn_cifar_forward.1} parent=0 // pred_check
    _
  $region31: #{cnn_cifar_forward.1} parent=0 // pred_check_branch
    %32 = sbr.rel (0) target = $region33
  $region32: #{cnn_cifar_forward.1} parent=0 // pred_region
    _
  $region33: #{cnn_cifar_forward.1} parent=0 // pred_fallthru
    _
  // Predicated region
  $region34: #{cnn_cifar_forward.1} parent=0 // pred_check
    _
  $region35: #{cnn_cifar_forward.1} parent=0 // pred_check_branch
    %34 = sbr.rel (0) target = $region37
  $region36: #{cnn_cifar_forward.1} parent=0 // pred_region
    _
  $region37: #{cnn_cifar_forward.1} parent=0 // pred_fallthru
    _
  // Predicated region
  $region38: #{cnn_cifar_forward.1} parent=0 // pred_check
    _
  $region39: #{cnn_cifar_forward.1} parent=0 // pred_check_branch
    %36 = sbr.rel (0) target = $region41
  $region40: #{cnn_cifar_forward.1} parent=0 // pred_region
    _
  $region41: #{cnn_cifar_forward.1} parent=0 // pred_fallthru
    _
  // Predicated region
  $region42: #{cnn_cifar_forward.1} parent=0 // pred_check
    _
  $region43: #{cnn_cifar_forward.1} parent=0 // pred_check_branch
    %38 = sbr.rel (0) target = $region45
  $region44: #{cnn_cifar_forward.1} parent=0 // pred_region
    _
  $region45: #{cnn_cifar_forward.1} parent=0 // pred_fallthru
    _
  // Predicated region
  $region46: #{cnn_cifar_forward.1} parent=0 // pred_check
    _
  $region47: #{cnn_cifar_forward.1} parent=0 // pred_check_branch
    %40 = sbr.rel (0) target = $region49
  $region48: #{cnn_cifar_forward.1} parent=0 // pred_region
    _
  $region49: #{cnn_cifar_forward.1} parent=0 // pred_fallthru
    _
  %v42 = vld [vmem:[%s0] sm:$0xff]
  %v43 = vld [vmem:[%s0 + $0x8] sm:$0xff]
  %v44 = vld [vmem:[%s0 + $0x10] sm:$0xff]
  %v45 = vld [vmem:[%s0 + $0x18] sm:$0xff]
  %v46 = vld [vmem:[%s0 + $0x20] sm:$0xff]
  %v47 = vld [vmem:[%s0 + $0x28] sm:$0xff]
  %v48 = vld [vmem:[%s0 + $0x30] sm:$0xff]
  %v49 = vld [vmem:[%s0 + $0x38] sm:$0xff]
  %v50 = vld [vmem:[%s0 + $0x40] sm:$0xff]
  %v51 = vld [vmem:[%s0 + $0x48] sm:$0xff]
  %v52 = vld [vmem:[%s0 + $0x50] sm:$0xff]
  %v53 = vld [vmem:[%s0 + $0x58] sm:$0xff]
  %v54 = vld [vmem:[%s0 + $0x60] sm:$0xff]
  %v55 = vld [vmem:[%s0 + $0x68] sm:$0xff]
  %v56 = vld [vmem:[%s0 + $0x70] sm:$0xff]
  %v57 = vld [vmem:[%s0 + $0x78] sm:$0xff]
  %v58 = vld [vmem:[%s0 + $0x80] sm:$0xff]
  %v59 = vld [vmem:[%s0 + $0x88] sm:$0xff]
  %v60 = vld [vmem:[%s0 + $0x90] sm:$0xff]
  %v61 = vld [vmem:[%s0 + $0x98] sm:$0xff]
  %v62 = vld [vmem:[%s0 + $0xa0] sm:$0xff]
  %v63 = vld [vmem:[%s0 + $0xa8] sm:$0xff]
  %v64 = vld [vmem:[%s0 + $0xb0] sm:$0xff]
  %v65 = vld [vmem:[%s0 + $0xb8] sm:$0xff]
  %v66 = vld [vmem:[%s0 + $0xc0] sm:$0xff]
  %v67 = vld [vmem:[%s0 + $0xc8] sm:$0xff]
  %v68 = vld [vmem:[%s0 + $0xd0] sm:$0xff]
  %v69 = vld [vmem:[%s0 + $0xd8] sm:$0xff]
  %v70 = vld [vmem:[%s0 + $0xe0] sm:$0xff]
  %v71 = vld [vmem:[%s0 + $0xe8] sm:$0xff]
  %v72 = vld [vmem:[%s0 + $0xf0] sm:$0xff]
  %v73 = vld [vmem:[%s0 + $0xf8] sm:$0xff]
  %v74 = vld [vmem:[%s0 + $0x100] sm:$0xff]
  %v75 = vld [vmem:[%s0 + $0x108] sm:$0xff]
  %v76 = vld [vmem:[%s0 + $0x110] sm:$0xff]
  %v77 = vld [vmem:[%s0 + $0x118] sm:$0xff]
  %v78 = vld [vmem:[%s0 + $0x120] sm:$0xff]
  %v79 = vld [vmem:[%s0 + $0x128] sm:$0xff]
  %v80 = vld [vmem:[%s0 + $0x130] sm:$0xff]
  %v81 = vld [vmem:[%s0 + $0x138] sm:$0xff]
  %v82 = vld [vmem:[%s0 + $0x140] sm:$0xff]
  %v83 = vld [vmem:[%s0 + $0x148] sm:$0xff]
  %v84 = vld [vmem:[%s0 + $0x150] sm:$0xff]
  %v85 = vld [vmem:[%s0 + $0x158] sm:$0xff]
  %v86 = vld [vmem:[%s0 + $0x160] sm:$0xff]
  %v87 = vld [vmem:[%s0 + $0x168] sm:$0xff]
  %v88 = vld [vmem:[%s0 + $0x170] sm:$0xff]
  %v89 = vld [vmem:[%s0 + $0x178] sm:$0xff]
  %v90 = vld [vmem:[%s0 + $0x180] sm:$0xff]
  %v91 = vld [vmem:[%s0 + $0x188] sm:$0xff]
  %v92 = vld [vmem:[%s0 + $0x190] sm:$0xff]
  %v93 = vld [vmem:[%s0 + $0x198] sm:$0xff]
  %v94 = vld [vmem:[%s0 + $0x1a0] sm:$0xff]
  %v95 = vld [vmem:[%s0 + $0x1a8] sm:$0xff]
  %v96 = vld [vmem:[%s0 + $0x1b0] sm:$0xff]
  %v97 = vld [vmem:[%s0 + $0x1b8] sm:$0xff]
  %v98 = vld [vmem:[%s1] sm:$0xff]
  %v99 = vld [vmem:[%s1 + $0x8] sm:$0xff]
  %v100 = vld [vmem:[%s1 + $0x10] sm:$0xff]
  %v101 = vld [vmem:[%s1 + $0x18] sm:$0xff]
  %v102 = vld [vmem:[%s1 + $0x20] sm:$0xff]
  %v103 = vld [vmem:[%s1 + $0x28] sm:$0xff]
  %v104 = vld [vmem:[%s1 + $0x30] sm:$0xff]
  %v105 = vld [vmem:[%s1 + $0x38] sm:$0xff]
  %v106 = vld [vmem:[%s1 + $0x40] sm:$0xff]
  %v107 = vld [vmem:[%s1 + $0x48] sm:$0xff]
  %v108 = vld [vmem:[%s1 + $0x50] sm:$0xff]
  %v109 = vld [vmem:[%s1 + $0x58] sm:$0xff]
  %v110 = vld [vmem:[%s1 + $0x60] sm:$0xff]
  %v111 = vld [vmem:[%s1 + $0x68] sm:$0xff]
  %v112 = vld [vmem:[%s1 + $0x70] sm:$0xff]
  %v113 = vld [vmem:[%s1 + $0x78] sm:$0xff]
  %v114 = vld [vmem:[%s1 + $0x80] sm:$0xff]
  %v115 = vld [vmem:[%s1 + $0x88] sm:$0xff]
  %v116 = vld [vmem:[%s1 + $0x90] sm:$0xff]
  %v117 = vld [vmem:[%s1 + $0x98] sm:$0xff]
  %v118 = vld [vmem:[%s1 + $0xa0] sm:$0xff]
  %v119 = vld [vmem:[%s1 + $0xa8] sm:$0xff]
  %v120 = vld [vmem:[%s1 + $0xb0] sm:$0xff]
  %v121 = vld [vmem:[%s1 + $0xb8] sm:$0xff]
  %v122 = vld [vmem:[%s1 + $0xc0] sm:$0xff]
  %v123 = vld [vmem:[%s1 + $0xc8] sm:$0xff]
  %v124 = vld [vmem:[%s1 + $0xd0] sm:$0xff]
  %v125 = vld [vmem:[%s1 + $0xd8] sm:$0xff]
  %v126 = vld [vmem:[%s1 + $0xe0] sm:$0xff]
  %v127 = vld [vmem:[%s1 + $0xe8] sm:$0xff]
  %v128 = vld [vmem:[%s1 + $0xf0] sm:$0xff]
  %v129 = vld [vmem:[%s1 + $0xf8] sm:$0xff]
  %v130 = vld [vmem:[%s1 + $0x100] sm:$0xff]
  %v131 = vld [vmem:[%s1 + $0x108] sm:$0xff]
  %v132 = vld [vmem:[%s1 + $0x110] sm:$0xff]
  %v133 = vld [vmem:[%s1 + $0x118] sm:$0xff]
  %v134 = vld [vmem:[%s1 + $0x120] sm:$0xff]
  %v135 = vld [vmem:[%s1 + $0x128] sm:$0xff]
  %v136 = vld [vmem:[%s1 + $0x130] sm:$0xff]
  %v137 = vld [vmem:[%s1 + $0x138] sm:$0xff]
  %v138 = vld [vmem:[%s1 + $0x140] sm:$0xff]
  %v139 = vld [vmem:[%s1 + $0x148] sm:$0xff]
  %v140 = vld [vmem:[%s1 + $0x150] sm:$0xff]
  %v141 = vld [vmem:[%s1 + $0x158] sm:$0xff]
  %v142 = vld [vmem:[%s1 + $0x160] sm:$0xff]
  %v143 = vld [vmem:[%s1 + $0x168] sm:$0xff]
  %v144 = vld [vmem:[%s1 + $0x170] sm:$0xff]
  %v145 = vld [vmem:[%s1 + $0x178] sm:$0xff]
  %v146 = vld [vmem:[%s1 + $0x180] sm:$0xff]
  %v147 = vld [vmem:[%s1 + $0x188] sm:$0xff]
  %v148 = vld [vmem:[%s1 + $0x190] sm:$0xff]
  %v149 = vld [vmem:[%s1 + $0x198] sm:$0xff]
  %v150 = vld [vmem:[%s1 + $0x1a0] sm:$0xff]
  %v151 = vld [vmem:[%s1 + $0x1a8] sm:$0xff]
  %v152 = vld [vmem:[%s1 + $0x1b0] sm:$0xff]
  %v153 = vld [vmem:[%s1 + $0x1b8] sm:$0xff]
  %v154 = vld [vmem:[%s2] sm:$0xf]
  %v155 = vld [vmem:[%s2 + $0x4] sm:$0xf]
  %v156 = vld [vmem:[%s2 + $0x8] sm:$0xf]
  %v157 = vld [vmem:[%s2 + $0xc] sm:$0xf]
  %v158 = vld [vmem:[%s2 + $0x10] sm:$0xf]
  %v159 = vld [vmem:[%s2 + $0x14] sm:$0xf]
  %v160 = vld [vmem:[%s2 + $0x18] sm:$0xf]
  %v161 = vld [vmem:[%s2 + $0x1c] sm:$0xf]
  %v162 = vld [vmem:[%s2 + $0x20] sm:$0xf]
  %v163 = vld [vmem:[%s2 + $0x24] sm:$0xf]
  %v164 = vld [vmem:[%s2 + $0x28] sm:$0xf]
  %v165 = vld [vmem:[%s2 + $0x2c] sm:$0xf]
  %v166 = vld [vmem:[%s2 + $0x30] sm:$0xf]
  %v167 = vld [vmem:[%s2 + $0x34] sm:$0xf]
  %v168 = vld [vmem:[%s2 + $0x38] sm:$0xf]
  %v169 = vld [vmem:[%s2 + $0x3c] sm:$0xf]
  %v170 = vld [vmem:[%s2 + $0x40] sm:$0xf]
  %v171 = vld [vmem:[%s2 + $0x44] sm:$0xf]
  %v172 = vld [vmem:[%s2 + $0x48] sm:$0xf]
  %v173 = vld [vmem:[%s2 + $0x4c] sm:$0xf]
  %v174 = vld [vmem:[%s2 + $0x50] sm:$0xf]
  %v175 = vld [vmem:[%s2 + $0x54] sm:$0xf]
  %v176 = vld [vmem:[%s2 + $0x58] sm:$0xf]
  %v177 = vld [vmem:[%s2 + $0x5c] sm:$0xf]
  %v178 = vld [vmem:[%s2 + $0x60] sm:$0xf]
  %v179 = vld [vmem:[%s2 + $0x64] sm:$0xf]
  %v180 = vld [vmem:[%s2 + $0x68] sm:$0xf]
  %v181 = vld [vmem:[%s2 + $0x6c] sm:$0xf]
  %v182 = vld [vmem:[%s2 + $0x70] sm:$0xf]
  %v183 = vld [vmem:[%s2 + $0x74] sm:$0xf]
  %v184 = vld [vmem:[%s2 + $0x78] sm:$0xf]
  %v185 = vld [vmem:[%s2 + $0x7c] sm:$0xf]
  %v186 = vld [vmem:[%s2 + $0x80] sm:$0xf]
  %v187 = vld [vmem:[%s2 + $0x84] sm:$0xf]
  %v188 = vld [vmem:[%s2 + $0x88] sm:$0xf]
  %v189 = vld [vmem:[%s2 + $0x8c] sm:$0xf]
  %v190 = vld [vmem:[%s2 + $0x90] sm:$0xf]
  %v191 = vld [vmem:[%s2 + $0x94] sm:$0xf]
  %v192 = vld [vmem:[%s2 + $0x98] sm:$0xf]
  %v193 = vld [vmem:[%s2 + $0x9c] sm:$0xf]
  %v194 = vld [vmem:[%s2 + $0xa0] sm:$0xf]
  %v195 = vld [vmem:[%s2 + $0xa4] sm:$0xf]
  %v196 = vld [vmem:[%s2 + $0xa8] sm:$0xf]
  %v197 = vld [vmem:[%s2 + $0xac] sm:$0xf]
  %v198 = vld [vmem:[%s2 + $0xb0] sm:$0xf]
  %v199 = vld [vmem:[%s2 + $0xb4] sm:$0xf]
  %v200 = vld [vmem:[%s2 + $0xb8] sm:$0xf]
  %v201 = vld [vmem:[%s2 + $0xbc] sm:$0xf]
  %v202 = vld [vmem:[%s2 + $0xc0] sm:$0xf]
  %v203 = vld [vmem:[%s2 + $0xc4] sm:$0xf]
  %v204 = vld [vmem:[%s2 + $0xc8] sm:$0xf]
  %v205 = vld [vmem:[%s2 + $0xcc] sm:$0xf]
  %v206 = vld [vmem:[%s2 + $0xd0] sm:$0xf]
  %v207 = vld [vmem:[%s2 + $0xd4] sm:$0xf]
  %v208 = vld [vmem:[%s2 + $0xd8] sm:$0xf]
  %v209 = vld [vmem:[%s2 + $0xdc] sm:$0xf]
  %v210 = vld [vmem:[%s2 + $0xe0] sm:$0xf]
  %v211 = vld [vmem:[%s2 + $0xe4] sm:$0xf]
  %v212 = vld [vmem:[%s2 + $0xe8] sm:$0xf]
  %v213 = vld [vmem:[%s2 + $0xec] sm:$0xf]
  %v270 = vunpack.c.l.b16 %v42
  %v271 = vunpack.c.h.b16 %v42
  %v272 = vunpack.c.l.b16 %v43
  %v273 = vunpack.c.h.b16 %v43
  %v274 = vunpack.c.l.b16 %v44
  %v275 = vunpack.c.h.b16 %v44
  %v276 = vunpack.c.l.b16 %v45
  %v277 = vunpack.c.h.b16 %v45
  %v278 = vunpack.c.l.b16 %v46
  %v279 = vunpack.c.h.b16 %v46
  %v280 = vunpack.c.l.b16 %v47
  %v281 = vunpack.c.h.b16 %v47
  %v282 = vunpack.c.l.b16 %v48
  %v283 = vunpack.c.h.b16 %v48
  %v284 = vunpack.c.l.b16 %v49
  %v285 = vunpack.c.h.b16 %v49
  %v286 = vunpack.c.l.b16 %v50
  %v287 = vunpack.c.h.b16 %v50
  %v288 = vunpack.c.l.b16 %v51
  %v289 = vunpack.c.h.b16 %v51
  %v290 = vunpack.c.l.b16 %v52
  %v291 = vunpack.c.h.b16 %v52
  %v292 = vunpack.c.l.b16 %v53
  %v293 = vunpack.c.h.b16 %v53
  %v294 = vunpack.c.l.b16 %v54
  %v295 = vunpack.c.h.b16 %v54
  %v296 = vunpack.c.l.b16 %v55
  %v297 = vunpack.c.h.b16 %v55
  %v298 = vunpack.c.l.b16 %v56
  %v299 = vunpack.c.h.b16 %v56
  %v300 = vunpack.c.l.b16 %v57
  %v301 = vunpack.c.h.b16 %v57
  %v302 = vunpack.c.l.b16 %v58
  %v303 = vunpack.c.h.b16 %v58
  %v304 = vunpack.c.l.b16 %v59
  %v305 = vunpack.c.h.b16 %v59
  %v306 = vunpack.c.l.b16 %v60
  %v307 = vunpack.c.h.b16 %v60
  %v308 = vunpack.c.l.b16 %v61
  %v309 = vunpack.c.h.b16 %v61
  %v310 = vunpack.c.l.b16 %v62
  %v311 = vunpack.c.h.b16 %v62
  %v312 = vunpack.c.l.b16 %v63
  %v313 = vunpack.c.h.b16 %v63
  %v314 = vunpack.c.l.b16 %v64
  %v315 = vunpack.c.h.b16 %v64
  %v316 = vunpack.c.l.b16 %v65
  %v317 = vunpack.c.h.b16 %v65
  %v318 = vunpack.c.l.b16 %v66
  %v319 = vunpack.c.h.b16 %v66
  %v320 = vunpack.c.l.b16 %v67
  %v321 = vunpack.c.h.b16 %v67
  %v322 = vunpack.c.l.b16 %v68
  %v323 = vunpack.c.h.b16 %v68
  %v324 = vunpack.c.l.b16 %v69
  %v325 = vunpack.c.h.b16 %v69
  %v326 = vunpack.c.l.b16 %v70
  %v327 = vunpack.c.h.b16 %v70
  %v328 = vunpack.c.l.b16 %v71
  %v329 = vunpack.c.h.b16 %v71
  %v330 = vunpack.c.l.b16 %v72
  %v331 = vunpack.c.h.b16 %v72
  %v332 = vunpack.c.l.b16 %v73
  %v333 = vunpack.c.h.b16 %v73
  %v334 = vunpack.c.l.b16 %v74
  %v335 = vunpack.c.h.b16 %v74
  %v336 = vunpack.c.l.b16 %v75
  %v337 = vunpack.c.h.b16 %v75
  %v338 = vunpack.c.l.b16 %v76
  %v339 = vunpack.c.h.b16 %v76
  %v340 = vunpack.c.l.b16 %v77
  %v341 = vunpack.c.h.b16 %v77
  %v342 = vunpack.c.l.b16 %v78
  %v343 = vunpack.c.h.b16 %v78
  %v344 = vunpack.c.l.b16 %v79
  %v345 = vunpack.c.h.b16 %v79
  %v346 = vunpack.c.l.b16 %v80
  %v347 = vunpack.c.h.b16 %v80
  %v348 = vunpack.c.l.b16 %v81
  %v349 = vunpack.c.h.b16 %v81
  %v350 = vunpack.c.l.b16 %v82
  %v351 = vunpack.c.h.b16 %v82
  %v352 = vunpack.c.l.b16 %v83
  %v353 = vunpack.c.h.b16 %v83
  %v354 = vunpack.c.l.b16 %v84
  %v355 = vunpack.c.h.b16 %v84
  %v356 = vunpack.c.l.b16 %v85
  %v357 = vunpack.c.h.b16 %v85
  %v358 = vunpack.c.l.b16 %v86
  %v359 = vunpack.c.h.b16 %v86
  %v360 = vunpack.c.l.b16 %v87
  %v361 = vunpack.c.h.b16 %v87
  %v362 = vunpack.c.l.b16 %v88
  %v363 = vunpack.c.h.b16 %v88
  %v364 = vunpack.c.l.b16 %v89
  %v365 = vunpack.c.h.b16 %v89
  %v366 = vunpack.c.l.b16 %v90
  %v367 = vunpack.c.h.b16 %v90
  %v368 = vunpack.c.l.b16 %v91
  %v369 = vunpack.c.h.b16 %v91
  %v370 = vunpack.c.l.b16 %v92
  %v371 = vunpack.c.h.b16 %v92
  %v372 = vunpack.c.l.b16 %v93
  %v373 = vunpack.c.h.b16 %v93
  %v374 = vunpack.c.l.b16 %v94
  %v375 = vunpack.c.h.b16 %v94
  %v376 = vunpack.c.l.b16 %v95
  %v377 = vunpack.c.h.b16 %v95
  %v378 = vunpack.c.l.b16 %v96
  %v379 = vunpack.c.h.b16 %v96
  %v380 = vunpack.c.l.b16 %v97
  %v381 = vunpack.c.h.b16 %v97
  %v382 = vpack.c.b16 %v274, %v270
  %v383 = vpack.c.b16 %v275, %v271
  %v384 = vpack.c.b16 %v276, %v272
  %v385 = vpack.c.b16 %v277, %v273
  %v386 = vpack.c.b16 %v282, %v278
  %v387 = vpack.c.b16 %v283, %v279
  %v388 = vpack.c.b16 %v284, %v280
  %v389 = vpack.c.b16 %v285, %v281
  %v390 = vpack.c.b16 %v290, %v286
  %v391 = vpack.c.b16 %v291, %v287
  %v392 = vpack.c.b16 %v292, %v288
  %v393 = vpack.c.b16 %v293, %v289
  %v394 = vpack.c.b16 %v298, %v294
  %v395 = vpack.c.b16 %v299, %v295
  %v396 = vpack.c.b16 %v300, %v296
  %v397 = vpack.c.b16 %v301, %v297
  %v398 = vpack.c.b16 %v306, %v302
  %v399 = vpack.c.b16 %v307, %v303
  %v400 = vpack.c.b16 %v308, %v304
  %v401 = vpack.c.b16 %v309, %v305
  %v402 = vpack.c.b16 %v314, %v310
  %v403 = vpack.c.b16 %v315, %v311
  %v404 = vpack.c.b16 %v316, %v312
  %v405 = vpack.c.b16 %v317, %v313
  %v406 = vpack.c.b16 %v322, %v318
  %v407 = vpack.c.b16 %v323, %v319
  %v408 = vpack.c.b16 %v324, %v320
  %v409 = vpack.c.b16 %v325, %v321
  %v410 = vpack.c.b16 %v330, %v326
  %v411 = vpack.c.b16 %v331, %v327
  %v412 = vpack.c.b16 %v332, %v328
  %v413 = vpack.c.b16 %v333, %v329
  %v414 = vpack.c.b16 %v338, %v334
  %v415 = vpack.c.b16 %v339, %v335
  %v416 = vpack.c.b16 %v340, %v336
  %v417 = vpack.c.b16 %v341, %v337
  %v418 = vpack.c.b16 %v346, %v342
  %v419 = vpack.c.b16 %v347, %v343
  %v420 = vpack.c.b16 %v348, %v344
  %v421 = vpack.c.b16 %v349, %v345
  %v422 = vpack.c.b16 %v354, %v350
  %v423 = vpack.c.b16 %v355, %v351
  %v424 = vpack.c.b16 %v356, %v352
  %v425 = vpack.c.b16 %v357, %v353
  %v426 = vpack.c.b16 %v362, %v358
  %v427 = vpack.c.b16 %v363, %v359
  %v428 = vpack.c.b16 %v364, %v360
  %v429 = vpack.c.b16 %v365, %v361
  %v430 = vpack.c.b16 %v370, %v366
  %v431 = vpack.c.b16 %v371, %v367
  %v432 = vpack.c.b16 %v372, %v368
  %v433 = vpack.c.b16 %v373, %v369
  %v434 = vpack.c.b16 %v378, %v374
  %v435 = vpack.c.b16 %v379, %v375
  %v436 = vpack.c.b16 %v380, %v376
  %v437 = vpack.c.b16 %v381, %v377
  %v540 = vunpack.c.l.b16 %v154
  %v541 = vunpack.c.l.b16 %v155
  %v542 = vunpack.c.l.b16 %v156
  %v543 = vunpack.c.l.b16 %v157
  %v544 = vunpack.c.l.b16 %v158
  %v545 = vunpack.c.l.b16 %v159
  %v546 = vunpack.c.l.b16 %v160
  %v547 = vunpack.c.l.b16 %v161
  %v548 = vunpack.c.l.b16 %v162
  %v549 = vunpack.c.l.b16 %v163
  %v550 = vunpack.c.l.b16 %v164
  %v551 = vunpack.c.l.b16 %v165
  %v552 = vunpack.c.l.b16 %v166
  %v553 = vunpack.c.l.b16 %v167
  %v554 = vunpack.c.l.b16 %v168
  %v555 = vunpack.c.l.b16 %v169
  %v556 = vunpack.c.l.b16 %v170
  %v557 = vunpack.c.l.b16 %v171
  %v558 = vunpack.c.l.b16 %v172
  %v559 = vunpack.c.l.b16 %v173
  %v560 = vunpack.c.l.b16 %v174
  %v561 = vunpack.c.l.b16 %v175
  %v562 = vunpack.c.l.b16 %v176
  %v563 = vunpack.c.l.b16 %v177
  %v564 = vunpack.c.l.b16 %v178
  %v565 = vunpack.c.l.b16 %v179
  %v566 = vunpack.c.l.b16 %v180
  %v567 = vunpack.c.l.b16 %v181
  %v568 = vunpack.c.l.b16 %v182
  %v569 = vunpack.c.l.b16 %v183
  %v570 = vunpack.c.l.b16 %v184
  %v571 = vunpack.c.l.b16 %v185
  %v572 = vunpack.c.l.b16 %v186
  %v573 = vunpack.c.l.b16 %v187
  %v574 = vunpack.c.l.b16 %v188
  %v575 = vunpack.c.l.b16 %v189
  %v576 = vunpack.c.l.b16 %v190
  %v577 = vunpack.c.l.b16 %v191
  %v578 = vunpack.c.l.b16 %v192
  %v579 = vunpack.c.l.b16 %v193
  %v580 = vunpack.c.l.b16 %v194
  %v581 = vunpack.c.l.b16 %v195
  %v582 = vunpack.c.l.b16 %v196
  %v583 = vunpack.c.l.b16 %v197
  %v584 = vunpack.c.l.b16 %v198
  %v585 = vunpack.c.l.b16 %v199
  %v586 = vunpack.c.l.b16 %v200
  %v587 = vunpack.c.l.b16 %v201
  %v588 = vunpack.c.l.b16 %v202
  %v589 = vunpack.c.l.b16 %v203
  %v590 = vunpack.c.l.b16 %v204
  %v591 = vunpack.c.l.b16 %v205
  %v592 = vunpack.c.l.b16 %v206
  %v593 = vunpack.c.l.b16 %v207
  %v594 = vunpack.c.l.b16 %v208
  %v595 = vunpack.c.l.b16 %v209
  %v596 = vunpack.c.l.b16 %v210
  %v597 = vunpack.c.l.b16 %v211
  %v598 = vunpack.c.l.b16 %v212
  %v599 = vunpack.c.l.b16 %v213
  %v600 = vpack.c.b16 %v541, %v540
  %v601 = vpack.c.b16 %v543, %v542
  %v602 = vpack.c.b16 %v545, %v544
  %v603 = vpack.c.b16 %v547, %v546
  %v604 = vpack.c.b16 %v549, %v548
  %v605 = vpack.c.b16 %v551, %v550
  %v606 = vpack.c.b16 %v553, %v552
  %v607 = vpack.c.b16 %v555, %v554
  %v608 = vpack.c.b16 %v557, %v556
  %v609 = vpack.c.b16 %v559, %v558
  %v610 = vpack.c.b16 %v561, %v560
  %v611 = vpack.c.b16 %v563, %v562
  %v612 = vpack.c.b16 %v565, %v564
  %v613 = vpack.c.b16 %v567, %v566
  %v614 = vpack.c.b16 %v569, %v568
  %v615 = vpack.c.b16 %v571, %v570
  %v616 = vpack.c.b16 %v573, %v572
  %v617 = vpack.c.b16 %v575, %v574
  %v618 = vpack.c.b16 %v577, %v576
  %v619 = vpack.c.b16 %v579, %v578
  %v620 = vpack.c.b16 %v581, %v580
  %v621 = vpack.c.b16 %v583, %v582
  %v622 = vpack.c.b16 %v585, %v584
  %v623 = vpack.c.b16 %v587, %v586
  %v624 = vpack.c.b16 %v589, %v588
  %v625 = vpack.c.b16 %v591, %v590
  %v626 = vpack.c.b16 %v593, %v592
  %v627 = vpack.c.b16 %v595, %v594
  %v628 = vpack.c.b16 %v597, %v596
  %v629 = vpack.c.b16 %v599, %v598
  %vm660 = vcmask 785408
  %v662 = vsel %vm660, %v385, 0
  %v665 = vsel %vm660, %v389, 0
  %v668 = vsel %vm660, %v393, 0
  %v671 = vsel %vm660, %v397, 0
  %v674 = vsel %vm660, %v401, 0
  %v677 = vsel %vm660, %v405, 0
  %v680 = vsel %vm660, %v409, 0
  %v683 = vsel %vm660, %v413, 0
  %v686 = vsel %vm660, %v417, 0
  %v689 = vsel %vm660, %v421, 0
  %v692 = vsel %vm660, %v425, 0
  %v695 = vsel %vm660, %v429, 0
  %v698 = vsel %vm660, %v433, 0
  %v701 = vsel %vm660, %v437, 0
  %703 = vmatprep.subr.bf16.mxu0 0
  %704 = vmatpush1.bf16.msra.mxu0 %v607
  %705 = vmatprep.subr.bf16.mxu0 0
  %706 = vmatpush1.bf16.msra.mxu0 %v606
  %707 = vmatprep.subr.bf16.mxu0 0
  %708 = vmatpush1.bf16.msra.mxu0 %v605
  %709 = vmatprep.subr.bf16.mxu0 0
  %710 = vmatpush1.bf16.msra.mxu0 %v604
  %711 = vmatprep.subr.bf16.mxu0 0
  %712 = vmatpush1.bf16.msra.mxu0 %v603
  %713 = vmatprep.subr.bf16.mxu0 0
  %714 = vmatpush1.bf16.msra.mxu0 %v602
  %715 = vmatprep.subr.bf16.mxu0 0
  %716 = vmatpush1.bf16.msra.mxu0 %v601
  %717 = vmatprep.subr.bf16.mxu0 0
  %718 = vmatpush1.bf16.msra.mxu0 %v600
  %719 = vmatprep.subr.bf16.mxu0 0
  %720 = vmatpush2.bf16.msra.mxu0 %v615
  %721 = vmatprep.subr.bf16.mxu0 0
  %722 = vmatpush2.bf16.msra.mxu0 %v614
  %723 = vmatprep.subr.bf16.mxu0 0
  %724 = vmatpush2.bf16.msra.mxu0 %v613
  %725 = vmatprep.subr.bf16.mxu0 0
  %726 = vmatpush2.bf16.msra.mxu0 %v612
  %727 = vmatprep.subr.bf16.mxu0 0
  %728 = vmatpush2.bf16.msra.mxu0 %v611
  %729 = vmatprep.subr.bf16.mxu0 0
  %730 = vmatpush2.bf16.msra.mxu0 %v610
  %731 = vmatprep.subr.bf16.mxu0 0
  %732 = vmatpush2.bf16.msra.mxu0 %v609
  %733 = vmatprep.subr.bf16.mxu0 0
  %734 = vmatpush2.bf16.msra.mxu0 %v608
  %735 = vmatprep.mubr.bf16.mxu0 %v383
  %736 = vmatmul.mubr.bf16.gmra.mxu0 %v382
  %v737 = vpop.f32.mrf.mxu0
  %v738 = vadd.f32 0.0, %v737
  %v739 = vpop.f32.mrf.mxu0
  %v740 = vpop.f32.mrf.mxu0
  %v741 = vadd.f32 0.0, %v740
  %v742 = vpop.f32.mrf.mxu0
  %743 = vmatprep.mubr.bf16.mxu0 %v387
  %744 = vmatmul.mubr.bf16.gmra.mxu0 %v386
  %v745 = vpop.f32.mrf.mxu0
  %v746 = vadd.f32 0.0, %v745
  %v747 = vpop.f32.mrf.mxu0
  %v748 = vpop.f32.mrf.mxu0
  %v749 = vadd.f32 0.0, %v748
  %v750 = vpop.f32.mrf.mxu0
  %751 = vmatprep.mubr.bf16.mxu0 %v391
  %752 = vmatmul.mubr.bf16.gmra.mxu0 %v390
  %v753 = vpop.f32.mrf.mxu0
  %v754 = vadd.f32 0.0, %v753
  %v755 = vpop.f32.mrf.mxu0
  %v756 = vpop.f32.mrf.mxu0
  %v757 = vadd.f32 0.0, %v756
  %v758 = vpop.f32.mrf.mxu0
  %759 = vmatprep.mubr.bf16.mxu0 %v395
  %760 = vmatmul.mubr.bf16.gmra.mxu0 %v394
  %v761 = vpop.f32.mrf.mxu0
  %v762 = vadd.f32 0.0, %v761
  %v763 = vpop.f32.mrf.mxu0
  %v764 = vpop.f32.mrf.mxu0
  %v765 = vadd.f32 0.0, %v764
  %v766 = vpop.f32.mrf.mxu0
  %767 = vmatprep.mubr.bf16.mxu0 %v399
  %768 = vmatmul.mubr.bf16.gmra.mxu0 %v398
  %v769 = vpop.f32.mrf.mxu0
  %v770 = vadd.f32 0.0, %v769
  %v771 = vpop.f32.mrf.mxu0
  %v772 = vpop.f32.mrf.mxu0
  %v773 = vadd.f32 0.0, %v772
  %v774 = vpop.f32.mrf.mxu0
  %775 = vmatprep.mubr.bf16.mxu0 %v403
  %776 = vmatmul.mubr.bf16.gmra.mxu0 %v402
  %v777 = vpop.f32.mrf.mxu0
  %v778 = vadd.f32 0.0, %v777
  %v779 = vpop.f32.mrf.mxu0
  %v780 = vpop.f32.mrf.mxu0
  %v781 = vadd.f32 0.0, %v780
  %v782 = vpop.f32.mrf.mxu0
  %783 = vmatprep.mubr.bf16.mxu0 %v407
  %784 = vmatmul.mubr.bf16.gmra.mxu0 %v406
  %v785 = vpop.f32.mrf.mxu0
  %v786 = vadd.f32 0.0, %v785
  %v787 = vpop.f32.mrf.mxu0
  %v788 = vpop.f32.mrf.mxu0
  %v789 = vadd.f32 0.0, %v788
  %v790 = vpop.f32.mrf.mxu0
  %791 = vmatprep.mubr.bf16.mxu0 %v411
  %792 = vmatmul.mubr.bf16.gmra.mxu0 %v410
  %v793 = vpop.f32.mrf.mxu0
  %v794 = vadd.f32 0.0, %v793
  %v795 = vpop.f32.mrf.mxu0
  %v796 = vpop.f32.mrf.mxu0
  %v797 = vadd.f32 0.0, %v796
  %v798 = vpop.f32.mrf.mxu0
  %799 = vmatprep.mubr.bf16.mxu0 %v415
  %800 = vmatmul.mubr.bf16.gmra.mxu0 %v414
  %v801 = vpop.f32.mrf.mxu0
  %v802 = vadd.f32 0.0, %v801
  %v803 = vpop.f32.mrf.mxu0
  %v804 = vpop.f32.mrf.mxu0
  %v805 = vadd.f32 0.0, %v804
  %v806 = vpop.f32.mrf.mxu0
  %807 = vmatprep.mubr.bf16.mxu0 %v419
  %808 = vmatmul.mubr.bf16.gmra.mxu0 %v418
  %v809 = vpop.f32.mrf.mxu0
  %v810 = vadd.f32 0.0, %v809
  %v811 = vpop.f32.mrf.mxu0
  %v812 = vpop.f32.mrf.mxu0
  %v813 = vadd.f32 0.0, %v812
  %v814 = vpop.f32.mrf.mxu0
  %815 = vmatprep.mubr.bf16.mxu0 %v423
  %816 = vmatmul.mubr.bf16.gmra.mxu0 %v422
  %v817 = vpop.f32.mrf.mxu0
  %v818 = vadd.f32 0.0, %v817
  %v819 = vpop.f32.mrf.mxu0
  %v820 = vpop.f32.mrf.mxu0
  %v821 = vadd.f32 0.0, %v820
  %v822 = vpop.f32.mrf.mxu0
  %823 = vmatprep.mubr.bf16.mxu0 %v427
  %824 = vmatmul.mubr.bf16.gmra.mxu0 %v426
  %v825 = vpop.f32.mrf.mxu0
  %v826 = vadd.f32 0.0, %v825
  %v827 = vpop.f32.mrf.mxu0
  %v828 = vpop.f32.mrf.mxu0
  %v829 = vadd.f32 0.0, %v828
  %v830 = vpop.f32.mrf.mxu0
  %831 = vmatprep.mubr.bf16.mxu0 %v431
  %832 = vmatmul.mubr.bf16.gmra.mxu0 %v430
  %v833 = vpop.f32.mrf.mxu0
  %v834 = vadd.f32 0.0, %v833
  %v835 = vpop.f32.mrf.mxu0
  %v836 = vpop.f32.mrf.mxu0
  %v837 = vadd.f32 0.0, %v836
  %v838 = vpop.f32.mrf.mxu0
  %839 = vmatprep.mubr.bf16.mxu0 %v435
  %840 = vmatmul.mubr.bf16.gmra.mxu0 %v434
  %v841 = vpop.f32.mrf.mxu0
  %v842 = vadd.f32 0.0, %v841
  %v843 = vpop.f32.mrf.mxu0
  %v844 = vpop.f32.mrf.mxu0
  %v845 = vadd.f32 0.0, %v844
  %v846 = vpop.f32.mrf.mxu0
  %847 = vdwg.mxu0
  %848 = vmatprep.subr.bf16.mxu0 0
  %849 = vmatpush1.bf16.msra.mxu0 %v623
  %850 = vmatprep.subr.bf16.mxu0 0
  %851 = vmatpush1.bf16.msra.mxu0 %v622
  %852 = vmatprep.subr.bf16.mxu0 0
  %853 = vmatpush1.bf16.msra.mxu0 %v621
  %854 = vmatprep.subr.bf16.mxu0 0
  %855 = vmatpush1.bf16.msra.mxu0 %v620
  %856 = vmatprep.subr.bf16.mxu0 0
  %857 = vmatpush1.bf16.msra.mxu0 %v619
  %858 = vmatprep.subr.bf16.mxu0 0
  %859 = vmatpush1.bf16.msra.mxu0 %v618
  %860 = vmatprep.subr.bf16.mxu0 0
  %861 = vmatpush1.bf16.msra.mxu0 %v617
  %862 = vmatprep.subr.bf16.mxu0 0
  %863 = vmatpush1.bf16.msra.mxu0 %v616
  %864 = vmatprep.subr.bf16.mxu0 0
  %865 = vmatpush2.bf16.msra.mxu0 0
  %866 = vmatprep.subr.bf16.mxu0 0
  %867 = vmatpush2.bf16.msra.mxu0 0
  %868 = vmatprep.subr.bf16.mxu0 0
  %869 = vmatpush2.bf16.msra.mxu0 %v629
  %870 = vmatprep.subr.bf16.mxu0 0
  %871 = vmatpush2.bf16.msra.mxu0 %v628
  %872 = vmatprep.subr.bf16.mxu0 0
  %873 = vmatpush2.bf16.msra.mxu0 %v627
  %874 = vmatprep.subr.bf16.mxu0 0
  %875 = vmatpush2.bf16.msra.mxu0 %v626
  %876 = vmatprep.subr.bf16.mxu0 0
  %877 = vmatpush2.bf16.msra.mxu0 %v625
  %878 = vmatprep.subr.bf16.mxu0 0
  %879 = vmatpush2.bf16.msra.mxu0 %v624
  %880 = vmatprep.mubr.bf16.mxu0 %v662
  %881 = vmatmul.mubr.bf16.gmra.mxu0 %v384
  %v882 = vpop.f32.mrf.mxu0
  %v883 = vadd.f32 %v738, %v882
  %v884 = vpop.f32.mrf.mxu0
  %v885 = vpop.f32.mrf.mxu0
  %v886 = vadd.f32 %v741, %v885
  %v887 = vpop.f32.mrf.mxu0
  %888 = vmatprep.mubr.bf16.mxu0 %v665
  %889 = vmatmul.mubr.bf16.gmra.mxu0 %v388
  %v890 = vpop.f32.mrf.mxu0
  %v891 = vadd.f32 %v746, %v890
  %v892 = vpop.f32.mrf.mxu0
  %v893 = vpop.f32.mrf.mxu0
  %v894 = vadd.f32 %v749, %v893
  %v895 = vpop.f32.mrf.mxu0
  %896 = vmatprep.mubr.bf16.mxu0 %v668
  %897 = vmatmul.mubr.bf16.gmra.mxu0 %v392
  %v898 = vpop.f32.mrf.mxu0
  %v899 = vadd.f32 %v754, %v898
  %v900 = vpop.f32.mrf.mxu0
  %v901 = vpop.f32.mrf.mxu0
  %v902 = vadd.f32 %v757, %v901
  %v903 = vpop.f32.mrf.mxu0
  %904 = vmatprep.mubr.bf16.mxu0 %v671
  %905 = vmatmul.mubr.bf16.gmra.mxu0 %v396
  %v906 = vpop.f32.mrf.mxu0
  %v907 = vadd.f32 %v762, %v906
  %v908 = vpop.f32.mrf.mxu0
  %v909 = vpop.f32.mrf.mxu0
  %v910 = vadd.f32 %v765, %v909
  %v911 = vpop.f32.mrf.mxu0
  %912 = vmatprep.mubr.bf16.mxu0 %v674
  %913 = vmatmul.mubr.bf16.gmra.mxu0 %v400
  %v914 = vpop.f32.mrf.mxu0
  %v915 = vadd.f32 %v770, %v914
  %v916 = vpop.f32.mrf.mxu0
  %v917 = vpop.f32.mrf.mxu0
  %v918 = vadd.f32 %v773, %v917
  %v919 = vpop.f32.mrf.mxu0
  %920 = vmatprep.mubr.bf16.mxu0 %v677
  %921 = vmatmul.mubr.bf16.gmra.mxu0 %v404
  %v922 = vpop.f32.mrf.mxu0
  %v923 = vadd.f32 %v778, %v922
  %v924 = vpop.f32.mrf.mxu0
  %v925 = vpop.f32.mrf.mxu0
  %v926 = vadd.f32 %v781, %v925
  %v927 = vpop.f32.mrf.mxu0
  %928 = vmatprep.mubr.bf16.mxu0 %v680
  %929 = vmatmul.mubr.bf16.gmra.mxu0 %v408
  %v930 = vpop.f32.mrf.mxu0
  %v931 = vadd.f32 %v786, %v930
  %v932 = vpop.f32.mrf.mxu0
  %v933 = vpop.f32.mrf.mxu0
  %v934 = vadd.f32 %v789, %v933
  %v935 = vpop.f32.mrf.mxu0
  %936 = vmatprep.mubr.bf16.mxu0 %v683
  %937 = vmatmul.mubr.bf16.gmra.mxu0 %v412
  %v938 = vpop.f32.mrf.mxu0
  %v939 = vadd.f32 %v794, %v938
  %v940 = vpop.f32.mrf.mxu0
  %v941 = vpop.f32.mrf.mxu0
  %v942 = vadd.f32 %v797, %v941
  %v943 = vpop.f32.mrf.mxu0
  %944 = vmatprep.mubr.bf16.mxu0 %v686
  %945 = vmatmul.mubr.bf16.gmra.mxu0 %v416
  %v946 = vpop.f32.mrf.mxu0
  %v947 = vadd.f32 %v802, %v946
  %v948 = vpop.f32.mrf.mxu0
  %v949 = vpop.f32.mrf.mxu0
  %v950 = vadd.f32 %v805, %v949
  %v951 = vpop.f32.mrf.mxu0
  %952 = vmatprep.mubr.bf16.mxu0 %v689
  %953 = vmatmul.mubr.bf16.gmra.mxu0 %v420
  %v954 = vpop.f32.mrf.mxu0
  %v955 = vadd.f32 %v810, %v954
  %v956 = vpop.f32.mrf.mxu0
  %v957 = vpop.f32.mrf.mxu0
  %v958 = vadd.f32 %v813, %v957
  %v959 = vpop.f32.mrf.mxu0
  %960 = vmatprep.mubr.bf16.mxu0 %v692
  %961 = vmatmul.mubr.bf16.gmra.mxu0 %v424
  %v962 = vpop.f32.mrf.mxu0
  %v963 = vadd.f32 %v818, %v962
  %v964 = vpop.f32.mrf.mxu0
  %v965 = vpop.f32.mrf.mxu0
  %v966 = vadd.f32 %v821, %v965
  %v967 = vpop.f32.mrf.mxu0
  %968 = vmatprep.mubr.bf16.mxu0 %v695
  %969 = vmatmul.mubr.bf16.gmra.mxu0 %v428
  %v970 = vpop.f32.mrf.mxu0
  %v971 = vadd.f32 %v826, %v970
  %v972 = vpop.f32.mrf.mxu0
  %v973 = vpop.f32.mrf.mxu0
  %v974 = vadd.f32 %v829, %v973
  %v975 = vpop.f32.mrf.mxu0
  %976 = vmatprep.mubr.bf16.mxu0 %v698
  %977 = vmatmul.mubr.bf16.gmra.mxu0 %v432
  %v978 = vpop.f32.mrf.mxu0
  %v979 = vadd.f32 %v834, %v978
  %v980 = vpop.f32.mrf.mxu0
  %v981 = vpop.f32.mrf.mxu0
  %v982 = vadd.f32 %v837, %v981
  %v983 = vpop.f32.mrf.mxu0
  %984 = vmatprep.mubr.bf16.mxu0 %v701
  %985 = vmatmul.mubr.bf16.gmra.mxu0 %v436
  %v986 = vpop.f32.mrf.mxu0
  %v987 = vadd.f32 %v842, %v986
  %v988 = vpop.f32.mrf.mxu0
  %v989 = vpop.f32.mrf.mxu0
  %v990 = vadd.f32 %v845, %v989
  %v991 = vpop.f32.mrf.mxu0
  %992 = vdwg.mxu0
  %s993 = scalar_lea.vmem %s2, 240
  %v994 = vld [vmem:[%s993] sm:$0xf]
  %v995 = vld [vmem:[%s993 + $0x4] sm:$0xf]
  %v996 = vld [vmem:[%s993 + $0x8] sm:$0xf]
  %v997 = vld [vmem:[%s993 + $0xc] sm:$0xf]
  %v998 = vld [vmem:[%s993 + $0x10] sm:$0xf]
  %v999 = vld [vmem:[%s993 + $0x14] sm:$0xf]
  %v1000 = vld [vmem:[%s993 + $0x18] sm:$0xf]
  %v1001 = vld [vmem:[%s993 + $0x1c] sm:$0xf]
  %v1002 = vld [vmem:[%s993 + $0x20] sm:$0xf]
  %v1003 = vld [vmem:[%s993 + $0x24] sm:$0xf]
  %v1004 = vld [vmem:[%s993 + $0x28] sm:$0xf]
  %v1005 = vld [vmem:[%s993 + $0x2c] sm:$0xf]
  %v1006 = vld [vmem:[%s993 + $0x30] sm:$0xf]
  %v1007 = vld [vmem:[%s993 + $0x34] sm:$0xf]
  %v1008 = vld [vmem:[%s993 + $0x38] sm:$0xf]
  %v1009 = vld [vmem:[%s993 + $0x3c] sm:$0xf]
  %v1010 = vld [vmem:[%s993 + $0x40] sm:$0xf]
  %v1011 = vld [vmem:[%s993 + $0x44] sm:$0xf]
  %v1012 = vld [vmem:[%s993 + $0x48] sm:$0xf]
  %v1013 = vld [vmem:[%s993 + $0x4c] sm:$0xf]
  %v1014 = vld [vmem:[%s993 + $0x50] sm:$0xf]
  %v1015 = vld [vmem:[%s993 + $0x54] sm:$0xf]
  %v1016 = vld [vmem:[%s993 + $0x58] sm:$0xf]
  %v1017 = vld [vmem:[%s993 + $0x5c] sm:$0xf]
  %v1018 = vld [vmem:[%s993 + $0x60] sm:$0xf]
  %v1019 = vld [vmem:[%s993 + $0x64] sm:$0xf]
  %v1020 = vld [vmem:[%s993 + $0x68] sm:$0xf]
  %v1021 = vld [vmem:[%s993 + $0x6c] sm:$0xf]
  %v1022 = vld [vmem:[%s993 + $0x70] sm:$0xf]
  %v1023 = vld [vmem:[%s993 + $0x74] sm:$0xf]
  %v1024 = vld [vmem:[%s993 + $0x78] sm:$0xf]
  %v1025 = vld [vmem:[%s993 + $0x7c] sm:$0xf]
  %v1026 = vld [vmem:[%s993 + $0x80] sm:$0xf]
  %v1027 = vld [vmem:[%s993 + $0x84] sm:$0xf]
  %v1028 = vld [vmem:[%s993 + $0x88] sm:$0xf]
  %v1029 = vld [vmem:[%s993 + $0x8c] sm:$0xf]
  %v1030 = vld [vmem:[%s993 + $0x90] sm:$0xf]
  %v1031 = vld [vmem:[%s993 + $0x94] sm:$0xf]
  %v1032 = vld [vmem:[%s993 + $0x98] sm:$0xf]
  %v1033 = vld [vmem:[%s993 + $0x9c] sm:$0xf]
  %v1034 = vld [vmem:[%s993 + $0xa0] sm:$0xf]
  %v1035 = vld [vmem:[%s993 + $0xa4] sm:$0xf]
  %v1036 = vld [vmem:[%s993 + $0xa8] sm:$0xf]
  %v1037 = vld [vmem:[%s993 + $0xac] sm:$0xf]
  %v1038 = vld [vmem:[%s993 + $0xb0] sm:$0xf]
  %v1039 = vld [vmem:[%s993 + $0xb4] sm:$0xf]
  %v1040 = vld [vmem:[%s993 + $0xb8] sm:$0xf]
  %v1041 = vld [vmem:[%s993 + $0xbc] sm:$0xf]
  %v1042 = vld [vmem:[%s993 + $0xc0] sm:$0xf]
  %v1043 = vld [vmem:[%s993 + $0xc4] sm:$0xf]
  %v1044 = vld [vmem:[%s993 + $0xc8] sm:$0xf]
  %v1045 = vld [vmem:[%s993 + $0xcc] sm:$0xf]
  %v1046 = vld [vmem:[%s993 + $0xd0] sm:$0xf]
  %v1047 = vld [vmem:[%s993 + $0xd4] sm:$0xf]
  %v1048 = vld [vmem:[%s993 + $0xd8] sm:$0xf]
  %v1049 = vld [vmem:[%s993 + $0xdc] sm:$0xf]
  %v1050 = vld [vmem:[%s993 + $0xe0] sm:$0xf]
  %v1051 = vld [vmem:[%s993 + $0xe4] sm:$0xf]
  %v1052 = vld [vmem:[%s993 + $0xe8] sm:$0xf]
  %v1053 = vld [vmem:[%s993 + $0xec] sm:$0xf]
  %v1114 = vunpack.c.l.b16 %v994
  %v1115 = vunpack.c.l.b16 %v995
  %v1116 = vunpack.c.l.b16 %v996
  %v1117 = vunpack.c.l.b16 %v997
  %v1118 = vunpack.c.l.b16 %v998
  %v1119 = vunpack.c.l.b16 %v999
  %v1120 = vunpack.c.l.b16 %v1000
  %v1121 = vunpack.c.l.b16 %v1001
  %v1122 = vunpack.c.l.b16 %v1002
  %v1123 = vunpack.c.l.b16 %v1003
  %v1124 = vunpack.c.l.b16 %v1004
  %v1125 = vunpack.c.l.b16 %v1005
  %v1126 = vunpack.c.l.b16 %v1006
  %v1127 = vunpack.c.l.b16 %v1007
  %v1128 = vunpack.c.l.b16 %v1008
  %v1129 = vunpack.c.l.b16 %v1009
  %v1130 = vunpack.c.l.b16 %v1010
  %v1131 = vunpack.c.l.b16 %v1011
  %v1132 = vunpack.c.l.b16 %v1012
  %v1133 = vunpack.c.l.b16 %v1013
  %v1134 = vunpack.c.l.b16 %v1014
  %v1135 = vunpack.c.l.b16 %v1015
  %v1136 = vunpack.c.l.b16 %v1016
  %v1137 = vunpack.c.l.b16 %v1017
  %v1138 = vunpack.c.l.b16 %v1018
  %v1139 = vunpack.c.l.b16 %v1019
  %v1140 = vunpack.c.l.b16 %v1020
  %v1141 = vunpack.c.l.b16 %v1021
  %v1142 = vunpack.c.l.b16 %v1022
  %v1143 = vunpack.c.l.b16 %v1023
  %v1144 = vunpack.c.l.b16 %v1024
  %v1145 = vunpack.c.l.b16 %v1025
  %v1146 = vunpack.c.l.b16 %v1026
  %v1147 = vunpack.c.l.b16 %v1027
  %v1148 = vunpack.c.l.b16 %v1028
  %v1149 = vunpack.c.l.b16 %v1029
  %v1150 = vunpack.c.l.b16 %v1030
  %v1151 = vunpack.c.l.b16 %v1031
  %v1152 = vunpack.c.l.b16 %v1032
  %v1153 = vunpack.c.l.b16 %v1033
  %v1154 = vunpack.c.l.b16 %v1034
  %v1155 = vunpack.c.l.b16 %v1035
  %v1156 = vunpack.c.l.b16 %v1036
  %v1157 = vunpack.c.l.b16 %v1037
  %v1158 = vunpack.c.l.b16 %v1038
  %v1159 = vunpack.c.l.b16 %v1039
  %v1160 = vunpack.c.l.b16 %v1040
  %v1161 = vunpack.c.l.b16 %v1041
  %v1162 = vunpack.c.l.b16 %v1042
  %v1163 = vunpack.c.l.b16 %v1043
  %v1164 = vunpack.c.l.b16 %v1044
  %v1165 = vunpack.c.l.b16 %v1045
  %v1166 = vunpack.c.l.b16 %v1046
  %v1167 = vunpack.c.l.b16 %v1047
  %v1168 = vunpack.c.l.b16 %v1048
  %v1169 = vunpack.c.l.b16 %v1049
  %v1170 = vunpack.c.l.b16 %v1050
  %v1171 = vunpack.c.l.b16 %v1051
  %v1172 = vunpack.c.l.b16 %v1052
  %v1173 = vunpack.c.l.b16 %v1053
  %v1174 = vpack.c.b16 %v1115, %v1114
  %v1175 = vpack.c.b16 %v1117, %v1116
  %v1176 = vpack.c.b16 %v1119, %v1118
  %v1177 = vpack.c.b16 %v1121, %v1120
  %v1178 = vpack.c.b16 %v1123, %v1122
  %v1179 = vpack.c.b16 %v1125, %v1124
  %v1180 = vpack.c.b16 %v1127, %v1126
  %v1181 = vpack.c.b16 %v1129, %v1128
  %v1182 = vpack.c.b16 %v1131, %v1130
  %v1183 = vpack.c.b16 %v1133, %v1132
  %v1184 = vpack.c.b16 %v1135, %v1134
  %v1185 = vpack.c.b16 %v1137, %v1136
  %v1186 = vpack.c.b16 %v1139, %v1138
  %v1187 = vpack.c.b16 %v1141, %v1140
  %v1188 = vpack.c.b16 %v1143, %v1142
  %v1189 = vpack.c.b16 %v1145, %v1144
  %v1190 = vpack.c.b16 %v1147, %v1146
  %v1191 = vpack.c.b16 %v1149, %v1148
  %v1192 = vpack.c.b16 %v1151, %v1150
  %v1193 = vpack.c.b16 %v1153, %v1152
  %v1194 = vpack.c.b16 %v1155, %v1154
  %v1195 = vpack.c.b16 %v1157, %v1156
  %v1196 = vpack.c.b16 %v1159, %v1158
  %v1197 = vpack.c.b16 %v1161, %v1160
  %v1198 = vpack.c.b16 %v1163, %v1162
  %v1199 = vpack.c.b16 %v1165, %v1164
  %v1200 = vpack.c.b16 %v1167, %v1166
  %v1201 = vpack.c.b16 %v1169, %v1168
  %v1202 = vpack.c.b16 %v1171, %v1170
  %v1203 = vpack.c.b16 %v1173, %v1172
  %1234 = vmatprep.subr.bf16.mxu0 0
  %1235 = vmatpush1.bf16.msra.mxu0 %v1181
  %1236 = vmatprep.subr.bf16.mxu0 0
  %1237 = vmatpush1.bf16.msra.mxu0 %v1180
  %1238 = vmatprep.subr.bf16.mxu0 0
  %1239 = vmatpush1.bf16.msra.mxu0 %v1179
  %1240 = vmatprep.subr.bf16.mxu0 0
  %1241 = vmatpush1.bf16.msra.mxu0 %v1178
  %1242 = vmatprep.subr.bf16.mxu0 0
  %1243 = vmatpush1.bf16.msra.mxu0 %v1177
  %1244 = vmatprep.subr.bf16.mxu0 0
  %1245 = vmatpush1.bf16.msra.mxu0 %v1176
  %1246 = vmatprep.subr.bf16.mxu0 0
  %1247 = vmatpush1.bf16.msra.mxu0 %v1175
  %1248 = vmatprep.subr.bf16.mxu0 0
  %1249 = vmatpush1.bf16.msra.mxu0 %v1174
  %1250 = vmatprep.subr.bf16.mxu0 0
  %1251 = vmatpush2.bf16.msra.mxu0 %v1189
  %1252 = vmatprep.subr.bf16.mxu0 0
  %1253 = vmatpush2.bf16.msra.mxu0 %v1188
  %1254 = vmatprep.subr.bf16.mxu0 0
  %1255 = vmatpush2.bf16.msra.mxu0 %v1187
  %1256 = vmatprep.subr.bf16.mxu0 0
  %1257 = vmatpush2.bf16.msra.mxu0 %v1186
  %1258 = vmatprep.subr.bf16.mxu0 0
  %1259 = vmatpush2.bf16.msra.mxu0 %v1185
  %1260 = vmatprep.subr.bf16.mxu0 0
  %1261 = vmatpush2.bf16.msra.mxu0 %v1184
  %1262 = vmatprep.subr.bf16.mxu0 0
  %1263 = vmatpush2.bf16.msra.mxu0 %v1183
  %1264 = vmatprep.subr.bf16.mxu0 0
  %1265 = vmatpush2.bf16.msra.mxu0 %v1182
  %1266 = vmatprep.mubr.bf16.mxu0 %v383
  %1267 = vmatmul.mubr.bf16.gmra.mxu0 %v382
  %v1268 = vpop.f32.mrf.mxu0
  %v1269 = vadd.f32 0.0, %v1268
  %v1270 = vpop.f32.mrf.mxu0
  %v1271 = vpop.f32.mrf.mxu0
  %v1272 = vadd.f32 0.0, %v1271
  %v1273 = vpop.f32.mrf.mxu0
  %1274 = vmatprep.mubr.bf16.mxu0 %v387
  %1275 = vmatmul.mubr.bf16.gmra.mxu0 %v386
  %v1276 = vpop.f32.mrf.mxu0
  %v1277 = vadd.f32 0.0, %v1276
  %v1278 = vpop.f32.mrf.mxu0
  %v1279 = vpop.f32.mrf.mxu0
  %v1280 = vadd.f32 0.0, %v1279
  %v1281 = vpop.f32.mrf.mxu0
  %1282 = vmatprep.mubr.bf16.mxu0 %v391
  %1283 = vmatmul.mubr.bf16.gmra.mxu0 %v390
  %v1284 = vpop.f32.mrf.mxu0
  %v1285 = vadd.f32 0.0, %v1284
  %v1286 = vpop.f32.mrf.mxu0
  %v1287 = vpop.f32.mrf.mxu0
  %v1288 = vadd.f32 0.0, %v1287
  %v1289 = vpop.f32.mrf.mxu0
  %1290 = vmatprep.mubr.bf16.mxu0 %v395
  %1291 = vmatmul.mubr.bf16.gmra.mxu0 %v394
  %v1292 = vpop.f32.mrf.mxu0
  %v1293 = vadd.f32 0.0, %v1292
  %v1294 = vpop.f32.mrf.mxu0
  %v1295 = vpop.f32.mrf.mxu0
  %v1296 = vadd.f32 0.0, %v1295
  %v1297 = vpop.f32.mrf.mxu0
  %1298 = vmatprep.mubr.bf16.mxu0 %v399
  %1299 = vmatmul.mubr.bf16.gmra.mxu0 %v398
  %v1300 = vpop.f32.mrf.mxu0
  %v1301 = vadd.f32 0.0, %v1300
  %v1302 = vpop.f32.mrf.mxu0
  %v1303 = vpop.f32.mrf.mxu0
  %v1304 = vadd.f32 0.0, %v1303
  %v1305 = vpop.f32.mrf.mxu0
  %1306 = vmatprep.mubr.bf16.mxu0 %v403
  %1307 = vmatmul.mubr.bf16.gmra.mxu0 %v402
  %v1308 = vpop.f32.mrf.mxu0
  %v1309 = vadd.f32 0.0, %v1308
  %v1310 = vpop.f32.mrf.mxu0
  %v1311 = vpop.f32.mrf.mxu0
  %v1312 = vadd.f32 0.0, %v1311
  %v1313 = vpop.f32.mrf.mxu0
  %1314 = vmatprep.mubr.bf16.mxu0 %v407
  %1315 = vmatmul.mubr.bf16.gmra.mxu0 %v406
  %v1316 = vpop.f32.mrf.mxu0
  %v1317 = vadd.f32 0.0, %v1316
  %v1318 = vpop.f32.mrf.mxu0
  %v1319 = vpop.f32.mrf.mxu0
  %v1320 = vadd.f32 0.0, %v1319
  %v1321 = vpop.f32.mrf.mxu0
  %1322 = vmatprep.mubr.bf16.mxu0 %v411
  %1323 = vmatmul.mubr.bf16.gmra.mxu0 %v410
  %v1324 = vpop.f32.mrf.mxu0
  %v1325 = vadd.f32 0.0, %v1324
  %v1326 = vpop.f32.mrf.mxu0
  %v1327 = vpop.f32.mrf.mxu0
  %v1328 = vadd.f32 0.0, %v1327
  %v1329 = vpop.f32.mrf.mxu0
  %1330 = vmatprep.mubr.bf16.mxu0 %v415
  %1331 = vmatmul.mubr.bf16.gmra.mxu0 %v414
  %v1332 = vpop.f32.mrf.mxu0
  %v1333 = vadd.f32 0.0, %v1332
  %v1334 = vpop.f32.mrf.mxu0
  %v1335 = vpop.f32.mrf.mxu0
  %v1336 = vadd.f32 0.0, %v1335
  %v1337 = vpop.f32.mrf.mxu0
  %1338 = vmatprep.mubr.bf16.mxu0 %v419
  %1339 = vmatmul.mubr.bf16.gmra.mxu0 %v418
  %v1340 = vpop.f32.mrf.mxu0
  %v1341 = vadd.f32 0.0, %v1340
  %v1342 = vpop.f32.mrf.mxu0
  %v1343 = vpop.f32.mrf.mxu0
  %v1344 = vadd.f32 0.0, %v1343
  %v1345 = vpop.f32.mrf.mxu0
  %1346 = vmatprep.mubr.bf16.mxu0 %v423
  %1347 = vmatmul.mubr.bf16.gmra.mxu0 %v422
  %v1348 = vpop.f32.mrf.mxu0
  %v1349 = vadd.f32 0.0, %v1348
  %v1350 = vpop.f32.mrf.mxu0
  %v1351 = vpop.f32.mrf.mxu0
  %v1352 = vadd.f32 0.0, %v1351
  %v1353 = vpop.f32.mrf.mxu0
  %1354 = vmatprep.mubr.bf16.mxu0 %v427
  %1355 = vmatmul.mubr.bf16.gmra.mxu0 %v426
  %v1356 = vpop.f32.mrf.mxu0
  %v1357 = vadd.f32 0.0, %v1356
  %v1358 = vpop.f32.mrf.mxu0
  %v1359 = vpop.f32.mrf.mxu0
  %v1360 = vadd.f32 0.0, %v1359
  %v1361 = vpop.f32.mrf.mxu0
  %1362 = vmatprep.mubr.bf16.mxu0 %v431
  %1363 = vmatmul.mubr.bf16.gmra.mxu0 %v430
  %v1364 = vpop.f32.mrf.mxu0
  %v1365 = vadd.f32 0.0, %v1364
  %v1366 = vpop.f32.mrf.mxu0
  %v1367 = vpop.f32.mrf.mxu0
  %v1368 = vadd.f32 0.0, %v1367
  %v1369 = vpop.f32.mrf.mxu0
  %1370 = vmatprep.mubr.bf16.mxu0 %v435
  %1371 = vmatmul.mubr.bf16.gmra.mxu0 %v434
  %v1372 = vpop.f32.mrf.mxu0
  %v1373 = vadd.f32 0.0, %v1372
  %v1374 = vpop.f32.mrf.mxu0
  %v1375 = vpop.f32.mrf.mxu0
  %v1376 = vadd.f32 0.0, %v1375
  %v1377 = vpop.f32.mrf.mxu0
  %1378 = vdwg.mxu0
  %1379 = vmatprep.subr.bf16.mxu0 0
  %1380 = vmatpush1.bf16.msra.mxu0 %v1197
  %1381 = vmatprep.subr.bf16.mxu0 0
  %1382 = vmatpush1.bf16.msra.mxu0 %v1196
  %1383 = vmatprep.subr.bf16.mxu0 0
  %1384 = vmatpush1.bf16.msra.mxu0 %v1195
  %1385 = vmatprep.subr.bf16.mxu0 0
  %1386 = vmatpush1.bf16.msra.mxu0 %v1194
  %1387 = vmatprep.subr.bf16.mxu0 0
  %1388 = vmatpush1.bf16.msra.mxu0 %v1193
  %1389 = vmatprep.subr.bf16.mxu0 0
  %1390 = vmatpush1.bf16.msra.mxu0 %v1192
  %1391 = vmatprep.subr.bf16.mxu0 0
  %1392 = vmatpush1.bf16.msra.mxu0 %v1191
  %1393 = vmatprep.subr.bf16.mxu0 0
  %1394 = vmatpush1.bf16.msra.mxu0 %v1190
  %1395 = vmatprep.subr.bf16.mxu0 0
  %1396 = vmatpush2.bf16.msra.mxu0 0
  %1397 = vmatprep.subr.bf16.mxu0 0
  %1398 = vmatpush2.bf16.msra.mxu0 0
  %1399 = vmatprep.subr.bf16.mxu0 0
  %1400 = vmatpush2.bf16.msra.mxu0 %v1203
  %1401 = vmatprep.subr.bf16.mxu0 0
  %1402 = vmatpush2.bf16.msra.mxu0 %v1202
  %1403 = vmatprep.subr.bf16.mxu0 0
  %1404 = vmatpush2.bf16.msra.mxu0 %v1201
  %1405 = vmatprep.subr.bf16.mxu0 0
  %1406 = vmatpush2.bf16.msra.mxu0 %v1200
  %1407 = vmatprep.subr.bf16.mxu0 0
  %1408 = vmatpush2.bf16.msra.mxu0 %v1199
  %1409 = vmatprep.subr.bf16.mxu0 0
  %1410 = vmatpush2.bf16.msra.mxu0 %v1198
  %1411 = vmatprep.mubr.bf16.mxu0 %v662
  %1412 = vmatmul.mubr.bf16.gmra.mxu0 %v384
  %v1413 = vpop.f32.mrf.mxu0
  %v1414 = vadd.f32 %v1269, %v1413
  %v1415 = vpop.f32.mrf.mxu0
  %v1416 = vpop.f32.mrf.mxu0
  %v1417 = vadd.f32 %v1272, %v1416
  %v1418 = vpop.f32.mrf.mxu0
  %1419 = vmatprep.mubr.bf16.mxu0 %v665
  %1420 = vmatmul.mubr.bf16.gmra.mxu0 %v388
  %v1421 = vpop.f32.mrf.mxu0
  %v1422 = vadd.f32 %v1277, %v1421
  %v1423 = vpop.f32.mrf.mxu0
  %v1424 = vpop.f32.mrf.mxu0
  %v1425 = vadd.f32 %v1280, %v1424
  %v1426 = vpop.f32.mrf.mxu0
  %1427 = vmatprep.mubr.bf16.mxu0 %v668
  %1428 = vmatmul.mubr.bf16.gmra.mxu0 %v392
  %v1429 = vpop.f32.mrf.mxu0
  %v1430 = vadd.f32 %v1285, %v1429
  %v1431 = vpop.f32.mrf.mxu0
  %v1432 = vpop.f32.mrf.mxu0
  %v1433 = vadd.f32 %v1288, %v1432
  %v1434 = vpop.f32.mrf.mxu0
  %1435 = vmatprep.mubr.bf16.mxu0 %v671
  %1436 = vmatmul.mubr.bf16.gmra.mxu0 %v396
  %v1437 = vpop.f32.mrf.mxu0
  %v1438 = vadd.f32 %v1293, %v1437
  %v1439 = vpop.f32.mrf.mxu0
  %v1440 = vpop.f32.mrf.mxu0
  %v1441 = vadd.f32 %v1296, %v1440
  %v1442 = vpop.f32.mrf.mxu0
  %1443 = vmatprep.mubr.bf16.mxu0 %v674
  %1444 = vmatmul.mubr.bf16.gmra.mxu0 %v400
  %v1445 = vpop.f32.mrf.mxu0
  %v1446 = vadd.f32 %v1301, %v1445
  %v1447 = vpop.f32.mrf.mxu0
  %v1448 = vpop.f32.mrf.mxu0
  %v1449 = vadd.f32 %v1304, %v1448
  %v1450 = vpop.f32.mrf.mxu0
  %1451 = vmatprep.mubr.bf16.mxu0 %v677
  %1452 = vmatmul.mubr.bf16.gmra.mxu0 %v404
  %v1453 = vpop.f32.mrf.mxu0
  %v1454 = vadd.f32 %v1309, %v1453
  %v1455 = vpop.f32.mrf.mxu0
  %v1456 = vpop.f32.mrf.mxu0
  %v1457 = vadd.f32 %v1312, %v1456
  %v1458 = vpop.f32.mrf.mxu0
  %1459 = vmatprep.mubr.bf16.mxu0 %v680
  %1460 = vmatmul.mubr.bf16.gmra.mxu0 %v408
  %v1461 = vpop.f32.mrf.mxu0
  %v1462 = vadd.f32 %v1317, %v1461
  %v1463 = vpop.f32.mrf.mxu0
  %v1464 = vpop.f32.mrf.mxu0
  %v1465 = vadd.f32 %v1320, %v1464
  %v1466 = vpop.f32.mrf.mxu0
  %1467 = vmatprep.mubr.bf16.mxu0 %v683
  %1468 = vmatmul.mubr.bf16.gmra.mxu0 %v412
  %v1469 = vpop.f32.mrf.mxu0
  %v1470 = vadd.f32 %v1325, %v1469
  %v1471 = vpop.f32.mrf.mxu0
  %v1472 = vpop.f32.mrf.mxu0
  %v1473 = vadd.f32 %v1328, %v1472
  %v1474 = vpop.f32.mrf.mxu0
  %1475 = vmatprep.mubr.bf16.mxu0 %v686
  %1476 = vmatmul.mubr.bf16.gmra.mxu0 %v416
  %v1477 = vpop.f32.mrf.mxu0
  %v1478 = vadd.f32 %v1333, %v1477
  %v1479 = vpop.f32.mrf.mxu0
  %v1480 = vpop.f32.mrf.mxu0
  %v1481 = vadd.f32 %v1336, %v1480
  %v1482 = vpop.f32.mrf.mxu0
  %1483 = vmatprep.mubr.bf16.mxu0 %v689
  %1484 = vmatmul.mubr.bf16.gmra.mxu0 %v420
  %v1485 = vpop.f32.mrf.mxu0
  %v1486 = vadd.f32 %v1341, %v1485
  %v1487 = vpop.f32.mrf.mxu0
  %v1488 = vpop.f32.mrf.mxu0
  %v1489 = vadd.f32 %v1344, %v1488
  %v1490 = vpop.f32.mrf.mxu0
  %1491 = vmatprep.mubr.bf16.mxu0 %v692
  %1492 = vmatmul.mubr.bf16.gmra.mxu0 %v424
  %v1493 = vpop.f32.mrf.mxu0
  %v1494 = vadd.f32 %v1349, %v1493
  %v1495 = vpop.f32.mrf.mxu0
  %v1496 = vpop.f32.mrf.mxu0
  %v1497 = vadd.f32 %v1352, %v1496
  %v1498 = vpop.f32.mrf.mxu0
  %1499 = vmatprep.mubr.bf16.mxu0 %v695
  %1500 = vmatmul.mubr.bf16.gmra.mxu0 %v428
  %v1501 = vpop.f32.mrf.mxu0
  %v1502 = vadd.f32 %v1357, %v1501
  %v1503 = vpop.f32.mrf.mxu0
  %v1504 = vpop.f32.mrf.mxu0
  %v1505 = vadd.f32 %v1360, %v1504
  %v1506 = vpop.f32.mrf.mxu0
  %1507 = vmatprep.mubr.bf16.mxu0 %v698
  %1508 = vmatmul.mubr.bf16.gmra.mxu0 %v432
  %v1509 = vpop.f32.mrf.mxu0
  %v1510 = vadd.f32 %v1365, %v1509
  %v1511 = vpop.f32.mrf.mxu0
  %v1512 = vpop.f32.mrf.mxu0
  %v1513 = vadd.f32 %v1368, %v1512
  %v1514 = vpop.f32.mrf.mxu0
  %1515 = vmatprep.mubr.bf16.mxu0 %v701
  %1516 = vmatmul.mubr.bf16.gmra.mxu0 %v436
  %v1517 = vpop.f32.mrf.mxu0
  %v1518 = vadd.f32 %v1373, %v1517
  %v1519 = vpop.f32.mrf.mxu0
  %v1520 = vpop.f32.mrf.mxu0
  %v1521 = vadd.f32 %v1376, %v1520
  %v1522 = vpop.f32.mrf.mxu0
  %1523 = vdwg.mxu0
  %v1524 = vmax.f32 %v883, %v1414
  %v1525 = vmax.f32 %v886, %v1417
  %v1526 = vmax.f32 %v891, %v1422
  %v1527 = vmax.f32 %v894, %v1425
  %v1528 = vmax.f32 %v899, %v1430
  %v1529 = vmax.f32 %v902, %v1433
  %v1530 = vmax.f32 %v907, %v1438
  %v1531 = vmax.f32 %v910, %v1441
  %v1532 = vmax.f32 %v915, %v1446
  %v1533 = vmax.f32 %v918, %v1449
  %v1534 = vmax.f32 %v923, %v1454
  %v1535 = vmax.f32 %v926, %v1457
  %v1536 = vmax.f32 %v931, %v1462
  %v1537 = vmax.f32 %v934, %v1465
  %v1538 = vmax.f32 %v939, %v1470
  %v1539 = vmax.f32 %v942, %v1473
  %v1540 = vmax.f32 %v947, %v1478
  %v1541 = vmax.f32 %v950, %v1481
  %v1542 = vmax.f32 %v955, %v1486
  %v1543 = vmax.f32 %v958, %v1489
  %v1544 = vmax.f32 %v963, %v1494
  %v1545 = vmax.f32 %v966, %v1497
  %v1546 = vmax.f32 %v971, %v1502
  %v1547 = vmax.f32 %v974, %v1505
  %v1548 = vmax.f32 %v979, %v1510
  %v1549 = vmax.f32 %v982, %v1513
  %v1550 = vmax.f32 %v987, %v1518
  %v1551 = vmax.f32 %v990, %v1521
  %v1608 = vunpack.c.l.b16 %v98
  %v1609 = vunpack.c.h.b16 %v98
  %v1610 = vunpack.c.l.b16 %v99
  %v1611 = vunpack.c.h.b16 %v99
  %v1612 = vunpack.c.l.b16 %v100
  %v1613 = vunpack.c.h.b16 %v100
  %v1614 = vunpack.c.l.b16 %v101
  %v1615 = vunpack.c.h.b16 %v101
  %v1616 = vunpack.c.l.b16 %v102
  %v1617 = vunpack.c.h.b16 %v102
  %v1618 = vunpack.c.l.b16 %v103
  %v1619 = vunpack.c.h.b16 %v103
  %v1620 = vunpack.c.l.b16 %v104
  %v1621 = vunpack.c.h.b16 %v104
  %v1622 = vunpack.c.l.b16 %v105
  %v1623 = vunpack.c.h.b16 %v105
  %v1624 = vunpack.c.l.b16 %v106
  %v1625 = vunpack.c.h.b16 %v106
  %v1626 = vunpack.c.l.b16 %v107
  %v1627 = vunpack.c.h.b16 %v107
  %v1628 = vunpack.c.l.b16 %v108
  %v1629 = vunpack.c.h.b16 %v108
  %v1630 = vunpack.c.l.b16 %v109
  %v1631 = vunpack.c.h.b16 %v109
  %v1632 = vunpack.c.l.b16 %v110
  %v1633 = vunpack.c.h.b16 %v110
  %v1634 = vunpack.c.l.b16 %v111
  %v1635 = vunpack.c.h.b16 %v111
  %v1636 = vunpack.c.l.b16 %v112
  %v1637 = vunpack.c.h.b16 %v112
  %v1638 = vunpack.c.l.b16 %v113
  %v1639 = vunpack.c.h.b16 %v113
  %v1640 = vunpack.c.l.b16 %v114
  %v1641 = vunpack.c.h.b16 %v114
  %v1642 = vunpack.c.l.b16 %v115
  %v1643 = vunpack.c.h.b16 %v115
  %v1644 = vunpack.c.l.b16 %v116
  %v1645 = vunpack.c.h.b16 %v116
  %v1646 = vunpack.c.l.b16 %v117
  %v1647 = vunpack.c.h.b16 %v117
  %v1648 = vunpack.c.l.b16 %v118
  %v1649 = vunpack.c.h.b16 %v118
  %v1650 = vunpack.c.l.b16 %v119
  %v1651 = vunpack.c.h.b16 %v119
  %v1652 = vunpack.c.l.b16 %v120
  %v1653 = vunpack.c.h.b16 %v120
  %v1654 = vunpack.c.l.b16 %v121
  %v1655 = vunpack.c.h.b16 %v121
  %v1656 = vunpack.c.l.b16 %v122
  %v1657 = vunpack.c.h.b16 %v122
  %v1658 = vunpack.c.l.b16 %v123
  %v1659 = vunpack.c.h.b16 %v123
  %v1660 = vunpack.c.l.b16 %v124
  %v1661 = vunpack.c.h.b16 %v124
  %v1662 = vunpack.c.l.b16 %v125
  %v1663 = vunpack.c.h.b16 %v125
  %v1664 = vunpack.c.l.b16 %v126
  %v1665 = vunpack.c.h.b16 %v126
  %v1666 = vunpack.c.l.b16 %v127
  %v1667 = vunpack.c.h.b16 %v127
  %v1668 = vunpack.c.l.b16 %v128
  %v1669 = vunpack.c.h.b16 %v128
  %v1670 = vunpack.c.l.b16 %v129
  %v1671 = vunpack.c.h.b16 %v129
  %v1672 = vunpack.c.l.b16 %v130
  %v1673 = vunpack.c.h.b16 %v130
  %v1674 = vunpack.c.l.b16 %v131
  %v1675 = vunpack.c.h.b16 %v131
  %v1676 = vunpack.c.l.b16 %v132
  %v1677 = vunpack.c.h.b16 %v132
  %v1678 = vunpack.c.l.b16 %v133
  %v1679 = vunpack.c.h.b16 %v133
  %v1680 = vunpack.c.l.b16 %v134
  %v1681 = vunpack.c.h.b16 %v134
  %v1682 = vunpack.c.l.b16 %v135
  %v1683 = vunpack.c.h.b16 %v135
  %v1684 = vunpack.c.l.b16 %v136
  %v1685 = vunpack.c.h.b16 %v136
  %v1686 = vunpack.c.l.b16 %v137
  %v1687 = vunpack.c.h.b16 %v137
  %v1688 = vunpack.c.l.b16 %v138
  %v1689 = vunpack.c.h.b16 %v138
  %v1690 = vunpack.c.l.b16 %v139
  %v1691 = vunpack.c.h.b16 %v139
  %v1692 = vunpack.c.l.b16 %v140
  %v1693 = vunpack.c.h.b16 %v140
  %v1694 = vunpack.c.l.b16 %v141
  %v1695 = vunpack.c.h.b16 %v141
  %v1696 = vunpack.c.l.b16 %v142
  %v1697 = vunpack.c.h.b16 %v142
  %v1698 = vunpack.c.l.b16 %v143
  %v1699 = vunpack.c.h.b16 %v143
  %v1700 = vunpack.c.l.b16 %v144
  %v1701 = vunpack.c.h.b16 %v144
  %v1702 = vunpack.c.l.b16 %v145
  %v1703 = vunpack.c.h.b16 %v145
  %v1704 = vunpack.c.l.b16 %v146
  %v1705 = vunpack.c.h.b16 %v146
  %v1706 = vunpack.c.l.b16 %v147
  %v1707 = vunpack.c.h.b16 %v147
  %v1708 = vunpack.c.l.b16 %v148
  %v1709 = vunpack.c.h.b16 %v148
  %v1710 = vunpack.c.l.b16 %v149
  %v1711 = vunpack.c.h.b16 %v149
  %v1712 = vunpack.c.l.b16 %v150
  %v1713 = vunpack.c.h.b16 %v150
  %v1714 = vunpack.c.l.b16 %v151
  %v1715 = vunpack.c.h.b16 %v151
  %v1716 = vunpack.c.l.b16 %v152
  %v1717 = vunpack.c.h.b16 %v152
  %v1718 = vunpack.c.l.b16 %v153
  %v1719 = vunpack.c.h.b16 %v153
  %v1720 = vpack.c.b16 %v1612, %v1608
  %v1721 = vpack.c.b16 %v1613, %v1609
  %v1722 = vpack.c.b16 %v1614, %v1610
  %v1723 = vpack.c.b16 %v1615, %v1611
  %v1724 = vpack.c.b16 %v1620, %v1616
  %v1725 = vpack.c.b16 %v1621, %v1617
  %v1726 = vpack.c.b16 %v1622, %v1618
  %v1727 = vpack.c.b16 %v1623, %v1619
  %v1728 = vpack.c.b16 %v1628, %v1624
  %v1729 = vpack.c.b16 %v1629, %v1625
  %v1730 = vpack.c.b16 %v1630, %v1626
  %v1731 = vpack.c.b16 %v1631, %v1627
  %v1732 = vpack.c.b16 %v1636, %v1632
  %v1733 = vpack.c.b16 %v1637, %v1633
  %v1734 = vpack.c.b16 %v1638, %v1634
  %v1735 = vpack.c.b16 %v1639, %v1635
  %v1736 = vpack.c.b16 %v1644, %v1640
  %v1737 = vpack.c.b16 %v1645, %v1641
  %v1738 = vpack.c.b16 %v1646, %v1642
  %v1739 = vpack.c.b16 %v1647, %v1643
  %v1740 = vpack.c.b16 %v1652, %v1648
  %v1741 = vpack.c.b16 %v1653, %v1649
  %v1742 = vpack.c.b16 %v1654, %v1650
  %v1743 = vpack.c.b16 %v1655, %v1651
  %v1744 = vpack.c.b16 %v1660, %v1656
  %v1745 = vpack.c.b16 %v1661, %v1657
  %v1746 = vpack.c.b16 %v1662, %v1658
  %v1747 = vpack.c.b16 %v1663, %v1659
  %v1748 = vpack.c.b16 %v1668, %v1664
  %v1749 = vpack.c.b16 %v1669, %v1665
  %v1750 = vpack.c.b16 %v1670, %v1666
  %v1751 = vpack.c.b16 %v1671, %v1667
  %v1752 = vpack.c.b16 %v1676, %v1672
  %v1753 = vpack.c.b16 %v1677, %v1673
  %v1754 = vpack.c.b16 %v1678, %v1674
  %v1755 = vpack.c.b16 %v1679, %v1675
  %v1756 = vpack.c.b16 %v1684, %v1680
  %v1757 = vpack.c.b16 %v1685, %v1681
  %v1758 = vpack.c.b16 %v1686, %v1682
  %v1759 = vpack.c.b16 %v1687, %v1683
  %v1760 = vpack.c.b16 %v1692, %v1688
  %v1761 = vpack.c.b16 %v1693, %v1689
  %v1762 = vpack.c.b16 %v1694, %v1690
  %v1763 = vpack.c.b16 %v1695, %v1691
  %v1764 = vpack.c.b16 %v1700, %v1696
  %v1765 = vpack.c.b16 %v1701, %v1697
  %v1766 = vpack.c.b16 %v1702, %v1698
  %v1767 = vpack.c.b16 %v1703, %v1699
  %v1768 = vpack.c.b16 %v1708, %v1704
  %v1769 = vpack.c.b16 %v1709, %v1705
  %v1770 = vpack.c.b16 %v1710, %v1706
  %v1771 = vpack.c.b16 %v1711, %v1707
  %v1772 = vpack.c.b16 %v1716, %v1712
  %v1773 = vpack.c.b16 %v1717, %v1713
  %v1774 = vpack.c.b16 %v1718, %v1714
  %v1775 = vpack.c.b16 %v1719, %v1715
  %v1819 = vsel %vm660, %v1723, 0
  %v1822 = vsel %vm660, %v1727, 0
  %v1825 = vsel %vm660, %v1731, 0
  %v1828 = vsel %vm660, %v1735, 0
  %v1831 = vsel %vm660, %v1739, 0
  %v1834 = vsel %vm660, %v1743, 0
  %v1837 = vsel %vm660, %v1747, 0
  %v1840 = vsel %vm660, %v1751, 0
  %v1843 = vsel %vm660, %v1755, 0
  %v1846 = vsel %vm660, %v1759, 0
  %v1849 = vsel %vm660, %v1763, 0
  %v1852 = vsel %vm660, %v1767, 0
  %v1855 = vsel %vm660, %v1771, 0
  %v1858 = vsel %vm660, %v1775, 0
  %1860 = vmatprep.subr.bf16.mxu0 0
  %1861 = vmatpush1.bf16.msra.mxu0 %v607
  %1862 = vmatprep.subr.bf16.mxu0 0
  %1863 = vmatpush1.bf16.msra.mxu0 %v606
  %1864 = vmatprep.subr.bf16.mxu0 0
  %1865 = vmatpush1.bf16.msra.mxu0 %v605
  %1866 = vmatprep.subr.bf16.mxu0 0
  %1867 = vmatpush1.bf16.msra.mxu0 %v604
  %1868 = vmatprep.subr.bf16.mxu0 0
  %1869 = vmatpush1.bf16.msra.mxu0 %v603
  %1870 = vmatprep.subr.bf16.mxu0 0
  %1871 = vmatpush1.bf16.msra.mxu0 %v602
  %1872 = vmatprep.subr.bf16.mxu0 0
  %1873 = vmatpush1.bf16.msra.mxu0 %v601
  %1874 = vmatprep.subr.bf16.mxu0 0
  %1875 = vmatpush1.bf16.msra.mxu0 %v600
  %1876 = vmatprep.subr.bf16.mxu0 0
  %1877 = vmatpush2.bf16.msra.mxu0 %v615
  %1878 = vmatprep.subr.bf16.mxu0 0
  %1879 = vmatpush2.bf16.msra.mxu0 %v614
  %1880 = vmatprep.subr.bf16.mxu0 0
  %1881 = vmatpush2.bf16.msra.mxu0 %v613
  %1882 = vmatprep.subr.bf16.mxu0 0
  %1883 = vmatpush2.bf16.msra.mxu0 %v612
  %1884 = vmatprep.subr.bf16.mxu0 0
  %1885 = vmatpush2.bf16.msra.mxu0 %v611
  %1886 = vmatprep.subr.bf16.mxu0 0
  %1887 = vmatpush2.bf16.msra.mxu0 %v610
  %1888 = vmatprep.subr.bf16.mxu0 0
  %1889 = vmatpush2.bf16.msra.mxu0 %v609
  %1890 = vmatprep.subr.bf16.mxu0 0
  %1891 = vmatpush2.bf16.msra.mxu0 %v608
  %1892 = vmatprep.mubr.bf16.mxu0 %v1721
  %1893 = vmatmul.mubr.bf16.gmra.mxu0 %v1720
  %v1894 = vpop.f32.mrf.mxu0
  %v1895 = vadd.f32 0.0, %v1894
  %v1896 = vpop.f32.mrf.mxu0
  %v1897 = vpop.f32.mrf.mxu0
  %v1898 = vadd.f32 0.0, %v1897
  %v1899 = vpop.f32.mrf.mxu0
  %1900 = vmatprep.mubr.bf16.mxu0 %v1725
  %1901 = vmatmul.mubr.bf16.gmra.mxu0 %v1724
  %v1902 = vpop.f32.mrf.mxu0
  %v1903 = vadd.f32 0.0, %v1902
  %v1904 = vpop.f32.mrf.mxu0
  %v1905 = vpop.f32.mrf.mxu0
  %v1906 = vadd.f32 0.0, %v1905
  %v1907 = vpop.f32.mrf.mxu0
  %1908 = vmatprep.mubr.bf16.mxu0 %v1729
  %1909 = vmatmul.mubr.bf16.gmra.mxu0 %v1728
  %v1910 = vpop.f32.mrf.mxu0
  %v1911 = vadd.f32 0.0, %v1910
  %v1912 = vpop.f32.mrf.mxu0
  %v1913 = vpop.f32.mrf.mxu0
  %v1914 = vadd.f32 0.0, %v1913
  %v1915 = vpop.f32.mrf.mxu0
  %1916 = vmatprep.mubr.bf16.mxu0 %v1733
  %1917 = vmatmul.mubr.bf16.gmra.mxu0 %v1732
  %v1918 = vpop.f32.mrf.mxu0
  %v1919 = vadd.f32 0.0, %v1918
  %v1920 = vpop.f32.mrf.mxu0
  %v1921 = vpop.f32.mrf.mxu0
  %v1922 = vadd.f32 0.0, %v1921
  %v1923 = vpop.f32.mrf.mxu0
  %1924 = vmatprep.mubr.bf16.mxu0 %v1737
  %1925 = vmatmul.mubr.bf16.gmra.mxu0 %v1736
  %v1926 = vpop.f32.mrf.mxu0
  %v1927 = vadd.f32 0.0, %v1926
  %v1928 = vpop.f32.mrf.mxu0
  %v1929 = vpop.f32.mrf.mxu0
  %v1930 = vadd.f32 0.0, %v1929
  %v1931 = vpop.f32.mrf.mxu0
  %1932 = vmatprep.mubr.bf16.mxu0 %v1741
  %1933 = vmatmul.mubr.bf16.gmra.mxu0 %v1740
  %v1934 = vpop.f32.mrf.mxu0
  %v1935 = vadd.f32 0.0, %v1934
  %v1936 = vpop.f32.mrf.mxu0
  %v1937 = vpop.f32.mrf.mxu0
  %v1938 = vadd.f32 0.0, %v1937
  %v1939 = vpop.f32.mrf.mxu0
  %1940 = vmatprep.mubr.bf16.mxu0 %v1745
  %1941 = vmatmul.mubr.bf16.gmra.mxu0 %v1744
  %v1942 = vpop.f32.mrf.mxu0
  %v1943 = vadd.f32 0.0, %v1942
  %v1944 = vpop.f32.mrf.mxu0
  %v1945 = vpop.f32.mrf.mxu0
  %v1946 = vadd.f32 0.0, %v1945
  %v1947 = vpop.f32.mrf.mxu0
  %1948 = vmatprep.mubr.bf16.mxu0 %v1749
  %1949 = vmatmul.mubr.bf16.gmra.mxu0 %v1748
  %v1950 = vpop.f32.mrf.mxu0
  %v1951 = vadd.f32 0.0, %v1950
  %v1952 = vpop.f32.mrf.mxu0
  %v1953 = vpop.f32.mrf.mxu0
  %v1954 = vadd.f32 0.0, %v1953
  %v1955 = vpop.f32.mrf.mxu0
  %1956 = vmatprep.mubr.bf16.mxu0 %v1753
  %1957 = vmatmul.mubr.bf16.gmra.mxu0 %v1752
  %v1958 = vpop.f32.mrf.mxu0
  %v1959 = vadd.f32 0.0, %v1958
  %v1960 = vpop.f32.mrf.mxu0
  %v1961 = vpop.f32.mrf.mxu0
  %v1962 = vadd.f32 0.0, %v1961
  %v1963 = vpop.f32.mrf.mxu0
  %1964 = vmatprep.mubr.bf16.mxu0 %v1757
  %1965 = vmatmul.mubr.bf16.gmra.mxu0 %v1756
  %v1966 = vpop.f32.mrf.mxu0
  %v1967 = vadd.f32 0.0, %v1966
  %v1968 = vpop.f32.mrf.mxu0
  %v1969 = vpop.f32.mrf.mxu0
  %v1970 = vadd.f32 0.0, %v1969
  %v1971 = vpop.f32.mrf.mxu0
  %1972 = vmatprep.mubr.bf16.mxu0 %v1761
  %1973 = vmatmul.mubr.bf16.gmra.mxu0 %v1760
  %v1974 = vpop.f32.mrf.mxu0
  %v1975 = vadd.f32 0.0, %v1974
  %v1976 = vpop.f32.mrf.mxu0
  %v1977 = vpop.f32.mrf.mxu0
  %v1978 = vadd.f32 0.0, %v1977
  %v1979 = vpop.f32.mrf.mxu0
  %1980 = vmatprep.mubr.bf16.mxu0 %v1765
  %1981 = vmatmul.mubr.bf16.gmra.mxu0 %v1764
  %v1982 = vpop.f32.mrf.mxu0
  %v1983 = vadd.f32 0.0, %v1982
  %v1984 = vpop.f32.mrf.mxu0
  %v1985 = vpop.f32.mrf.mxu0
  %v1986 = vadd.f32 0.0, %v1985
  %v1987 = vpop.f32.mrf.mxu0
  %1988 = vmatprep.mubr.bf16.mxu0 %v1769
  %1989 = vmatmul.mubr.bf16.gmra.mxu0 %v1768
  %v1990 = vpop.f32.mrf.mxu0
  %v1991 = vadd.f32 0.0, %v1990
  %v1992 = vpop.f32.mrf.mxu0
  %v1993 = vpop.f32.mrf.mxu0
  %v1994 = vadd.f32 0.0, %v1993
  %v1995 = vpop.f32.mrf.mxu0
  %1996 = vmatprep.mubr.bf16.mxu0 %v1773
  %1997 = vmatmul.mubr.bf16.gmra.mxu0 %v1772
  %v1998 = vpop.f32.mrf.mxu0
  %v1999 = vadd.f32 0.0, %v1998
  %v2000 = vpop.f32.mrf.mxu0
  %v2001 = vpop.f32.mrf.mxu0
  %v2002 = vadd.f32 0.0, %v2001
  %v2003 = vpop.f32.mrf.mxu0
  %2004 = vdwg.mxu0
  %2005 = vmatprep.subr.bf16.mxu0 0
  %2006 = vmatpush1.bf16.msra.mxu0 %v623
  %2007 = vmatprep.subr.bf16.mxu0 0
  %2008 = vmatpush1.bf16.msra.mxu0 %v622
  %2009 = vmatprep.subr.bf16.mxu0 0
  %2010 = vmatpush1.bf16.msra.mxu0 %v621
  %2011 = vmatprep.subr.bf16.mxu0 0
  %2012 = vmatpush1.bf16.msra.mxu0 %v620
  %2013 = vmatprep.subr.bf16.mxu0 0
  %2014 = vmatpush1.bf16.msra.mxu0 %v619
  %2015 = vmatprep.subr.bf16.mxu0 0
  %2016 = vmatpush1.bf16.msra.mxu0 %v618
  %2017 = vmatprep.subr.bf16.mxu0 0
  %2018 = vmatpush1.bf16.msra.mxu0 %v617
  %2019 = vmatprep.subr.bf16.mxu0 0
  %2020 = vmatpush1.bf16.msra.mxu0 %v616
  %2021 = vmatprep.subr.bf16.mxu0 0
  %2022 = vmatpush2.bf16.msra.mxu0 0
  %2023 = vmatprep.subr.bf16.mxu0 0
  %2024 = vmatpush2.bf16.msra.mxu0 0
  %2025 = vmatprep.subr.bf16.mxu0 0
  %2026 = vmatpush2.bf16.msra.mxu0 %v629
  %2027 = vmatprep.subr.bf16.mxu0 0
  %2028 = vmatpush2.bf16.msra.mxu0 %v628
  %2029 = vmatprep.subr.bf16.mxu0 0
  %2030 = vmatpush2.bf16.msra.mxu0 %v627
  %2031 = vmatprep.subr.bf16.mxu0 0
  %2032 = vmatpush2.bf16.msra.mxu0 %v626
  %2033 = vmatprep.subr.bf16.mxu0 0
  %2034 = vmatpush2.bf16.msra.mxu0 %v625
  %2035 = vmatprep.subr.bf16.mxu0 0
  %2036 = vmatpush2.bf16.msra.mxu0 %v624
  %2037 = vmatprep.mubr.bf16.mxu0 %v1819
  %2038 = vmatmul.mubr.bf16.gmra.mxu0 %v1722
  %v2039 = vpop.f32.mrf.mxu0
  %v2040 = vadd.f32 %v1895, %v2039
  %v2041 = vpop.f32.mrf.mxu0
  %v2042 = vpop.f32.mrf.mxu0
  %v2043 = vadd.f32 %v1898, %v2042
  %v2044 = vpop.f32.mrf.mxu0
  %2045 = vmatprep.mubr.bf16.mxu0 %v1822
  %2046 = vmatmul.mubr.bf16.gmra.mxu0 %v1726
  %v2047 = vpop.f32.mrf.mxu0
  %v2048 = vadd.f32 %v1903, %v2047
  %v2049 = vpop.f32.mrf.mxu0
  %v2050 = vpop.f32.mrf.mxu0
  %v2051 = vadd.f32 %v1906, %v2050
  %v2052 = vpop.f32.mrf.mxu0
  %2053 = vmatprep.mubr.bf16.mxu0 %v1825
  %2054 = vmatmul.mubr.bf16.gmra.mxu0 %v1730
  %v2055 = vpop.f32.mrf.mxu0
  %v2056 = vadd.f32 %v1911, %v2055
  %v2057 = vpop.f32.mrf.mxu0
  %v2058 = vpop.f32.mrf.mxu0
  %v2059 = vadd.f32 %v1914, %v2058
  %v2060 = vpop.f32.mrf.mxu0
  %2061 = vmatprep.mubr.bf16.mxu0 %v1828
  %2062 = vmatmul.mubr.bf16.gmra.mxu0 %v1734
  %v2063 = vpop.f32.mrf.mxu0
  %v2064 = vadd.f32 %v1919, %v2063
  %v2065 = vpop.f32.mrf.mxu0
  %v2066 = vpop.f32.mrf.mxu0
  %v2067 = vadd.f32 %v1922, %v2066
  %v2068 = vpop.f32.mrf.mxu0
  %2069 = vmatprep.mubr.bf16.mxu0 %v1831
  %2070 = vmatmul.mubr.bf16.gmra.mxu0 %v1738
  %v2071 = vpop.f32.mrf.mxu0
  %v2072 = vadd.f32 %v1927, %v2071
  %v2073 = vpop.f32.mrf.mxu0
  %v2074 = vpop.f32.mrf.mxu0
  %v2075 = vadd.f32 %v1930, %v2074
  %v2076 = vpop.f32.mrf.mxu0
  %2077 = vmatprep.mubr.bf16.mxu0 %v1834
  %2078 = vmatmul.mubr.bf16.gmra.mxu0 %v1742
  %v2079 = vpop.f32.mrf.mxu0
  %v2080 = vadd.f32 %v1935, %v2079
  %v2081 = vpop.f32.mrf.mxu0
  %v2082 = vpop.f32.mrf.mxu0
  %v2083 = vadd.f32 %v1938, %v2082
  %v2084 = vpop.f32.mrf.mxu0
  %2085 = vmatprep.mubr.bf16.mxu0 %v1837
  %2086 = vmatmul.mubr.bf16.gmra.mxu0 %v1746
  %v2087 = vpop.f32.mrf.mxu0
  %v2088 = vadd.f32 %v1943, %v2087
  %v2089 = vpop.f32.mrf.mxu0
  %v2090 = vpop.f32.mrf.mxu0
  %v2091 = vadd.f32 %v1946, %v2090
  %v2092 = vpop.f32.mrf.mxu0
  %2093 = vmatprep.mubr.bf16.mxu0 %v1840
  %2094 = vmatmul.mubr.bf16.gmra.mxu0 %v1750
  %v2095 = vpop.f32.mrf.mxu0
  %v2096 = vadd.f32 %v1951, %v2095
  %v2097 = vpop.f32.mrf.mxu0
  %v2098 = vpop.f32.mrf.mxu0
  %v2099 = vadd.f32 %v1954, %v2098
  %v2100 = vpop.f32.mrf.mxu0
  %2101 = vmatprep.mubr.bf16.mxu0 %v1843
  %2102 = vmatmul.mubr.bf16.gmra.mxu0 %v1754
  %v2103 = vpop.f32.mrf.mxu0
  %v2104 = vadd.f32 %v1959, %v2103
  %v2105 = vpop.f32.mrf.mxu0
  %v2106 = vpop.f32.mrf.mxu0
  %v2107 = vadd.f32 %v1962, %v2106
  %v2108 = vpop.f32.mrf.mxu0
  %2109 = vmatprep.mubr.bf16.mxu0 %v1846
  %2110 = vmatmul.mubr.bf16.gmra.mxu0 %v1758
  %v2111 = vpop.f32.mrf.mxu0
  %v2112 = vadd.f32 %v1967, %v2111
  %v2113 = vpop.f32.mrf.mxu0
  %v2114 = vpop.f32.mrf.mxu0
  %v2115 = vadd.f32 %v1970, %v2114
  %v2116 = vpop.f32.mrf.mxu0
  %2117 = vmatprep.mubr.bf16.mxu0 %v1849
  %2118 = vmatmul.mubr.bf16.gmra.mxu0 %v1762
  %v2119 = vpop.f32.mrf.mxu0
  %v2120 = vadd.f32 %v1975, %v2119
  %v2121 = vpop.f32.mrf.mxu0
  %v2122 = vpop.f32.mrf.mxu0
  %v2123 = vadd.f32 %v1978, %v2122
  %v2124 = vpop.f32.mrf.mxu0
  %2125 = vmatprep.mubr.bf16.mxu0 %v1852
  %2126 = vmatmul.mubr.bf16.gmra.mxu0 %v1766
  %v2127 = vpop.f32.mrf.mxu0
  %v2128 = vadd.f32 %v1983, %v2127
  %v2129 = vpop.f32.mrf.mxu0
  %v2130 = vpop.f32.mrf.mxu0
  %v2131 = vadd.f32 %v1986, %v2130
  %v2132 = vpop.f32.mrf.mxu0
  %2133 = vmatprep.mubr.bf16.mxu0 %v1855
  %2134 = vmatmul.mubr.bf16.gmra.mxu0 %v1770
  %v2135 = vpop.f32.mrf.mxu0
  %v2136 = vadd.f32 %v1991, %v2135
  %v2137 = vpop.f32.mrf.mxu0
  %v2138 = vpop.f32.mrf.mxu0
  %v2139 = vadd.f32 %v1994, %v2138
  %v2140 = vpop.f32.mrf.mxu0
  %2141 = vmatprep.mubr.bf16.mxu0 %v1858
  %2142 = vmatmul.mubr.bf16.gmra.mxu0 %v1774
  %v2143 = vpop.f32.mrf.mxu0
  %v2144 = vadd.f32 %v1999, %v2143
  %v2145 = vpop.f32.mrf.mxu0
  %v2146 = vpop.f32.mrf.mxu0
  %v2147 = vadd.f32 %v2002, %v2146
  %v2148 = vpop.f32.mrf.mxu0
  %2149 = vdwg.mxu0
  %v2150 = vmax.f32 %v1524, %v2040
  %v2151 = vmax.f32 %v1525, %v2043
  %v2152 = vmax.f32 %v1526, %v2048
  %v2153 = vmax.f32 %v1527, %v2051
  %v2154 = vmax.f32 %v1528, %v2056
  %v2155 = vmax.f32 %v1529, %v2059
  %v2156 = vmax.f32 %v1530, %v2064
  %v2157 = vmax.f32 %v1531, %v2067
  %v2158 = vmax.f32 %v1532, %v2072
  %v2159 = vmax.f32 %v1533, %v2075
  %v2160 = vmax.f32 %v1534, %v2080
  %v2161 = vmax.f32 %v1535, %v2083
  %v2162 = vmax.f32 %v1536, %v2088
  %v2163 = vmax.f32 %v1537, %v2091
  %v2164 = vmax.f32 %v1538, %v2096
  %v2165 = vmax.f32 %v1539, %v2099
  %v2166 = vmax.f32 %v1540, %v2104
  %v2167 = vmax.f32 %v1541, %v2107
  %v2168 = vmax.f32 %v1542, %v2112
  %v2169 = vmax.f32 %v1543, %v2115
  %v2170 = vmax.f32 %v1544, %v2120
  %v2171 = vmax.f32 %v1545, %v2123
  %v2172 = vmax.f32 %v1546, %v2128
  %v2173 = vmax.f32 %v1547, %v2131
  %v2174 = vmax.f32 %v1548, %v2136
  %v2175 = vmax.f32 %v1549, %v2139
  %v2176 = vmax.f32 %v1550, %v2144
  %v2177 = vmax.f32 %v1551, %v2147
  %2178 = vmatprep.subr.bf16.mxu0 0
  %2179 = vmatpush1.bf16.msra.mxu0 %v1181
  %2180 = vmatprep.subr.bf16.mxu0 0
  %2181 = vmatpush1.bf16.msra.mxu0 %v1180
  %2182 = vmatprep.subr.bf16.mxu0 0
  %2183 = vmatpush1.bf16.msra.mxu0 %v1179
  %2184 = vmatprep.subr.bf16.mxu0 0
  %2185 = vmatpush1.bf16.msra.mxu0 %v1178
  %2186 = vmatprep.subr.bf16.mxu0 0
  %2187 = vmatpush1.bf16.msra.mxu0 %v1177
  %2188 = vmatprep.subr.bf16.mxu0 0
  %2189 = vmatpush1.bf16.msra.mxu0 %v1176
  %2190 = vmatprep.subr.bf16.mxu0 0
  %2191 = vmatpush1.bf16.msra.mxu0 %v1175
  %2192 = vmatprep.subr.bf16.mxu0 0
  %2193 = vmatpush1.bf16.msra.mxu0 %v1174
  %2194 = vmatprep.subr.bf16.mxu0 0
  %2195 = vmatpush2.bf16.msra.mxu0 %v1189
  %2196 = vmatprep.subr.bf16.mxu0 0
  %2197 = vmatpush2.bf16.msra.mxu0 %v1188
  %2198 = vmatprep.subr.bf16.mxu0 0
  %2199 = vmatpush2.bf16.msra.mxu0 %v1187
  %2200 = vmatprep.subr.bf16.mxu0 0
  %2201 = vmatpush2.bf16.msra.mxu0 %v1186
  %2202 = vmatprep.subr.bf16.mxu0 0
  %2203 = vmatpush2.bf16.msra.mxu0 %v1185
  %2204 = vmatprep.subr.bf16.mxu0 0
  %2205 = vmatpush2.bf16.msra.mxu0 %v1184
  %2206 = vmatprep.subr.bf16.mxu0 0
  %2207 = vmatpush2.bf16.msra.mxu0 %v1183
  %2208 = vmatprep.subr.bf16.mxu0 0
  %2209 = vmatpush2.bf16.msra.mxu0 %v1182
  %2210 = vmatprep.mubr.bf16.mxu0 %v1721
  %2211 = vmatmul.mubr.bf16.gmra.mxu0 %v1720
  %v2212 = vpop.f32.mrf.mxu0
  %v2213 = vadd.f32 0.0, %v2212
  %v2214 = vpop.f32.mrf.mxu0
  %v2215 = vpop.f32.mrf.mxu0
  %v2216 = vadd.f32 0.0, %v2215
  %v2217 = vpop.f32.mrf.mxu0
  %2218 = vmatprep.mubr.bf16.mxu0 %v1725
  %2219 = vmatmul.mubr.bf16.gmra.mxu0 %v1724
  %v2220 = vpop.f32.mrf.mxu0
  %v2221 = vadd.f32 0.0, %v2220
  %v2222 = vpop.f32.mrf.mxu0
  %v2223 = vpop.f32.mrf.mxu0
  %v2224 = vadd.f32 0.0, %v2223
  %v2225 = vpop.f32.mrf.mxu0
  %2226 = vmatprep.mubr.bf16.mxu0 %v1729
  %2227 = vmatmul.mubr.bf16.gmra.mxu0 %v1728
  %v2228 = vpop.f32.mrf.mxu0
  %v2229 = vadd.f32 0.0, %v2228
  %v2230 = vpop.f32.mrf.mxu0
  %v2231 = vpop.f32.mrf.mxu0
  %v2232 = vadd.f32 0.0, %v2231
  %v2233 = vpop.f32.mrf.mxu0
  %2234 = vmatprep.mubr.bf16.mxu0 %v1733
  %2235 = vmatmul.mubr.bf16.gmra.mxu0 %v1732
  %v2236 = vpop.f32.mrf.mxu0
  %v2237 = vadd.f32 0.0, %v2236
  %v2238 = vpop.f32.mrf.mxu0
  %v2239 = vpop.f32.mrf.mxu0
  %v2240 = vadd.f32 0.0, %v2239
  %v2241 = vpop.f32.mrf.mxu0
  %2242 = vmatprep.mubr.bf16.mxu0 %v1737
  %2243 = vmatmul.mubr.bf16.gmra.mxu0 %v1736
  %v2244 = vpop.f32.mrf.mxu0
  %v2245 = vadd.f32 0.0, %v2244
  %v2246 = vpop.f32.mrf.mxu0
  %v2247 = vpop.f32.mrf.mxu0
  %v2248 = vadd.f32 0.0, %v2247
  %v2249 = vpop.f32.mrf.mxu0
  %2250 = vmatprep.mubr.bf16.mxu0 %v1741
  %2251 = vmatmul.mubr.bf16.gmra.mxu0 %v1740
  %v2252 = vpop.f32.mrf.mxu0
  %v2253 = vadd.f32 0.0, %v2252
  %v2254 = vpop.f32.mrf.mxu0
  %v2255 = vpop.f32.mrf.mxu0
  %v2256 = vadd.f32 0.0, %v2255
  %v2257 = vpop.f32.mrf.mxu0
  %2258 = vmatprep.mubr.bf16.mxu0 %v1745
  %2259 = vmatmul.mubr.bf16.gmra.mxu0 %v1744
  %v2260 = vpop.f32.mrf.mxu0
  %v2261 = vadd.f32 0.0, %v2260
  %v2262 = vpop.f32.mrf.mxu0
  %v2263 = vpop.f32.mrf.mxu0
  %v2264 = vadd.f32 0.0, %v2263
  %v2265 = vpop.f32.mrf.mxu0
  %2266 = vmatprep.mubr.bf16.mxu0 %v1749
  %2267 = vmatmul.mubr.bf16.gmra.mxu0 %v1748
  %v2268 = vpop.f32.mrf.mxu0
  %v2269 = vadd.f32 0.0, %v2268
  %v2270 = vpop.f32.mrf.mxu0
  %v2271 = vpop.f32.mrf.mxu0
  %v2272 = vadd.f32 0.0, %v2271
  %v2273 = vpop.f32.mrf.mxu0
  %2274 = vmatprep.mubr.bf16.mxu0 %v1753
  %2275 = vmatmul.mubr.bf16.gmra.mxu0 %v1752
  %v2276 = vpop.f32.mrf.mxu0
  %v2277 = vadd.f32 0.0, %v2276
  %v2278 = vpop.f32.mrf.mxu0
  %v2279 = vpop.f32.mrf.mxu0
  %v2280 = vadd.f32 0.0, %v2279
  %v2281 = vpop.f32.mrf.mxu0
  %2282 = vmatprep.mubr.bf16.mxu0 %v1757
  %2283 = vmatmul.mubr.bf16.gmra.mxu0 %v1756
  %v2284 = vpop.f32.mrf.mxu0
  %v2285 = vadd.f32 0.0, %v2284
  %v2286 = vpop.f32.mrf.mxu0
  %v2287 = vpop.f32.mrf.mxu0
  %v2288 = vadd.f32 0.0, %v2287
  %v2289 = vpop.f32.mrf.mxu0
  %2290 = vmatprep.mubr.bf16.mxu0 %v1761
  %2291 = vmatmul.mubr.bf16.gmra.mxu0 %v1760
  %v2292 = vpop.f32.mrf.mxu0
  %v2293 = vadd.f32 0.0, %v2292
  %v2294 = vpop.f32.mrf.mxu0
  %v2295 = vpop.f32.mrf.mxu0
  %v2296 = vadd.f32 0.0, %v2295
  %v2297 = vpop.f32.mrf.mxu0
  %2298 = vmatprep.mubr.bf16.mxu0 %v1765
  %2299 = vmatmul.mubr.bf16.gmra.mxu0 %v1764
  %v2300 = vpop.f32.mrf.mxu0
  %v2301 = vadd.f32 0.0, %v2300
  %v2302 = vpop.f32.mrf.mxu0
  %v2303 = vpop.f32.mrf.mxu0
  %v2304 = vadd.f32 0.0, %v2303
  %v2305 = vpop.f32.mrf.mxu0
  %2306 = vmatprep.mubr.bf16.mxu0 %v1769
  %2307 = vmatmul.mubr.bf16.gmra.mxu0 %v1768
  %v2308 = vpop.f32.mrf.mxu0
  %v2309 = vadd.f32 0.0, %v2308
  %v2310 = vpop.f32.mrf.mxu0
  %v2311 = vpop.f32.mrf.mxu0
  %v2312 = vadd.f32 0.0, %v2311
  %v2313 = vpop.f32.mrf.mxu0
  %2314 = vmatprep.mubr.bf16.mxu0 %v1773
  %2315 = vmatmul.mubr.bf16.gmra.mxu0 %v1772
  %v2316 = vpop.f32.mrf.mxu0
  %v2317 = vadd.f32 0.0, %v2316
  %v2318 = vpop.f32.mrf.mxu0
  %v2319 = vpop.f32.mrf.mxu0
  %v2320 = vadd.f32 0.0, %v2319
  %v2321 = vpop.f32.mrf.mxu0
  %2322 = vdwg.mxu0
  %2323 = vmatprep.subr.bf16.mxu0 0
  %2324 = vmatpush1.bf16.msra.mxu0 %v1197
  %2325 = vmatprep.subr.bf16.mxu0 0
  %2326 = vmatpush1.bf16.msra.mxu0 %v1196
  %2327 = vmatprep.subr.bf16.mxu0 0
  %2328 = vmatpush1.bf16.msra.mxu0 %v1195
  %2329 = vmatprep.subr.bf16.mxu0 0
  %2330 = vmatpush1.bf16.msra.mxu0 %v1194
  %2331 = vmatprep.subr.bf16.mxu0 0
  %2332 = vmatpush1.bf16.msra.mxu0 %v1193
  %2333 = vmatprep.subr.bf16.mxu0 0
  %2334 = vmatpush1.bf16.msra.mxu0 %v1192
  %2335 = vmatprep.subr.bf16.mxu0 0
  %2336 = vmatpush1.bf16.msra.mxu0 %v1191
  %2337 = vmatprep.subr.bf16.mxu0 0
  %2338 = vmatpush1.bf16.msra.mxu0 %v1190
  %2339 = vmatprep.subr.bf16.mxu0 0
  %2340 = vmatpush2.bf16.msra.mxu0 0
  %2341 = vmatprep.subr.bf16.mxu0 0
  %2342 = vmatpush2.bf16.msra.mxu0 0
  %2343 = vmatprep.subr.bf16.mxu0 0
  %2344 = vmatpush2.bf16.msra.mxu0 %v1203
  %2345 = vmatprep.subr.bf16.mxu0 0
  %2346 = vmatpush2.bf16.msra.mxu0 %v1202
  %2347 = vmatprep.subr.bf16.mxu0 0
  %2348 = vmatpush2.bf16.msra.mxu0 %v1201
  %2349 = vmatprep.subr.bf16.mxu0 0
  %2350 = vmatpush2.bf16.msra.mxu0 %v1200
  %2351 = vmatprep.subr.bf16.mxu0 0
  %2352 = vmatpush2.bf16.msra.mxu0 %v1199
  %2353 = vmatprep.subr.bf16.mxu0 0
  %2354 = vmatpush2.bf16.msra.mxu0 %v1198
  %2355 = vmatprep.mubr.bf16.mxu0 %v1819
  %2356 = vmatmul.mubr.bf16.gmra.mxu0 %v1722
  %v2357 = vpop.f32.mrf.mxu0
  %v2358 = vadd.f32 %v2213, %v2357
  %v2359 = vpop.f32.mrf.mxu0
  %v2360 = vpop.f32.mrf.mxu0
  %v2361 = vadd.f32 %v2216, %v2360
  %v2362 = vpop.f32.mrf.mxu0
  %2363 = vmatprep.mubr.bf16.mxu0 %v1822
  %2364 = vmatmul.mubr.bf16.gmra.mxu0 %v1726
  %v2365 = vpop.f32.mrf.mxu0
  %v2366 = vadd.f32 %v2221, %v2365
  %v2367 = vpop.f32.mrf.mxu0
  %v2368 = vpop.f32.mrf.mxu0
  %v2369 = vadd.f32 %v2224, %v2368
  %v2370 = vpop.f32.mrf.mxu0
  %2371 = vmatprep.mubr.bf16.mxu0 %v1825
  %2372 = vmatmul.mubr.bf16.gmra.mxu0 %v1730
  %v2373 = vpop.f32.mrf.mxu0
  %v2374 = vadd.f32 %v2229, %v2373
  %v2375 = vpop.f32.mrf.mxu0
  %v2376 = vpop.f32.mrf.mxu0
  %v2377 = vadd.f32 %v2232, %v2376
  %v2378 = vpop.f32.mrf.mxu0
  %2379 = vmatprep.mubr.bf16.mxu0 %v1828
  %2380 = vmatmul.mubr.bf16.gmra.mxu0 %v1734
  %v2381 = vpop.f32.mrf.mxu0
  %v2382 = vadd.f32 %v2237, %v2381
  %v2383 = vpop.f32.mrf.mxu0
  %v2384 = vpop.f32.mrf.mxu0
  %v2385 = vadd.f32 %v2240, %v2384
  %v2386 = vpop.f32.mrf.mxu0
  %2387 = vmatprep.mubr.bf16.mxu0 %v1831
  %2388 = vmatmul.mubr.bf16.gmra.mxu0 %v1738
  %v2389 = vpop.f32.mrf.mxu0
  %v2390 = vadd.f32 %v2245, %v2389
  %v2391 = vpop.f32.mrf.mxu0
  %v2392 = vpop.f32.mrf.mxu0
  %v2393 = vadd.f32 %v2248, %v2392
  %v2394 = vpop.f32.mrf.mxu0
  %2395 = vmatprep.mubr.bf16.mxu0 %v1834
  %2396 = vmatmul.mubr.bf16.gmra.mxu0 %v1742
  %v2397 = vpop.f32.mrf.mxu0
  %v2398 = vadd.f32 %v2253, %v2397
  %v2399 = vpop.f32.mrf.mxu0
  %v2400 = vpop.f32.mrf.mxu0
  %v2401 = vadd.f32 %v2256, %v2400
  %v2402 = vpop.f32.mrf.mxu0
  %2403 = vmatprep.mubr.bf16.mxu0 %v1837
  %2404 = vmatmul.mubr.bf16.gmra.mxu0 %v1746
  %v2405 = vpop.f32.mrf.mxu0
  %v2406 = vadd.f32 %v2261, %v2405
  %v2407 = vpop.f32.mrf.mxu0
  %v2408 = vpop.f32.mrf.mxu0
  %v2409 = vadd.f32 %v2264, %v2408
  %v2410 = vpop.f32.mrf.mxu0
  %2411 = vmatprep.mubr.bf16.mxu0 %v1840
  %2412 = vmatmul.mubr.bf16.gmra.mxu0 %v1750
  %v2413 = vpop.f32.mrf.mxu0
  %v2414 = vadd.f32 %v2269, %v2413
  %v2415 = vpop.f32.mrf.mxu0
  %v2416 = vpop.f32.mrf.mxu0
  %v2417 = vadd.f32 %v2272, %v2416
  %v2418 = vpop.f32.mrf.mxu0
  %2419 = vmatprep.mubr.bf16.mxu0 %v1843
  %2420 = vmatmul.mubr.bf16.gmra.mxu0 %v1754
  %v2421 = vpop.f32.mrf.mxu0
  %v2422 = vadd.f32 %v2277, %v2421
  %v2423 = vpop.f32.mrf.mxu0
  %v2424 = vpop.f32.mrf.mxu0
  %v2425 = vadd.f32 %v2280, %v2424
  %v2426 = vpop.f32.mrf.mxu0
  %2427 = vmatprep.mubr.bf16.mxu0 %v1846
  %2428 = vmatmul.mubr.bf16.gmra.mxu0 %v1758
  %v2429 = vpop.f32.mrf.mxu0
  %v2430 = vadd.f32 %v2285, %v2429
  %v2431 = vpop.f32.mrf.mxu0
  %v2432 = vpop.f32.mrf.mxu0
  %v2433 = vadd.f32 %v2288, %v2432
  %v2434 = vpop.f32.mrf.mxu0
  %2435 = vmatprep.mubr.bf16.mxu0 %v1849
  %2436 = vmatmul.mubr.bf16.gmra.mxu0 %v1762
  %v2437 = vpop.f32.mrf.mxu0
  %v2438 = vadd.f32 %v2293, %v2437
  %v2439 = vpop.f32.mrf.mxu0
  %v2440 = vpop.f32.mrf.mxu0
  %v2441 = vadd.f32 %v2296, %v2440
  %v2442 = vpop.f32.mrf.mxu0
  %2443 = vmatprep.mubr.bf16.mxu0 %v1852
  %2444 = vmatmul.mubr.bf16.gmra.mxu0 %v1766
  %v2445 = vpop.f32.mrf.mxu0
  %v2446 = vadd.f32 %v2301, %v2445
  %v2447 = vpop.f32.mrf.mxu0
  %v2448 = vpop.f32.mrf.mxu0
  %v2449 = vadd.f32 %v2304, %v2448
  %v2450 = vpop.f32.mrf.mxu0
  %2451 = vmatprep.mubr.bf16.mxu0 %v1855
  %2452 = vmatmul.mubr.bf16.gmra.mxu0 %v1770
  %v2453 = vpop.f32.mrf.mxu0
  %v2454 = vadd.f32 %v2309, %v2453
  %v2455 = vpop.f32.mrf.mxu0
  %v2456 = vpop.f32.mrf.mxu0
  %v2457 = vadd.f32 %v2312, %v2456
  %v2458 = vpop.f32.mrf.mxu0
  %2459 = vmatprep.mubr.bf16.mxu0 %v1858
  %2460 = vmatmul.mubr.bf16.gmra.mxu0 %v1774
  %v2461 = vpop.f32.mrf.mxu0
  %v2462 = vadd.f32 %v2317, %v2461
  %v2463 = vpop.f32.mrf.mxu0
  %v2464 = vpop.f32.mrf.mxu0
  %v2465 = vadd.f32 %v2320, %v2464
  %v2466 = vpop.f32.mrf.mxu0
  %2467 = vdwg.mxu0
  %v2468 = vmax.f32 %v2150, %v2358
  %v2469 = vmax.f32 %v2151, %v2361
  %v2470 = vmax.f32 %v2152, %v2366
  %v2471 = vmax.f32 %v2153, %v2369
  %v2472 = vmax.f32 %v2154, %v2374
  %v2473 = vmax.f32 %v2155, %v2377
  %v2474 = vmax.f32 %v2156, %v2382
  %v2475 = vmax.f32 %v2157, %v2385
  %v2476 = vmax.f32 %v2158, %v2390
  %v2477 = vmax.f32 %v2159, %v2393
  %v2478 = vmax.f32 %v2160, %v2398
  %v2479 = vmax.f32 %v2161, %v2401
  %v2480 = vmax.f32 %v2162, %v2406
  %v2481 = vmax.f32 %v2163, %v2409
  %v2482 = vmax.f32 %v2164, %v2414
  %v2483 = vmax.f32 %v2165, %v2417
  %v2484 = vmax.f32 %v2166, %v2422
  %v2485 = vmax.f32 %v2167, %v2425
  %v2486 = vmax.f32 %v2168, %v2430
  %v2487 = vmax.f32 %v2169, %v2433
  %v2488 = vmax.f32 %v2170, %v2438
  %v2489 = vmax.f32 %v2171, %v2441
  %v2490 = vmax.f32 %v2172, %v2446
  %v2491 = vmax.f32 %v2173, %v2449
  %v2492 = vmax.f32 %v2174, %v2454
  %v2493 = vmax.f32 %v2175, %v2457
  %v2494 = vmax.f32 %v2176, %v2462
  %v2495 = vmax.f32 %v2177, %v2465
  %v2496 = vld [vmem:[%s3] sm:$0x1]
  %v2498 = vlaneseq
  %v2499 = vshrl.u32 %v2498, 7
  %v2500 = vsub.s32 0, %v2499
  %v2501 = vrot.slane %v2496, %v2500
  %v2503 = vadd.f32 %v2468, %v2501
  %v2504 = vadd.f32 %v2469, %v2501
  %v2505 = vadd.f32 %v2470, %v2501
  %v2506 = vadd.f32 %v2471, %v2501
  %v2507 = vadd.f32 %v2472, %v2501
  %v2508 = vadd.f32 %v2473, %v2501
  %v2509 = vadd.f32 %v2474, %v2501
  %v2510 = vadd.f32 %v2475, %v2501
  %v2511 = vadd.f32 %v2476, %v2501
  %v2512 = vadd.f32 %v2477, %v2501
  %v2513 = vadd.f32 %v2478, %v2501
  %v2514 = vadd.f32 %v2479, %v2501
  %v2515 = vadd.f32 %v2480, %v2501
  %v2516 = vadd.f32 %v2481, %v2501
  %v2517 = vadd.f32 %v2482, %v2501
  %v2518 = vadd.f32 %v2483, %v2501
  %v2519 = vadd.f32 %v2484, %v2501
  %v2520 = vadd.f32 %v2485, %v2501
  %v2521 = vadd.f32 %v2486, %v2501
  %v2522 = vadd.f32 %v2487, %v2501
  %v2523 = vadd.f32 %v2488, %v2501
  %v2524 = vadd.f32 %v2489, %v2501
  %v2525 = vadd.f32 %v2490, %v2501
  %v2526 = vadd.f32 %v2491, %v2501
  %v2527 = vadd.f32 %v2492, %v2501
  %v2528 = vadd.f32 %v2493, %v2501
  %v2529 = vadd.f32 %v2494, %v2501
  %v2530 = vadd.f32 %v2495, %v2501
  %v2531 = vmax.f32 %v2503, 0.0
  %v2532 = vmax.f32 %v2504, 0.0
  %v2533 = vmax.f32 %v2505, 0.0
  %v2534 = vmax.f32 %v2506, 0.0
  %v2535 = vmax.f32 %v2507, 0.0
  %v2536 = vmax.f32 %v2508, 0.0
  %v2537 = vmax.f32 %v2509, 0.0
  %v2538 = vmax.f32 %v2510, 0.0
  %v2539 = vmax.f32 %v2511, 0.0
  %v2540 = vmax.f32 %v2512, 0.0
  %v2541 = vmax.f32 %v2513, 0.0
  %v2542 = vmax.f32 %v2514, 0.0
  %v2543 = vmax.f32 %v2515, 0.0
  %v2544 = vmax.f32 %v2516, 0.0
  %v2545 = vmax.f32 %v2517, 0.0
  %v2546 = vmax.f32 %v2518, 0.0
  %v2547 = vmax.f32 %v2519, 0.0
  %v2548 = vmax.f32 %v2520, 0.0
  %v2549 = vmax.f32 %v2521, 0.0
  %v2550 = vmax.f32 %v2522, 0.0
  %v2551 = vmax.f32 %v2523, 0.0
  %v2552 = vmax.f32 %v2524, 0.0
  %v2553 = vmax.f32 %v2525, 0.0
  %v2554 = vmax.f32 %v2526, 0.0
  %v2555 = vmax.f32 %v2527, 0.0
  %v2556 = vmax.f32 %v2528, 0.0
  %v2557 = vmax.f32 %v2529, 0.0
  %v2558 = vmax.f32 %v2530, 0.0
  %v2559 = vpack.c.bf16 %v2532, %v2531
  %v2560 = vpack.c.bf16 %v2534, %v2533
  %v2561 = vpack.c.bf16 %v2536, %v2535
  %v2562 = vpack.c.bf16 %v2538, %v2537
  %v2563 = vpack.c.bf16 %v2540, %v2539
  %v2564 = vpack.c.bf16 %v2542, %v2541
  %v2565 = vpack.c.bf16 %v2544, %v2543
  %v2566 = vpack.c.bf16 %v2546, %v2545
  %v2567 = vpack.c.bf16 %v2548, %v2547
  %v2568 = vpack.c.bf16 %v2550, %v2549
  %v2569 = vpack.c.bf16 %v2552, %v2551
  %v2570 = vpack.c.bf16 %v2554, %v2553
  %v2571 = vpack.c.bf16 %v2556, %v2555
  %v2572 = vpack.c.bf16 %v2558, %v2557
  %v2587 = vunpack.c.l.b16 %v2559
  %v2588 = vunpack.c.h.b16 %v2559
  %v2589 = vunpack.c.l.b16 %v2560
  %v2590 = vunpack.c.h.b16 %v2560
  %v2591 = vunpack.c.l.b16 %v2561
  %v2592 = vunpack.c.h.b16 %v2561
  %v2593 = vunpack.c.l.b16 %v2562
  %v2594 = vunpack.c.h.b16 %v2562
  %v2595 = vunpack.c.l.b16 %v2563
  %v2596 = vunpack.c.h.b16 %v2563
  %v2597 = vunpack.c.l.b16 %v2564
  %v2598 = vunpack.c.h.b16 %v2564
  %v2599 = vunpack.c.l.b16 %v2565
  %v2600 = vunpack.c.h.b16 %v2565
  %v2601 = vunpack.c.l.b16 %v2566
  %v2602 = vunpack.c.h.b16 %v2566
  %v2603 = vunpack.c.l.b16 %v2567
  %v2604 = vunpack.c.h.b16 %v2567
  %v2605 = vunpack.c.l.b16 %v2568
  %v2606 = vunpack.c.h.b16 %v2568
  %v2607 = vunpack.c.l.b16 %v2569
  %v2608 = vunpack.c.h.b16 %v2569
  %v2609 = vunpack.c.l.b16 %v2570
  %v2610 = vunpack.c.h.b16 %v2570
  %v2611 = vunpack.c.l.b16 %v2571
  %v2612 = vunpack.c.h.b16 %v2571
  %v2613 = vunpack.c.l.b16 %v2572
  %v2614 = vunpack.c.h.b16 %v2572
  %v2615 = vpack.c.b16 %v2587, %v2587
  %v2616 = vpack.c.b16 %v2588, %v2588
  %v2617 = vpack.c.b16 %v2589, %v2589
  %v2618 = vpack.c.b16 %v2590, %v2590
  %v2619 = vpack.c.b16 %v2591, %v2591
  %v2620 = vpack.c.b16 %v2592, %v2592
  %v2621 = vpack.c.b16 %v2593, %v2593
  %v2622 = vpack.c.b16 %v2594, %v2594
  %v2623 = vpack.c.b16 %v2595, %v2595
  %v2624 = vpack.c.b16 %v2596, %v2596
  %v2625 = vpack.c.b16 %v2597, %v2597
  %v2626 = vpack.c.b16 %v2598, %v2598
  %v2627 = vpack.c.b16 %v2599, %v2599
  %v2628 = vpack.c.b16 %v2600, %v2600
  %v2629 = vpack.c.b16 %v2601, %v2601
  %v2630 = vpack.c.b16 %v2602, %v2602
  %v2631 = vpack.c.b16 %v2603, %v2603
  %v2632 = vpack.c.b16 %v2604, %v2604
  %v2633 = vpack.c.b16 %v2605, %v2605
  %v2634 = vpack.c.b16 %v2606, %v2606
  %v2635 = vpack.c.b16 %v2607, %v2607
  %v2636 = vpack.c.b16 %v2608, %v2608
  %v2637 = vpack.c.b16 %v2609, %v2609
  %v2638 = vpack.c.b16 %v2610, %v2610
  %v2639 = vpack.c.b16 %v2611, %v2611
  %v2640 = vpack.c.b16 %v2612, %v2612
  %v2641 = vpack.c.b16 %v2613, %v2613
  %v2642 = vpack.c.b16 %v2614, %v2614
  %vm2671 = vcmask 683008
  %2672 = vst.msk [vmem:[#allocation2] sm:$0xf] %vm2671, %v2615
  %2673 = vst.msk [vmem:[#allocation2 + $0x4] sm:$0xf] %vm2671, %v2616
  %2674 = vst.msk [vmem:[#allocation2 + $0x8] sm:$0xf] %vm2671, %v2617
  %2675 = vst.msk [vmem:[#allocation2 + $0xc] sm:$0xf] %vm2671, %v2618
  %2676 = vst.msk [vmem:[#allocation2 + $0x10] sm:$0xf] %vm2671, %v2619
  %2677 = vst.msk [vmem:[#allocation2 + $0x14] sm:$0xf] %vm2671, %v2620
  %2678 = vst.msk [vmem:[#allocation2 + $0x18] sm:$0xf] %vm2671, %v2621
  %2679 = vst.msk [vmem:[#allocation2 + $0x1c] sm:$0xf] %vm2671, %v2622
  %2680 = vst.msk [vmem:[#allocation2 + $0x20] sm:$0xf] %vm2671, %v2623
  %2681 = vst.msk [vmem:[#allocation2 + $0x24] sm:$0xf] %vm2671, %v2624
  %2682 = vst.msk [vmem:[#allocation2 + $0x28] sm:$0xf] %vm2671, %v2625
  %2683 = vst.msk [vmem:[#allocation2 + $0x2c] sm:$0xf] %vm2671, %v2626
  %2684 = vst.msk [vmem:[#allocation2 + $0x30] sm:$0xf] %vm2671, %v2627
  %2685 = vst.msk [vmem:[#allocation2 + $0x34] sm:$0xf] %vm2671, %v2628
  %2686 = vst.msk [vmem:[#allocation2 + $0x38] sm:$0xf] %vm2671, %v2629
  %2687 = vst.msk [vmem:[#allocation2 + $0x3c] sm:$0xf] %vm2671, %v2630
  %2688 = vst.msk [vmem:[#allocation2 + $0x40] sm:$0xf] %vm2671, %v2631
  %2689 = vst.msk [vmem:[#allocation2 + $0x44] sm:$0xf] %vm2671, %v2632
  %2690 = vst.msk [vmem:[#allocation2 + $0x48] sm:$0xf] %vm2671, %v2633
  %2691 = vst.msk [vmem:[#allocation2 + $0x4c] sm:$0xf] %vm2671, %v2634
  %2692 = vst.msk [vmem:[#allocation2 + $0x50] sm:$0xf] %vm2671, %v2635
  %2693 = vst.msk [vmem:[#allocation2 + $0x54] sm:$0xf] %vm2671, %v2636
  %2694 = vst.msk [vmem:[#allocation2 + $0x58] sm:$0xf] %vm2671, %v2637
  %2695 = vst.msk [vmem:[#allocation2 + $0x5c] sm:$0xf] %vm2671, %v2638
  %2696 = vst.msk [vmem:[#allocation2 + $0x60] sm:$0xf] %vm2671, %v2639
  %2697 = vst.msk [vmem:[#allocation2 + $0x64] sm:$0xf] %vm2671, %v2640
  %2698 = vst.msk [vmem:[#allocation2 + $0x68] sm:$0xf] %vm2671, %v2641
  %2699 = vst.msk [vmem:[#allocation2 + $0x6c] sm:$0xf] %vm2671, %v2642
  %v2700 = vld [vmem:[%s0 + $0x1c0] sm:$0xff]
  %v2701 = vld [vmem:[%s0 + $0x1c8] sm:$0xff]
  %v2702 = vld [vmem:[%s0 + $0x1d0] sm:$0xff]
  %v2703 = vld [vmem:[%s0 + $0x1d8] sm:$0xff]
  %v2704 = vld [vmem:[%s0 + $0x1e0] sm:$0xff]
  %v2705 = vld [vmem:[%s0 + $0x1e8] sm:$0xff]
  %v2706 = vld [vmem:[%s0 + $0x1f0] sm:$0xff]
  %v2707 = vld [vmem:[%s0 + $0x1f8] sm:$0xff]
  %v2708 = vld [vmem:[%s0 + $0x200] sm:$0xff]
  %v2709 = vld [vmem:[%s0 + $0x208] sm:$0xff]
  %v2710 = vld [vmem:[%s0 + $0x210] sm:$0xff]
  %v2711 = vld [vmem:[%s0 + $0x218] sm:$0xff]
  %v2712 = vld [vmem:[%s0 + $0x220] sm:$0xff]
  %v2713 = vld [vmem:[%s0 + $0x228] sm:$0xff]
  %v2714 = vld [vmem:[%s0 + $0x230] sm:$0xff]
  %v2715 = vld [vmem:[%s0 + $0x238] sm:$0xff]
  %v2716 = vld [vmem:[%s0 + $0x240] sm:$0xff]
  %v2717 = vld [vmem:[%s0 + $0x248] sm:$0xff]
  %v2718 = vld [vmem:[%s0 + $0x250] sm:$0xff]
  %v2719 = vld [vmem:[%s0 + $0x258] sm:$0xff]
  %v2720 = vld [vmem:[%s0 + $0x260] sm:$0xff]
  %v2721 = vld [vmem:[%s0 + $0x268] sm:$0xff]
  %v2722 = vld [vmem:[%s0 + $0x270] sm:$0xff]
  %v2723 = vld [vmem:[%s0 + $0x278] sm:$0xff]
  %v2724 = vld [vmem:[%s0 + $0x280] sm:$0xff]
  %v2725 = vld [vmem:[%s0 + $0x288] sm:$0xff]
  %v2726 = vld [vmem:[%s0 + $0x290] sm:$0xff]
  %v2727 = vld [vmem:[%s0 + $0x298] sm:$0xff]
  %v2728 = vld [vmem:[%s0 + $0x2a0] sm:$0xff]
  %v2729 = vld [vmem:[%s0 + $0x2a8] sm:$0xff]
  %v2730 = vld [vmem:[%s0 + $0x2b0] sm:$0xff]
  %v2731 = vld [vmem:[%s0 + $0x2b8] sm:$0xff]
  %v2732 = vld [vmem:[%s0 + $0x2c0] sm:$0xff]
  %v2733 = vld [vmem:[%s0 + $0x2c8] sm:$0xff]
  %v2734 = vld [vmem:[%s0 + $0x2d0] sm:$0xff]
  %v2735 = vld [vmem:[%s0 + $0x2d8] sm:$0xff]
  %v2736 = vld [vmem:[%s0 + $0x2e0] sm:$0xff]
  %v2737 = vld [vmem:[%s0 + $0x2e8] sm:$0xff]
  %v2738 = vld [vmem:[%s0 + $0x2f0] sm:$0xff]
  %v2739 = vld [vmem:[%s0 + $0x2f8] sm:$0xff]
  %v2740 = vld [vmem:[%s0 + $0x300] sm:$0xff]
  %v2741 = vld [vmem:[%s0 + $0x308] sm:$0xff]
  %v2742 = vld [vmem:[%s0 + $0x310] sm:$0xff]
  %v2743 = vld [vmem:[%s0 + $0x318] sm:$0xff]
  %v2744 = vld [vmem:[%s0 + $0x320] sm:$0xff]
  %v2745 = vld [vmem:[%s0 + $0x328] sm:$0xff]
  %v2746 = vld [vmem:[%s0 + $0x330] sm:$0xff]
  %v2747 = vld [vmem:[%s0 + $0x338] sm:$0xff]
  %v2748 = vld [vmem:[%s0 + $0x340] sm:$0xff]
  %v2749 = vld [vmem:[%s0 + $0x348] sm:$0xff]
  %v2750 = vld [vmem:[%s0 + $0x350] sm:$0xff]
  %v2751 = vld [vmem:[%s0 + $0x358] sm:$0xff]
  %v2752 = vld [vmem:[%s0 + $0x360] sm:$0xff]
  %v2753 = vld [vmem:[%s0 + $0x368] sm:$0xff]
  %v2754 = vld [vmem:[%s0 + $0x370] sm:$0xff]
  %v2755 = vld [vmem:[%s0 + $0x378] sm:$0xff]
  %v2756 = vld [vmem:[%s1 + $0x1c0] sm:$0xff]
  %v2757 = vld [vmem:[%s1 + $0x1c8] sm:$0xff]
  %v2758 = vld [vmem:[%s1 + $0x1d0] sm:$0xff]
  %v2759 = vld [vmem:[%s1 + $0x1d8] sm:$0xff]
  %v2760 = vld [vmem:[%s1 + $0x1e0] sm:$0xff]
  %v2761 = vld [vmem:[%s1 + $0x1e8] sm:$0xff]
  %v2762 = vld [vmem:[%s1 + $0x1f0] sm:$0xff]
  %v2763 = vld [vmem:[%s1 + $0x1f8] sm:$0xff]
  %v2764 = vld [vmem:[%s1 + $0x200] sm:$0xff]
  %v2765 = vld [vmem:[%s1 + $0x208] sm:$0xff]
  %v2766 = vld [vmem:[%s1 + $0x210] sm:$0xff]
  %v2767 = vld [vmem:[%s1 + $0x218] sm:$0xff]
  %v2768 = vld [vmem:[%s1 + $0x220] sm:$0xff]
  %v2769 = vld [vmem:[%s1 + $0x228] sm:$0xff]
  %v2770 = vld [vmem:[%s1 + $0x230] sm:$0xff]
  %v2771 = vld [vmem:[%s1 + $0x238] sm:$0xff]
  %v2772 = vld [vmem:[%s1 + $0x240] sm:$0xff]
  %v2773 = vld [vmem:[%s1 + $0x248] sm:$0xff]
  %v2774 = vld [vmem:[%s1 + $0x250] sm:$0xff]
  %v2775 = vld [vmem:[%s1 + $0x258] sm:$0xff]
  %v2776 = vld [vmem:[%s1 + $0x260] sm:$0xff]
  %v2777 = vld [vmem:[%s1 + $0x268] sm:$0xff]
  %v2778 = vld [vmem:[%s1 + $0x270] sm:$0xff]
  %v2779 = vld [vmem:[%s1 + $0x278] sm:$0xff]
  %v2780 = vld [vmem:[%s1 + $0x280] sm:$0xff]
  %v2781 = vld [vmem:[%s1 + $0x288] sm:$0xff]
  %v2782 = vld [vmem:[%s1 + $0x290] sm:$0xff]
  %v2783 = vld [vmem:[%s1 + $0x298] sm:$0xff]
  %v2784 = vld [vmem:[%s1 + $0x2a0] sm:$0xff]
  %v2785 = vld [vmem:[%s1 + $0x2a8] sm:$0xff]
  %v2786 = vld [vmem:[%s1 + $0x2b0] sm:$0xff]
  %v2787 = vld [vmem:[%s1 + $0x2b8] sm:$0xff]
  %v2788 = vld [vmem:[%s1 + $0x2c0] sm:$0xff]
  %v2789 = vld [vmem:[%s1 + $0x2c8] sm:$0xff]
  %v2790 = vld [vmem:[%s1 + $0x2d0] sm:$0xff]
  %v2791 = vld [vmem:[%s1 + $0x2d8] sm:$0xff]
  %v2792 = vld [vmem:[%s1 + $0x2e0] sm:$0xff]
  %v2793 = vld [vmem:[%s1 + $0x2e8] sm:$0xff]
  %v2794 = vld [vmem:[%s1 + $0x2f0] sm:$0xff]
  %v2795 = vld [vmem:[%s1 + $0x2f8] sm:$0xff]
  %v2796 = vld [vmem:[%s1 + $0x300] sm:$0xff]
  %v2797 = vld [vmem:[%s1 + $0x308] sm:$0xff]
  %v2798 = vld [vmem:[%s1 + $0x310] sm:$0xff]
  %v2799 = vld [vmem:[%s1 + $0x318] sm:$0xff]
  %v2800 = vld [vmem:[%s1 + $0x320] sm:$0xff]
  %v2801 = vld [vmem:[%s1 + $0x328] sm:$0xff]
  %v2802 = vld [vmem:[%s1 + $0x330] sm:$0xff]
  %v2803 = vld [vmem:[%s1 + $0x338] sm:$0xff]
  %v2804 = vld [vmem:[%s1 + $0x340] sm:$0xff]
  %v2805 = vld [vmem:[%s1 + $0x348] sm:$0xff]
  %v2806 = vld [vmem:[%s1 + $0x350] sm:$0xff]
  %v2807 = vld [vmem:[%s1 + $0x358] sm:$0xff]
  %v2808 = vld [vmem:[%s1 + $0x360] sm:$0xff]
  %v2809 = vld [vmem:[%s1 + $0x368] sm:$0xff]
  %v2810 = vld [vmem:[%s1 + $0x370] sm:$0xff]
  %v2811 = vld [vmem:[%s1 + $0x378] sm:$0xff]
  %v2812 = vld [vmem:[%s2] sm:$0xf]
  %v2813 = vld [vmem:[%s2 + $0x4] sm:$0xf]
  %v2814 = vld [vmem:[%s2 + $0x8] sm:$0xf]
  %v2815 = vld [vmem:[%s2 + $0xc] sm:$0xf]
  %v2816 = vld [vmem:[%s2 + $0x10] sm:$0xf]
  %v2817 = vld [vmem:[%s2 + $0x14] sm:$0xf]
  %v2818 = vld [vmem:[%s2 + $0x18] sm:$0xf]
  %v2819 = vld [vmem:[%s2 + $0x1c] sm:$0xf]
  %v2820 = vld [vmem:[%s2 + $0x20] sm:$0xf]
  %v2821 = vld [vmem:[%s2 + $0x24] sm:$0xf]
  %v2822 = vld [vmem:[%s2 + $0x28] sm:$0xf]
  %v2823 = vld [vmem:[%s2 + $0x2c] sm:$0xf]
  %v2824 = vld [vmem:[%s2 + $0x30] sm:$0xf]
  %v2825 = vld [vmem:[%s2 + $0x34] sm:$0xf]
  %v2826 = vld [vmem:[%s2 + $0x38] sm:$0xf]
  %v2827 = vld [vmem:[%s2 + $0x3c] sm:$0xf]
  %v2828 = vld [vmem:[%s2 + $0x40] sm:$0xf]
  %v2829 = vld [vmem:[%s2 + $0x44] sm:$0xf]
  %v2830 = vld [vmem:[%s2 + $0x48] sm:$0xf]
  %v2831 = vld [vmem:[%s2 + $0x4c] sm:$0xf]
  %v2832 = vld [vmem:[%s2 + $0x50] sm:$0xf]
  %v2833 = vld [vmem:[%s2 + $0x54] sm:$0xf]
  %v2834 = vld [vmem:[%s2 + $0x58] sm:$0xf]
  %v2835 = vld [vmem:[%s2 + $0x5c] sm:$0xf]
  %v2836 = vld [vmem:[%s2 + $0x60] sm:$0xf]
  %v2837 = vld [vmem:[%s2 + $0x64] sm:$0xf]
  %v2838 = vld [vmem:[%s2 + $0x68] sm:$0xf]
  %v2839 = vld [vmem:[%s2 + $0x6c] sm:$0xf]
  %v2840 = vld [vmem:[%s2 + $0x70] sm:$0xf]
  %v2841 = vld [vmem:[%s2 + $0x74] sm:$0xf]
  %v2842 = vld [vmem:[%s2 + $0x78] sm:$0xf]
  %v2843 = vld [vmem:[%s2 + $0x7c] sm:$0xf]
  %v2844 = vld [vmem:[%s2 + $0x80] sm:$0xf]
  %v2845 = vld [vmem:[%s2 + $0x84] sm:$0xf]
  %v2846 = vld [vmem:[%s2 + $0x88] sm:$0xf]
  %v2847 = vld [vmem:[%s2 + $0x8c] sm:$0xf]
  %v2848 = vld [vmem:[%s2 + $0x90] sm:$0xf]
  %v2849 = vld [vmem:[%s2 + $0x94] sm:$0xf]
  %v2850 = vld [vmem:[%s2 + $0x98] sm:$0xf]
  %v2851 = vld [vmem:[%s2 + $0x9c] sm:$0xf]
  %v2852 = vld [vmem:[%s2 + $0xa0] sm:$0xf]
  %v2853 = vld [vmem:[%s2 + $0xa4] sm:$0xf]
  %v2854 = vld [vmem:[%s2 + $0xa8] sm:$0xf]
  %v2855 = vld [vmem:[%s2 + $0xac] sm:$0xf]
  %v2856 = vld [vmem:[%s2 + $0xb0] sm:$0xf]
  %v2857 = vld [vmem:[%s2 + $0xb4] sm:$0xf]
  %v2858 = vld [vmem:[%s2 + $0xb8] sm:$0xf]
  %v2859 = vld [vmem:[%s2 + $0xbc] sm:$0xf]
  %v2860 = vld [vmem:[%s2 + $0xc0] sm:$0xf]
  %v2861 = vld [vmem:[%s2 + $0xc4] sm:$0xf]
  %v2862 = vld [vmem:[%s2 + $0xc8] sm:$0xf]
  %v2863 = vld [vmem:[%s2 + $0xcc] sm:$0xf]
  %v2864 = vld [vmem:[%s2 + $0xd0] sm:$0xf]
  %v2865 = vld [vmem:[%s2 + $0xd4] sm:$0xf]
  %v2866 = vld [vmem:[%s2 + $0xd8] sm:$0xf]
  %v2867 = vld [vmem:[%s2 + $0xdc] sm:$0xf]
  %v2868 = vld [vmem:[%s2 + $0xe0] sm:$0xf]
  %v2869 = vld [vmem:[%s2 + $0xe4] sm:$0xf]
  %v2870 = vld [vmem:[%s2 + $0xe8] sm:$0xf]
  %v2871 = vld [vmem:[%s2 + $0xec] sm:$0xf]
  %v2928 = vunpack.c.l.b16 %v2700
  %v2929 = vunpack.c.h.b16 %v2700
  %v2930 = vunpack.c.l.b16 %v2701
  %v2931 = vunpack.c.h.b16 %v2701
  %v2932 = vunpack.c.l.b16 %v2702
  %v2933 = vunpack.c.h.b16 %v2702
  %v2934 = vunpack.c.l.b16 %v2703
  %v2935 = vunpack.c.h.b16 %v2703
  %v2936 = vunpack.c.l.b16 %v2704
  %v2937 = vunpack.c.h.b16 %v2704
  %v2938 = vunpack.c.l.b16 %v2705
  %v2939 = vunpack.c.h.b16 %v2705
  %v2940 = vunpack.c.l.b16 %v2706
  %v2941 = vunpack.c.h.b16 %v2706
  %v2942 = vunpack.c.l.b16 %v2707
  %v2943 = vunpack.c.h.b16 %v2707
  %v2944 = vunpack.c.l.b16 %v2708
  %v2945 = vunpack.c.h.b16 %v2708
  %v2946 = vunpack.c.l.b16 %v2709
  %v2947 = vunpack.c.h.b16 %v2709
  %v2948 = vunpack.c.l.b16 %v2710
  %v2949 = vunpack.c.h.b16 %v2710
  %v2950 = vunpack.c.l.b16 %v2711
  %v2951 = vunpack.c.h.b16 %v2711
  %v2952 = vunpack.c.l.b16 %v2712
  %v2953 = vunpack.c.h.b16 %v2712
  %v2954 = vunpack.c.l.b16 %v2713
  %v2955 = vunpack.c.h.b16 %v2713
  %v2956 = vunpack.c.l.b16 %v2714
  %v2957 = vunpack.c.h.b16 %v2714
  %v2958 = vunpack.c.l.b16 %v2715
  %v2959 = vunpack.c.h.b16 %v2715
  %v2960 = vunpack.c.l.b16 %v2716
  %v2961 = vunpack.c.h.b16 %v2716
  %v2962 = vunpack.c.l.b16 %v2717
  %v2963 = vunpack.c.h.b16 %v2717
  %v2964 = vunpack.c.l.b16 %v2718
  %v2965 = vunpack.c.h.b16 %v2718
  %v2966 = vunpack.c.l.b16 %v2719
  %v2967 = vunpack.c.h.b16 %v2719
  %v2968 = vunpack.c.l.b16 %v2720
  %v2969 = vunpack.c.h.b16 %v2720
  %v2970 = vunpack.c.l.b16 %v2721
  %v2971 = vunpack.c.h.b16 %v2721
  %v2972 = vunpack.c.l.b16 %v2722
  %v2973 = vunpack.c.h.b16 %v2722
  %v2974 = vunpack.c.l.b16 %v2723
  %v2975 = vunpack.c.h.b16 %v2723
  %v2976 = vunpack.c.l.b16 %v2724
  %v2977 = vunpack.c.h.b16 %v2724
  %v2978 = vunpack.c.l.b16 %v2725
  %v2979 = vunpack.c.h.b16 %v2725
  %v2980 = vunpack.c.l.b16 %v2726
  %v2981 = vunpack.c.h.b16 %v2726
  %v2982 = vunpack.c.l.b16 %v2727
  %v2983 = vunpack.c.h.b16 %v2727
  %v2984 = vunpack.c.l.b16 %v2728
  %v2985 = vunpack.c.h.b16 %v2728
  %v2986 = vunpack.c.l.b16 %v2729
  %v2987 = vunpack.c.h.b16 %v2729
  %v2988 = vunpack.c.l.b16 %v2730
  %v2989 = vunpack.c.h.b16 %v2730
  %v2990 = vunpack.c.l.b16 %v2731
  %v2991 = vunpack.c.h.b16 %v2731
  %v2992 = vunpack.c.l.b16 %v2732
  %v2993 = vunpack.c.h.b16 %v2732
  %v2994 = vunpack.c.l.b16 %v2733
  %v2995 = vunpack.c.h.b16 %v2733
  %v2996 = vunpack.c.l.b16 %v2734
  %v2997 = vunpack.c.h.b16 %v2734
  %v2998 = vunpack.c.l.b16 %v2735
  %v2999 = vunpack.c.h.b16 %v2735
  %v3000 = vunpack.c.l.b16 %v2736
  %v3001 = vunpack.c.h.b16 %v2736
  %v3002 = vunpack.c.l.b16 %v2737
  %v3003 = vunpack.c.h.b16 %v2737
  %v3004 = vunpack.c.l.b16 %v2738
  %v3005 = vunpack.c.h.b16 %v2738
  %v3006 = vunpack.c.l.b16 %v2739
  %v3007 = vunpack.c.h.b16 %v2739
  %v3008 = vunpack.c.l.b16 %v2740
  %v3009 = vunpack.c.h.b16 %v2740
  %v3010 = vunpack.c.l.b16 %v2741
  %v3011 = vunpack.c.h.b16 %v2741
  %v3012 = vunpack.c.l.b16 %v2742
  %v3013 = vunpack.c.h.b16 %v2742
  %v3014 = vunpack.c.l.b16 %v2743
  %v3015 = vunpack.c.h.b16 %v2743
  %v3016 = vunpack.c.l.b16 %v2744
  %v3017 = vunpack.c.h.b16 %v2744
  %v3018 = vunpack.c.l.b16 %v2745
  %v3019 = vunpack.c.h.b16 %v2745
  %v3020 = vunpack.c.l.b16 %v2746
  %v3021 = vunpack.c.h.b16 %v2746
  %v3022 = vunpack.c.l.b16 %v2747
  %v3023 = vunpack.c.h.b16 %v2747
  %v3024 = vunpack.c.l.b16 %v2748
  %v3025 = vunpack.c.h.b16 %v2748
  %v3026 = vunpack.c.l.b16 %v2749
  %v3027 = vunpack.c.h.b16 %v2749
  %v3028 = vunpack.c.l.b16 %v2750
  %v3029 = vunpack.c.h.b16 %v2750
  %v3030 = vunpack.c.l.b16 %v2751
  %v3031 = vunpack.c.h.b16 %v2751
  %v3032 = vunpack.c.l.b16 %v2752
  %v3033 = vunpack.c.h.b16 %v2752
  %v3034 = vunpack.c.l.b16 %v2753
  %v3035 = vunpack.c.h.b16 %v2753
  %v3036 = vunpack.c.l.b16 %v2754
  %v3037 = vunpack.c.h.b16 %v2754
  %v3038 = vunpack.c.l.b16 %v2755
  %v3039 = vunpack.c.h.b16 %v2755
  %v3040 = vpack.c.b16 %v2932, %v2928
  %v3041 = vpack.c.b16 %v2933, %v2929
  %v3042 = vpack.c.b16 %v2934, %v2930
  %v3043 = vpack.c.b16 %v2935, %v2931
  %v3044 = vpack.c.b16 %v2940, %v2936
  %v3045 = vpack.c.b16 %v2941, %v2937
  %v3046 = vpack.c.b16 %v2942, %v2938
  %v3047 = vpack.c.b16 %v2943, %v2939
  %v3048 = vpack.c.b16 %v2948, %v2944
  %v3049 = vpack.c.b16 %v2949, %v2945
  %v3050 = vpack.c.b16 %v2950, %v2946
  %v3051 = vpack.c.b16 %v2951, %v2947
  %v3052 = vpack.c.b16 %v2956, %v2952
  %v3053 = vpack.c.b16 %v2957, %v2953
  %v3054 = vpack.c.b16 %v2958, %v2954
  %v3055 = vpack.c.b16 %v2959, %v2955
  %v3056 = vpack.c.b16 %v2964, %v2960
  %v3057 = vpack.c.b16 %v2965, %v2961
  %v3058 = vpack.c.b16 %v2966, %v2962
  %v3059 = vpack.c.b16 %v2967, %v2963
  %v3060 = vpack.c.b16 %v2972, %v2968
  %v3061 = vpack.c.b16 %v2973, %v2969
  %v3062 = vpack.c.b16 %v2974, %v2970
  %v3063 = vpack.c.b16 %v2975, %v2971
  %v3064 = vpack.c.b16 %v2980, %v2976
  %v3065 = vpack.c.b16 %v2981, %v2977
  %v3066 = vpack.c.b16 %v2982, %v2978
  %v3067 = vpack.c.b16 %v2983, %v2979
  %v3068 = vpack.c.b16 %v2988, %v2984
  %v3069 = vpack.c.b16 %v2989, %v2985
  %v3070 = vpack.c.b16 %v2990, %v2986
  %v3071 = vpack.c.b16 %v2991, %v2987
  %v3072 = vpack.c.b16 %v2996, %v2992
  %v3073 = vpack.c.b16 %v2997, %v2993
  %v3074 = vpack.c.b16 %v2998, %v2994
  %v3075 = vpack.c.b16 %v2999, %v2995
  %v3076 = vpack.c.b16 %v3004, %v3000
  %v3077 = vpack.c.b16 %v3005, %v3001
  %v3078 = vpack.c.b16 %v3006, %v3002
  %v3079 = vpack.c.b16 %v3007, %v3003
  %v3080 = vpack.c.b16 %v3012, %v3008
  %v3081 = vpack.c.b16 %v3013, %v3009
  %v3082 = vpack.c.b16 %v3014, %v3010
  %v3083 = vpack.c.b16 %v3015, %v3011
  %v3084 = vpack.c.b16 %v3020, %v3016
  %v3085 = vpack.c.b16 %v3021, %v3017
  %v3086 = vpack.c.b16 %v3022, %v3018
  %v3087 = vpack.c.b16 %v3023, %v3019
  %v3088 = vpack.c.b16 %v3028, %v3024
  %v3089 = vpack.c.b16 %v3029, %v3025
  %v3090 = vpack.c.b16 %v3030, %v3026
  %v3091 = vpack.c.b16 %v3031, %v3027
  %v3092 = vpack.c.b16 %v3036, %v3032
  %v3093 = vpack.c.b16 %v3037, %v3033
  %v3094 = vpack.c.b16 %v3038, %v3034
  %v3095 = vpack.c.b16 %v3039, %v3035
  %v3198 = vunpack.c.l.b16 %v2812
  %v3199 = vunpack.c.l.b16 %v2813
  %v3200 = vunpack.c.l.b16 %v2814
  %v3201 = vunpack.c.l.b16 %v2815
  %v3202 = vunpack.c.l.b16 %v2816
  %v3203 = vunpack.c.l.b16 %v2817
  %v3204 = vunpack.c.l.b16 %v2818
  %v3205 = vunpack.c.l.b16 %v2819
  %v3206 = vunpack.c.l.b16 %v2820
  %v3207 = vunpack.c.l.b16 %v2821
  %v3208 = vunpack.c.l.b16 %v2822
  %v3209 = vunpack.c.l.b16 %v2823
  %v3210 = vunpack.c.l.b16 %v2824
  %v3211 = vunpack.c.l.b16 %v2825
  %v3212 = vunpack.c.l.b16 %v2826
  %v3213 = vunpack.c.l.b16 %v2827
  %v3214 = vunpack.c.l.b16 %v2828
  %v3215 = vunpack.c.l.b16 %v2829
  %v3216 = vunpack.c.l.b16 %v2830
  %v3217 = vunpack.c.l.b16 %v2831
  %v3218 = vunpack.c.l.b16 %v2832
  %v3219 = vunpack.c.l.b16 %v2833
  %v3220 = vunpack.c.l.b16 %v2834
  %v3221 = vunpack.c.l.b16 %v2835
  %v3222 = vunpack.c.l.b16 %v2836
  %v3223 = vunpack.c.l.b16 %v2837
  %v3224 = vunpack.c.l.b16 %v2838
  %v3225 = vunpack.c.l.b16 %v2839
  %v3226 = vunpack.c.l.b16 %v2840
  %v3227 = vunpack.c.l.b16 %v2841
  %v3228 = vunpack.c.l.b16 %v2842
  %v3229 = vunpack.c.l.b16 %v2843
  %v3230 = vunpack.c.l.b16 %v2844
  %v3231 = vunpack.c.l.b16 %v2845
  %v3232 = vunpack.c.l.b16 %v2846
  %v3233 = vunpack.c.l.b16 %v2847
  %v3234 = vunpack.c.l.b16 %v2848
  %v3235 = vunpack.c.l.b16 %v2849
  %v3236 = vunpack.c.l.b16 %v2850
  %v3237 = vunpack.c.l.b16 %v2851
  %v3238 = vunpack.c.l.b16 %v2852
  %v3239 = vunpack.c.l.b16 %v2853
  %v3240 = vunpack.c.l.b16 %v2854
  %v3241 = vunpack.c.l.b16 %v2855
  %v3242 = vunpack.c.l.b16 %v2856
  %v3243 = vunpack.c.l.b16 %v2857
  %v3244 = vunpack.c.l.b16 %v2858
  %v3245 = vunpack.c.l.b16 %v2859
  %v3246 = vunpack.c.l.b16 %v2860
  %v3247 = vunpack.c.l.b16 %v2861
  %v3248 = vunpack.c.l.b16 %v2862
  %v3249 = vunpack.c.l.b16 %v2863
  %v3250 = vunpack.c.l.b16 %v2864
  %v3251 = vunpack.c.l.b16 %v2865
  %v3252 = vunpack.c.l.b16 %v2866
  %v3253 = vunpack.c.l.b16 %v2867
  %v3254 = vunpack.c.l.b16 %v2868
  %v3255 = vunpack.c.l.b16 %v2869
  %v3256 = vunpack.c.l.b16 %v2870
  %v3257 = vunpack.c.l.b16 %v2871
  %v3258 = vpack.c.b16 %v3199, %v3198
  %v3259 = vpack.c.b16 %v3201, %v3200
  %v3260 = vpack.c.b16 %v3203, %v3202
  %v3261 = vpack.c.b16 %v3205, %v3204
  %v3262 = vpack.c.b16 %v3207, %v3206
  %v3263 = vpack.c.b16 %v3209, %v3208
  %v3264 = vpack.c.b16 %v3211, %v3210
  %v3265 = vpack.c.b16 %v3213, %v3212
  %v3266 = vpack.c.b16 %v3215, %v3214
  %v3267 = vpack.c.b16 %v3217, %v3216
  %v3268 = vpack.c.b16 %v3219, %v3218
  %v3269 = vpack.c.b16 %v3221, %v3220
  %v3270 = vpack.c.b16 %v3223, %v3222
  %v3271 = vpack.c.b16 %v3225, %v3224
  %v3272 = vpack.c.b16 %v3227, %v3226
  %v3273 = vpack.c.b16 %v3229, %v3228
  %v3274 = vpack.c.b16 %v3231, %v3230
  %v3275 = vpack.c.b16 %v3233, %v3232
  %v3276 = vpack.c.b16 %v3235, %v3234
  %v3277 = vpack.c.b16 %v3237, %v3236
  %v3278 = vpack.c.b16 %v3239, %v3238
  %v3279 = vpack.c.b16 %v3241, %v3240
  %v3280 = vpack.c.b16 %v3243, %v3242
  %v3281 = vpack.c.b16 %v3245, %v3244
  %v3282 = vpack.c.b16 %v3247, %v3246
  %v3283 = vpack.c.b16 %v3249, %v3248
  %v3284 = vpack.c.b16 %v3251, %v3250
  %v3285 = vpack.c.b16 %v3253, %v3252
  %v3286 = vpack.c.b16 %v3255, %v3254
  %v3287 = vpack.c.b16 %v3257, %v3256
  %v3319 = vsel %vm660, %v3043, 0
  %v3322 = vsel %vm660, %v3047, 0
  %v3325 = vsel %vm660, %v3051, 0
  %v3328 = vsel %vm660, %v3055, 0
  %v3331 = vsel %vm660, %v3059, 0
  %v3334 = vsel %vm660, %v3063, 0
  %v3337 = vsel %vm660, %v3067, 0
  %v3340 = vsel %vm660, %v3071, 0
  %v3343 = vsel %vm660, %v3075, 0
  %v3346 = vsel %vm660, %v3079, 0
  %v3349 = vsel %vm660, %v3083, 0
  %v3352 = vsel %vm660, %v3087, 0
  %v3355 = vsel %vm660, %v3091, 0
  %v3358 = vsel %vm660, %v3095, 0
  %3360 = vmatprep.subr.bf16.mxu0 0
  %3361 = vmatpush1.bf16.msra.mxu0 %v3265
  %3362 = vmatprep.subr.bf16.mxu0 0
  %3363 = vmatpush1.bf16.msra.mxu0 %v3264
  %3364 = vmatprep.subr.bf16.mxu0 0
  %3365 = vmatpush1.bf16.msra.mxu0 %v3263
  %3366 = vmatprep.subr.bf16.mxu0 0
  %3367 = vmatpush1.bf16.msra.mxu0 %v3262
  %3368 = vmatprep.subr.bf16.mxu0 0
  %3369 = vmatpush1.bf16.msra.mxu0 %v3261
  %3370 = vmatprep.subr.bf16.mxu0 0
  %3371 = vmatpush1.bf16.msra.mxu0 %v3260
  %3372 = vmatprep.subr.bf16.mxu0 0
  %3373 = vmatpush1.bf16.msra.mxu0 %v3259
  %3374 = vmatprep.subr.bf16.mxu0 0
  %3375 = vmatpush1.bf16.msra.mxu0 %v3258
  %3376 = vmatprep.subr.bf16.mxu0 0
  %3377 = vmatpush2.bf16.msra.mxu0 %v3273
  %3378 = vmatprep.subr.bf16.mxu0 0
  %3379 = vmatpush2.bf16.msra.mxu0 %v3272
  %3380 = vmatprep.subr.bf16.mxu0 0
  %3381 = vmatpush2.bf16.msra.mxu0 %v3271
  %3382 = vmatprep.subr.bf16.mxu0 0
  %3383 = vmatpush2.bf16.msra.mxu0 %v3270
  %3384 = vmatprep.subr.bf16.mxu0 0
  %3385 = vmatpush2.bf16.msra.mxu0 %v3269
  %3386 = vmatprep.subr.bf16.mxu0 0
  %3387 = vmatpush2.bf16.msra.mxu0 %v3268
  %3388 = vmatprep.subr.bf16.mxu0 0
  %3389 = vmatpush2.bf16.msra.mxu0 %v3267
  %3390 = vmatprep.subr.bf16.mxu0 0
  %3391 = vmatpush2.bf16.msra.mxu0 %v3266
  %3392 = vmatprep.mubr.bf16.mxu0 %v3041
  %3393 = vmatmul.mubr.bf16.gmra.mxu0 %v3040
  %v3394 = vpop.f32.mrf.mxu0
  %v3395 = vadd.f32 0.0, %v3394
  %v3396 = vpop.f32.mrf.mxu0
  %v3397 = vpop.f32.mrf.mxu0
  %v3398 = vadd.f32 0.0, %v3397
  %v3399 = vpop.f32.mrf.mxu0
  %3400 = vmatprep.mubr.bf16.mxu0 %v3045
  %3401 = vmatmul.mubr.bf16.gmra.mxu0 %v3044
  %v3402 = vpop.f32.mrf.mxu0
  %v3403 = vadd.f32 0.0, %v3402
  %v3404 = vpop.f32.mrf.mxu0
  %v3405 = vpop.f32.mrf.mxu0
  %v3406 = vadd.f32 0.0, %v3405
  %v3407 = vpop.f32.mrf.mxu0
  %3408 = vmatprep.mubr.bf16.mxu0 %v3049
  %3409 = vmatmul.mubr.bf16.gmra.mxu0 %v3048
  %v3410 = vpop.f32.mrf.mxu0
  %v3411 = vadd.f32 0.0, %v3410
  %v3412 = vpop.f32.mrf.mxu0
  %v3413 = vpop.f32.mrf.mxu0
  %v3414 = vadd.f32 0.0, %v3413
  %v3415 = vpop.f32.mrf.mxu0
  %3416 = vmatprep.mubr.bf16.mxu0 %v3053
  %3417 = vmatmul.mubr.bf16.gmra.mxu0 %v3052
  %v3418 = vpop.f32.mrf.mxu0
  %v3419 = vadd.f32 0.0, %v3418
  %v3420 = vpop.f32.mrf.mxu0
  %v3421 = vpop.f32.mrf.mxu0
  %v3422 = vadd.f32 0.0, %v3421
  %v3423 = vpop.f32.mrf.mxu0
  %3424 = vmatprep.mubr.bf16.mxu0 %v3057
  %3425 = vmatmul.mubr.bf16.gmra.mxu0 %v3056
  %v3426 = vpop.f32.mrf.mxu0
  %v3427 = vadd.f32 0.0, %v3426
  %v3428 = vpop.f32.mrf.mxu0
  %v3429 = vpop.f32.mrf.mxu0
  %v3430 = vadd.f32 0.0, %v3429
  %v3431 = vpop.f32.mrf.mxu0
  %3432 = vmatprep.mubr.bf16.mxu0 %v3061
  %3433 = vmatmul.mubr.bf16.gmra.mxu0 %v3060
  %v3434 = vpop.f32.mrf.mxu0
  %v3435 = vadd.f32 0.0, %v3434
  %v3436 = vpop.f32.mrf.mxu0
  %v3437 = vpop.f32.mrf.mxu0
  %v3438 = vadd.f32 0.0, %v3437
  %v3439 = vpop.f32.mrf.mxu0
  %3440 = vmatprep.mubr.bf16.mxu0 %v3065
  %3441 = vmatmul.mubr.bf16.gmra.mxu0 %v3064
  %v3442 = vpop.f32.mrf.mxu0
  %v3443 = vadd.f32 0.0, %v3442
  %v3444 = vpop.f32.mrf.mxu0
  %v3445 = vpop.f32.mrf.mxu0
  %v3446 = vadd.f32 0.0, %v3445
  %v3447 = vpop.f32.mrf.mxu0
  %3448 = vmatprep.mubr.bf16.mxu0 %v3069
  %3449 = vmatmul.mubr.bf16.gmra.mxu0 %v3068
  %v3450 = vpop.f32.mrf.mxu0
  %v3451 = vadd.f32 0.0, %v3450
  %v3452 = vpop.f32.mrf.mxu0
  %v3453 = vpop.f32.mrf.mxu0
  %v3454 = vadd.f32 0.0, %v3453
  %v3455 = vpop.f32.mrf.mxu0
  %3456 = vmatprep.mubr.bf16.mxu0 %v3073
  %3457 = vmatmul.mubr.bf16.gmra.mxu0 %v3072
  %v3458 = vpop.f32.mrf.mxu0
  %v3459 = vadd.f32 0.0, %v3458
  %v3460 = vpop.f32.mrf.mxu0
  %v3461 = vpop.f32.mrf.mxu0
  %v3462 = vadd.f32 0.0, %v3461
  %v3463 = vpop.f32.mrf.mxu0
  %3464 = vmatprep.mubr.bf16.mxu0 %v3077
  %3465 = vmatmul.mubr.bf16.gmra.mxu0 %v3076
  %v3466 = vpop.f32.mrf.mxu0
  %v3467 = vadd.f32 0.0, %v3466
  %v3468 = vpop.f32.mrf.mxu0
  %v3469 = vpop.f32.mrf.mxu0
  %v3470 = vadd.f32 0.0, %v3469
  %v3471 = vpop.f32.mrf.mxu0
  %3472 = vmatprep.mubr.bf16.mxu0 %v3081
  %3473 = vmatmul.mubr.bf16.gmra.mxu0 %v3080
  %v3474 = vpop.f32.mrf.mxu0
  %v3475 = vadd.f32 0.0, %v3474
  %v3476 = vpop.f32.mrf.mxu0
  %v3477 = vpop.f32.mrf.mxu0
  %v3478 = vadd.f32 0.0, %v3477
  %v3479 = vpop.f32.mrf.mxu0
  %3480 = vmatprep.mubr.bf16.mxu0 %v3085
  %3481 = vmatmul.mubr.bf16.gmra.mxu0 %v3084
  %v3482 = vpop.f32.mrf.mxu0
  %v3483 = vadd.f32 0.0, %v3482
  %v3484 = vpop.f32.mrf.mxu0
  %v3485 = vpop.f32.mrf.mxu0
  %v3486 = vadd.f32 0.0, %v3485
  %v3487 = vpop.f32.mrf.mxu0
  %3488 = vmatprep.mubr.bf16.mxu0 %v3089
  %3489 = vmatmul.mubr.bf16.gmra.mxu0 %v3088
  %v3490 = vpop.f32.mrf.mxu0
  %v3491 = vadd.f32 0.0, %v3490
  %v3492 = vpop.f32.mrf.mxu0
  %v3493 = vpop.f32.mrf.mxu0
  %v3494 = vadd.f32 0.0, %v3493
  %v3495 = vpop.f32.mrf.mxu0
  %3496 = vmatprep.mubr.bf16.mxu0 %v3093
  %3497 = vmatmul.mubr.bf16.gmra.mxu0 %v3092
  %v3498 = vpop.f32.mrf.mxu0
  %v3499 = vadd.f32 0.0, %v3498
  %v3500 = vpop.f32.mrf.mxu0
  %v3501 = vpop.f32.mrf.mxu0
  %v3502 = vadd.f32 0.0, %v3501
  %v3503 = vpop.f32.mrf.mxu0
  %3504 = vdwg.mxu0
  %3505 = vmatprep.subr.bf16.mxu0 0
  %3506 = vmatpush1.bf16.msra.mxu0 %v3281
  %3507 = vmatprep.subr.bf16.mxu0 0
  %3508 = vmatpush1.bf16.msra.mxu0 %v3280
  %3509 = vmatprep.subr.bf16.mxu0 0
  %3510 = vmatpush1.bf16.msra.mxu0 %v3279
  %3511 = vmatprep.subr.bf16.mxu0 0
  %3512 = vmatpush1.bf16.msra.mxu0 %v3278
  %3513 = vmatprep.subr.bf16.mxu0 0
  %3514 = vmatpush1.bf16.msra.mxu0 %v3277
  %3515 = vmatprep.subr.bf16.mxu0 0
  %3516 = vmatpush1.bf16.msra.mxu0 %v3276
  %3517 = vmatprep.subr.bf16.mxu0 0
  %3518 = vmatpush1.bf16.msra.mxu0 %v3275
  %3519 = vmatprep.subr.bf16.mxu0 0
  %3520 = vmatpush1.bf16.msra.mxu0 %v3274
  %3521 = vmatprep.subr.bf16.mxu0 0
  %3522 = vmatpush2.bf16.msra.mxu0 0
  %3523 = vmatprep.subr.bf16.mxu0 0
  %3524 = vmatpush2.bf16.msra.mxu0 0
  %3525 = vmatprep.subr.bf16.mxu0 0
  %3526 = vmatpush2.bf16.msra.mxu0 %v3287
  %3527 = vmatprep.subr.bf16.mxu0 0
  %3528 = vmatpush2.bf16.msra.mxu0 %v3286
  %3529 = vmatprep.subr.bf16.mxu0 0
  %3530 = vmatpush2.bf16.msra.mxu0 %v3285
  %3531 = vmatprep.subr.bf16.mxu0 0
  %3532 = vmatpush2.bf16.msra.mxu0 %v3284
  %3533 = vmatprep.subr.bf16.mxu0 0
  %3534 = vmatpush2.bf16.msra.mxu0 %v3283
  %3535 = vmatprep.subr.bf16.mxu0 0
  %3536 = vmatpush2.bf16.msra.mxu0 %v3282
  %3537 = vmatprep.mubr.bf16.mxu0 %v3319
  %3538 = vmatmul.mubr.bf16.gmra.mxu0 %v3042
  %v3539 = vpop.f32.mrf.mxu0
  %v3540 = vadd.f32 %v3395, %v3539
  %v3541 = vpop.f32.mrf.mxu0
  %v3542 = vpop.f32.mrf.mxu0
  %v3543 = vadd.f32 %v3398, %v3542
  %v3544 = vpop.f32.mrf.mxu0
  %3545 = vmatprep.mubr.bf16.mxu0 %v3322
  %3546 = vmatmul.mubr.bf16.gmra.mxu0 %v3046
  %v3547 = vpop.f32.mrf.mxu0
  %v3548 = vadd.f32 %v3403, %v3547
  %v3549 = vpop.f32.mrf.mxu0
  %v3550 = vpop.f32.mrf.mxu0
  %v3551 = vadd.f32 %v3406, %v3550
  %v3552 = vpop.f32.mrf.mxu0
  %3553 = vmatprep.mubr.bf16.mxu0 %v3325
  %3554 = vmatmul.mubr.bf16.gmra.mxu0 %v3050
  %v3555 = vpop.f32.mrf.mxu0
  %v3556 = vadd.f32 %v3411, %v3555
  %v3557 = vpop.f32.mrf.mxu0
  %v3558 = vpop.f32.mrf.mxu0
  %v3559 = vadd.f32 %v3414, %v3558
  %v3560 = vpop.f32.mrf.mxu0
  %3561 = vmatprep.mubr.bf16.mxu0 %v3328
  %3562 = vmatmul.mubr.bf16.gmra.mxu0 %v3054
  %v3563 = vpop.f32.mrf.mxu0
  %v3564 = vadd.f32 %v3419, %v3563
  %v3565 = vpop.f32.mrf.mxu0
  %v3566 = vpop.f32.mrf.mxu0
  %v3567 = vadd.f32 %v3422, %v3566
  %v3568 = vpop.f32.mrf.mxu0
  %3569 = vmatprep.mubr.bf16.mxu0 %v3331
  %3570 = vmatmul.mubr.bf16.gmra.mxu0 %v3058
  %v3571 = vpop.f32.mrf.mxu0
  %v3572 = vadd.f32 %v3427, %v3571
  %v3573 = vpop.f32.mrf.mxu0
  %v3574 = vpop.f32.mrf.mxu0
  %v3575 = vadd.f32 %v3430, %v3574
  %v3576 = vpop.f32.mrf.mxu0
  %3577 = vmatprep.mubr.bf16.mxu0 %v3334
  %3578 = vmatmul.mubr.bf16.gmra.mxu0 %v3062
  %v3579 = vpop.f32.mrf.mxu0
  %v3580 = vadd.f32 %v3435, %v3579
  %v3581 = vpop.f32.mrf.mxu0
  %v3582 = vpop.f32.mrf.mxu0
  %v3583 = vadd.f32 %v3438, %v3582
  %v3584 = vpop.f32.mrf.mxu0
  %3585 = vmatprep.mubr.bf16.mxu0 %v3337
  %3586 = vmatmul.mubr.bf16.gmra.mxu0 %v3066
  %v3587 = vpop.f32.mrf.mxu0
  %v3588 = vadd.f32 %v3443, %v3587
  %v3589 = vpop.f32.mrf.mxu0
  %v3590 = vpop.f32.mrf.mxu0
  %v3591 = vadd.f32 %v3446, %v3590
  %v3592 = vpop.f32.mrf.mxu0
  %3593 = vmatprep.mubr.bf16.mxu0 %v3340
  %3594 = vmatmul.mubr.bf16.gmra.mxu0 %v3070
  %v3595 = vpop.f32.mrf.mxu0
  %v3596 = vadd.f32 %v3451, %v3595
  %v3597 = vpop.f32.mrf.mxu0
  %v3598 = vpop.f32.mrf.mxu0
  %v3599 = vadd.f32 %v3454, %v3598
  %v3600 = vpop.f32.mrf.mxu0
  %3601 = vmatprep.mubr.bf16.mxu0 %v3343
  %3602 = vmatmul.mubr.bf16.gmra.mxu0 %v3074
  %v3603 = vpop.f32.mrf.mxu0
  %v3604 = vadd.f32 %v3459, %v3603
  %v3605 = vpop.f32.mrf.mxu0
  %v3606 = vpop.f32.mrf.mxu0
  %v3607 = vadd.f32 %v3462, %v3606
  %v3608 = vpop.f32.mrf.mxu0
  %3609 = vmatprep.mubr.bf16.mxu0 %v3346
  %3610 = vmatmul.mubr.bf16.gmra.mxu0 %v3078
  %v3611 = vpop.f32.mrf.mxu0
  %v3612 = vadd.f32 %v3467, %v3611
  %v3613 = vpop.f32.mrf.mxu0
  %v3614 = vpop.f32.mrf.mxu0
  %v3615 = vadd.f32 %v3470, %v3614
  %v3616 = vpop.f32.mrf.mxu0
  %3617 = vmatprep.mubr.bf16.mxu0 %v3349
  %3618 = vmatmul.mubr.bf16.gmra.mxu0 %v3082
  %v3619 = vpop.f32.mrf.mxu0
  %v3620 = vadd.f32 %v3475, %v3619
  %v3621 = vpop.f32.mrf.mxu0
  %v3622 = vpop.f32.mrf.mxu0
  %v3623 = vadd.f32 %v3478, %v3622
  %v3624 = vpop.f32.mrf.mxu0
  %3625 = vmatprep.mubr.bf16.mxu0 %v3352
  %3626 = vmatmul.mubr.bf16.gmra.mxu0 %v3086
  %v3627 = vpop.f32.mrf.mxu0
  %v3628 = vadd.f32 %v3483, %v3627
  %v3629 = vpop.f32.mrf.mxu0
  %v3630 = vpop.f32.mrf.mxu0
  %v3631 = vadd.f32 %v3486, %v3630
  %v3632 = vpop.f32.mrf.mxu0
  %3633 = vmatprep.mubr.bf16.mxu0 %v3355
  %3634 = vmatmul.mubr.bf16.gmra.mxu0 %v3090
  %v3635 = vpop.f32.mrf.mxu0
  %v3636 = vadd.f32 %v3491, %v3635
  %v3637 = vpop.f32.mrf.mxu0
  %v3638 = vpop.f32.mrf.mxu0
  %v3639 = vadd.f32 %v3494, %v3638
  %v3640 = vpop.f32.mrf.mxu0
  %3641 = vmatprep.mubr.bf16.mxu0 %v3358
  %3642 = vmatmul.mubr.bf16.gmra.mxu0 %v3094
  %v3643 = vpop.f32.mrf.mxu0
  %v3644 = vadd.f32 %v3499, %v3643
  %v3645 = vpop.f32.mrf.mxu0
  %v3646 = vpop.f32.mrf.mxu0
  %v3647 = vadd.f32 %v3502, %v3646
  %v3648 = vpop.f32.mrf.mxu0
  %3649 = vdwg.mxu0
  %v3650 = vld [vmem:[%s993] sm:$0xf]
  %v3651 = vld [vmem:[%s993 + $0x4] sm:$0xf]
  %v3652 = vld [vmem:[%s993 + $0x8] sm:$0xf]
  %v3653 = vld [vmem:[%s993 + $0xc] sm:$0xf]
  %v3654 = vld [vmem:[%s993 + $0x10] sm:$0xf]
  %v3655 = vld [vmem:[%s993 + $0x14] sm:$0xf]
  %v3656 = vld [vmem:[%s993 + $0x18] sm:$0xf]
  %v3657 = vld [vmem:[%s993 + $0x1c] sm:$0xf]
  %v3658 = vld [vmem:[%s993 + $0x20] sm:$0xf]
  %v3659 = vld [vmem:[%s993 + $0x24] sm:$0xf]
  %v3660 = vld [vmem:[%s993 + $0x28] sm:$0xf]
  %v3661 = vld [vmem:[%s993 + $0x2c] sm:$0xf]
  %v3662 = vld [vmem:[%s993 + $0x30] sm:$0xf]
  %v3663 = vld [vmem:[%s993 + $0x34] sm:$0xf]
  %v3664 = vld [vmem:[%s993 + $0x38] sm:$0xf]
  %v3665 = vld [vmem:[%s993 + $0x3c] sm:$0xf]
  %v3666 = vld [vmem:[%s993 + $0x40] sm:$0xf]
  %v3667 = vld [vmem:[%s993 + $0x44] sm:$0xf]
  %v3668 = vld [vmem:[%s993 + $0x48] sm:$0xf]
  %v3669 = vld [vmem:[%s993 + $0x4c] sm:$0xf]
  %v3670 = vld [vmem:[%s993 + $0x50] sm:$0xf]
  %v3671 = vld [vmem:[%s993 + $0x54] sm:$0xf]
  %v3672 = vld [vmem:[%s993 + $0x58] sm:$0xf]
  %v3673 = vld [vmem:[%s993 + $0x5c] sm:$0xf]
  %v3674 = vld [vmem:[%s993 + $0x60] sm:$0xf]
  %v3675 = vld [vmem:[%s993 + $0x64] sm:$0xf]
  %v3676 = vld [vmem:[%s993 + $0x68] sm:$0xf]
  %v3677 = vld [vmem:[%s993 + $0x6c] sm:$0xf]
  %v3678 = vld [vmem:[%s993 + $0x70] sm:$0xf]
  %v3679 = vld [vmem:[%s993 + $0x74] sm:$0xf]
  %v3680 = vld [vmem:[%s993 + $0x78] sm:$0xf]
  %v3681 = vld [vmem:[%s993 + $0x7c] sm:$0xf]
  %v3682 = vld [vmem:[%s993 + $0x80] sm:$0xf]
  %v3683 = vld [vmem:[%s993 + $0x84] sm:$0xf]
  %v3684 = vld [vmem:[%s993 + $0x88] sm:$0xf]
  %v3685 = vld [vmem:[%s993 + $0x8c] sm:$0xf]
  %v3686 = vld [vmem:[%s993 + $0x90] sm:$0xf]
  %v3687 = vld [vmem:[%s993 + $0x94] sm:$0xf]
  %v3688 = vld [vmem:[%s993 + $0x98] sm:$0xf]
  %v3689 = vld [vmem:[%s993 + $0x9c] sm:$0xf]
  %v3690 = vld [vmem:[%s993 + $0xa0] sm:$0xf]
  %v3691 = vld [vmem:[%s993 + $0xa4] sm:$0xf]
  %v3692 = vld [vmem:[%s993 + $0xa8] sm:$0xf]
  %v3693 = vld [vmem:[%s993 + $0xac] sm:$0xf]
  %v3694 = vld [vmem:[%s993 + $0xb0] sm:$0xf]
  %v3695 = vld [vmem:[%s993 + $0xb4] sm:$0xf]
  %v3696 = vld [vmem:[%s993 + $0xb8] sm:$0xf]
  %v3697 = vld [vmem:[%s993 + $0xbc] sm:$0xf]
  %v3698 = vld [vmem:[%s993 + $0xc0] sm:$0xf]
  %v3699 = vld [vmem:[%s993 + $0xc4] sm:$0xf]
  %v3700 = vld [vmem:[%s993 + $0xc8] sm:$0xf]
  %v3701 = vld [vmem:[%s993 + $0xcc] sm:$0xf]
  %v3702 = vld [vmem:[%s993 + $0xd0] sm:$0xf]
  %v3703 = vld [vmem:[%s993 + $0xd4] sm:$0xf]
  %v3704 = vld [vmem:[%s993 + $0xd8] sm:$0xf]
  %v3705 = vld [vmem:[%s993 + $0xdc] sm:$0xf]
  %v3706 = vld [vmem:[%s993 + $0xe0] sm:$0xf]
  %v3707 = vld [vmem:[%s993 + $0xe4] sm:$0xf]
  %v3708 = vld [vmem:[%s993 + $0xe8] sm:$0xf]
  %v3709 = vld [vmem:[%s993 + $0xec] sm:$0xf]
  %v3770 = vunpack.c.l.b16 %v3650
  %v3771 = vunpack.c.l.b16 %v3651
  %v3772 = vunpack.c.l.b16 %v3652
  %v3773 = vunpack.c.l.b16 %v3653
  %v3774 = vunpack.c.l.b16 %v3654
  %v3775 = vunpack.c.l.b16 %v3655
  %v3776 = vunpack.c.l.b16 %v3656
  %v3777 = vunpack.c.l.b16 %v3657
  %v3778 = vunpack.c.l.b16 %v3658
  %v3779 = vunpack.c.l.b16 %v3659
  %v3780 = vunpack.c.l.b16 %v3660
  %v3781 = vunpack.c.l.b16 %v3661
  %v3782 = vunpack.c.l.b16 %v3662
  %v3783 = vunpack.c.l.b16 %v3663
  %v3784 = vunpack.c.l.b16 %v3664
  %v3785 = vunpack.c.l.b16 %v3665
  %v3786 = vunpack.c.l.b16 %v3666
  %v3787 = vunpack.c.l.b16 %v3667
  %v3788 = vunpack.c.l.b16 %v3668
  %v3789 = vunpack.c.l.b16 %v3669
  %v3790 = vunpack.c.l.b16 %v3670
  %v3791 = vunpack.c.l.b16 %v3671
  %v3792 = vunpack.c.l.b16 %v3672
  %v3793 = vunpack.c.l.b16 %v3673
  %v3794 = vunpack.c.l.b16 %v3674
  %v3795 = vunpack.c.l.b16 %v3675
  %v3796 = vunpack.c.l.b16 %v3676
  %v3797 = vunpack.c.l.b16 %v3677
  %v3798 = vunpack.c.l.b16 %v3678
  %v3799 = vunpack.c.l.b16 %v3679
  %v3800 = vunpack.c.l.b16 %v3680
  %v3801 = vunpack.c.l.b16 %v3681
  %v3802 = vunpack.c.l.b16 %v3682
  %v3803 = vunpack.c.l.b16 %v3683
  %v3804 = vunpack.c.l.b16 %v3684
  %v3805 = vunpack.c.l.b16 %v3685
  %v3806 = vunpack.c.l.b16 %v3686
  %v3807 = vunpack.c.l.b16 %v3687
  %v3808 = vunpack.c.l.b16 %v3688
  %v3809 = vunpack.c.l.b16 %v3689
  %v3810 = vunpack.c.l.b16 %v3690
  %v3811 = vunpack.c.l.b16 %v3691
  %v3812 = vunpack.c.l.b16 %v3692
  %v3813 = vunpack.c.l.b16 %v3693
  %v3814 = vunpack.c.l.b16 %v3694
  %v3815 = vunpack.c.l.b16 %v3695
  %v3816 = vunpack.c.l.b16 %v3696
  %v3817 = vunpack.c.l.b16 %v3697
  %v3818 = vunpack.c.l.b16 %v3698
  %v3819 = vunpack.c.l.b16 %v3699
  %v3820 = vunpack.c.l.b16 %v3700
  %v3821 = vunpack.c.l.b16 %v3701
  %v3822 = vunpack.c.l.b16 %v3702
  %v3823 = vunpack.c.l.b16 %v3703
  %v3824 = vunpack.c.l.b16 %v3704
  %v3825 = vunpack.c.l.b16 %v3705
  %v3826 = vunpack.c.l.b16 %v3706
  %v3827 = vunpack.c.l.b16 %v3707
  %v3828 = vunpack.c.l.b16 %v3708
  %v3829 = vunpack.c.l.b16 %v3709
  %v3830 = vpack.c.b16 %v3771, %v3770
  %v3831 = vpack.c.b16 %v3773, %v3772
  %v3832 = vpack.c.b16 %v3775, %v3774
  %v3833 = vpack.c.b16 %v3777, %v3776
  %v3834 = vpack.c.b16 %v3779, %v3778
  %v3835 = vpack.c.b16 %v3781, %v3780
  %v3836 = vpack.c.b16 %v3783, %v3782
  %v3837 = vpack.c.b16 %v3785, %v3784
  %v3838 = vpack.c.b16 %v3787, %v3786
  %v3839 = vpack.c.b16 %v3789, %v3788
  %v3840 = vpack.c.b16 %v3791, %v3790
  %v3841 = vpack.c.b16 %v3793, %v3792
  %v3842 = vpack.c.b16 %v3795, %v3794
  %v3843 = vpack.c.b16 %v3797, %v3796
  %v3844 = vpack.c.b16 %v3799, %v3798
  %v3845 = vpack.c.b16 %v3801, %v3800
  %v3846 = vpack.c.b16 %v3803, %v3802
  %v3847 = vpack.c.b16 %v3805, %v3804
  %v3848 = vpack.c.b16 %v3807, %v3806
  %v3849 = vpack.c.b16 %v3809, %v3808
  %v3850 = vpack.c.b16 %v3811, %v3810
  %v3851 = vpack.c.b16 %v3813, %v3812
  %v3852 = vpack.c.b16 %v3815, %v3814
  %v3853 = vpack.c.b16 %v3817, %v3816
  %v3854 = vpack.c.b16 %v3819, %v3818
  %v3855 = vpack.c.b16 %v3821, %v3820
  %v3856 = vpack.c.b16 %v3823, %v3822
  %v3857 = vpack.c.b16 %v3825, %v3824
  %v3858 = vpack.c.b16 %v3827, %v3826
  %v3859 = vpack.c.b16 %v3829, %v3828
  %3890 = vmatprep.subr.bf16.mxu0 0
  %3891 = vmatpush1.bf16.msra.mxu0 %v3837
  %3892 = vmatprep.subr.bf16.mxu0 0
  %3893 = vmatpush1.bf16.msra.mxu0 %v3836
  %3894 = vmatprep.subr.bf16.mxu0 0
  %3895 = vmatpush1.bf16.msra.mxu0 %v3835
  %3896 = vmatprep.subr.bf16.mxu0 0
  %3897 = vmatpush1.bf16.msra.mxu0 %v3834
  %3898 = vmatprep.subr.bf16.mxu0 0
  %3899 = vmatpush1.bf16.msra.mxu0 %v3833
  %3900 = vmatprep.subr.bf16.mxu0 0
  %3901 = vmatpush1.bf16.msra.mxu0 %v3832
  %3902 = vmatprep.subr.bf16.mxu0 0
  %3903 = vmatpush1.bf16.msra.mxu0 %v3831
  %3904 = vmatprep.subr.bf16.mxu0 0
  %3905 = vmatpush1.bf16.msra.mxu0 %v3830
  %3906 = vmatprep.subr.bf16.mxu0 0
  %3907 = vmatpush2.bf16.msra.mxu0 %v3845
  %3908 = vmatprep.subr.bf16.mxu0 0
  %3909 = vmatpush2.bf16.msra.mxu0 %v3844
  %3910 = vmatprep.subr.bf16.mxu0 0
  %3911 = vmatpush2.bf16.msra.mxu0 %v3843
  %3912 = vmatprep.subr.bf16.mxu0 0
  %3913 = vmatpush2.bf16.msra.mxu0 %v3842
  %3914 = vmatprep.subr.bf16.mxu0 0
  %3915 = vmatpush2.bf16.msra.mxu0 %v3841
  %3916 = vmatprep.subr.bf16.mxu0 0
  %3917 = vmatpush2.bf16.msra.mxu0 %v3840
  %3918 = vmatprep.subr.bf16.mxu0 0
  %3919 = vmatpush2.bf16.msra.mxu0 %v3839
  %3920 = vmatprep.subr.bf16.mxu0 0
  %3921 = vmatpush2.bf16.msra.mxu0 %v3838
  %3922 = vmatprep.mubr.bf16.mxu0 %v3041
  %3923 = vmatmul.mubr.bf16.gmra.mxu0 %v3040
  %v3924 = vpop.f32.mrf.mxu0
  %v3925 = vadd.f32 0.0, %v3924
  %v3926 = vpop.f32.mrf.mxu0
  %v3927 = vpop.f32.mrf.mxu0
  %v3928 = vadd.f32 0.0, %v3927
  %v3929 = vpop.f32.mrf.mxu0
  %3930 = vmatprep.mubr.bf16.mxu0 %v3045
  %3931 = vmatmul.mubr.bf16.gmra.mxu0 %v3044
  %v3932 = vpop.f32.mrf.mxu0
  %v3933 = vadd.f32 0.0, %v3932
  %v3934 = vpop.f32.mrf.mxu0
  %v3935 = vpop.f32.mrf.mxu0
  %v3936 = vadd.f32 0.0, %v3935
  %v3937 = vpop.f32.mrf.mxu0
  %3938 = vmatprep.mubr.bf16.mxu0 %v3049
  %3939 = vmatmul.mubr.bf16.gmra.mxu0 %v3048
  %v3940 = vpop.f32.mrf.mxu0
  %v3941 = vadd.f32 0.0, %v3940
  %v3942 = vpop.f32.mrf.mxu0
  %v3943 = vpop.f32.mrf.mxu0
  %v3944 = vadd.f32 0.0, %v3943
  %v3945 = vpop.f32.mrf.mxu0
  %3946 = vmatprep.mubr.bf16.mxu0 %v3053
  %3947 = vmatmul.mubr.bf16.gmra.mxu0 %v3052
  %v3948 = vpop.f32.mrf.mxu0
  %v3949 = vadd.f32 0.0, %v3948
  %v3950 = vpop.f32.mrf.mxu0
  %v3951 = vpop.f32.mrf.mxu0
  %v3952 = vadd.f32 0.0, %v3951
  %v3953 = vpop.f32.mrf.mxu0
  %3954 = vmatprep.mubr.bf16.mxu0 %v3057
  %3955 = vmatmul.mubr.bf16.gmra.mxu0 %v3056
  %v3956 = vpop.f32.mrf.mxu0
  %v3957 = vadd.f32 0.0, %v3956
  %v3958 = vpop.f32.mrf.mxu0
  %v3959 = vpop.f32.mrf.mxu0
  %v3960 = vadd.f32 0.0, %v3959
  %v3961 = vpop.f32.mrf.mxu0
  %3962 = vmatprep.mubr.bf16.mxu0 %v3061
  %3963 = vmatmul.mubr.bf16.gmra.mxu0 %v3060
  %v3964 = vpop.f32.mrf.mxu0
  %v3965 = vadd.f32 0.0, %v3964
  %v3966 = vpop.f32.mrf.mxu0
  %v3967 = vpop.f32.mrf.mxu0
  %v3968 = vadd.f32 0.0, %v3967
  %v3969 = vpop.f32.mrf.mxu0
  %3970 = vmatprep.mubr.bf16.mxu0 %v3065
  %3971 = vmatmul.mubr.bf16.gmra.mxu0 %v3064
  %v3972 = vpop.f32.mrf.mxu0
  %v3973 = vadd.f32 0.0, %v3972
  %v3974 = vpop.f32.mrf.mxu0
  %v3975 = vpop.f32.mrf.mxu0
  %v3976 = vadd.f32 0.0, %v3975
  %v3977 = vpop.f32.mrf.mxu0
  %3978 = vmatprep.mubr.bf16.mxu0 %v3069
  %3979 = vmatmul.mubr.bf16.gmra.mxu0 %v3068
  %v3980 = vpop.f32.mrf.mxu0
  %v3981 = vadd.f32 0.0, %v3980
  %v3982 = vpop.f32.mrf.mxu0
  %v3983 = vpop.f32.mrf.mxu0
  %v3984 = vadd.f32 0.0, %v3983
  %v3985 = vpop.f32.mrf.mxu0
  %3986 = vmatprep.mubr.bf16.mxu0 %v3073
  %3987 = vmatmul.mubr.bf16.gmra.mxu0 %v3072
  %v3988 = vpop.f32.mrf.mxu0
  %v3989 = vadd.f32 0.0, %v3988
  %v3990 = vpop.f32.mrf.mxu0
  %v3991 = vpop.f32.mrf.mxu0
  %v3992 = vadd.f32 0.0, %v3991
  %v3993 = vpop.f32.mrf.mxu0
  %3994 = vmatprep.mubr.bf16.mxu0 %v3077
  %3995 = vmatmul.mubr.bf16.gmra.mxu0 %v3076
  %v3996 = vpop.f32.mrf.mxu0
  %v3997 = vadd.f32 0.0, %v3996
  %v3998 = vpop.f32.mrf.mxu0
  %v3999 = vpop.f32.mrf.mxu0
  %v4000 = vadd.f32 0.0, %v3999
  %v4001 = vpop.f32.mrf.mxu0
  %4002 = vmatprep.mubr.bf16.mxu0 %v3081
  %4003 = vmatmul.mubr.bf16.gmra.mxu0 %v3080
  %v4004 = vpop.f32.mrf.mxu0
  %v4005 = vadd.f32 0.0, %v4004
  %v4006 = vpop.f32.mrf.mxu0
  %v4007 = vpop.f32.mrf.mxu0
  %v4008 = vadd.f32 0.0, %v4007
  %v4009 = vpop.f32.mrf.mxu0
  %4010 = vmatprep.mubr.bf16.mxu0 %v3085
  %4011 = vmatmul.mubr.bf16.gmra.mxu0 %v3084
  %v4012 = vpop.f32.mrf.mxu0
  %v4013 = vadd.f32 0.0, %v4012
  %v4014 = vpop.f32.mrf.mxu0
  %v4015 = vpop.f32.mrf.mxu0
  %v4016 = vadd.f32 0.0, %v4015
  %v4017 = vpop.f32.mrf.mxu0
  %4018 = vmatprep.mubr.bf16.mxu0 %v3089
  %4019 = vmatmul.mubr.bf16.gmra.mxu0 %v3088
  %v4020 = vpop.f32.mrf.mxu0
  %v4021 = vadd.f32 0.0, %v4020
  %v4022 = vpop.f32.mrf.mxu0
  %v4023 = vpop.f32.mrf.mxu0
  %v4024 = vadd.f32 0.0, %v4023
  %v4025 = vpop.f32.mrf.mxu0
  %4026 = vmatprep.mubr.bf16.mxu0 %v3093
  %4027 = vmatmul.mubr.bf16.gmra.mxu0 %v3092
  %v4028 = vpop.f32.mrf.mxu0
  %v4029 = vadd.f32 0.0, %v4028
  %v4030 = vpop.f32.mrf.mxu0
  %v4031 = vpop.f32.mrf.mxu0
  %v4032 = vadd.f32 0.0, %v4031
  %v4033 = vpop.f32.mrf.mxu0
  %4034 = vdwg.mxu0
  %4035 = vmatprep.subr.bf16.mxu0 0
  %4036 = vmatpush1.bf16.msra.mxu0 %v3853
  %4037 = vmatprep.subr.bf16.mxu0 0
  %4038 = vmatpush1.bf16.msra.mxu0 %v3852
  %4039 = vmatprep.subr.bf16.mxu0 0
  %4040 = vmatpush1.bf16.msra.mxu0 %v3851
  %4041 = vmatprep.subr.bf16.mxu0 0
  %4042 = vmatpush1.bf16.msra.mxu0 %v3850
  %4043 = vmatprep.subr.bf16.mxu0 0
  %4044 = vmatpush1.bf16.msra.mxu0 %v3849
  %4045 = vmatprep.subr.bf16.mxu0 0
  %4046 = vmatpush1.bf16.msra.mxu0 %v3848
  %4047 = vmatprep.subr.bf16.mxu0 0
  %4048 = vmatpush1.bf16.msra.mxu0 %v3847
  %4049 = vmatprep.subr.bf16.mxu0 0
  %4050 = vmatpush1.bf16.msra.mxu0 %v3846
  %4051 = vmatprep.subr.bf16.mxu0 0
  %4052 = vmatpush2.bf16.msra.mxu0 0
  %4053 = vmatprep.subr.bf16.mxu0 0
  %4054 = vmatpush2.bf16.msra.mxu0 0
  %4055 = vmatprep.subr.bf16.mxu0 0
  %4056 = vmatpush2.bf16.msra.mxu0 %v3859
  %4057 = vmatprep.subr.bf16.mxu0 0
  %4058 = vmatpush2.bf16.msra.mxu0 %v3858
  %4059 = vmatprep.subr.bf16.mxu0 0
  %4060 = vmatpush2.bf16.msra.mxu0 %v3857
  %4061 = vmatprep.subr.bf16.mxu0 0
  %4062 = vmatpush2.bf16.msra.mxu0 %v3856
  %4063 = vmatprep.subr.bf16.mxu0 0
  %4064 = vmatpush2.bf16.msra.mxu0 %v3855
  %4065 = vmatprep.subr.bf16.mxu0 0
  %4066 = vmatpush2.bf16.msra.mxu0 %v3854
  %4067 = vmatprep.mubr.bf16.mxu0 %v3319
  %4068 = vmatmul.mubr.bf16.gmra.mxu0 %v3042
  %v4069 = vpop.f32.mrf.mxu0
  %v4070 = vadd.f32 %v3925, %v4069
  %v4071 = vpop.f32.mrf.mxu0
  %v4072 = vpop.f32.mrf.mxu0
  %v4073 = vadd.f32 %v3928, %v4072
  %v4074 = vpop.f32.mrf.mxu0
  %4075 = vmatprep.mubr.bf16.mxu0 %v3322
  %4076 = vmatmul.mubr.bf16.gmra.mxu0 %v3046
  %v4077 = vpop.f32.mrf.mxu0
  %v4078 = vadd.f32 %v3933, %v4077
  %v4079 = vpop.f32.mrf.mxu0
  %v4080 = vpop.f32.mrf.mxu0
  %v4081 = vadd.f32 %v3936, %v4080
  %v4082 = vpop.f32.mrf.mxu0
  %4083 = vmatprep.mubr.bf16.mxu0 %v3325
  %4084 = vmatmul.mubr.bf16.gmra.mxu0 %v3050
  %v4085 = vpop.f32.mrf.mxu0
  %v4086 = vadd.f32 %v3941, %v4085
  %v4087 = vpop.f32.mrf.mxu0
  %v4088 = vpop.f32.mrf.mxu0
  %v4089 = vadd.f32 %v3944, %v4088
  %v4090 = vpop.f32.mrf.mxu0
  %4091 = vmatprep.mubr.bf16.mxu0 %v3328
  %4092 = vmatmul.mubr.bf16.gmra.mxu0 %v3054
  %v4093 = vpop.f32.mrf.mxu0
  %v4094 = vadd.f32 %v3949, %v4093
  %v4095 = vpop.f32.mrf.mxu0
  %v4096 = vpop.f32.mrf.mxu0
  %v4097 = vadd.f32 %v3952, %v4096
  %v4098 = vpop.f32.mrf.mxu0
  %4099 = vmatprep.mubr.bf16.mxu0 %v3331
  %4100 = vmatmul.mubr.bf16.gmra.mxu0 %v3058
  %v4101 = vpop.f32.mrf.mxu0
  %v4102 = vadd.f32 %v3957, %v4101
  %v4103 = vpop.f32.mrf.mxu0
  %v4104 = vpop.f32.mrf.mxu0
  %v4105 = vadd.f32 %v3960, %v4104
  %v4106 = vpop.f32.mrf.mxu0
  %4107 = vmatprep.mubr.bf16.mxu0 %v3334
  %4108 = vmatmul.mubr.bf16.gmra.mxu0 %v3062
  %v4109 = vpop.f32.mrf.mxu0
  %v4110 = vadd.f32 %v3965, %v4109
  %v4111 = vpop.f32.mrf.mxu0
  %v4112 = vpop.f32.mrf.mxu0
  %v4113 = vadd.f32 %v3968, %v4112
  %v4114 = vpop.f32.mrf.mxu0
  %4115 = vmatprep.mubr.bf16.mxu0 %v3337
  %4116 = vmatmul.mubr.bf16.gmra.mxu0 %v3066
  %v4117 = vpop.f32.mrf.mxu0
  %v4118 = vadd.f32 %v3973, %v4117
  %v4119 = vpop.f32.mrf.mxu0
  %v4120 = vpop.f32.mrf.mxu0
  %v4121 = vadd.f32 %v3976, %v4120
  %v4122 = vpop.f32.mrf.mxu0
  %4123 = vmatprep.mubr.bf16.mxu0 %v3340
  %4124 = vmatmul.mubr.bf16.gmra.mxu0 %v3070
  %v4125 = vpop.f32.mrf.mxu0
  %v4126 = vadd.f32 %v3981, %v4125
  %v4127 = vpop.f32.mrf.mxu0
  %v4128 = vpop.f32.mrf.mxu0
  %v4129 = vadd.f32 %v3984, %v4128
  %v4130 = vpop.f32.mrf.mxu0
  %4131 = vmatprep.mubr.bf16.mxu0 %v3343
  %4132 = vmatmul.mubr.bf16.gmra.mxu0 %v3074
  %v4133 = vpop.f32.mrf.mxu0
  %v4134 = vadd.f32 %v3989, %v4133
  %v4135 = vpop.f32.mrf.mxu0
  %v4136 = vpop.f32.mrf.mxu0
  %v4137 = vadd.f32 %v3992, %v4136
  %v4138 = vpop.f32.mrf.mxu0
  %4139 = vmatprep.mubr.bf16.mxu0 %v3346
  %4140 = vmatmul.mubr.bf16.gmra.mxu0 %v3078
  %v4141 = vpop.f32.mrf.mxu0
  %v4142 = vadd.f32 %v3997, %v4141
  %v4143 = vpop.f32.mrf.mxu0
  %v4144 = vpop.f32.mrf.mxu0
  %v4145 = vadd.f32 %v4000, %v4144
  %v4146 = vpop.f32.mrf.mxu0
  %4147 = vmatprep.mubr.bf16.mxu0 %v3349
  %4148 = vmatmul.mubr.bf16.gmra.mxu0 %v3082
  %v4149 = vpop.f32.mrf.mxu0
  %v4150 = vadd.f32 %v4005, %v4149
  %v4151 = vpop.f32.mrf.mxu0
  %v4152 = vpop.f32.mrf.mxu0
  %v4153 = vadd.f32 %v4008, %v4152
  %v4154 = vpop.f32.mrf.mxu0
  %4155 = vmatprep.mubr.bf16.mxu0 %v3352
  %4156 = vmatmul.mubr.bf16.gmra.mxu0 %v3086
  %v4157 = vpop.f32.mrf.mxu0
  %v4158 = vadd.f32 %v4013, %v4157
  %v4159 = vpop.f32.mrf.mxu0
  %v4160 = vpop.f32.mrf.mxu0
  %v4161 = vadd.f32 %v4016, %v4160
  %v4162 = vpop.f32.mrf.mxu0
  %4163 = vmatprep.mubr.bf16.mxu0 %v3355
  %4164 = vmatmul.mubr.bf16.gmra.mxu0 %v3090
  %v4165 = vpop.f32.mrf.mxu0
  %v4166 = vadd.f32 %v4021, %v4165
  %v4167 = vpop.f32.mrf.mxu0
  %v4168 = vpop.f32.mrf.mxu0
  %v4169 = vadd.f32 %v4024, %v4168
  %v4170 = vpop.f32.mrf.mxu0
  %4171 = vmatprep.mubr.bf16.mxu0 %v3358
  %4172 = vmatmul.mubr.bf16.gmra.mxu0 %v3094
  %v4173 = vpop.f32.mrf.mxu0
  %v4174 = vadd.f32 %v4029, %v4173
  %v4175 = vpop.f32.mrf.mxu0
  %v4176 = vpop.f32.mrf.mxu0
  %v4177 = vadd.f32 %v4032, %v4176
  %v4178 = vpop.f32.mrf.mxu0
  %4179 = vdwg.mxu0
  %v4180 = vmax.f32 %v3540, %v4070
  %v4181 = vmax.f32 %v3543, %v4073
  %v4182 = vmax.f32 %v3548, %v4078
  %v4183 = vmax.f32 %v3551, %v4081
  %v4184 = vmax.f32 %v3556, %v4086
  %v4185 = vmax.f32 %v3559, %v4089
  %v4186 = vmax.f32 %v3564, %v4094
  %v4187 = vmax.f32 %v3567, %v4097
  %v4188 = vmax.f32 %v3572, %v4102
  %v4189 = vmax.f32 %v3575, %v4105
  %v4190 = vmax.f32 %v3580, %v4110
  %v4191 = vmax.f32 %v3583, %v4113
  %v4192 = vmax.f32 %v3588, %v4118
  %v4193 = vmax.f32 %v3591, %v4121
  %v4194 = vmax.f32 %v3596, %v4126
  %v4195 = vmax.f32 %v3599, %v4129
  %v4196 = vmax.f32 %v3604, %v4134
  %v4197 = vmax.f32 %v3607, %v4137
  %v4198 = vmax.f32 %v3612, %v4142
  %v4199 = vmax.f32 %v3615, %v4145
  %v4200 = vmax.f32 %v3620, %v4150
  %v4201 = vmax.f32 %v3623, %v4153
  %v4202 = vmax.f32 %v3628, %v4158
  %v4203 = vmax.f32 %v3631, %v4161
  %v4204 = vmax.f32 %v3636, %v4166
  %v4205 = vmax.f32 %v3639, %v4169
  %v4206 = vmax.f32 %v3644, %v4174
  %v4207 = vmax.f32 %v3647, %v4177
  %v4264 = vunpack.c.l.b16 %v2756
  %v4265 = vunpack.c.h.b16 %v2756
  %v4266 = vunpack.c.l.b16 %v2757
  %v4267 = vunpack.c.h.b16 %v2757
  %v4268 = vunpack.c.l.b16 %v2758
  %v4269 = vunpack.c.h.b16 %v2758
  %v4270 = vunpack.c.l.b16 %v2759
  %v4271 = vunpack.c.h.b16 %v2759
  %v4272 = vunpack.c.l.b16 %v2760
  %v4273 = vunpack.c.h.b16 %v2760
  %v4274 = vunpack.c.l.b16 %v2761
  %v4275 = vunpack.c.h.b16 %v2761
  %v4276 = vunpack.c.l.b16 %v2762
  %v4277 = vunpack.c.h.b16 %v2762
  %v4278 = vunpack.c.l.b16 %v2763
  %v4279 = vunpack.c.h.b16 %v2763
  %v4280 = vunpack.c.l.b16 %v2764
  %v4281 = vunpack.c.h.b16 %v2764
  %v4282 = vunpack.c.l.b16 %v2765
  %v4283 = vunpack.c.h.b16 %v2765
  %v4284 = vunpack.c.l.b16 %v2766
  %v4285 = vunpack.c.h.b16 %v2766
  %v4286 = vunpack.c.l.b16 %v2767
  %v4287 = vunpack.c.h.b16 %v2767
  %v4288 = vunpack.c.l.b16 %v2768
  %v4289 = vunpack.c.h.b16 %v2768
  %v4290 = vunpack.c.l.b16 %v2769
  %v4291 = vunpack.c.h.b16 %v2769
  %v4292 = vunpack.c.l.b16 %v2770
  %v4293 = vunpack.c.h.b16 %v2770
  %v4294 = vunpack.c.l.b16 %v2771
  %v4295 = vunpack.c.h.b16 %v2771
  %v4296 = vunpack.c.l.b16 %v2772
  %v4297 = vunpack.c.h.b16 %v2772
  %v4298 = vunpack.c.l.b16 %v2773
  %v4299 = vunpack.c.h.b16 %v2773
  %v4300 = vunpack.c.l.b16 %v2774
  %v4301 = vunpack.c.h.b16 %v2774
  %v4302 = vunpack.c.l.b16 %v2775
  %v4303 = vunpack.c.h.b16 %v2775
  %v4304 = vunpack.c.l.b16 %v2776
  %v4305 = vunpack.c.h.b16 %v2776
  %v4306 = vunpack.c.l.b16 %v2777
  %v4307 = vunpack.c.h.b16 %v2777
  %v4308 = vunpack.c.l.b16 %v2778
  %v4309 = vunpack.c.h.b16 %v2778
  %v4310 = vunpack.c.l.b16 %v2779
  %v4311 = vunpack.c.h.b16 %v2779
  %v4312 = vunpack.c.l.b16 %v2780
  %v4313 = vunpack.c.h.b16 %v2780
  %v4314 = vunpack.c.l.b16 %v2781
  %v4315 = vunpack.c.h.b16 %v2781
  %v4316 = vunpack.c.l.b16 %v2782
  %v4317 = vunpack.c.h.b16 %v2782
  %v4318 = vunpack.c.l.b16 %v2783
  %v4319 = vunpack.c.h.b16 %v2783
  %v4320 = vunpack.c.l.b16 %v2784
  %v4321 = vunpack.c.h.b16 %v2784
  %v4322 = vunpack.c.l.b16 %v2785
  %v4323 = vunpack.c.h.b16 %v2785
  %v4324 = vunpack.c.l.b16 %v2786
  %v4325 = vunpack.c.h.b16 %v2786
  %v4326 = vunpack.c.l.b16 %v2787
  %v4327 = vunpack.c.h.b16 %v2787
  %v4328 = vunpack.c.l.b16 %v2788
  %v4329 = vunpack.c.h.b16 %v2788
  %v4330 = vunpack.c.l.b16 %v2789
  %v4331 = vunpack.c.h.b16 %v2789
  %v4332 = vunpack.c.l.b16 %v2790
  %v4333 = vunpack.c.h.b16 %v2790
  %v4334 = vunpack.c.l.b16 %v2791
  %v4335 = vunpack.c.h.b16 %v2791
  %v4336 = vunpack.c.l.b16 %v2792
  %v4337 = vunpack.c.h.b16 %v2792
  %v4338 = vunpack.c.l.b16 %v2793
  %v4339 = vunpack.c.h.b16 %v2793
  %v4340 = vunpack.c.l.b16 %v2794
  %v4341 = vunpack.c.h.b16 %v2794
  %v4342 = vunpack.c.l.b16 %v2795
  %v4343 = vunpack.c.h.b16 %v2795
  %v4344 = vunpack.c.l.b16 %v2796
  %v4345 = vunpack.c.h.b16 %v2796
  %v4346 = vunpack.c.l.b16 %v2797
  %v4347 = vunpack.c.h.b16 %v2797
  %v4348 = vunpack.c.l.b16 %v2798
  %v4349 = vunpack.c.h.b16 %v2798
  %v4350 = vunpack.c.l.b16 %v2799
  %v4351 = vunpack.c.h.b16 %v2799
  %v4352 = vunpack.c.l.b16 %v2800
  %v4353 = vunpack.c.h.b16 %v2800
  %v4354 = vunpack.c.l.b16 %v2801
  %v4355 = vunpack.c.h.b16 %v2801
  %v4356 = vunpack.c.l.b16 %v2802
  %v4357 = vunpack.c.h.b16 %v2802
  %v4358 = vunpack.c.l.b16 %v2803
  %v4359 = vunpack.c.h.b16 %v2803
  %v4360 = vunpack.c.l.b16 %v2804
  %v4361 = vunpack.c.h.b16 %v2804
  %v4362 = vunpack.c.l.b16 %v2805
  %v4363 = vunpack.c.h.b16 %v2805
  %v4364 = vunpack.c.l.b16 %v2806
  %v4365 = vunpack.c.h.b16 %v2806
  %v4366 = vunpack.c.l.b16 %v2807
  %v4367 = vunpack.c.h.b16 %v2807
  %v4368 = vunpack.c.l.b16 %v2808
  %v4369 = vunpack.c.h.b16 %v2808
  %v4370 = vunpack.c.l.b16 %v2809
  %v4371 = vunpack.c.h.b16 %v2809
  %v4372 = vunpack.c.l.b16 %v2810
  %v4373 = vunpack.c.h.b16 %v2810
  %v4374 = vunpack.c.l.b16 %v2811
  %v4375 = vunpack.c.h.b16 %v2811
  %v4376 = vpack.c.b16 %v4268, %v4264
  %v4377 = vpack.c.b16 %v4269, %v4265
  %v4378 = vpack.c.b16 %v4270, %v4266
  %v4379 = vpack.c.b16 %v4271, %v4267
  %v4380 = vpack.c.b16 %v4276, %v4272
  %v4381 = vpack.c.b16 %v4277, %v4273
  %v4382 = vpack.c.b16 %v4278, %v4274
  %v4383 = vpack.c.b16 %v4279, %v4275
  %v4384 = vpack.c.b16 %v4284, %v4280
  %v4385 = vpack.c.b16 %v4285, %v4281
  %v4386 = vpack.c.b16 %v4286, %v4282
  %v4387 = vpack.c.b16 %v4287, %v4283
  %v4388 = vpack.c.b16 %v4292, %v4288
  %v4389 = vpack.c.b16 %v4293, %v4289
  %v4390 = vpack.c.b16 %v4294, %v4290
  %v4391 = vpack.c.b16 %v4295, %v4291
  %v4392 = vpack.c.b16 %v4300, %v4296
  %v4393 = vpack.c.b16 %v4301, %v4297
  %v4394 = vpack.c.b16 %v4302, %v4298
  %v4395 = vpack.c.b16 %v4303, %v4299
  %v4396 = vpack.c.b16 %v4308, %v4304
  %v4397 = vpack.c.b16 %v4309, %v4305
  %v4398 = vpack.c.b16 %v4310, %v4306
  %v4399 = vpack.c.b16 %v4311, %v4307
  %v4400 = vpack.c.b16 %v4316, %v4312
  %v4401 = vpack.c.b16 %v4317, %v4313
  %v4402 = vpack.c.b16 %v4318, %v4314
  %v4403 = vpack.c.b16 %v4319, %v4315
  %v4404 = vpack.c.b16 %v4324, %v4320
  %v4405 = vpack.c.b16 %v4325, %v4321
  %v4406 = vpack.c.b16 %v4326, %v4322
  %v4407 = vpack.c.b16 %v4327, %v4323
  %v4408 = vpack.c.b16 %v4332, %v4328
  %v4409 = vpack.c.b16 %v4333, %v4329
  %v4410 = vpack.c.b16 %v4334, %v4330
  %v4411 = vpack.c.b16 %v4335, %v4331
  %v4412 = vpack.c.b16 %v4340, %v4336
  %v4413 = vpack.c.b16 %v4341, %v4337
  %v4414 = vpack.c.b16 %v4342, %v4338
  %v4415 = vpack.c.b16 %v4343, %v4339
  %v4416 = vpack.c.b16 %v4348, %v4344
  %v4417 = vpack.c.b16 %v4349, %v4345
  %v4418 = vpack.c.b16 %v4350, %v4346
  %v4419 = vpack.c.b16 %v4351, %v4347
  %v4420 = vpack.c.b16 %v4356, %v4352
  %v4421 = vpack.c.b16 %v4357, %v4353
  %v4422 = vpack.c.b16 %v4358, %v4354
  %v4423 = vpack.c.b16 %v4359, %v4355
  %v4424 = vpack.c.b16 %v4364, %v4360
  %v4425 = vpack.c.b16 %v4365, %v4361
  %v4426 = vpack.c.b16 %v4366, %v4362
  %v4427 = vpack.c.b16 %v4367, %v4363
  %v4428 = vpack.c.b16 %v4372, %v4368
  %v4429 = vpack.c.b16 %v4373, %v4369
  %v4430 = vpack.c.b16 %v4374, %v4370
  %v4431 = vpack.c.b16 %v4375, %v4371
  %v4475 = vsel %vm660, %v4379, 0
  %v4478 = vsel %vm660, %v4383, 0
  %v4481 = vsel %vm660, %v4387, 0
  %v4484 = vsel %vm660, %v4391, 0
  %v4487 = vsel %vm660, %v4395, 0
  %v4490 = vsel %vm660, %v4399, 0
  %v4493 = vsel %vm660, %v4403, 0
  %v4496 = vsel %vm660, %v4407, 0
  %v4499 = vsel %vm660, %v4411, 0
  %v4502 = vsel %vm660, %v4415, 0
  %v4505 = vsel %vm660, %v4419, 0
  %v4508 = vsel %vm660, %v4423, 0
  %v4511 = vsel %vm660, %v4427, 0
  %v4514 = vsel %vm660, %v4431, 0
  %4516 = vmatprep.subr.bf16.mxu0 0
  %4517 = vmatpush1.bf16.msra.mxu0 %v3265
  %4518 = vmatprep.subr.bf16.mxu0 0
  %4519 = vmatpush1.bf16.msra.mxu0 %v3264
  %4520 = vmatprep.subr.bf16.mxu0 0
  %4521 = vmatpush1.bf16.msra.mxu0 %v3263
  %4522 = vmatprep.subr.bf16.mxu0 0
  %4523 = vmatpush1.bf16.msra.mxu0 %v3262
  %4524 = vmatprep.subr.bf16.mxu0 0
  %4525 = vmatpush1.bf16.msra.mxu0 %v3261
  %4526 = vmatprep.subr.bf16.mxu0 0
  %4527 = vmatpush1.bf16.msra.mxu0 %v3260
  %4528 = vmatprep.subr.bf16.mxu0 0
  %4529 = vmatpush1.bf16.msra.mxu0 %v3259
  %4530 = vmatprep.subr.bf16.mxu0 0
  %4531 = vmatpush1.bf16.msra.mxu0 %v3258
  %4532 = vmatprep.subr.bf16.mxu0 0
  %4533 = vmatpush2.bf16.msra.mxu0 %v3273
  %4534 = vmatprep.subr.bf16.mxu0 0
  %4535 = vmatpush2.bf16.msra.mxu0 %v3272
  %4536 = vmatprep.subr.bf16.mxu0 0
  %4537 = vmatpush2.bf16.msra.mxu0 %v3271
  %4538 = vmatprep.subr.bf16.mxu0 0
  %4539 = vmatpush2.bf16.msra.mxu0 %v3270
  %4540 = vmatprep.subr.bf16.mxu0 0
  %4541 = vmatpush2.bf16.msra.mxu0 %v3269
  %4542 = vmatprep.subr.bf16.mxu0 0
  %4543 = vmatpush2.bf16.msra.mxu0 %v3268
  %4544 = vmatprep.subr.bf16.mxu0 0
  %4545 = vmatpush2.bf16.msra.mxu0 %v3267
  %4546 = vmatprep.subr.bf16.mxu0 0
  %4547 = vmatpush2.bf16.msra.mxu0 %v3266
  %4548 = vmatprep.mubr.bf16.mxu0 %v4377
  %4549 = vmatmul.mubr.bf16.gmra.mxu0 %v4376
  %v4550 = vpop.f32.mrf.mxu0
  %v4551 = vadd.f32 0.0, %v4550
  %v4552 = vpop.f32.mrf.mxu0
  %v4553 = vpop.f32.mrf.mxu0
  %v4554 = vadd.f32 0.0, %v4553
  %v4555 = vpop.f32.mrf.mxu0
  %4556 = vmatprep.mubr.bf16.mxu0 %v4381
  %4557 = vmatmul.mubr.bf16.gmra.mxu0 %v4380
  %v4558 = vpop.f32.mrf.mxu0
  %v4559 = vadd.f32 0.0, %v4558
  %v4560 = vpop.f32.mrf.mxu0
  %v4561 = vpop.f32.mrf.mxu0
  %v4562 = vadd.f32 0.0, %v4561
  %v4563 = vpop.f32.mrf.mxu0
  %4564 = vmatprep.mubr.bf16.mxu0 %v4385
  %4565 = vmatmul.mubr.bf16.gmra.mxu0 %v4384
  %v4566 = vpop.f32.mrf.mxu0
  %v4567 = vadd.f32 0.0, %v4566
  %v4568 = vpop.f32.mrf.mxu0
  %v4569 = vpop.f32.mrf.mxu0
  %v4570 = vadd.f32 0.0, %v4569
  %v4571 = vpop.f32.mrf.mxu0
  %4572 = vmatprep.mubr.bf16.mxu0 %v4389
  %4573 = vmatmul.mubr.bf16.gmra.mxu0 %v4388
  %v4574 = vpop.f32.mrf.mxu0
  %v4575 = vadd.f32 0.0, %v4574
  %v4576 = vpop.f32.mrf.mxu0
  %v4577 = vpop.f32.mrf.mxu0
  %v4578 = vadd.f32 0.0, %v4577
  %v4579 = vpop.f32.mrf.mxu0
  %4580 = vmatprep.mubr.bf16.mxu0 %v4393
  %4581 = vmatmul.mubr.bf16.gmra.mxu0 %v4392
  %v4582 = vpop.f32.mrf.mxu0
  %v4583 = vadd.f32 0.0, %v4582
  %v4584 = vpop.f32.mrf.mxu0
  %v4585 = vpop.f32.mrf.mxu0
  %v4586 = vadd.f32 0.0, %v4585
  %v4587 = vpop.f32.mrf.mxu0
  %4588 = vmatprep.mubr.bf16.mxu0 %v4397
  %4589 = vmatmul.mubr.bf16.gmra.mxu0 %v4396
  %v4590 = vpop.f32.mrf.mxu0
  %v4591 = vadd.f32 0.0, %v4590
  %v4592 = vpop.f32.mrf.mxu0
  %v4593 = vpop.f32.mrf.mxu0
  %v4594 = vadd.f32 0.0, %v4593
  %v4595 = vpop.f32.mrf.mxu0
  %4596 = vmatprep.mubr.bf16.mxu0 %v4401
  %4597 = vmatmul.mubr.bf16.gmra.mxu0 %v4400
  %v4598 = vpop.f32.mrf.mxu0
  %v4599 = vadd.f32 0.0, %v4598
  %v4600 = vpop.f32.mrf.mxu0
  %v4601 = vpop.f32.mrf.mxu0
  %v4602 = vadd.f32 0.0, %v4601
  %v4603 = vpop.f32.mrf.mxu0
  %4604 = vmatprep.mubr.bf16.mxu0 %v4405
  %4605 = vmatmul.mubr.bf16.gmra.mxu0 %v4404
  %v4606 = vpop.f32.mrf.mxu0
  %v4607 = vadd.f32 0.0, %v4606
  %v4608 = vpop.f32.mrf.mxu0
  %v4609 = vpop.f32.mrf.mxu0
  %v4610 = vadd.f32 0.0, %v4609
  %v4611 = vpop.f32.mrf.mxu0
  %4612 = vmatprep.mubr.bf16.mxu0 %v4409
  %4613 = vmatmul.mubr.bf16.gmra.mxu0 %v4408
  %v4614 = vpop.f32.mrf.mxu0
  %v4615 = vadd.f32 0.0, %v4614
  %v4616 = vpop.f32.mrf.mxu0
  %v4617 = vpop.f32.mrf.mxu0
  %v4618 = vadd.f32 0.0, %v4617
  %v4619 = vpop.f32.mrf.mxu0
  %4620 = vmatprep.mubr.bf16.mxu0 %v4413
  %4621 = vmatmul.mubr.bf16.gmra.mxu0 %v4412
  %v4622 = vpop.f32.mrf.mxu0
  %v4623 = vadd.f32 0.0, %v4622
  %v4624 = vpop.f32.mrf.mxu0
  %v4625 = vpop.f32.mrf.mxu0
  %v4626 = vadd.f32 0.0, %v4625
  %v4627 = vpop.f32.mrf.mxu0
  %4628 = vmatprep.mubr.bf16.mxu0 %v4417
  %4629 = vmatmul.mubr.bf16.gmra.mxu0 %v4416
  %v4630 = vpop.f32.mrf.mxu0
  %v4631 = vadd.f32 0.0, %v4630
  %v4632 = vpop.f32.mrf.mxu0
  %v4633 = vpop.f32.mrf.mxu0
  %v4634 = vadd.f32 0.0, %v4633
  %v4635 = vpop.f32.mrf.mxu0
  %4636 = vmatprep.mubr.bf16.mxu0 %v4421
  %4637 = vmatmul.mubr.bf16.gmra.mxu0 %v4420
  %v4638 = vpop.f32.mrf.mxu0
  %v4639 = vadd.f32 0.0, %v4638
  %v4640 = vpop.f32.mrf.mxu0
  %v4641 = vpop.f32.mrf.mxu0
  %v4642 = vadd.f32 0.0, %v4641
  %v4643 = vpop.f32.mrf.mxu0
  %4644 = vmatprep.mubr.bf16.mxu0 %v4425
  %4645 = vmatmul.mubr.bf16.gmra.mxu0 %v4424
  %v4646 = vpop.f32.mrf.mxu0
  %v4647 = vadd.f32 0.0, %v4646
  %v4648 = vpop.f32.mrf.mxu0
  %v4649 = vpop.f32.mrf.mxu0
  %v4650 = vadd.f32 0.0, %v4649
  %v4651 = vpop.f32.mrf.mxu0
  %4652 = vmatprep.mubr.bf16.mxu0 %v4429
  %4653 = vmatmul.mubr.bf16.gmra.mxu0 %v4428
  %v4654 = vpop.f32.mrf.mxu0
  %v4655 = vadd.f32 0.0, %v4654
  %v4656 = vpop.f32.mrf.mxu0
  %v4657 = vpop.f32.mrf.mxu0
  %v4658 = vadd.f32 0.0, %v4657
  %v4659 = vpop.f32.mrf.mxu0
  %4660 = vdwg.mxu0
  %4661 = vmatprep.subr.bf16.mxu0 0
  %4662 = vmatpush1.bf16.msra.mxu0 %v3281
  %4663 = vmatprep.subr.bf16.mxu0 0
  %4664 = vmatpush1.bf16.msra.mxu0 %v3280
  %4665 = vmatprep.subr.bf16.mxu0 0
  %4666 = vmatpush1.bf16.msra.mxu0 %v3279
  %4667 = vmatprep.subr.bf16.mxu0 0
  %4668 = vmatpush1.bf16.msra.mxu0 %v3278
  %4669 = vmatprep.subr.bf16.mxu0 0
  %4670 = vmatpush1.bf16.msra.mxu0 %v3277
  %4671 = vmatprep.subr.bf16.mxu0 0
  %4672 = vmatpush1.bf16.msra.mxu0 %v3276
  %4673 = vmatprep.subr.bf16.mxu0 0
  %4674 = vmatpush1.bf16.msra.mxu0 %v3275
  %4675 = vmatprep.subr.bf16.mxu0 0
  %4676 = vmatpush1.bf16.msra.mxu0 %v3274
  %4677 = vmatprep.subr.bf16.mxu0 0
  %4678 = vmatpush2.bf16.msra.mxu0 0
  %4679 = vmatprep.subr.bf16.mxu0 0
  %4680 = vmatpush2.bf16.msra.mxu0 0
  %4681 = vmatprep.subr.bf16.mxu0 0
  %4682 = vmatpush2.bf16.msra.mxu0 %v3287
  %4683 = vmatprep.subr.bf16.mxu0 0
  %4684 = vmatpush2.bf16.msra.mxu0 %v3286
  %4685 = vmatprep.subr.bf16.mxu0 0
  %4686 = vmatpush2.bf16.msra.mxu0 %v3285
  %4687 = vmatprep.subr.bf16.mxu0 0
  %4688 = vmatpush2.bf16.msra.mxu0 %v3284
  %4689 = vmatprep.subr.bf16.mxu0 0
  %4690 = vmatpush2.bf16.msra.mxu0 %v3283
  %4691 = vmatprep.subr.bf16.mxu0 0
  %4692 = vmatpush2.bf16.msra.mxu0 %v3282
  %4693 = vmatprep.mubr.bf16.mxu0 %v4475
  %4694 = vmatmul.mubr.bf16.gmra.mxu0 %v4378
  %v4695 = vpop.f32.mrf.mxu0
  %v4696 = vadd.f32 %v4551, %v4695
  %v4697 = vpop.f32.mrf.mxu0
  %v4698 = vpop.f32.mrf.mxu0
  %v4699 = vadd.f32 %v4554, %v4698
  %v4700 = vpop.f32.mrf.mxu0
  %4701 = vmatprep.mubr.bf16.mxu0 %v4478
  %4702 = vmatmul.mubr.bf16.gmra.mxu0 %v4382
  %v4703 = vpop.f32.mrf.mxu0
  %v4704 = vadd.f32 %v4559, %v4703
  %v4705 = vpop.f32.mrf.mxu0
  %v4706 = vpop.f32.mrf.mxu0
  %v4707 = vadd.f32 %v4562, %v4706
  %v4708 = vpop.f32.mrf.mxu0
  %4709 = vmatprep.mubr.bf16.mxu0 %v4481
  %4710 = vmatmul.mubr.bf16.gmra.mxu0 %v4386
  %v4711 = vpop.f32.mrf.mxu0
  %v4712 = vadd.f32 %v4567, %v4711
  %v4713 = vpop.f32.mrf.mxu0
  %v4714 = vpop.f32.mrf.mxu0
  %v4715 = vadd.f32 %v4570, %v4714
  %v4716 = vpop.f32.mrf.mxu0
  %4717 = vmatprep.mubr.bf16.mxu0 %v4484
  %4718 = vmatmul.mubr.bf16.gmra.mxu0 %v4390
  %v4719 = vpop.f32.mrf.mxu0
  %v4720 = vadd.f32 %v4575, %v4719
  %v4721 = vpop.f32.mrf.mxu0
  %v4722 = vpop.f32.mrf.mxu0
  %v4723 = vadd.f32 %v4578, %v4722
  %v4724 = vpop.f32.mrf.mxu0
  %4725 = vmatprep.mubr.bf16.mxu0 %v4487
  %4726 = vmatmul.mubr.bf16.gmra.mxu0 %v4394
  %v4727 = vpop.f32.mrf.mxu0
  %v4728 = vadd.f32 %v4583, %v4727
  %v4729 = vpop.f32.mrf.mxu0
  %v4730 = vpop.f32.mrf.mxu0
  %v4731 = vadd.f32 %v4586, %v4730
  %v4732 = vpop.f32.mrf.mxu0
  %4733 = vmatprep.mubr.bf16.mxu0 %v4490
  %4734 = vmatmul.mubr.bf16.gmra.mxu0 %v4398
  %v4735 = vpop.f32.mrf.mxu0
  %v4736 = vadd.f32 %v4591, %v4735
  %v4737 = vpop.f32.mrf.mxu0
  %v4738 = vpop.f32.mrf.mxu0
  %v4739 = vadd.f32 %v4594, %v4738
  %v4740 = vpop.f32.mrf.mxu0
  %4741 = vmatprep.mubr.bf16.mxu0 %v4493
  %4742 = vmatmul.mubr.bf16.gmra.mxu0 %v4402
  %v4743 = vpop.f32.mrf.mxu0
  %v4744 = vadd.f32 %v4599, %v4743
  %v4745 = vpop.f32.mrf.mxu0
  %v4746 = vpop.f32.mrf.mxu0
  %v4747 = vadd.f32 %v4602, %v4746
  %v4748 = vpop.f32.mrf.mxu0
  %4749 = vmatprep.mubr.bf16.mxu0 %v4496
  %4750 = vmatmul.mubr.bf16.gmra.mxu0 %v4406
  %v4751 = vpop.f32.mrf.mxu0
  %v4752 = vadd.f32 %v4607, %v4751
  %v4753 = vpop.f32.mrf.mxu0
  %v4754 = vpop.f32.mrf.mxu0
  %v4755 = vadd.f32 %v4610, %v4754
  %v4756 = vpop.f32.mrf.mxu0
  %4757 = vmatprep.mubr.bf16.mxu0 %v4499
  %4758 = vmatmul.mubr.bf16.gmra.mxu0 %v4410
  %v4759 = vpop.f32.mrf.mxu0
  %v4760 = vadd.f32 %v4615, %v4759
  %v4761 = vpop.f32.mrf.mxu0
  %v4762 = vpop.f32.mrf.mxu0
  %v4763 = vadd.f32 %v4618, %v4762
  %v4764 = vpop.f32.mrf.mxu0
  %4765 = vmatprep.mubr.bf16.mxu0 %v4502
  %4766 = vmatmul.mubr.bf16.gmra.mxu0 %v4414
  %v4767 = vpop.f32.mrf.mxu0
  %v4768 = vadd.f32 %v4623, %v4767
  %v4769 = vpop.f32.mrf.mxu0
  %v4770 = vpop.f32.mrf.mxu0
  %v4771 = vadd.f32 %v4626, %v4770
  %v4772 = vpop.f32.mrf.mxu0
  %4773 = vmatprep.mubr.bf16.mxu0 %v4505
  %4774 = vmatmul.mubr.bf16.gmra.mxu0 %v4418
  %v4775 = vpop.f32.mrf.mxu0
  %v4776 = vadd.f32 %v4631, %v4775
  %v4777 = vpop.f32.mrf.mxu0
  %v4778 = vpop.f32.mrf.mxu0
  %v4779 = vadd.f32 %v4634, %v4778
  %v4780 = vpop.f32.mrf.mxu0
  %4781 = vmatprep.mubr.bf16.mxu0 %v4508
  %4782 = vmatmul.mubr.bf16.gmra.mxu0 %v4422
  %v4783 = vpop.f32.mrf.mxu0
  %v4784 = vadd.f32 %v4639, %v4783
  %v4785 = vpop.f32.mrf.mxu0
  %v4786 = vpop.f32.mrf.mxu0
  %v4787 = vadd.f32 %v4642, %v4786
  %v4788 = vpop.f32.mrf.mxu0
  %4789 = vmatprep.mubr.bf16.mxu0 %v4511
  %4790 = vmatmul.mubr.bf16.gmra.mxu0 %v4426
  %v4791 = vpop.f32.mrf.mxu0
  %v4792 = vadd.f32 %v4647, %v4791
  %v4793 = vpop.f32.mrf.mxu0
  %v4794 = vpop.f32.mrf.mxu0
  %v4795 = vadd.f32 %v4650, %v4794
  %v4796 = vpop.f32.mrf.mxu0
  %4797 = vmatprep.mubr.bf16.mxu0 %v4514
  %4798 = vmatmul.mubr.bf16.gmra.mxu0 %v4430
  %v4799 = vpop.f32.mrf.mxu0
  %v4800 = vadd.f32 %v4655, %v4799
  %v4801 = vpop.f32.mrf.mxu0
  %v4802 = vpop.f32.mrf.mxu0
  %v4803 = vadd.f32 %v4658, %v4802
  %v4804 = vpop.f32.mrf.mxu0
  %4805 = vdwg.mxu0
  %v4806 = vmax.f32 %v4180, %v4696
  %v4807 = vmax.f32 %v4181, %v4699
  %v4808 = vmax.f32 %v4182, %v4704
  %v4809 = vmax.f32 %v4183, %v4707
  %v4810 = vmax.f32 %v4184, %v4712
  %v4811 = vmax.f32 %v4185, %v4715
  %v4812 = vmax.f32 %v4186, %v4720
  %v4813 = vmax.f32 %v4187, %v4723
  %v4814 = vmax.f32 %v4188, %v4728
  %v4815 = vmax.f32 %v4189, %v4731
  %v4816 = vmax.f32 %v4190, %v4736
  %v4817 = vmax.f32 %v4191, %v4739
  %v4818 = vmax.f32 %v4192, %v4744
  %v4819 = vmax.f32 %v4193, %v4747
  %v4820 = vmax.f32 %v4194, %v4752
  %v4821 = vmax.f32 %v4195, %v4755
  %v4822 = vmax.f32 %v4196, %v4760
  %v4823 = vmax.f32 %v4197, %v4763
  %v4824 = vmax.f32 %v4198, %v4768
  %v4825 = vmax.f32 %v4199, %v4771
  %v4826 = vmax.f32 %v4200, %v4776
  %v4827 = vmax.f32 %v4201, %v4779
  %v4828 = vmax.f32 %v4202, %v4784
  %v4829 = vmax.f32 %v4203, %v4787
  %v4830 = vmax.f32 %v4204, %v4792
  %v4831 = vmax.f32 %v4205, %v4795
  %v4832 = vmax.f32 %v4206, %v4800
  %v4833 = vmax.f32 %v4207, %v4803
  %4834 = vmatprep.subr.bf16.mxu0 0
  %4835 = vmatpush1.bf16.msra.mxu0 %v3837
  %4836 = vmatprep.subr.bf16.mxu0 0
  %4837 = vmatpush1.bf16.msra.mxu0 %v3836
  %4838 = vmatprep.subr.bf16.mxu0 0
  %4839 = vmatpush1.bf16.msra.mxu0 %v3835
  %4840 = vmatprep.subr.bf16.mxu0 0
  %4841 = vmatpush1.bf16.msra.mxu0 %v3834
  %4842 = vmatprep.subr.bf16.mxu0 0
  %4843 = vmatpush1.bf16.msra.mxu0 %v3833
  %4844 = vmatprep.subr.bf16.mxu0 0
  %4845 = vmatpush1.bf16.msra.mxu0 %v3832
  %4846 = vmatprep.subr.bf16.mxu0 0
  %4847 = vmatpush1.bf16.msra.mxu0 %v3831
  %4848 = vmatprep.subr.bf16.mxu0 0
  %4849 = vmatpush1.bf16.msra.mxu0 %v3830
  %4850 = vmatprep.subr.bf16.mxu0 0
  %4851 = vmatpush2.bf16.msra.mxu0 %v3845
  %4852 = vmatprep.subr.bf16.mxu0 0
  %4853 = vmatpush2.bf16.msra.mxu0 %v3844
  %4854 = vmatprep.subr.bf16.mxu0 0
  %4855 = vmatpush2.bf16.msra.mxu0 %v3843
  %4856 = vmatprep.subr.bf16.mxu0 0
  %4857 = vmatpush2.bf16.msra.mxu0 %v3842
  %4858 = vmatprep.subr.bf16.mxu0 0
  %4859 = vmatpush2.bf16.msra.mxu0 %v3841
  %4860 = vmatprep.subr.bf16.mxu0 0
  %4861 = vmatpush2.bf16.msra.mxu0 %v3840
  %4862 = vmatprep.subr.bf16.mxu0 0
  %4863 = vmatpush2.bf16.msra.mxu0 %v3839
  %4864 = vmatprep.subr.bf16.mxu0 0
  %4865 = vmatpush2.bf16.msra.mxu0 %v3838
  %4866 = vmatprep.mubr.bf16.mxu0 %v4377
  %4867 = vmatmul.mubr.bf16.gmra.mxu0 %v4376
  %v4868 = vpop.f32.mrf.mxu0
  %v4869 = vadd.f32 0.0, %v4868
  %v4870 = vpop.f32.mrf.mxu0
  %v4871 = vpop.f32.mrf.mxu0
  %v4872 = vadd.f32 0.0, %v4871
  %v4873 = vpop.f32.mrf.mxu0
  %4874 = vmatprep.mubr.bf16.mxu0 %v4381
  %4875 = vmatmul.mubr.bf16.gmra.mxu0 %v4380
  %v4876 = vpop.f32.mrf.mxu0
  %v4877 = vadd.f32 0.0, %v4876
  %v4878 = vpop.f32.mrf.mxu0
  %v4879 = vpop.f32.mrf.mxu0
  %v4880 = vadd.f32 0.0, %v4879
  %v4881 = vpop.f32.mrf.mxu0
  %4882 = vmatprep.mubr.bf16.mxu0 %v4385
  %4883 = vmatmul.mubr.bf16.gmra.mxu0 %v4384
  %v4884 = vpop.f32.mrf.mxu0
  %v4885 = vadd.f32 0.0, %v4884
  %v4886 = vpop.f32.mrf.mxu0
  %v4887 = vpop.f32.mrf.mxu0
  %v4888 = vadd.f32 0.0, %v4887
  %v4889 = vpop.f32.mrf.mxu0
  %4890 = vmatprep.mubr.bf16.mxu0 %v4389
  %4891 = vmatmul.mubr.bf16.gmra.mxu0 %v4388
  %v4892 = vpop.f32.mrf.mxu0
  %v4893 = vadd.f32 0.0, %v4892
  %v4894 = vpop.f32.mrf.mxu0
  %v4895 = vpop.f32.mrf.mxu0
  %v4896 = vadd.f32 0.0, %v4895
  %v4897 = vpop.f32.mrf.mxu0
  %4898 = vmatprep.mubr.bf16.mxu0 %v4393
  %4899 = vmatmul.mubr.bf16.gmra.mxu0 %v4392
  %v4900 = vpop.f32.mrf.mxu0
  %v4901 = vadd.f32 0.0, %v4900
  %v4902 = vpop.f32.mrf.mxu0
  %v4903 = vpop.f32.mrf.mxu0
  %v4904 = vadd.f32 0.0, %v4903
  %v4905 = vpop.f32.mrf.mxu0
  %4906 = vmatprep.mubr.bf16.mxu0 %v4397
  %4907 = vmatmul.mubr.bf16.gmra.mxu0 %v4396
  %v4908 = vpop.f32.mrf.mxu0
  %v4909 = vadd.f32 0.0, %v4908
  %v4910 = vpop.f32.mrf.mxu0
  %v4911 = vpop.f32.mrf.mxu0
  %v4912 = vadd.f32 0.0, %v4911
  %v4913 = vpop.f32.mrf.mxu0
  %4914 = vmatprep.mubr.bf16.mxu0 %v4401
  %4915 = vmatmul.mubr.bf16.gmra.mxu0 %v4400
  %v4916 = vpop.f32.mrf.mxu0
  %v4917 = vadd.f32 0.0, %v4916
  %v4918 = vpop.f32.mrf.mxu0
  %v4919 = vpop.f32.mrf.mxu0
  %v4920 = vadd.f32 0.0, %v4919
  %v4921 = vpop.f32.mrf.mxu0
  %4922 = vmatprep.mubr.bf16.mxu0 %v4405
  %4923 = vmatmul.mubr.bf16.gmra.mxu0 %v4404
  %v4924 = vpop.f32.mrf.mxu0
  %v4925 = vadd.f32 0.0, %v4924
  %v4926 = vpop.f32.mrf.mxu0
  %v4927 = vpop.f32.mrf.mxu0
  %v4928 = vadd.f32 0.0, %v4927
  %v4929 = vpop.f32.mrf.mxu0
  %4930 = vmatprep.mubr.bf16.mxu0 %v4409
  %4931 = vmatmul.mubr.bf16.gmra.mxu0 %v4408
  %v4932 = vpop.f32.mrf.mxu0
  %v4933 = vadd.f32 0.0, %v4932
  %v4934 = vpop.f32.mrf.mxu0
  %v4935 = vpop.f32.mrf.mxu0
  %v4936 = vadd.f32 0.0, %v4935
  %v4937 = vpop.f32.mrf.mxu0
  %4938 = vmatprep.mubr.bf16.mxu0 %v4413
  %4939 = vmatmul.mubr.bf16.gmra.mxu0 %v4412
  %v4940 = vpop.f32.mrf.mxu0
  %v4941 = vadd.f32 0.0, %v4940
  %v4942 = vpop.f32.mrf.mxu0
  %v4943 = vpop.f32.mrf.mxu0
  %v4944 = vadd.f32 0.0, %v4943
  %v4945 = vpop.f32.mrf.mxu0
  %4946 = vmatprep.mubr.bf16.mxu0 %v4417
  %4947 = vmatmul.mubr.bf16.gmra.mxu0 %v4416
  %v4948 = vpop.f32.mrf.mxu0
  %v4949 = vadd.f32 0.0, %v4948
  %v4950 = vpop.f32.mrf.mxu0
  %v4951 = vpop.f32.mrf.mxu0
  %v4952 = vadd.f32 0.0, %v4951
  %v4953 = vpop.f32.mrf.mxu0
  %4954 = vmatprep.mubr.bf16.mxu0 %v4421
  %4955 = vmatmul.mubr.bf16.gmra.mxu0 %v4420
  %v4956 = vpop.f32.mrf.mxu0
  %v4957 = vadd.f32 0.0, %v4956
  %v4958 = vpop.f32.mrf.mxu0
  %v4959 = vpop.f32.mrf.mxu0
  %v4960 = vadd.f32 0.0, %v4959
  %v4961 = vpop.f32.mrf.mxu0
  %4962 = vmatprep.mubr.bf16.mxu0 %v4425
  %4963 = vmatmul.mubr.bf16.gmra.mxu0 %v4424
  %v4964 = vpop.f32.mrf.mxu0
  %v4965 = vadd.f32 0.0, %v4964
  %v4966 = vpop.f32.mrf.mxu0
  %v4967 = vpop.f32.mrf.mxu0
  %v4968 = vadd.f32 0.0, %v4967
  %v4969 = vpop.f32.mrf.mxu0
  %4970 = vmatprep.mubr.bf16.mxu0 %v4429
  %4971 = vmatmul.mubr.bf16.gmra.mxu0 %v4428
  %v4972 = vpop.f32.mrf.mxu0
  %v4973 = vadd.f32 0.0, %v4972
  %v4974 = vpop.f32.mrf.mxu0
  %v4975 = vpop.f32.mrf.mxu0
  %v4976 = vadd.f32 0.0, %v4975
  %v4977 = vpop.f32.mrf.mxu0
  %4978 = vdwg.mxu0
  %4979 = vmatprep.subr.bf16.mxu0 0
  %4980 = vmatpush1.bf16.msra.mxu0 %v3853
  %4981 = vmatprep.subr.bf16.mxu0 0
  %4982 = vmatpush1.bf16.msra.mxu0 %v3852
  %4983 = vmatprep.subr.bf16.mxu0 0
  %4984 = vmatpush1.bf16.msra.mxu0 %v3851
  %4985 = vmatprep.subr.bf16.mxu0 0
  %4986 = vmatpush1.bf16.msra.mxu0 %v3850
  %4987 = vmatprep.subr.bf16.mxu0 0
  %4988 = vmatpush1.bf16.msra.mxu0 %v3849
  %4989 = vmatprep.subr.bf16.mxu0 0
  %4990 = vmatpush1.bf16.msra.mxu0 %v3848
  %4991 = vmatprep.subr.bf16.mxu0 0
  %4992 = vmatpush1.bf16.msra.mxu0 %v3847
  %4993 = vmatprep.subr.bf16.mxu0 0
  %4994 = vmatpush1.bf16.msra.mxu0 %v3846
  %4995 = vmatprep.subr.bf16.mxu0 0
  %4996 = vmatpush2.bf16.msra.mxu0 0
  %4997 = vmatprep.subr.bf16.mxu0 0
  %4998 = vmatpush2.bf16.msra.mxu0 0
  %4999 = vmatprep.subr.bf16.mxu0 0
  %5000 = vmatpush2.bf16.msra.mxu0 %v3859
  %5001 = vmatprep.subr.bf16.mxu0 0
  %5002 = vmatpush2.bf16.msra.mxu0 %v3858
  %5003 = vmatprep.subr.bf16.mxu0 0
  %5004 = vmatpush2.bf16.msra.mxu0 %v3857
  %5005 = vmatprep.subr.bf16.mxu0 0
  %5006 = vmatpush2.bf16.msra.mxu0 %v3856
  %5007 = vmatprep.subr.bf16.mxu0 0
  %5008 = vmatpush2.bf16.msra.mxu0 %v3855
  %5009 = vmatprep.subr.bf16.mxu0 0
  %5010 = vmatpush2.bf16.msra.mxu0 %v3854
  %5011 = vmatprep.mubr.bf16.mxu0 %v4475
  %5012 = vmatmul.mubr.bf16.gmra.mxu0 %v4378
  %v5013 = vpop.f32.mrf.mxu0
  %v5014 = vadd.f32 %v4869, %v5013
  %v5015 = vpop.f32.mrf.mxu0
  %v5016 = vpop.f32.mrf.mxu0
  %v5017 = vadd.f32 %v4872, %v5016
  %v5018 = vpop.f32.mrf.mxu0
  %5019 = vmatprep.mubr.bf16.mxu0 %v4478
  %5020 = vmatmul.mubr.bf16.gmra.mxu0 %v4382
  %v5021 = vpop.f32.mrf.mxu0
  %v5022 = vadd.f32 %v4877, %v5021
  %v5023 = vpop.f32.mrf.mxu0
  %v5024 = vpop.f32.mrf.mxu0
  %v5025 = vadd.f32 %v4880, %v5024
  %v5026 = vpop.f32.mrf.mxu0
  %5027 = vmatprep.mubr.bf16.mxu0 %v4481
  %5028 = vmatmul.mubr.bf16.gmra.mxu0 %v4386
  %v5029 = vpop.f32.mrf.mxu0
  %v5030 = vadd.f32 %v4885, %v5029
  %v5031 = vpop.f32.mrf.mxu0
  %v5032 = vpop.f32.mrf.mxu0
  %v5033 = vadd.f32 %v4888, %v5032
  %v5034 = vpop.f32.mrf.mxu0
  %5035 = vmatprep.mubr.bf16.mxu0 %v4484
  %5036 = vmatmul.mubr.bf16.gmra.mxu0 %v4390
  %v5037 = vpop.f32.mrf.mxu0
  %v5038 = vadd.f32 %v4893, %v5037
  %v5039 = vpop.f32.mrf.mxu0
  %v5040 = vpop.f32.mrf.mxu0
  %v5041 = vadd.f32 %v4896, %v5040
  %v5042 = vpop.f32.mrf.mxu0
  %5043 = vmatprep.mubr.bf16.mxu0 %v4487
  %5044 = vmatmul.mubr.bf16.gmra.mxu0 %v4394
  %v5045 = vpop.f32.mrf.mxu0
  %v5046 = vadd.f32 %v4901, %v5045
  %v5047 = vpop.f32.mrf.mxu0
  %v5048 = vpop.f32.mrf.mxu0
  %v5049 = vadd.f32 %v4904, %v5048
  %v5050 = vpop.f32.mrf.mxu0
  %5051 = vmatprep.mubr.bf16.mxu0 %v4490
  %5052 = vmatmul.mubr.bf16.gmra.mxu0 %v4398
  %v5053 = vpop.f32.mrf.mxu0
  %v5054 = vadd.f32 %v4909, %v5053
  %v5055 = vpop.f32.mrf.mxu0
  %v5056 = vpop.f32.mrf.mxu0
  %v5057 = vadd.f32 %v4912, %v5056
  %v5058 = vpop.f32.mrf.mxu0
  %5059 = vmatprep.mubr.bf16.mxu0 %v4493
  %5060 = vmatmul.mubr.bf16.gmra.mxu0 %v4402
  %v5061 = vpop.f32.mrf.mxu0
  %v5062 = vadd.f32 %v4917, %v5061
  %v5063 = vpop.f32.mrf.mxu0
  %v5064 = vpop.f32.mrf.mxu0
  %v5065 = vadd.f32 %v4920, %v5064
  %v5066 = vpop.f32.mrf.mxu0
  %5067 = vmatprep.mubr.bf16.mxu0 %v4496
  %5068 = vmatmul.mubr.bf16.gmra.mxu0 %v4406
  %v5069 = vpop.f32.mrf.mxu0
  %v5070 = vadd.f32 %v4925, %v5069
  %v5071 = vpop.f32.mrf.mxu0
  %v5072 = vpop.f32.mrf.mxu0
  %v5073 = vadd.f32 %v4928, %v5072
  %v5074 = vpop.f32.mrf.mxu0
  %5075 = vmatprep.mubr.bf16.mxu0 %v4499
  %5076 = vmatmul.mubr.bf16.gmra.mxu0 %v4410
  %v5077 = vpop.f32.mrf.mxu0
  %v5078 = vadd.f32 %v4933, %v5077
  %v5079 = vpop.f32.mrf.mxu0
  %v5080 = vpop.f32.mrf.mxu0
  %v5081 = vadd.f32 %v4936, %v5080
  %v5082 = vpop.f32.mrf.mxu0
  %5083 = vmatprep.mubr.bf16.mxu0 %v4502
  %5084 = vmatmul.mubr.bf16.gmra.mxu0 %v4414
  %v5085 = vpop.f32.mrf.mxu0
  %v5086 = vadd.f32 %v4941, %v5085
  %v5087 = vpop.f32.mrf.mxu0
  %v5088 = vpop.f32.mrf.mxu0
  %v5089 = vadd.f32 %v4944, %v5088
  %v5090 = vpop.f32.mrf.mxu0
  %5091 = vmatprep.mubr.bf16.mxu0 %v4505
  %5092 = vmatmul.mubr.bf16.gmra.mxu0 %v4418
  %v5093 = vpop.f32.mrf.mxu0
  %v5094 = vadd.f32 %v4949, %v5093
  %v5095 = vpop.f32.mrf.mxu0
  %v5096 = vpop.f32.mrf.mxu0
  %v5097 = vadd.f32 %v4952, %v5096
  %v5098 = vpop.f32.mrf.mxu0
  %5099 = vmatprep.mubr.bf16.mxu0 %v4508
  %5100 = vmatmul.mubr.bf16.gmra.mxu0 %v4422
  %v5101 = vpop.f32.mrf.mxu0
  %v5102 = vadd.f32 %v4957, %v5101
  %v5103 = vpop.f32.mrf.mxu0
  %v5104 = vpop.f32.mrf.mxu0
  %v5105 = vadd.f32 %v4960, %v5104
  %v5106 = vpop.f32.mrf.mxu0
  %5107 = vmatprep.mubr.bf16.mxu0 %v4511
  %5108 = vmatmul.mubr.bf16.gmra.mxu0 %v4426
  %v5109 = vpop.f32.mrf.mxu0
  %v5110 = vadd.f32 %v4965, %v5109
  %v5111 = vpop.f32.mrf.mxu0
  %v5112 = vpop.f32.mrf.mxu0
  %v5113 = vadd.f32 %v4968, %v5112
  %v5114 = vpop.f32.mrf.mxu0
  %5115 = vmatprep.mubr.bf16.mxu0 %v4514
  %5116 = vmatmul.mubr.bf16.gmra.mxu0 %v4430
  %v5117 = vpop.f32.mrf.mxu0
  %v5118 = vadd.f32 %v4973, %v5117
  %v5119 = vpop.f32.mrf.mxu0
  %v5120 = vpop.f32.mrf.mxu0
  %v5121 = vadd.f32 %v4976, %v5120
  %v5122 = vpop.f32.mrf.mxu0
  %5123 = vdwg.mxu0
  %v5124 = vmax.f32 %v4806, %v5014
  %v5125 = vmax.f32 %v4807, %v5017
  %v5126 = vmax.f32 %v4808, %v5022
  %v5127 = vmax.f32 %v4809, %v5025
  %v5128 = vmax.f32 %v4810, %v5030
  %v5129 = vmax.f32 %v4811, %v5033
  %v5130 = vmax.f32 %v4812, %v5038
  %v5131 = vmax.f32 %v4813, %v5041
  %v5132 = vmax.f32 %v4814, %v5046
  %v5133 = vmax.f32 %v4815, %v5049
  %v5134 = vmax.f32 %v4816, %v5054
  %v5135 = vmax.f32 %v4817, %v5057
  %v5136 = vmax.f32 %v4818, %v5062
  %v5137 = vmax.f32 %v4819, %v5065
  %v5138 = vmax.f32 %v4820, %v5070
  %v5139 = vmax.f32 %v4821, %v5073
  %v5140 = vmax.f32 %v4822, %v5078
  %v5141 = vmax.f32 %v4823, %v5081
  %v5142 = vmax.f32 %v4824, %v5086
  %v5143 = vmax.f32 %v4825, %v5089
  %v5144 = vmax.f32 %v4826, %v5094
  %v5145 = vmax.f32 %v4827, %v5097
  %v5146 = vmax.f32 %v4828, %v5102
  %v5147 = vmax.f32 %v4829, %v5105
  %v5148 = vmax.f32 %v4830, %v5110
  %v5149 = vmax.f32 %v4831, %v5113
  %v5150 = vmax.f32 %v4832, %v5118
  %v5151 = vmax.f32 %v4833, %v5121
  %v5152 = vld [vmem:[%s3] sm:$0x1]
  %v5154 = vlaneseq
  %v5155 = vshrl.u32 %v5154, 7
  %v5156 = vsub.s32 0, %v5155
  %v5157 = vrot.slane %v5152, %v5156
  %v5159 = vadd.f32 %v5124, %v5157
  %v5160 = vadd.f32 %v5125, %v5157
  %v5161 = vadd.f32 %v5126, %v5157
  %v5162 = vadd.f32 %v5127, %v5157
  %v5163 = vadd.f32 %v5128, %v5157
  %v5164 = vadd.f32 %v5129, %v5157
  %v5165 = vadd.f32 %v5130, %v5157
  %v5166 = vadd.f32 %v5131, %v5157
  %v5167 = vadd.f32 %v5132, %v5157
  %v5168 = vadd.f32 %v5133, %v5157
  %v5169 = vadd.f32 %v5134, %v5157
  %v5170 = vadd.f32 %v5135, %v5157
  %v5171 = vadd.f32 %v5136, %v5157
  %v5172 = vadd.f32 %v5137, %v5157
  %v5173 = vadd.f32 %v5138, %v5157
  %v5174 = vadd.f32 %v5139, %v5157
  %v5175 = vadd.f32 %v5140, %v5157
  %v5176 = vadd.f32 %v5141, %v5157
  %v5177 = vadd.f32 %v5142, %v5157
  %v5178 = vadd.f32 %v5143, %v5157
  %v5179 = vadd.f32 %v5144, %v5157
  %v5180 = vadd.f32 %v5145, %v5157
  %v5181 = vadd.f32 %v5146, %v5157
  %v5182 = vadd.f32 %v5147, %v5157
  %v5183 = vadd.f32 %v5148, %v5157
  %v5184 = vadd.f32 %v5149, %v5157
  %v5185 = vadd.f32 %v5150, %v5157
  %v5186 = vadd.f32 %v5151, %v5157
  %v5187 = vmax.f32 %v5159, 0.0
  %v5188 = vmax.f32 %v5160, 0.0
  %v5189 = vmax.f32 %v5161, 0.0
  %v5190 = vmax.f32 %v5162, 0.0
  %v5191 = vmax.f32 %v5163, 0.0
  %v5192 = vmax.f32 %v5164, 0.0
  %v5193 = vmax.f32 %v5165, 0.0
  %v5194 = vmax.f32 %v5166, 0.0
  %v5195 = vmax.f32 %v5167, 0.0
  %v5196 = vmax.f32 %v5168, 0.0
  %v5197 = vmax.f32 %v5169, 0.0
  %v5198 = vmax.f32 %v5170, 0.0
  %v5199 = vmax.f32 %v5171, 0.0
  %v5200 = vmax.f32 %v5172, 0.0
  %v5201 = vmax.f32 %v5173, 0.0
  %v5202 = vmax.f32 %v5174, 0.0
  %v5203 = vmax.f32 %v5175, 0.0
  %v5204 = vmax.f32 %v5176, 0.0
  %v5205 = vmax.f32 %v5177, 0.0
  %v5206 = vmax.f32 %v5178, 0.0
  %v5207 = vmax.f32 %v5179, 0.0
  %v5208 = vmax.f32 %v5180, 0.0
  %v5209 = vmax.f32 %v5181, 0.0
  %v5210 = vmax.f32 %v5182, 0.0
  %v5211 = vmax.f32 %v5183, 0.0
  %v5212 = vmax.f32 %v5184, 0.0
  %v5213 = vmax.f32 %v5185, 0.0
  %v5214 = vmax.f32 %v5186, 0.0
  %v5215 = vpack.c.bf16 %v5188, %v5187
  %v5216 = vpack.c.bf16 %v5190, %v5189
  %v5217 = vpack.c.bf16 %v5192, %v5191
  %v5218 = vpack.c.bf16 %v5194, %v5193
  %v5219 = vpack.c.bf16 %v5196, %v5195
  %v5220 = vpack.c.bf16 %v5198, %v5197
  %v5221 = vpack.c.bf16 %v5200, %v5199
  %v5222 = vpack.c.bf16 %v5202, %v5201
  %v5223 = vpack.c.bf16 %v5204, %v5203
  %v5224 = vpack.c.bf16 %v5206, %v5205
  %v5225 = vpack.c.bf16 %v5208, %v5207
  %v5226 = vpack.c.bf16 %v5210, %v5209
  %v5227 = vpack.c.bf16 %v5212, %v5211
  %v5228 = vpack.c.bf16 %v5214, %v5213
  %v5243 = vunpack.c.l.b16 %v5215
  %v5244 = vunpack.c.h.b16 %v5215
  %v5245 = vunpack.c.l.b16 %v5216
  %v5246 = vunpack.c.h.b16 %v5216
  %v5247 = vunpack.c.l.b16 %v5217
  %v5248 = vunpack.c.h.b16 %v5217
  %v5249 = vunpack.c.l.b16 %v5218
  %v5250 = vunpack.c.h.b16 %v5218
  %v5251 = vunpack.c.l.b16 %v5219
  %v5252 = vunpack.c.h.b16 %v5219
  %v5253 = vunpack.c.l.b16 %v5220
  %v5254 = vunpack.c.h.b16 %v5220
  %v5255 = vunpack.c.l.b16 %v5221
  %v5256 = vunpack.c.h.b16 %v5221
  %v5257 = vunpack.c.l.b16 %v5222
  %v5258 = vunpack.c.h.b16 %v5222
  %v5259 = vunpack.c.l.b16 %v5223
  %v5260 = vunpack.c.h.b16 %v5223
  %v5261 = vunpack.c.l.b16 %v5224
  %v5262 = vunpack.c.h.b16 %v5224
  %v5263 = vunpack.c.l.b16 %v5225
  %v5264 = vunpack.c.h.b16 %v5225
  %v5265 = vunpack.c.l.b16 %v5226
  %v5266 = vunpack.c.h.b16 %v5226
  %v5267 = vunpack.c.l.b16 %v5227
  %v5268 = vunpack.c.h.b16 %v5227
  %v5269 = vunpack.c.l.b16 %v5228
  %v5270 = vunpack.c.h.b16 %v5228
  %v5271 = vpack.c.b16 %v5243, %v5243
  %v5272 = vpack.c.b16 %v5244, %v5244
  %v5273 = vpack.c.b16 %v5245, %v5245
  %v5274 = vpack.c.b16 %v5246, %v5246
  %v5275 = vpack.c.b16 %v5247, %v5247
  %v5276 = vpack.c.b16 %v5248, %v5248
  %v5277 = vpack.c.b16 %v5249, %v5249
  %v5278 = vpack.c.b16 %v5250, %v5250
  %v5279 = vpack.c.b16 %v5251, %v5251
  %v5280 = vpack.c.b16 %v5252, %v5252
  %v5281 = vpack.c.b16 %v5253, %v5253
  %v5282 = vpack.c.b16 %v5254, %v5254
  %v5283 = vpack.c.b16 %v5255, %v5255
  %v5284 = vpack.c.b16 %v5256, %v5256
  %v5285 = vpack.c.b16 %v5257, %v5257
  %v5286 = vpack.c.b16 %v5258, %v5258
  %v5287 = vpack.c.b16 %v5259, %v5259
  %v5288 = vpack.c.b16 %v5260, %v5260
  %v5289 = vpack.c.b16 %v5261, %v5261
  %v5290 = vpack.c.b16 %v5262, %v5262
  %v5291 = vpack.c.b16 %v5263, %v5263
  %v5292 = vpack.c.b16 %v5264, %v5264
  %v5293 = vpack.c.b16 %v5265, %v5265
  %v5294 = vpack.c.b16 %v5266, %v5266
  %v5295 = vpack.c.b16 %v5267, %v5267
  %v5296 = vpack.c.b16 %v5268, %v5268
  %v5297 = vpack.c.b16 %v5269, %v5269
  %v5298 = vpack.c.b16 %v5270, %v5270
  %5327 = vst.msk [vmem:[#allocation2 + $0x70] sm:$0xf] %vm2671, %v5271
  %5328 = vst.msk [vmem:[#allocation2 + $0x74] sm:$0xf] %vm2671, %v5272
  %5329 = vst.msk [vmem:[#allocation2 + $0x78] sm:$0xf] %vm2671, %v5273
  %5330 = vst.msk [vmem:[#allocation2 + $0x7c] sm:$0xf] %vm2671, %v5274
  %5331 = vst.msk [vmem:[#allocation2 + $0x80] sm:$0xf] %vm2671, %v5275
  %5332 = vst.msk [vmem:[#allocation2 + $0x84] sm:$0xf] %vm2671, %v5276
  %5333 = vst.msk [vmem:[#allocation2 + $0x88] sm:$0xf] %vm2671, %v5277
  %5334 = vst.msk [vmem:[#allocation2 + $0x8c] sm:$0xf] %vm2671, %v5278
  %5335 = vst.msk [vmem:[#allocation2 + $0x90] sm:$0xf] %vm2671, %v5279
  %5336 = vst.msk [vmem:[#allocation2 + $0x94] sm:$0xf] %vm2671, %v5280
  %5337 = vst.msk [vmem:[#allocation2 + $0x98] sm:$0xf] %vm2671, %v5281
  %5338 = vst.msk [vmem:[#allocation2 + $0x9c] sm:$0xf] %vm2671, %v5282
  %5339 = vst.msk [vmem:[#allocation2 + $0xa0] sm:$0xf] %vm2671, %v5283
  %5340 = vst.msk [vmem:[#allocation2 + $0xa4] sm:$0xf] %vm2671, %v5284
  %5341 = vst.msk [vmem:[#allocation2 + $0xa8] sm:$0xf] %vm2671, %v5285
  %5342 = vst.msk [vmem:[#allocation2 + $0xac] sm:$0xf] %vm2671, %v5286
  %5343 = vst.msk [vmem:[#allocation2 + $0xb0] sm:$0xf] %vm2671, %v5287
  %5344 = vst.msk [vmem:[#allocation2 + $0xb4] sm:$0xf] %vm2671, %v5288
  %5345 = vst.msk [vmem:[#allocation2 + $0xb8] sm:$0xf] %vm2671, %v5289
  %5346 = vst.msk [vmem:[#allocation2 + $0xbc] sm:$0xf] %vm2671, %v5290
  %5347 = vst.msk [vmem:[#allocation2 + $0xc0] sm:$0xf] %vm2671, %v5291
  %5348 = vst.msk [vmem:[#allocation2 + $0xc4] sm:$0xf] %vm2671, %v5292
  %5349 = vst.msk [vmem:[#allocation2 + $0xc8] sm:$0xf] %vm2671, %v5293
  %5350 = vst.msk [vmem:[#allocation2 + $0xcc] sm:$0xf] %vm2671, %v5294
  %5351 = vst.msk [vmem:[#allocation2 + $0xd0] sm:$0xf] %vm2671, %v5295
  %5352 = vst.msk [vmem:[#allocation2 + $0xd4] sm:$0xf] %vm2671, %v5296
  %5353 = vst.msk [vmem:[#allocation2 + $0xd8] sm:$0xf] %vm2671, %v5297
  %5354 = vst.msk [vmem:[#allocation2 + $0xdc] sm:$0xf] %vm2671, %v5298
  %v5355 = vld [vmem:[#allocation2] sm:$0xf]
  %v5356 = vld [vmem:[#allocation2 + $0x4] sm:$0xf]
  %v5357 = vld [vmem:[#allocation2 + $0x8] sm:$0xf]
  %v5358 = vld [vmem:[#allocation2 + $0xc] sm:$0xf]
  %v5359 = vld [vmem:[#allocation2 + $0x10] sm:$0xf]
  %v5360 = vld [vmem:[#allocation2 + $0x14] sm:$0xf]
  %v5361 = vld [vmem:[#allocation2 + $0x18] sm:$0xf]
  %v5362 = vld [vmem:[#allocation2 + $0x1c] sm:$0xf]
  %v5363 = vld [vmem:[#allocation2 + $0x20] sm:$0xf]
  %v5364 = vld [vmem:[#allocation2 + $0x24] sm:$0xf]
  %v5365 = vld [vmem:[#allocation2 + $0x28] sm:$0xf]
  %v5366 = vld [vmem:[#allocation2 + $0x2c] sm:$0xf]
  %v5367 = vld [vmem:[#allocation2 + $0x30] sm:$0xf]
  %v5368 = vld [vmem:[#allocation2 + $0x34] sm:$0xf]
  %v5369 = vld [vmem:[#allocation2 + $0x38] sm:$0xf]
  %v5370 = vld [vmem:[#allocation2 + $0x3c] sm:$0xf]
  %v5371 = vld [vmem:[#allocation2 + $0x40] sm:$0xf]
  %v5372 = vld [vmem:[#allocation2 + $0x44] sm:$0xf]
  %v5373 = vld [vmem:[#allocation2 + $0x48] sm:$0xf]
  %v5374 = vld [vmem:[#allocation2 + $0x4c] sm:$0xf]
  %v5375 = vld [vmem:[#allocation2 + $0x70] sm:$0xf]
  %v5376 = vld [vmem:[#allocation2 + $0x74] sm:$0xf]
  %v5377 = vld [vmem:[#allocation2 + $0x78] sm:$0xf]
  %v5378 = vld [vmem:[#allocation2 + $0x7c] sm:$0xf]
  %v5379 = vld [vmem:[#allocation2 + $0x80] sm:$0xf]
  %v5380 = vld [vmem:[#allocation2 + $0x84] sm:$0xf]
  %v5381 = vld [vmem:[#allocation2 + $0x88] sm:$0xf]
  %v5382 = vld [vmem:[#allocation2 + $0x8c] sm:$0xf]
  %v5383 = vld [vmem:[#allocation2 + $0x90] sm:$0xf]
  %v5384 = vld [vmem:[#allocation2 + $0x94] sm:$0xf]
  %v5385 = vld [vmem:[#allocation2 + $0x98] sm:$0xf]
  %v5386 = vld [vmem:[#allocation2 + $0x9c] sm:$0xf]
  %v5387 = vld [vmem:[#allocation2 + $0xa0] sm:$0xf]
  %v5388 = vld [vmem:[#allocation2 + $0xa4] sm:$0xf]
  %v5389 = vld [vmem:[#allocation2 + $0xa8] sm:$0xf]
  %v5390 = vld [vmem:[#allocation2 + $0xac] sm:$0xf]
  %v5391 = vld [vmem:[#allocation2 + $0xb0] sm:$0xf]
  %v5392 = vld [vmem:[#allocation2 + $0xb4] sm:$0xf]
  %v5393 = vld [vmem:[#allocation2 + $0xb8] sm:$0xf]
  %v5394 = vld [vmem:[#allocation2 + $0xbc] sm:$0xf]
  %v5395 = vld [vmem:[#allocation2 + $0x50] sm:$0xf]
  %v5396 = vld [vmem:[#allocation2 + $0x54] sm:$0xf]
  %v5397 = vld [vmem:[#allocation2 + $0x58] sm:$0xf]
  %v5398 = vld [vmem:[#allocation2 + $0x5c] sm:$0xf]
  %v5399 = vld [vmem:[#allocation2 + $0xc0] sm:$0xf]
  %v5400 = vld [vmem:[#allocation2 + $0xc4] sm:$0xf]
  %v5401 = vld [vmem:[#allocation2 + $0xc8] sm:$0xf]
  %v5402 = vld [vmem:[#allocation2 + $0xcc] sm:$0xf]
  %v5403 = vld [vmem:[#allocation2 + $0x60] sm:$0xf]
  %v5404 = vld [vmem:[#allocation2 + $0x64] sm:$0xf]
  %v5405 = vld [vmem:[#allocation2 + $0x68] sm:$0xf]
  %v5406 = vld [vmem:[#allocation2 + $0x6c] sm:$0xf]
  %v5407 = vld [vmem:[%s4] sm:$0xf]
  %v5408 = vld [vmem:[%s4 + $0x4] sm:$0xf]
  %v5409 = vld [vmem:[%s4 + $0x8] sm:$0xf]
  %v5410 = vld [vmem:[%s4 + $0xc] sm:$0xf]
  %v5411 = vld [vmem:[%s4 + $0x10] sm:$0xf]
  %v5412 = vld [vmem:[%s4 + $0x14] sm:$0xf]
  %v5413 = vld [vmem:[%s4 + $0x18] sm:$0xf]
  %v5414 = vld [vmem:[%s4 + $0x1c] sm:$0xf]
  %v5415 = vld [vmem:[%s4 + $0x20] sm:$0xf]
  %v5416 = vld [vmem:[%s4 + $0x24] sm:$0xf]
  %v5417 = vld [vmem:[%s4 + $0x28] sm:$0x3]
  %s5418 = scalar_lea.vmem %s4, 44
  %v5419 = vld [vmem:[%s5418] sm:$0xf]
  %v5420 = vld [vmem:[%s5418 + $0x4] sm:$0xf]
  %v5421 = vld [vmem:[%s5418 + $0x8] sm:$0xf]
  %v5422 = vld [vmem:[%s5418 + $0xc] sm:$0xf]
  %v5423 = vld [vmem:[%s5418 + $0x10] sm:$0xf]
  %v5424 = vld [vmem:[%s5418 + $0x14] sm:$0xf]
  %v5425 = vld [vmem:[%s5418 + $0x18] sm:$0xf]
  %v5426 = vld [vmem:[%s5418 + $0x1c] sm:$0xf]
  %v5427 = vld [vmem:[%s5418 + $0x20] sm:$0xf]
  %v5428 = vld [vmem:[%s5418 + $0x24] sm:$0xf]
  %v5429 = vld [vmem:[%s5418 + $0x28] sm:$0x3]
  %v5450 = vunpack.c.l.b16 %v5375
  %v5451 = vunpack.c.l.b16 %v5376
  %v5452 = vunpack.c.l.b16 %v5377
  %v5453 = vunpack.c.l.b16 %v5378
  %v5454 = vunpack.c.l.b16 %v5379
  %v5455 = vunpack.c.l.b16 %v5380
  %v5456 = vunpack.c.l.b16 %v5381
  %v5457 = vunpack.c.l.b16 %v5382
  %v5458 = vunpack.c.l.b16 %v5383
  %v5459 = vunpack.c.l.b16 %v5384
  %v5460 = vunpack.c.l.b16 %v5385
  %v5461 = vunpack.c.l.b16 %v5386
  %v5462 = vunpack.c.l.b16 %v5387
  %v5463 = vunpack.c.l.b16 %v5388
  %v5464 = vunpack.c.l.b16 %v5389
  %v5465 = vunpack.c.l.b16 %v5390
  %v5466 = vunpack.c.l.b16 %v5391
  %v5467 = vunpack.c.l.b16 %v5392
  %v5468 = vunpack.c.l.b16 %v5393
  %v5469 = vunpack.c.l.b16 %v5394
  %v5470 = vpack.c.b16 %v5451, %v5450
  %v5471 = vpack.c.b16 %v5453, %v5452
  %v5472 = vpack.c.b16 %v5455, %v5454
  %v5473 = vpack.c.b16 %v5457, %v5456
  %v5474 = vpack.c.b16 %v5459, %v5458
  %v5475 = vpack.c.b16 %v5461, %v5460
  %v5476 = vpack.c.b16 %v5463, %v5462
  %v5477 = vpack.c.b16 %v5465, %v5464
  %v5478 = vpack.c.b16 %v5467, %v5466
  %v5479 = vpack.c.b16 %v5469, %v5468
  %v5491 = vunpack.c.l.b16 %v5419
  %v5492 = vunpack.c.l.b16 %v5420
  %v5493 = vunpack.c.l.b16 %v5421
  %v5494 = vunpack.c.l.b16 %v5422
  %v5495 = vunpack.c.l.b16 %v5423
  %v5496 = vunpack.c.l.b16 %v5424
  %v5497 = vunpack.c.l.b16 %v5425
  %v5498 = vunpack.c.l.b16 %v5426
  %v5499 = vunpack.c.l.b16 %v5427
  %v5500 = vunpack.c.l.b16 %v5428
  %v5501 = vunpack.c.l.b16 %v5429
  %v5502 = vpack.c.b16 %v5492, %v5491
  %v5503 = vpack.c.b16 %v5494, %v5493
  %v5504 = vpack.c.b16 %v5496, %v5495
  %v5505 = vpack.c.b16 %v5498, %v5497
  %v5506 = vpack.c.b16 %v5500, %v5499
  %v5507 = vpack.c.b16 %v5501, %v5501
  %vm5513 = vcmask 687104
  %v5515 = vsel %vm5513, %v5470, 0
  %v5518 = vsel %vm5513, %v5471, 0
  %v5521 = vsel %vm5513, %v5472, 0
  %v5524 = vsel %vm5513, %v5473, 0
  %v5527 = vsel %vm5513, %v5474, 0
  %v5530 = vsel %vm5513, %v5475, 0
  %v5533 = vsel %vm5513, %v5476, 0
  %v5536 = vsel %vm5513, %v5477, 0
  %v5539 = vsel %vm5513, %v5478, 0
  %v5542 = vsel %vm5513, %v5479, 0
  %vm5544 = vcmask 1041408
  %v5546 = vsel %vm5544, %v5507, 0
  %5548 = vmatprep.subr.bf16.mxu0 0
  %5549 = vmatpush1.bf16.msra.mxu0 0
  %5550 = vmatprep.subr.bf16.mxu0 0
  %5551 = vmatpush1.bf16.msra.mxu0 0
  %5552 = vmatprep.subr.bf16.mxu0 0
  %5553 = vmatpush1.bf16.msra.mxu0 %v5546
  %5554 = vmatprep.subr.bf16.mxu0 0
  %5555 = vmatpush1.bf16.msra.mxu0 %v5506
  %5556 = vmatprep.subr.bf16.mxu0 0
  %5557 = vmatpush1.bf16.msra.mxu0 %v5505
  %5558 = vmatprep.subr.bf16.mxu0 0
  %5559 = vmatpush1.bf16.msra.mxu0 %v5504
  %5560 = vmatprep.subr.bf16.mxu0 0
  %5561 = vmatpush1.bf16.msra.mxu0 %v5503
  %5562 = vmatprep.subr.bf16.mxu0 0
  %5563 = vmatpush1.bf16.msra.mxu0 %v5502
  %5564 = vmatprep.subr.bf16.mxu0 0
  %5565 = vmatpush2.bf16.msra.mxu0 0
  %5566 = vmatprep.subr.bf16.mxu0 0
  %5567 = vmatpush2.bf16.msra.mxu0 0
  %5568 = vmatprep.subr.bf16.mxu0 0
  %5569 = vmatpush2.bf16.msra.mxu0 0
  %5570 = vmatprep.subr.bf16.mxu0 0
  %5571 = vmatpush2.bf16.msra.mxu0 0
  %5572 = vmatprep.subr.bf16.mxu0 0
  %5573 = vmatpush2.bf16.msra.mxu0 0
  %5574 = vmatprep.subr.bf16.mxu0 0
  %5575 = vmatpush2.bf16.msra.mxu0 0
  %5576 = vmatprep.subr.bf16.mxu0 0
  %5577 = vmatpush2.bf16.msra.mxu0 0
  %5578 = vmatprep.subr.bf16.mxu0 0
  %5579 = vmatpush2.bf16.msra.mxu0 0
  %5580 = vmatprep.mubr.bf16.mxu0 0
  %5581 = vmatmul.mubr.bf16.gmra.mxu0 %v5515
  %v5582 = vpop.f32.mrf.mxu0
  %v5583 = vadd.f32 0.0, %v5582
  %v5584 = vpop.f32.mrf.mxu0
  %v5585 = vpop.f32.mrf.mxu0
  %v5586 = vadd.f32 0.0, %v5585
  %v5587 = vpop.f32.mrf.mxu0
  %5588 = vmatprep.mubr.bf16.mxu0 0
  %5589 = vmatmul.mubr.bf16.gmra.mxu0 %v5518
  %v5590 = vpop.f32.mrf.mxu0
  %v5591 = vadd.f32 0.0, %v5590
  %v5592 = vpop.f32.mrf.mxu0
  %v5593 = vpop.f32.mrf.mxu0
  %v5594 = vadd.f32 0.0, %v5593
  %v5595 = vpop.f32.mrf.mxu0
  %5596 = vmatprep.mubr.bf16.mxu0 0
  %5597 = vmatmul.mubr.bf16.gmra.mxu0 %v5521
  %v5598 = vpop.f32.mrf.mxu0
  %v5599 = vadd.f32 0.0, %v5598
  %v5600 = vpop.f32.mrf.mxu0
  %v5601 = vpop.f32.mrf.mxu0
  %v5602 = vadd.f32 0.0, %v5601
  %v5603 = vpop.f32.mrf.mxu0
  %5604 = vmatprep.mubr.bf16.mxu0 0
  %5605 = vmatmul.mubr.bf16.gmra.mxu0 %v5524
  %v5606 = vpop.f32.mrf.mxu0
  %v5607 = vadd.f32 0.0, %v5606
  %v5608 = vpop.f32.mrf.mxu0
  %v5609 = vpop.f32.mrf.mxu0
  %v5610 = vadd.f32 0.0, %v5609
  %v5611 = vpop.f32.mrf.mxu0
  %5612 = vmatprep.mubr.bf16.mxu0 0
  %5613 = vmatmul.mubr.bf16.gmra.mxu0 %v5527
  %v5614 = vpop.f32.mrf.mxu0
  %v5615 = vadd.f32 0.0, %v5614
  %v5616 = vpop.f32.mrf.mxu0
  %v5617 = vpop.f32.mrf.mxu0
  %v5618 = vadd.f32 0.0, %v5617
  %v5619 = vpop.f32.mrf.mxu0
  %5620 = vmatprep.mubr.bf16.mxu0 0
  %5621 = vmatmul.mubr.bf16.gmra.mxu0 %v5530
  %v5622 = vpop.f32.mrf.mxu0
  %v5623 = vadd.f32 0.0, %v5622
  %v5624 = vpop.f32.mrf.mxu0
  %v5625 = vpop.f32.mrf.mxu0
  %v5626 = vadd.f32 0.0, %v5625
  %v5627 = vpop.f32.mrf.mxu0
  %5628 = vmatprep.mubr.bf16.mxu0 0
  %5629 = vmatmul.mubr.bf16.gmra.mxu0 %v5533
  %v5630 = vpop.f32.mrf.mxu0
  %v5631 = vadd.f32 0.0, %v5630
  %v5632 = vpop.f32.mrf.mxu0
  %v5633 = vpop.f32.mrf.mxu0
  %v5634 = vadd.f32 0.0, %v5633
  %v5635 = vpop.f32.mrf.mxu0
  %5636 = vmatprep.mubr.bf16.mxu0 0
  %5637 = vmatmul.mubr.bf16.gmra.mxu0 %v5536
  %v5638 = vpop.f32.mrf.mxu0
  %v5639 = vadd.f32 0.0, %v5638
  %v5640 = vpop.f32.mrf.mxu0
  %v5641 = vpop.f32.mrf.mxu0
  %v5642 = vadd.f32 0.0, %v5641
  %v5643 = vpop.f32.mrf.mxu0
  %5644 = vmatprep.mubr.bf16.mxu0 0
  %5645 = vmatmul.mubr.bf16.gmra.mxu0 %v5539
  %v5646 = vpop.f32.mrf.mxu0
  %v5647 = vadd.f32 0.0, %v5646
  %v5648 = vpop.f32.mrf.mxu0
  %v5649 = vpop.f32.mrf.mxu0
  %v5650 = vadd.f32 0.0, %v5649
  %v5651 = vpop.f32.mrf.mxu0
  %5652 = vmatprep.mubr.bf16.mxu0 0
  %5653 = vmatmul.mubr.bf16.gmra.mxu0 %v5542
  %v5654 = vpop.f32.mrf.mxu0
  %v5655 = vadd.f32 0.0, %v5654
  %v5656 = vpop.f32.mrf.mxu0
  %v5657 = vpop.f32.mrf.mxu0
  %v5658 = vadd.f32 0.0, %v5657
  %v5659 = vpop.f32.mrf.mxu0
  %5660 = vdwg.mxu0
  %v5681 = vunpack.c.l.b16 %v5355
  %v5682 = vunpack.c.l.b16 %v5356
  %v5683 = vunpack.c.l.b16 %v5357
  %v5684 = vunpack.c.l.b16 %v5358
  %v5685 = vunpack.c.l.b16 %v5359
  %v5686 = vunpack.c.l.b16 %v5360
  %v5687 = vunpack.c.l.b16 %v5361
  %v5688 = vunpack.c.l.b16 %v5362
  %v5689 = vunpack.c.l.b16 %v5363
  %v5690 = vunpack.c.l.b16 %v5364
  %v5691 = vunpack.c.l.b16 %v5365
  %v5692 = vunpack.c.l.b16 %v5366
  %v5693 = vunpack.c.l.b16 %v5367
  %v5694 = vunpack.c.l.b16 %v5368
  %v5695 = vunpack.c.l.b16 %v5369
  %v5696 = vunpack.c.l.b16 %v5370
  %v5697 = vunpack.c.l.b16 %v5371
  %v5698 = vunpack.c.l.b16 %v5372
  %v5699 = vunpack.c.l.b16 %v5373
  %v5700 = vunpack.c.l.b16 %v5374
  %v5701 = vpack.c.b16 %v5682, %v5681
  %v5702 = vpack.c.b16 %v5684, %v5683
  %v5703 = vpack.c.b16 %v5686, %v5685
  %v5704 = vpack.c.b16 %v5688, %v5687
  %v5705 = vpack.c.b16 %v5690, %v5689
  %v5706 = vpack.c.b16 %v5692, %v5691
  %v5707 = vpack.c.b16 %v5694, %v5693
  %v5708 = vpack.c.b16 %v5696, %v5695
  %v5709 = vpack.c.b16 %v5698, %v5697
  %v5710 = vpack.c.b16 %v5700, %v5699
  %v5722 = vunpack.c.l.b16 %v5407
  %v5723 = vunpack.c.l.b16 %v5408
  %v5724 = vunpack.c.l.b16 %v5409
  %v5725 = vunpack.c.l.b16 %v5410
  %v5726 = vunpack.c.l.b16 %v5411
  %v5727 = vunpack.c.l.b16 %v5412
  %v5728 = vunpack.c.l.b16 %v5413
  %v5729 = vunpack.c.l.b16 %v5414
  %v5730 = vunpack.c.l.b16 %v5415
  %v5731 = vunpack.c.l.b16 %v5416
  %v5732 = vunpack.c.l.b16 %v5417
  %v5733 = vpack.c.b16 %v5723, %v5722
  %v5734 = vpack.c.b16 %v5725, %v5724
  %v5735 = vpack.c.b16 %v5727, %v5726
  %v5736 = vpack.c.b16 %v5729, %v5728
  %v5737 = vpack.c.b16 %v5731, %v5730
  %v5738 = vpack.c.b16 %v5732, %v5732
  %v5745 = vsel %vm5513, %v5701, 0
  %v5748 = vsel %vm5513, %v5702, 0
  %v5751 = vsel %vm5513, %v5703, 0
  %v5754 = vsel %vm5513, %v5704, 0
  %v5757 = vsel %vm5513, %v5705, 0
  %v5760 = vsel %vm5513, %v5706, 0
  %v5763 = vsel %vm5513, %v5707, 0
  %v5766 = vsel %vm5513, %v5708, 0
  %v5769 = vsel %vm5513, %v5709, 0
  %v5772 = vsel %vm5513, %v5710, 0
  %v5775 = vsel %vm5544, %v5738, 0
  %5777 = vmatprep.subr.bf16.mxu0 0
  %5778 = vmatpush1.bf16.msra.mxu0 0
  %5779 = vmatprep.subr.bf16.mxu0 0
  %5780 = vmatpush1.bf16.msra.mxu0 0
  %5781 = vmatprep.subr.bf16.mxu0 0
  %5782 = vmatpush1.bf16.msra.mxu0 %v5775
  %5783 = vmatprep.subr.bf16.mxu0 0
  %5784 = vmatpush1.bf16.msra.mxu0 %v5737
  %5785 = vmatprep.subr.bf16.mxu0 0
  %5786 = vmatpush1.bf16.msra.mxu0 %v5736
  %5787 = vmatprep.subr.bf16.mxu0 0
  %5788 = vmatpush1.bf16.msra.mxu0 %v5735
  %5789 = vmatprep.subr.bf16.mxu0 0
  %5790 = vmatpush1.bf16.msra.mxu0 %v5734
  %5791 = vmatprep.subr.bf16.mxu0 0
  %5792 = vmatpush1.bf16.msra.mxu0 %v5733
  %5793 = vmatprep.subr.bf16.mxu0 0
  %5794 = vmatpush2.bf16.msra.mxu0 0
  %5795 = vmatprep.subr.bf16.mxu0 0
  %5796 = vmatpush2.bf16.msra.mxu0 0
  %5797 = vmatprep.subr.bf16.mxu0 0
  %5798 = vmatpush2.bf16.msra.mxu0 0
  %5799 = vmatprep.subr.bf16.mxu0 0
  %5800 = vmatpush2.bf16.msra.mxu0 0
  %5801 = vmatprep.subr.bf16.mxu0 0
  %5802 = vmatpush2.bf16.msra.mxu0 0
  %5803 = vmatprep.subr.bf16.mxu0 0
  %5804 = vmatpush2.bf16.msra.mxu0 0
  %5805 = vmatprep.subr.bf16.mxu0 0
  %5806 = vmatpush2.bf16.msra.mxu0 0
  %5807 = vmatprep.subr.bf16.mxu0 0
  %5808 = vmatpush2.bf16.msra.mxu0 0
  %5809 = vmatprep.mubr.bf16.mxu0 0
  %5810 = vmatmul.mubr.bf16.gmra.mxu0 %v5745
  %v5811 = vpop.f32.mrf.mxu0
  %v5812 = vadd.f32 %v5583, %v5811
  %v5813 = vpop.f32.mrf.mxu0
  %v5814 = vpop.f32.mrf.mxu0
  %v5815 = vadd.f32 %v5586, %v5814
  %v5816 = vpop.f32.mrf.mxu0
  %5817 = vmatprep.mubr.bf16.mxu0 0
  %5818 = vmatmul.mubr.bf16.gmra.mxu0 %v5748
  %v5819 = vpop.f32.mrf.mxu0
  %v5820 = vadd.f32 %v5591, %v5819
  %v5821 = vpop.f32.mrf.mxu0
  %v5822 = vpop.f32.mrf.mxu0
  %v5823 = vadd.f32 %v5594, %v5822
  %v5824 = vpop.f32.mrf.mxu0
  %5825 = vmatprep.mubr.bf16.mxu0 0
  %5826 = vmatmul.mubr.bf16.gmra.mxu0 %v5751
  %v5827 = vpop.f32.mrf.mxu0
  %v5828 = vadd.f32 %v5599, %v5827
  %v5829 = vpop.f32.mrf.mxu0
  %v5830 = vpop.f32.mrf.mxu0
  %v5831 = vadd.f32 %v5602, %v5830
  %v5832 = vpop.f32.mrf.mxu0
  %5833 = vmatprep.mubr.bf16.mxu0 0
  %5834 = vmatmul.mubr.bf16.gmra.mxu0 %v5754
  %v5835 = vpop.f32.mrf.mxu0
  %v5836 = vadd.f32 %v5607, %v5835
  %v5837 = vpop.f32.mrf.mxu0
  %v5838 = vpop.f32.mrf.mxu0
  %v5839 = vadd.f32 %v5610, %v5838
  %v5840 = vpop.f32.mrf.mxu0
  %5841 = vmatprep.mubr.bf16.mxu0 0
  %5842 = vmatmul.mubr.bf16.gmra.mxu0 %v5757
  %v5843 = vpop.f32.mrf.mxu0
  %v5844 = vadd.f32 %v5615, %v5843
  %v5845 = vpop.f32.mrf.mxu0
  %v5846 = vpop.f32.mrf.mxu0
  %v5847 = vadd.f32 %v5618, %v5846
  %v5848 = vpop.f32.mrf.mxu0
  %5849 = vmatprep.mubr.bf16.mxu0 0
  %5850 = vmatmul.mubr.bf16.gmra.mxu0 %v5760
  %v5851 = vpop.f32.mrf.mxu0
  %v5852 = vadd.f32 %v5623, %v5851
  %v5853 = vpop.f32.mrf.mxu0
  %v5854 = vpop.f32.mrf.mxu0
  %v5855 = vadd.f32 %v5626, %v5854
  %v5856 = vpop.f32.mrf.mxu0
  %5857 = vmatprep.mubr.bf16.mxu0 0
  %5858 = vmatmul.mubr.bf16.gmra.mxu0 %v5763
  %v5859 = vpop.f32.mrf.mxu0
  %v5860 = vadd.f32 %v5631, %v5859
  %v5861 = vpop.f32.mrf.mxu0
  %v5862 = vpop.f32.mrf.mxu0
  %v5863 = vadd.f32 %v5634, %v5862
  %v5864 = vpop.f32.mrf.mxu0
  %5865 = vmatprep.mubr.bf16.mxu0 0
  %5866 = vmatmul.mubr.bf16.gmra.mxu0 %v5766
  %v5867 = vpop.f32.mrf.mxu0
  %v5868 = vadd.f32 %v5639, %v5867
  %v5869 = vpop.f32.mrf.mxu0
  %v5870 = vpop.f32.mrf.mxu0
  %v5871 = vadd.f32 %v5642, %v5870
  %v5872 = vpop.f32.mrf.mxu0
  %5873 = vmatprep.mubr.bf16.mxu0 0
  %5874 = vmatmul.mubr.bf16.gmra.mxu0 %v5769
  %v5875 = vpop.f32.mrf.mxu0
  %v5876 = vadd.f32 %v5647, %v5875
  %v5877 = vpop.f32.mrf.mxu0
  %v5878 = vpop.f32.mrf.mxu0
  %v5879 = vadd.f32 %v5650, %v5878
  %v5880 = vpop.f32.mrf.mxu0
  %5881 = vmatprep.mubr.bf16.mxu0 0
  %5882 = vmatmul.mubr.bf16.gmra.mxu0 %v5772
  %v5883 = vpop.f32.mrf.mxu0
  %v5884 = vadd.f32 %v5655, %v5883
  %v5885 = vpop.f32.mrf.mxu0
  %v5886 = vpop.f32.mrf.mxu0
  %v5887 = vadd.f32 %v5658, %v5886
  %v5888 = vpop.f32.mrf.mxu0
  %5889 = vdwg.mxu0
  %s5890 = scalar_lea.vmem %s4, 88
  %v5891 = vld [vmem:[%s5890] sm:$0xf]
  %v5892 = vld [vmem:[%s5890 + $0x4] sm:$0xf]
  %v5893 = vld [vmem:[%s5890 + $0x8] sm:$0xf]
  %v5894 = vld [vmem:[%s5890 + $0xc] sm:$0xf]
  %v5895 = vld [vmem:[%s5890 + $0x10] sm:$0xf]
  %v5896 = vld [vmem:[%s5890 + $0x14] sm:$0xf]
  %v5897 = vld [vmem:[%s5890 + $0x18] sm:$0xf]
  %v5898 = vld [vmem:[%s5890 + $0x1c] sm:$0xf]
  %v5899 = vld [vmem:[%s5890 + $0x20] sm:$0xf]
  %v5900 = vld [vmem:[%s5890 + $0x24] sm:$0xf]
  %v5901 = vld [vmem:[%s5890 + $0x28] sm:$0x3]
  %v5906 = vunpack.c.l.b16 %v5395
  %v5907 = vunpack.c.l.b16 %v5396
  %v5908 = vunpack.c.l.b16 %v5397
  %v5909 = vunpack.c.l.b16 %v5398
  %v5910 = vpack.c.b16 %v5907, %v5906
  %v5911 = vpack.c.b16 %v5909, %v5908
  %v5923 = vunpack.c.l.b16 %v5891
  %v5924 = vunpack.c.l.b16 %v5892
  %v5925 = vunpack.c.l.b16 %v5893
  %v5926 = vunpack.c.l.b16 %v5894
  %v5927 = vunpack.c.l.b16 %v5895
  %v5928 = vunpack.c.l.b16 %v5896
  %v5929 = vunpack.c.l.b16 %v5897
  %v5930 = vunpack.c.l.b16 %v5898
  %v5931 = vunpack.c.l.b16 %v5899
  %v5932 = vunpack.c.l.b16 %v5900
  %v5933 = vunpack.c.l.b16 %v5901
  %v5934 = vpack.c.b16 %v5924, %v5923
  %v5935 = vpack.c.b16 %v5926, %v5925
  %v5936 = vpack.c.b16 %v5928, %v5927
  %v5937 = vpack.c.b16 %v5930, %v5929
  %v5938 = vpack.c.b16 %v5932, %v5931
  %v5939 = vpack.c.b16 %v5933, %v5933
  %v5946 = vsel %vm5513, %v5910, 0
  %v5949 = vsel %vm5513, %v5911, 0
  %v5952 = vsel %vm5544, %v5939, 0
  %5954 = vmatprep.subr.bf16.mxu0 0
  %5955 = vmatpush1.bf16.msra.mxu0 0
  %5956 = vmatprep.subr.bf16.mxu0 0
  %5957 = vmatpush1.bf16.msra.mxu0 0
  %5958 = vmatprep.subr.bf16.mxu0 0
  %5959 = vmatpush1.bf16.msra.mxu0 %v5952
  %5960 = vmatprep.subr.bf16.mxu0 0
  %5961 = vmatpush1.bf16.msra.mxu0 %v5938
  %5962 = vmatprep.subr.bf16.mxu0 0
  %5963 = vmatpush1.bf16.msra.mxu0 %v5937
  %5964 = vmatprep.subr.bf16.mxu0 0
  %5965 = vmatpush1.bf16.msra.mxu0 %v5936
  %5966 = vmatprep.subr.bf16.mxu0 0
  %5967 = vmatpush1.bf16.msra.mxu0 %v5935
  %5968 = vmatprep.subr.bf16.mxu0 0
  %5969 = vmatpush1.bf16.msra.mxu0 %v5934
  %5970 = vmatprep.subr.bf16.mxu0 0
  %5971 = vmatpush2.bf16.msra.mxu0 0
  %5972 = vmatprep.subr.bf16.mxu0 0
  %5973 = vmatpush2.bf16.msra.mxu0 0
  %5974 = vmatprep.subr.bf16.mxu0 0
  %5975 = vmatpush2.bf16.msra.mxu0 0
  %5976 = vmatprep.subr.bf16.mxu0 0
  %5977 = vmatpush2.bf16.msra.mxu0 0
  %5978 = vmatprep.subr.bf16.mxu0 0
  %5979 = vmatpush2.bf16.msra.mxu0 0
  %5980 = vmatprep.subr.bf16.mxu0 0
  %5981 = vmatpush2.bf16.msra.mxu0 0
  %5982 = vmatprep.subr.bf16.mxu0 0
  %5983 = vmatpush2.bf16.msra.mxu0 0
  %5984 = vmatprep.subr.bf16.mxu0 0
  %5985 = vmatpush2.bf16.msra.mxu0 0
  %5986 = vmatprep.mubr.bf16.mxu0 0
  %5987 = vmatmul.mubr.bf16.gmra.mxu0 %v5751
  %v5988 = vpop.f32.mrf.mxu0
  %v5989 = vadd.f32 0.0, %v5988
  %v5990 = vpop.f32.mrf.mxu0
  %v5991 = vpop.f32.mrf.mxu0
  %v5992 = vadd.f32 0.0, %v5991
  %v5993 = vpop.f32.mrf.mxu0
  %5994 = vmatprep.mubr.bf16.mxu0 0
  %5995 = vmatmul.mubr.bf16.gmra.mxu0 %v5754
  %v5996 = vpop.f32.mrf.mxu0
  %v5997 = vadd.f32 0.0, %v5996
  %v5998 = vpop.f32.mrf.mxu0
  %v5999 = vpop.f32.mrf.mxu0
  %v6000 = vadd.f32 0.0, %v5999
  %v6001 = vpop.f32.mrf.mxu0
  %6002 = vmatprep.mubr.bf16.mxu0 0
  %6003 = vmatmul.mubr.bf16.gmra.mxu0 %v5757
  %v6004 = vpop.f32.mrf.mxu0
  %v6005 = vadd.f32 0.0, %v6004
  %v6006 = vpop.f32.mrf.mxu0
  %v6007 = vpop.f32.mrf.mxu0
  %v6008 = vadd.f32 0.0, %v6007
  %v6009 = vpop.f32.mrf.mxu0
  %6010 = vmatprep.mubr.bf16.mxu0 0
  %6011 = vmatmul.mubr.bf16.gmra.mxu0 %v5760
  %v6012 = vpop.f32.mrf.mxu0
  %v6013 = vadd.f32 0.0, %v6012
  %v6014 = vpop.f32.mrf.mxu0
  %v6015 = vpop.f32.mrf.mxu0
  %v6016 = vadd.f32 0.0, %v6015
  %v6017 = vpop.f32.mrf.mxu0
  %6018 = vmatprep.mubr.bf16.mxu0 0
  %6019 = vmatmul.mubr.bf16.gmra.mxu0 %v5763
  %v6020 = vpop.f32.mrf.mxu0
  %v6021 = vadd.f32 0.0, %v6020
  %v6022 = vpop.f32.mrf.mxu0
  %v6023 = vpop.f32.mrf.mxu0
  %v6024 = vadd.f32 0.0, %v6023
  %v6025 = vpop.f32.mrf.mxu0
  %6026 = vmatprep.mubr.bf16.mxu0 0
  %6027 = vmatmul.mubr.bf16.gmra.mxu0 %v5766
  %v6028 = vpop.f32.mrf.mxu0
  %v6029 = vadd.f32 0.0, %v6028
  %v6030 = vpop.f32.mrf.mxu0
  %v6031 = vpop.f32.mrf.mxu0
  %v6032 = vadd.f32 0.0, %v6031
  %v6033 = vpop.f32.mrf.mxu0
  %6034 = vmatprep.mubr.bf16.mxu0 0
  %6035 = vmatmul.mubr.bf16.gmra.mxu0 %v5769
  %v6036 = vpop.f32.mrf.mxu0
  %v6037 = vadd.f32 0.0, %v6036
  %v6038 = vpop.f32.mrf.mxu0
  %v6039 = vpop.f32.mrf.mxu0
  %v6040 = vadd.f32 0.0, %v6039
  %v6041 = vpop.f32.mrf.mxu0
  %6042 = vmatprep.mubr.bf16.mxu0 0
  %6043 = vmatmul.mubr.bf16.gmra.mxu0 %v5772
  %v6044 = vpop.f32.mrf.mxu0
  %v6045 = vadd.f32 0.0, %v6044
  %v6046 = vpop.f32.mrf.mxu0
  %v6047 = vpop.f32.mrf.mxu0
  %v6048 = vadd.f32 0.0, %v6047
  %v6049 = vpop.f32.mrf.mxu0
  %6050 = vmatprep.mubr.bf16.mxu0 0
  %6051 = vmatmul.mubr.bf16.gmra.mxu0 %v5946
  %v6052 = vpop.f32.mrf.mxu0
  %v6053 = vadd.f32 0.0, %v6052
  %v6054 = vpop.f32.mrf.mxu0
  %v6055 = vpop.f32.mrf.mxu0
  %v6056 = vadd.f32 0.0, %v6055
  %v6057 = vpop.f32.mrf.mxu0
  %6058 = vmatprep.mubr.bf16.mxu0 0
  %6059 = vmatmul.mubr.bf16.gmra.mxu0 %v5949
  %v6060 = vpop.f32.mrf.mxu0
  %v6061 = vadd.f32 0.0, %v6060
  %v6062 = vpop.f32.mrf.mxu0
  %v6063 = vpop.f32.mrf.mxu0
  %v6064 = vadd.f32 0.0, %v6063
  %v6065 = vpop.f32.mrf.mxu0
  %6066 = vdwg.mxu0
  %v6067 = vadd.f32 %v5812, %v5989
  %v6068 = vadd.f32 %v5815, %v5992
  %v6069 = vadd.f32 %v5820, %v5997
  %v6070 = vadd.f32 %v5823, %v6000
  %v6071 = vadd.f32 %v5828, %v6005
  %v6072 = vadd.f32 %v5831, %v6008
  %v6073 = vadd.f32 %v5836, %v6013
  %v6074 = vadd.f32 %v5839, %v6016
  %v6075 = vadd.f32 %v5844, %v6021
  %v6076 = vadd.f32 %v5847, %v6024
  %v6077 = vadd.f32 %v5852, %v6029
  %v6078 = vadd.f32 %v5855, %v6032
  %v6079 = vadd.f32 %v5860, %v6037
  %v6080 = vadd.f32 %v5863, %v6040
  %v6081 = vadd.f32 %v5868, %v6045
  %v6082 = vadd.f32 %v5871, %v6048
  %v6083 = vadd.f32 %v5876, %v6053
  %v6084 = vadd.f32 %v5879, %v6056
  %v6085 = vadd.f32 %v5884, %v6061
  %v6086 = vadd.f32 %v5887, %v6064
  %s6087 = scalar_lea.vmem %s4, 132
  %v6088 = vld [vmem:[%s6087] sm:$0xf]
  %v6089 = vld [vmem:[%s6087 + $0x4] sm:$0xf]
  %v6090 = vld [vmem:[%s6087 + $0x8] sm:$0xf]
  %v6091 = vld [vmem:[%s6087 + $0xc] sm:$0xf]
  %v6092 = vld [vmem:[%s6087 + $0x10] sm:$0xf]
  %v6093 = vld [vmem:[%s6087 + $0x14] sm:$0xf]
  %v6094 = vld [vmem:[%s6087 + $0x18] sm:$0xf]
  %v6095 = vld [vmem:[%s6087 + $0x1c] sm:$0xf]
  %v6096 = vld [vmem:[%s6087 + $0x20] sm:$0xf]
  %v6097 = vld [vmem:[%s6087 + $0x24] sm:$0xf]
  %v6098 = vld [vmem:[%s6087 + $0x28] sm:$0x3]
  %v6103 = vunpack.c.l.b16 %v5399
  %v6104 = vunpack.c.l.b16 %v5400
  %v6105 = vunpack.c.l.b16 %v5401
  %v6106 = vunpack.c.l.b16 %v5402
  %v6107 = vpack.c.b16 %v6104, %v6103
  %v6108 = vpack.c.b16 %v6106, %v6105
  %v6120 = vunpack.c.l.b16 %v6088
  %v6121 = vunpack.c.l.b16 %v6089
  %v6122 = vunpack.c.l.b16 %v6090
  %v6123 = vunpack.c.l.b16 %v6091
  %v6124 = vunpack.c.l.b16 %v6092
  %v6125 = vunpack.c.l.b16 %v6093
  %v6126 = vunpack.c.l.b16 %v6094
  %v6127 = vunpack.c.l.b16 %v6095
  %v6128 = vunpack.c.l.b16 %v6096
  %v6129 = vunpack.c.l.b16 %v6097
  %v6130 = vunpack.c.l.b16 %v6098
  %v6131 = vpack.c.b16 %v6121, %v6120
  %v6132 = vpack.c.b16 %v6123, %v6122
  %v6133 = vpack.c.b16 %v6125, %v6124
  %v6134 = vpack.c.b16 %v6127, %v6126
  %v6135 = vpack.c.b16 %v6129, %v6128
  %v6136 = vpack.c.b16 %v6130, %v6130
  %v6143 = vsel %vm5513, %v6107, 0
  %v6146 = vsel %vm5513, %v6108, 0
  %v6149 = vsel %vm5544, %v6136, 0
  %6151 = vmatprep.subr.bf16.mxu0 0
  %6152 = vmatpush1.bf16.msra.mxu0 0
  %6153 = vmatprep.subr.bf16.mxu0 0
  %6154 = vmatpush1.bf16.msra.mxu0 0
  %6155 = vmatprep.subr.bf16.mxu0 0
  %6156 = vmatpush1.bf16.msra.mxu0 %v6149
  %6157 = vmatprep.subr.bf16.mxu0 0
  %6158 = vmatpush1.bf16.msra.mxu0 %v6135
  %6159 = vmatprep.subr.bf16.mxu0 0
  %6160 = vmatpush1.bf16.msra.mxu0 %v6134
  %6161 = vmatprep.subr.bf16.mxu0 0
  %6162 = vmatpush1.bf16.msra.mxu0 %v6133
  %6163 = vmatprep.subr.bf16.mxu0 0
  %6164 = vmatpush1.bf16.msra.mxu0 %v6132
  %6165 = vmatprep.subr.bf16.mxu0 0
  %6166 = vmatpush1.bf16.msra.mxu0 %v6131
  %6167 = vmatprep.subr.bf16.mxu0 0
  %6168 = vmatpush2.bf16.msra.mxu0 0
  %6169 = vmatprep.subr.bf16.mxu0 0
  %6170 = vmatpush2.bf16.msra.mxu0 0
  %6171 = vmatprep.subr.bf16.mxu0 0
  %6172 = vmatpush2.bf16.msra.mxu0 0
  %6173 = vmatprep.subr.bf16.mxu0 0
  %6174 = vmatpush2.bf16.msra.mxu0 0
  %6175 = vmatprep.subr.bf16.mxu0 0
  %6176 = vmatpush2.bf16.msra.mxu0 0
  %6177 = vmatprep.subr.bf16.mxu0 0
  %6178 = vmatpush2.bf16.msra.mxu0 0
  %6179 = vmatprep.subr.bf16.mxu0 0
  %6180 = vmatpush2.bf16.msra.mxu0 0
  %6181 = vmatprep.subr.bf16.mxu0 0
  %6182 = vmatpush2.bf16.msra.mxu0 0
  %6183 = vmatprep.mubr.bf16.mxu0 0
  %6184 = vmatmul.mubr.bf16.gmra.mxu0 %v5521
  %v6185 = vpop.f32.mrf.mxu0
  %v6186 = vadd.f32 0.0, %v6185
  %v6187 = vpop.f32.mrf.mxu0
  %v6188 = vpop.f32.mrf.mxu0
  %v6189 = vadd.f32 0.0, %v6188
  %v6190 = vpop.f32.mrf.mxu0
  %6191 = vmatprep.mubr.bf16.mxu0 0
  %6192 = vmatmul.mubr.bf16.gmra.mxu0 %v5524
  %v6193 = vpop.f32.mrf.mxu0
  %v6194 = vadd.f32 0.0, %v6193
  %v6195 = vpop.f32.mrf.mxu0
  %v6196 = vpop.f32.mrf.mxu0
  %v6197 = vadd.f32 0.0, %v6196
  %v6198 = vpop.f32.mrf.mxu0
  %6199 = vmatprep.mubr.bf16.mxu0 0
  %6200 = vmatmul.mubr.bf16.gmra.mxu0 %v5527
  %v6201 = vpop.f32.mrf.mxu0
  %v6202 = vadd.f32 0.0, %v6201
  %v6203 = vpop.f32.mrf.mxu0
  %v6204 = vpop.f32.mrf.mxu0
  %v6205 = vadd.f32 0.0, %v6204
  %v6206 = vpop.f32.mrf.mxu0
  %6207 = vmatprep.mubr.bf16.mxu0 0
  %6208 = vmatmul.mubr.bf16.gmra.mxu0 %v5530
  %v6209 = vpop.f32.mrf.mxu0
  %v6210 = vadd.f32 0.0, %v6209
  %v6211 = vpop.f32.mrf.mxu0
  %v6212 = vpop.f32.mrf.mxu0
  %v6213 = vadd.f32 0.0, %v6212
  %v6214 = vpop.f32.mrf.mxu0
  %6215 = vmatprep.mubr.bf16.mxu0 0
  %6216 = vmatmul.mubr.bf16.gmra.mxu0 %v5533
  %v6217 = vpop.f32.mrf.mxu0
  %v6218 = vadd.f32 0.0, %v6217
  %v6219 = vpop.f32.mrf.mxu0
  %v6220 = vpop.f32.mrf.mxu0
  %v6221 = vadd.f32 0.0, %v6220
  %v6222 = vpop.f32.mrf.mxu0
  %6223 = vmatprep.mubr.bf16.mxu0 0
  %6224 = vmatmul.mubr.bf16.gmra.mxu0 %v5536
  %v6225 = vpop.f32.mrf.mxu0
  %v6226 = vadd.f32 0.0, %v6225
  %v6227 = vpop.f32.mrf.mxu0
  %v6228 = vpop.f32.mrf.mxu0
  %v6229 = vadd.f32 0.0, %v6228
  %v6230 = vpop.f32.mrf.mxu0
  %6231 = vmatprep.mubr.bf16.mxu0 0
  %6232 = vmatmul.mubr.bf16.gmra.mxu0 %v5539
  %v6233 = vpop.f32.mrf.mxu0
  %v6234 = vadd.f32 0.0, %v6233
  %v6235 = vpop.f32.mrf.mxu0
  %v6236 = vpop.f32.mrf.mxu0
  %v6237 = vadd.f32 0.0, %v6236
  %v6238 = vpop.f32.mrf.mxu0
  %6239 = vmatprep.mubr.bf16.mxu0 0
  %6240 = vmatmul.mubr.bf16.gmra.mxu0 %v5542
  %v6241 = vpop.f32.mrf.mxu0
  %v6242 = vadd.f32 0.0, %v6241
  %v6243 = vpop.f32.mrf.mxu0
  %v6244 = vpop.f32.mrf.mxu0
  %v6245 = vadd.f32 0.0, %v6244
  %v6246 = vpop.f32.mrf.mxu0
  %6247 = vmatprep.mubr.bf16.mxu0 0
  %6248 = vmatmul.mubr.bf16.gmra.mxu0 %v6143
  %v6249 = vpop.f32.mrf.mxu0
  %v6250 = vadd.f32 0.0, %v6249
  %v6251 = vpop.f32.mrf.mxu0
  %v6252 = vpop.f32.mrf.mxu0
  %v6253 = vadd.f32 0.0, %v6252
  %v6254 = vpop.f32.mrf.mxu0
  %6255 = vmatprep.mubr.bf16.mxu0 0
  %6256 = vmatmul.mubr.bf16.gmra.mxu0 %v6146
  %v6257 = vpop.f32.mrf.mxu0
  %v6258 = vadd.f32 0.0, %v6257
  %v6259 = vpop.f32.mrf.mxu0
  %v6260 = vpop.f32.mrf.mxu0
  %v6261 = vadd.f32 0.0, %v6260
  %v6262 = vpop.f32.mrf.mxu0
  %6263 = vdwg.mxu0
  %v6264 = vadd.f32 %v6067, %v6186
  %v6265 = vadd.f32 %v6068, %v6189
  %v6266 = vadd.f32 %v6069, %v6194
  %v6267 = vadd.f32 %v6070, %v6197
  %v6268 = vadd.f32 %v6071, %v6202
  %v6269 = vadd.f32 %v6072, %v6205
  %v6270 = vadd.f32 %v6073, %v6210
  %v6271 = vadd.f32 %v6074, %v6213
  %v6272 = vadd.f32 %v6075, %v6218
  %v6273 = vadd.f32 %v6076, %v6221
  %v6274 = vadd.f32 %v6077, %v6226
  %v6275 = vadd.f32 %v6078, %v6229
  %v6276 = vadd.f32 %v6079, %v6234
  %v6277 = vadd.f32 %v6080, %v6237
  %v6278 = vadd.f32 %v6081, %v6242
  %v6279 = vadd.f32 %v6082, %v6245
  %v6280 = vadd.f32 %v6083, %v6250
  %v6281 = vadd.f32 %v6084, %v6253
  %v6282 = vadd.f32 %v6085, %v6258
  %v6283 = vadd.f32 %v6086, %v6261
  %s6284 = scalar_lea.vmem %s4, 176
  %v6285 = vld [vmem:[%s6284] sm:$0xf]
  %v6286 = vld [vmem:[%s6284 + $0x4] sm:$0xf]
  %v6287 = vld [vmem:[%s6284 + $0x8] sm:$0xf]
  %v6288 = vld [vmem:[%s6284 + $0xc] sm:$0xf]
  %v6289 = vld [vmem:[%s6284 + $0x10] sm:$0xf]
  %v6290 = vld [vmem:[%s6284 + $0x14] sm:$0xf]
  %v6291 = vld [vmem:[%s6284 + $0x18] sm:$0xf]
  %v6292 = vld [vmem:[%s6284 + $0x1c] sm:$0xf]
  %v6293 = vld [vmem:[%s6284 + $0x20] sm:$0xf]
  %v6294 = vld [vmem:[%s6284 + $0x24] sm:$0xf]
  %v6295 = vld [vmem:[%s6284 + $0x28] sm:$0x3]
  %v6300 = vunpack.c.l.b16 %v5403
  %v6301 = vunpack.c.l.b16 %v5404
  %v6302 = vunpack.c.l.b16 %v5405
  %v6303 = vunpack.c.l.b16 %v5406
  %v6304 = vpack.c.b16 %v6301, %v6300
  %v6305 = vpack.c.b16 %v6303, %v6302
  %v6317 = vunpack.c.l.b16 %v6285
  %v6318 = vunpack.c.l.b16 %v6286
  %v6319 = vunpack.c.l.b16 %v6287
  %v6320 = vunpack.c.l.b16 %v6288
  %v6321 = vunpack.c.l.b16 %v6289
  %v6322 = vunpack.c.l.b16 %v6290
  %v6323 = vunpack.c.l.b16 %v6291
  %v6324 = vunpack.c.l.b16 %v6292
  %v6325 = vunpack.c.l.b16 %v6293
  %v6326 = vunpack.c.l.b16 %v6294
  %v6327 = vunpack.c.l.b16 %v6295
  %v6328 = vpack.c.b16 %v6318, %v6317
  %v6329 = vpack.c.b16 %v6320, %v6319
  %v6330 = vpack.c.b16 %v6322, %v6321
  %v6331 = vpack.c.b16 %v6324, %v6323
  %v6332 = vpack.c.b16 %v6326, %v6325
  %v6333 = vpack.c.b16 %v6327, %v6327
  %v6340 = vsel %vm5513, %v6304, 0
  %v6343 = vsel %vm5513, %v6305, 0
  %v6346 = vsel %vm5544, %v6333, 0
  %6348 = vmatprep.subr.bf16.mxu0 0
  %6349 = vmatpush1.bf16.msra.mxu0 0
  %6350 = vmatprep.subr.bf16.mxu0 0
  %6351 = vmatpush1.bf16.msra.mxu0 0
  %6352 = vmatprep.subr.bf16.mxu0 0
  %6353 = vmatpush1.bf16.msra.mxu0 %v6346
  %6354 = vmatprep.subr.bf16.mxu0 0
  %6355 = vmatpush1.bf16.msra.mxu0 %v6332
  %6356 = vmatprep.subr.bf16.mxu0 0
  %6357 = vmatpush1.bf16.msra.mxu0 %v6331
  %6358 = vmatprep.subr.bf16.mxu0 0
  %6359 = vmatpush1.bf16.msra.mxu0 %v6330
  %6360 = vmatprep.subr.bf16.mxu0 0
  %6361 = vmatpush1.bf16.msra.mxu0 %v6329
  %6362 = vmatprep.subr.bf16.mxu0 0
  %6363 = vmatpush1.bf16.msra.mxu0 %v6328
  %6364 = vmatprep.subr.bf16.mxu0 0
  %6365 = vmatpush2.bf16.msra.mxu0 0
  %6366 = vmatprep.subr.bf16.mxu0 0
  %6367 = vmatpush2.bf16.msra.mxu0 0
  %6368 = vmatprep.subr.bf16.mxu0 0
  %6369 = vmatpush2.bf16.msra.mxu0 0
  %6370 = vmatprep.subr.bf16.mxu0 0
  %6371 = vmatpush2.bf16.msra.mxu0 0
  %6372 = vmatprep.subr.bf16.mxu0 0
  %6373 = vmatpush2.bf16.msra.mxu0 0
  %6374 = vmatprep.subr.bf16.mxu0 0
  %6375 = vmatpush2.bf16.msra.mxu0 0
  %6376 = vmatprep.subr.bf16.mxu0 0
  %6377 = vmatpush2.bf16.msra.mxu0 0
  %6378 = vmatprep.subr.bf16.mxu0 0
  %6379 = vmatpush2.bf16.msra.mxu0 0
  %6380 = vmatprep.mubr.bf16.mxu0 0
  %6381 = vmatmul.mubr.bf16.gmra.mxu0 %v5757
  %v6382 = vpop.f32.mrf.mxu0
  %v6383 = vadd.f32 0.0, %v6382
  %v6384 = vpop.f32.mrf.mxu0
  %v6385 = vpop.f32.mrf.mxu0
  %v6386 = vadd.f32 0.0, %v6385
  %v6387 = vpop.f32.mrf.mxu0
  %6388 = vmatprep.mubr.bf16.mxu0 0
  %6389 = vmatmul.mubr.bf16.gmra.mxu0 %v5760
  %v6390 = vpop.f32.mrf.mxu0
  %v6391 = vadd.f32 0.0, %v6390
  %v6392 = vpop.f32.mrf.mxu0
  %v6393 = vpop.f32.mrf.mxu0
  %v6394 = vadd.f32 0.0, %v6393
  %v6395 = vpop.f32.mrf.mxu0
  %6396 = vmatprep.mubr.bf16.mxu0 0
  %6397 = vmatmul.mubr.bf16.gmra.mxu0 %v5763
  %v6398 = vpop.f32.mrf.mxu0
  %v6399 = vadd.f32 0.0, %v6398
  %v6400 = vpop.f32.mrf.mxu0
  %v6401 = vpop.f32.mrf.mxu0
  %v6402 = vadd.f32 0.0, %v6401
  %v6403 = vpop.f32.mrf.mxu0
  %6404 = vmatprep.mubr.bf16.mxu0 0
  %6405 = vmatmul.mubr.bf16.gmra.mxu0 %v5766
  %v6406 = vpop.f32.mrf.mxu0
  %v6407 = vadd.f32 0.0, %v6406
  %v6408 = vpop.f32.mrf.mxu0
  %v6409 = vpop.f32.mrf.mxu0
  %v6410 = vadd.f32 0.0, %v6409
  %v6411 = vpop.f32.mrf.mxu0
  %6412 = vmatprep.mubr.bf16.mxu0 0
  %6413 = vmatmul.mubr.bf16.gmra.mxu0 %v5769
  %v6414 = vpop.f32.mrf.mxu0
  %v6415 = vadd.f32 0.0, %v6414
  %v6416 = vpop.f32.mrf.mxu0
  %v6417 = vpop.f32.mrf.mxu0
  %v6418 = vadd.f32 0.0, %v6417
  %v6419 = vpop.f32.mrf.mxu0
  %6420 = vmatprep.mubr.bf16.mxu0 0
  %6421 = vmatmul.mubr.bf16.gmra.mxu0 %v5772
  %v6422 = vpop.f32.mrf.mxu0
  %v6423 = vadd.f32 0.0, %v6422
  %v6424 = vpop.f32.mrf.mxu0
  %v6425 = vpop.f32.mrf.mxu0
  %v6426 = vadd.f32 0.0, %v6425
  %v6427 = vpop.f32.mrf.mxu0
  %6428 = vmatprep.mubr.bf16.mxu0 0
  %6429 = vmatmul.mubr.bf16.gmra.mxu0 %v5946
  %v6430 = vpop.f32.mrf.mxu0
  %v6431 = vadd.f32 0.0, %v6430
  %v6432 = vpop.f32.mrf.mxu0
  %v6433 = vpop.f32.mrf.mxu0
  %v6434 = vadd.f32 0.0, %v6433
  %v6435 = vpop.f32.mrf.mxu0
  %6436 = vmatprep.mubr.bf16.mxu0 0
  %6437 = vmatmul.mubr.bf16.gmra.mxu0 %v5949
  %v6438 = vpop.f32.mrf.mxu0
  %v6439 = vadd.f32 0.0, %v6438
  %v6440 = vpop.f32.mrf.mxu0
  %v6441 = vpop.f32.mrf.mxu0
  %v6442 = vadd.f32 0.0, %v6441
  %v6443 = vpop.f32.mrf.mxu0
  %6444 = vmatprep.mubr.bf16.mxu0 0
  %6445 = vmatmul.mubr.bf16.gmra.mxu0 %v6340
  %v6446 = vpop.f32.mrf.mxu0
  %v6447 = vadd.f32 0.0, %v6446
  %v6448 = vpop.f32.mrf.mxu0
  %v6449 = vpop.f32.mrf.mxu0
  %v6450 = vadd.f32 0.0, %v6449
  %v6451 = vpop.f32.mrf.mxu0
  %6452 = vmatprep.mubr.bf16.mxu0 0
  %6453 = vmatmul.mubr.bf16.gmra.mxu0 %v6343
  %v6454 = vpop.f32.mrf.mxu0
  %v6455 = vadd.f32 0.0, %v6454
  %v6456 = vpop.f32.mrf.mxu0
  %v6457 = vpop.f32.mrf.mxu0
  %v6458 = vadd.f32 0.0, %v6457
  %v6459 = vpop.f32.mrf.mxu0
  %6460 = vdwg.mxu0
  %v6461 = vadd.f32 %v6264, %v6383
  %v6462 = vadd.f32 %v6265, %v6386
  %v6463 = vadd.f32 %v6266, %v6391
  %v6464 = vadd.f32 %v6267, %v6394
  %v6465 = vadd.f32 %v6268, %v6399
  %v6466 = vadd.f32 %v6269, %v6402
  %v6467 = vadd.f32 %v6270, %v6407
  %v6468 = vadd.f32 %v6271, %v6410
  %v6469 = vadd.f32 %v6272, %v6415
  %v6470 = vadd.f32 %v6273, %v6418
  %v6471 = vadd.f32 %v6274, %v6423
  %v6472 = vadd.f32 %v6275, %v6426
  %v6473 = vadd.f32 %v6276, %v6431
  %v6474 = vadd.f32 %v6277, %v6434
  %v6475 = vadd.f32 %v6278, %v6439
  %v6476 = vadd.f32 %v6279, %v6442
  %v6477 = vadd.f32 %v6280, %v6447
  %v6478 = vadd.f32 %v6281, %v6450
  %v6479 = vadd.f32 %v6282, %v6455
  %v6480 = vadd.f32 %v6283, %v6458
  %s6481 = scalar_lea.vmem %s4, 220
  %v6482 = vld [vmem:[%s6481] sm:$0xf]
  %v6483 = vld [vmem:[%s6481 + $0x4] sm:$0xf]
  %v6484 = vld [vmem:[%s6481 + $0x8] sm:$0xf]
  %v6485 = vld [vmem:[%s6481 + $0xc] sm:$0xf]
  %v6486 = vld [vmem:[%s6481 + $0x10] sm:$0xf]
  %v6487 = vld [vmem:[%s6481 + $0x14] sm:$0xf]
  %v6488 = vld [vmem:[%s6481 + $0x18] sm:$0xf]
  %v6489 = vld [vmem:[%s6481 + $0x1c] sm:$0xf]
  %v6490 = vld [vmem:[%s6481 + $0x20] sm:$0xf]
  %v6491 = vld [vmem:[%s6481 + $0x24] sm:$0xf]
  %v6492 = vld [vmem:[%s6481 + $0x28] sm:$0x3]
  %s6493 = scalar_lea.vmem %s4, 264
  %v6494 = vld [vmem:[%s6493] sm:$0xf]
  %v6495 = vld [vmem:[%s6493 + $0x4] sm:$0xf]
  %v6496 = vld [vmem:[%s6493 + $0x8] sm:$0xf]
  %v6497 = vld [vmem:[%s6493 + $0xc] sm:$0xf]
  %v6498 = vld [vmem:[%s6493 + $0x10] sm:$0xf]
  %v6499 = vld [vmem:[%s6493 + $0x14] sm:$0xf]
  %v6500 = vld [vmem:[%s6493 + $0x18] sm:$0xf]
  %v6501 = vld [vmem:[%s6493 + $0x1c] sm:$0xf]
  %v6502 = vld [vmem:[%s6493 + $0x20] sm:$0xf]
  %v6503 = vld [vmem:[%s6493 + $0x24] sm:$0xf]
  %v6504 = vld [vmem:[%s6493 + $0x28] sm:$0x3]
  %v6516 = vunpack.c.l.b16 %v6494
  %v6517 = vunpack.c.l.b16 %v6495
  %v6518 = vunpack.c.l.b16 %v6496
  %v6519 = vunpack.c.l.b16 %v6497
  %v6520 = vunpack.c.l.b16 %v6498
  %v6521 = vunpack.c.l.b16 %v6499
  %v6522 = vunpack.c.l.b16 %v6500
  %v6523 = vunpack.c.l.b16 %v6501
  %v6524 = vunpack.c.l.b16 %v6502
  %v6525 = vunpack.c.l.b16 %v6503
  %v6526 = vunpack.c.l.b16 %v6504
  %v6527 = vpack.c.b16 %v6517, %v6516
  %v6528 = vpack.c.b16 %v6519, %v6518
  %v6529 = vpack.c.b16 %v6521, %v6520
  %v6530 = vpack.c.b16 %v6523, %v6522
  %v6531 = vpack.c.b16 %v6525, %v6524
  %v6532 = vpack.c.b16 %v6526, %v6526
  %v6539 = vsel %vm5544, %v6532, 0
  %6541 = vmatprep.subr.bf16.mxu0 0
  %6542 = vmatpush1.bf16.msra.mxu0 0
  %6543 = vmatprep.subr.bf16.mxu0 0
  %6544 = vmatpush1.bf16.msra.mxu0 0
  %6545 = vmatprep.subr.bf16.mxu0 0
  %6546 = vmatpush1.bf16.msra.mxu0 %v6539
  %6547 = vmatprep.subr.bf16.mxu0 0
  %6548 = vmatpush1.bf16.msra.mxu0 %v6531
  %6549 = vmatprep.subr.bf16.mxu0 0
  %6550 = vmatpush1.bf16.msra.mxu0 %v6530
  %6551 = vmatprep.subr.bf16.mxu0 0
  %6552 = vmatpush1.bf16.msra.mxu0 %v6529
  %6553 = vmatprep.subr.bf16.mxu0 0
  %6554 = vmatpush1.bf16.msra.mxu0 %v6528
  %6555 = vmatprep.subr.bf16.mxu0 0
  %6556 = vmatpush1.bf16.msra.mxu0 %v6527
  %6557 = vmatprep.subr.bf16.mxu0 0
  %6558 = vmatpush2.bf16.msra.mxu0 0
  %6559 = vmatprep.subr.bf16.mxu0 0
  %6560 = vmatpush2.bf16.msra.mxu0 0
  %6561 = vmatprep.subr.bf16.mxu0 0
  %6562 = vmatpush2.bf16.msra.mxu0 0
  %6563 = vmatprep.subr.bf16.mxu0 0
  %6564 = vmatpush2.bf16.msra.mxu0 0
  %6565 = vmatprep.subr.bf16.mxu0 0
  %6566 = vmatpush2.bf16.msra.mxu0 0
  %6567 = vmatprep.subr.bf16.mxu0 0
  %6568 = vmatpush2.bf16.msra.mxu0 0
  %6569 = vmatprep.subr.bf16.mxu0 0
  %6570 = vmatpush2.bf16.msra.mxu0 0
  %6571 = vmatprep.subr.bf16.mxu0 0
  %6572 = vmatpush2.bf16.msra.mxu0 0
  %6573 = vmatprep.mubr.bf16.mxu0 0
  %6574 = vmatmul.mubr.bf16.gmra.mxu0 %v5515
  %v6575 = vpop.f32.mrf.mxu0
  %v6576 = vadd.f32 0.0, %v6575
  %v6577 = vpop.f32.mrf.mxu0
  %v6578 = vpop.f32.mrf.mxu0
  %v6579 = vadd.f32 0.0, %v6578
  %v6580 = vpop.f32.mrf.mxu0
  %6581 = vmatprep.mubr.bf16.mxu0 0
  %6582 = vmatmul.mubr.bf16.gmra.mxu0 %v5518
  %v6583 = vpop.f32.mrf.mxu0
  %v6584 = vadd.f32 0.0, %v6583
  %v6585 = vpop.f32.mrf.mxu0
  %v6586 = vpop.f32.mrf.mxu0
  %v6587 = vadd.f32 0.0, %v6586
  %v6588 = vpop.f32.mrf.mxu0
  %6589 = vmatprep.mubr.bf16.mxu0 0
  %6590 = vmatmul.mubr.bf16.gmra.mxu0 %v5521
  %v6591 = vpop.f32.mrf.mxu0
  %v6592 = vadd.f32 0.0, %v6591
  %v6593 = vpop.f32.mrf.mxu0
  %v6594 = vpop.f32.mrf.mxu0
  %v6595 = vadd.f32 0.0, %v6594
  %v6596 = vpop.f32.mrf.mxu0
  %6597 = vmatprep.mubr.bf16.mxu0 0
  %6598 = vmatmul.mubr.bf16.gmra.mxu0 %v5524
  %v6599 = vpop.f32.mrf.mxu0
  %v6600 = vadd.f32 0.0, %v6599
  %v6601 = vpop.f32.mrf.mxu0
  %v6602 = vpop.f32.mrf.mxu0
  %v6603 = vadd.f32 0.0, %v6602
  %v6604 = vpop.f32.mrf.mxu0
  %6605 = vmatprep.mubr.bf16.mxu0 0
  %6606 = vmatmul.mubr.bf16.gmra.mxu0 %v5527
  %v6607 = vpop.f32.mrf.mxu0
  %v6608 = vadd.f32 0.0, %v6607
  %v6609 = vpop.f32.mrf.mxu0
  %v6610 = vpop.f32.mrf.mxu0
  %v6611 = vadd.f32 0.0, %v6610
  %v6612 = vpop.f32.mrf.mxu0
  %6613 = vmatprep.mubr.bf16.mxu0 0
  %6614 = vmatmul.mubr.bf16.gmra.mxu0 %v5530
  %v6615 = vpop.f32.mrf.mxu0
  %v6616 = vadd.f32 0.0, %v6615
  %v6617 = vpop.f32.mrf.mxu0
  %v6618 = vpop.f32.mrf.mxu0
  %v6619 = vadd.f32 0.0, %v6618
  %v6620 = vpop.f32.mrf.mxu0
  %6621 = vmatprep.mubr.bf16.mxu0 0
  %6622 = vmatmul.mubr.bf16.gmra.mxu0 %v5533
  %v6623 = vpop.f32.mrf.mxu0
  %v6624 = vadd.f32 0.0, %v6623
  %v6625 = vpop.f32.mrf.mxu0
  %v6626 = vpop.f32.mrf.mxu0
  %v6627 = vadd.f32 0.0, %v6626
  %v6628 = vpop.f32.mrf.mxu0
  %6629 = vmatprep.mubr.bf16.mxu0 0
  %6630 = vmatmul.mubr.bf16.gmra.mxu0 %v5536
  %v6631 = vpop.f32.mrf.mxu0
  %v6632 = vadd.f32 0.0, %v6631
  %v6633 = vpop.f32.mrf.mxu0
  %v6634 = vpop.f32.mrf.mxu0
  %v6635 = vadd.f32 0.0, %v6634
  %v6636 = vpop.f32.mrf.mxu0
  %6637 = vmatprep.mubr.bf16.mxu0 0
  %6638 = vmatmul.mubr.bf16.gmra.mxu0 %v5539
  %v6639 = vpop.f32.mrf.mxu0
  %v6640 = vadd.f32 0.0, %v6639
  %v6641 = vpop.f32.mrf.mxu0
  %v6642 = vpop.f32.mrf.mxu0
  %v6643 = vadd.f32 0.0, %v6642
  %v6644 = vpop.f32.mrf.mxu0
  %6645 = vmatprep.mubr.bf16.mxu0 0
  %6646 = vmatmul.mubr.bf16.gmra.mxu0 %v5542
  %v6647 = vpop.f32.mrf.mxu0
  %v6648 = vadd.f32 0.0, %v6647
  %v6649 = vpop.f32.mrf.mxu0
  %v6650 = vpop.f32.mrf.mxu0
  %v6651 = vadd.f32 0.0, %v6650
  %v6652 = vpop.f32.mrf.mxu0
  %6653 = vdwg.mxu0
  %v6665 = vunpack.c.l.b16 %v6482
  %v6666 = vunpack.c.l.b16 %v6483
  %v6667 = vunpack.c.l.b16 %v6484
  %v6668 = vunpack.c.l.b16 %v6485
  %v6669 = vunpack.c.l.b16 %v6486
  %v6670 = vunpack.c.l.b16 %v6487
  %v6671 = vunpack.c.l.b16 %v6488
  %v6672 = vunpack.c.l.b16 %v6489
  %v6673 = vunpack.c.l.b16 %v6490
  %v6674 = vunpack.c.l.b16 %v6491
  %v6675 = vunpack.c.l.b16 %v6492
  %v6676 = vpack.c.b16 %v6666, %v6665
  %v6677 = vpack.c.b16 %v6668, %v6667
  %v6678 = vpack.c.b16 %v6670, %v6669
  %v6679 = vpack.c.b16 %v6672, %v6671
  %v6680 = vpack.c.b16 %v6674, %v6673
  %v6681 = vpack.c.b16 %v6675, %v6675
  %v6688 = vsel %vm5544, %v6681, 0
  %6690 = vmatprep.subr.bf16.mxu0 0
  %6691 = vmatpush1.bf16.msra.mxu0 0
  %6692 = vmatprep.subr.bf16.mxu0 0
  %6693 = vmatpush1.bf16.msra.mxu0 0
  %6694 = vmatprep.subr.bf16.mxu0 0
  %6695 = vmatpush1.bf16.msra.mxu0 %v6688
  %6696 = vmatprep.subr.bf16.mxu0 0
  %6697 = vmatpush1.bf16.msra.mxu0 %v6680
  %6698 = vmatprep.subr.bf16.mxu0 0
  %6699 = vmatpush1.bf16.msra.mxu0 %v6679
  %6700 = vmatprep.subr.bf16.mxu0 0
  %6701 = vmatpush1.bf16.msra.mxu0 %v6678
  %6702 = vmatprep.subr.bf16.mxu0 0
  %6703 = vmatpush1.bf16.msra.mxu0 %v6677
  %6704 = vmatprep.subr.bf16.mxu0 0
  %6705 = vmatpush1.bf16.msra.mxu0 %v6676
  %6706 = vmatprep.subr.bf16.mxu0 0
  %6707 = vmatpush2.bf16.msra.mxu0 0
  %6708 = vmatprep.subr.bf16.mxu0 0
  %6709 = vmatpush2.bf16.msra.mxu0 0
  %6710 = vmatprep.subr.bf16.mxu0 0
  %6711 = vmatpush2.bf16.msra.mxu0 0
  %6712 = vmatprep.subr.bf16.mxu0 0
  %6713 = vmatpush2.bf16.msra.mxu0 0
  %6714 = vmatprep.subr.bf16.mxu0 0
  %6715 = vmatpush2.bf16.msra.mxu0 0
  %6716 = vmatprep.subr.bf16.mxu0 0
  %6717 = vmatpush2.bf16.msra.mxu0 0
  %6718 = vmatprep.subr.bf16.mxu0 0
  %6719 = vmatpush2.bf16.msra.mxu0 0
  %6720 = vmatprep.subr.bf16.mxu0 0
  %6721 = vmatpush2.bf16.msra.mxu0 0
  %6722 = vmatprep.mubr.bf16.mxu0 0
  %6723 = vmatmul.mubr.bf16.gmra.mxu0 %v5745
  %v6724 = vpop.f32.mrf.mxu0
  %v6725 = vadd.f32 %v6576, %v6724
  %v6726 = vpop.f32.mrf.mxu0
  %v6727 = vpop.f32.mrf.mxu0
  %v6728 = vadd.f32 %v6579, %v6727
  %v6729 = vpop.f32.mrf.mxu0
  %6730 = vmatprep.mubr.bf16.mxu0 0
  %6731 = vmatmul.mubr.bf16.gmra.mxu0 %v5748
  %v6732 = vpop.f32.mrf.mxu0
  %v6733 = vadd.f32 %v6584, %v6732
  %v6734 = vpop.f32.mrf.mxu0
  %v6735 = vpop.f32.mrf.mxu0
  %v6736 = vadd.f32 %v6587, %v6735
  %v6737 = vpop.f32.mrf.mxu0
  %6738 = vmatprep.mubr.bf16.mxu0 0
  %6739 = vmatmul.mubr.bf16.gmra.mxu0 %v5751
  %v6740 = vpop.f32.mrf.mxu0
  %v6741 = vadd.f32 %v6592, %v6740
  %v6742 = vpop.f32.mrf.mxu0
  %v6743 = vpop.f32.mrf.mxu0
  %v6744 = vadd.f32 %v6595, %v6743
  %v6745 = vpop.f32.mrf.mxu0
  %6746 = vmatprep.mubr.bf16.mxu0 0
  %6747 = vmatmul.mubr.bf16.gmra.mxu0 %v5754
  %v6748 = vpop.f32.mrf.mxu0
  %v6749 = vadd.f32 %v6600, %v6748
  %v6750 = vpop.f32.mrf.mxu0
  %v6751 = vpop.f32.mrf.mxu0
  %v6752 = vadd.f32 %v6603, %v6751
  %v6753 = vpop.f32.mrf.mxu0
  %6754 = vmatprep.mubr.bf16.mxu0 0
  %6755 = vmatmul.mubr.bf16.gmra.mxu0 %v5757
  %v6756 = vpop.f32.mrf.mxu0
  %v6757 = vadd.f32 %v6608, %v6756
  %v6758 = vpop.f32.mrf.mxu0
  %v6759 = vpop.f32.mrf.mxu0
  %v6760 = vadd.f32 %v6611, %v6759
  %v6761 = vpop.f32.mrf.mxu0
  %6762 = vmatprep.mubr.bf16.mxu0 0
  %6763 = vmatmul.mubr.bf16.gmra.mxu0 %v5760
  %v6764 = vpop.f32.mrf.mxu0
  %v6765 = vadd.f32 %v6616, %v6764
  %v6766 = vpop.f32.mrf.mxu0
  %v6767 = vpop.f32.mrf.mxu0
  %v6768 = vadd.f32 %v6619, %v6767
  %v6769 = vpop.f32.mrf.mxu0
  %6770 = vmatprep.mubr.bf16.mxu0 0
  %6771 = vmatmul.mubr.bf16.gmra.mxu0 %v5763
  %v6772 = vpop.f32.mrf.mxu0
  %v6773 = vadd.f32 %v6624, %v6772
  %v6774 = vpop.f32.mrf.mxu0
  %v6775 = vpop.f32.mrf.mxu0
  %v6776 = vadd.f32 %v6627, %v6775
  %v6777 = vpop.f32.mrf.mxu0
  %6778 = vmatprep.mubr.bf16.mxu0 0
  %6779 = vmatmul.mubr.bf16.gmra.mxu0 %v5766
  %v6780 = vpop.f32.mrf.mxu0
  %v6781 = vadd.f32 %v6632, %v6780
  %v6782 = vpop.f32.mrf.mxu0
  %v6783 = vpop.f32.mrf.mxu0
  %v6784 = vadd.f32 %v6635, %v6783
  %v6785 = vpop.f32.mrf.mxu0
  %6786 = vmatprep.mubr.bf16.mxu0 0
  %6787 = vmatmul.mubr.bf16.gmra.mxu0 %v5769
  %v6788 = vpop.f32.mrf.mxu0
  %v6789 = vadd.f32 %v6640, %v6788
  %v6790 = vpop.f32.mrf.mxu0
  %v6791 = vpop.f32.mrf.mxu0
  %v6792 = vadd.f32 %v6643, %v6791
  %v6793 = vpop.f32.mrf.mxu0
  %6794 = vmatprep.mubr.bf16.mxu0 0
  %6795 = vmatmul.mubr.bf16.gmra.mxu0 %v5772
  %v6796 = vpop.f32.mrf.mxu0
  %v6797 = vadd.f32 %v6648, %v6796
  %v6798 = vpop.f32.mrf.mxu0
  %v6799 = vpop.f32.mrf.mxu0
  %v6800 = vadd.f32 %v6651, %v6799
  %v6801 = vpop.f32.mrf.mxu0
  %6802 = vdwg.mxu0
  %s6803 = scalar_lea.vmem %s4, 308
  %v6804 = vld [vmem:[%s6803] sm:$0xf]
  %v6805 = vld [vmem:[%s6803 + $0x4] sm:$0xf]
  %v6806 = vld [vmem:[%s6803 + $0x8] sm:$0xf]
  %v6807 = vld [vmem:[%s6803 + $0xc] sm:$0xf]
  %v6808 = vld [vmem:[%s6803 + $0x10] sm:$0xf]
  %v6809 = vld [vmem:[%s6803 + $0x14] sm:$0xf]
  %v6810 = vld [vmem:[%s6803 + $0x18] sm:$0xf]
  %v6811 = vld [vmem:[%s6803 + $0x1c] sm:$0xf]
  %v6812 = vld [vmem:[%s6803 + $0x20] sm:$0xf]
  %v6813 = vld [vmem:[%s6803 + $0x24] sm:$0xf]
  %v6814 = vld [vmem:[%s6803 + $0x28] sm:$0x3]
  %v6826 = vunpack.c.l.b16 %v6804
  %v6827 = vunpack.c.l.b16 %v6805
  %v6828 = vunpack.c.l.b16 %v6806
  %v6829 = vunpack.c.l.b16 %v6807
  %v6830 = vunpack.c.l.b16 %v6808
  %v6831 = vunpack.c.l.b16 %v6809
  %v6832 = vunpack.c.l.b16 %v6810
  %v6833 = vunpack.c.l.b16 %v6811
  %v6834 = vunpack.c.l.b16 %v6812
  %v6835 = vunpack.c.l.b16 %v6813
  %v6836 = vunpack.c.l.b16 %v6814
  %v6837 = vpack.c.b16 %v6827, %v6826
  %v6838 = vpack.c.b16 %v6829, %v6828
  %v6839 = vpack.c.b16 %v6831, %v6830
  %v6840 = vpack.c.b16 %v6833, %v6832
  %v6841 = vpack.c.b16 %v6835, %v6834
  %v6842 = vpack.c.b16 %v6836, %v6836
  %v6849 = vsel %vm5544, %v6842, 0
  %6851 = vmatprep.subr.bf16.mxu0 0
  %6852 = vmatpush1.bf16.msra.mxu0 0
  %6853 = vmatprep.subr.bf16.mxu0 0
  %6854 = vmatpush1.bf16.msra.mxu0 0
  %6855 = vmatprep.subr.bf16.mxu0 0
  %6856 = vmatpush1.bf16.msra.mxu0 %v6849
  %6857 = vmatprep.subr.bf16.mxu0 0
  %6858 = vmatpush1.bf16.msra.mxu0 %v6841
  %6859 = vmatprep.subr.bf16.mxu0 0
  %6860 = vmatpush1.bf16.msra.mxu0 %v6840
  %6861 = vmatprep.subr.bf16.mxu0 0
  %6862 = vmatpush1.bf16.msra.mxu0 %v6839
  %6863 = vmatprep.subr.bf16.mxu0 0
  %6864 = vmatpush1.bf16.msra.mxu0 %v6838
  %6865 = vmatprep.subr.bf16.mxu0 0
  %6866 = vmatpush1.bf16.msra.mxu0 %v6837
  %6867 = vmatprep.subr.bf16.mxu0 0
  %6868 = vmatpush2.bf16.msra.mxu0 0
  %6869 = vmatprep.subr.bf16.mxu0 0
  %6870 = vmatpush2.bf16.msra.mxu0 0
  %6871 = vmatprep.subr.bf16.mxu0 0
  %6872 = vmatpush2.bf16.msra.mxu0 0
  %6873 = vmatprep.subr.bf16.mxu0 0
  %6874 = vmatpush2.bf16.msra.mxu0 0
  %6875 = vmatprep.subr.bf16.mxu0 0
  %6876 = vmatpush2.bf16.msra.mxu0 0
  %6877 = vmatprep.subr.bf16.mxu0 0
  %6878 = vmatpush2.bf16.msra.mxu0 0
  %6879 = vmatprep.subr.bf16.mxu0 0
  %6880 = vmatpush2.bf16.msra.mxu0 0
  %6881 = vmatprep.subr.bf16.mxu0 0
  %6882 = vmatpush2.bf16.msra.mxu0 0
  %6883 = vmatprep.mubr.bf16.mxu0 0
  %6884 = vmatmul.mubr.bf16.gmra.mxu0 %v5751
  %v6885 = vpop.f32.mrf.mxu0
  %v6886 = vadd.f32 0.0, %v6885
  %v6887 = vpop.f32.mrf.mxu0
  %v6888 = vpop.f32.mrf.mxu0
  %v6889 = vadd.f32 0.0, %v6888
  %v6890 = vpop.f32.mrf.mxu0
  %6891 = vmatprep.mubr.bf16.mxu0 0
  %6892 = vmatmul.mubr.bf16.gmra.mxu0 %v5754
  %v6893 = vpop.f32.mrf.mxu0
  %v6894 = vadd.f32 0.0, %v6893
  %v6895 = vpop.f32.mrf.mxu0
  %v6896 = vpop.f32.mrf.mxu0
  %v6897 = vadd.f32 0.0, %v6896
  %v6898 = vpop.f32.mrf.mxu0
  %6899 = vmatprep.mubr.bf16.mxu0 0
  %6900 = vmatmul.mubr.bf16.gmra.mxu0 %v5757
  %v6901 = vpop.f32.mrf.mxu0
  %v6902 = vadd.f32 0.0, %v6901
  %v6903 = vpop.f32.mrf.mxu0
  %v6904 = vpop.f32.mrf.mxu0
  %v6905 = vadd.f32 0.0, %v6904
  %v6906 = vpop.f32.mrf.mxu0
  %6907 = vmatprep.mubr.bf16.mxu0 0
  %6908 = vmatmul.mubr.bf16.gmra.mxu0 %v5760
  %v6909 = vpop.f32.mrf.mxu0
  %v6910 = vadd.f32 0.0, %v6909
  %v6911 = vpop.f32.mrf.mxu0
  %v6912 = vpop.f32.mrf.mxu0
  %v6913 = vadd.f32 0.0, %v6912
  %v6914 = vpop.f32.mrf.mxu0
  %6915 = vmatprep.mubr.bf16.mxu0 0
  %6916 = vmatmul.mubr.bf16.gmra.mxu0 %v5763
  %v6917 = vpop.f32.mrf.mxu0
  %v6918 = vadd.f32 0.0, %v6917
  %v6919 = vpop.f32.mrf.mxu0
  %v6920 = vpop.f32.mrf.mxu0
  %v6921 = vadd.f32 0.0, %v6920
  %v6922 = vpop.f32.mrf.mxu0
  %6923 = vmatprep.mubr.bf16.mxu0 0
  %6924 = vmatmul.mubr.bf16.gmra.mxu0 %v5766
  %v6925 = vpop.f32.mrf.mxu0
  %v6926 = vadd.f32 0.0, %v6925
  %v6927 = vpop.f32.mrf.mxu0
  %v6928 = vpop.f32.mrf.mxu0
  %v6929 = vadd.f32 0.0, %v6928
  %v6930 = vpop.f32.mrf.mxu0
  %6931 = vmatprep.mubr.bf16.mxu0 0
  %6932 = vmatmul.mubr.bf16.gmra.mxu0 %v5769
  %v6933 = vpop.f32.mrf.mxu0
  %v6934 = vadd.f32 0.0, %v6933
  %v6935 = vpop.f32.mrf.mxu0
  %v6936 = vpop.f32.mrf.mxu0
  %v6937 = vadd.f32 0.0, %v6936
  %v6938 = vpop.f32.mrf.mxu0
  %6939 = vmatprep.mubr.bf16.mxu0 0
  %6940 = vmatmul.mubr.bf16.gmra.mxu0 %v5772
  %v6941 = vpop.f32.mrf.mxu0
  %v6942 = vadd.f32 0.0, %v6941
  %v6943 = vpop.f32.mrf.mxu0
  %v6944 = vpop.f32.mrf.mxu0
  %v6945 = vadd.f32 0.0, %v6944
  %v6946 = vpop.f32.mrf.mxu0
  %6947 = vmatprep.mubr.bf16.mxu0 0
  %6948 = vmatmul.mubr.bf16.gmra.mxu0 %v5946
  %v6949 = vpop.f32.mrf.mxu0
  %v6950 = vadd.f32 0.0, %v6949
  %v6951 = vpop.f32.mrf.mxu0
  %v6952 = vpop.f32.mrf.mxu0
  %v6953 = vadd.f32 0.0, %v6952
  %v6954 = vpop.f32.mrf.mxu0
  %6955 = vmatprep.mubr.bf16.mxu0 0
  %6956 = vmatmul.mubr.bf16.gmra.mxu0 %v5949
  %v6957 = vpop.f32.mrf.mxu0
  %v6958 = vadd.f32 0.0, %v6957
  %v6959 = vpop.f32.mrf.mxu0
  %v6960 = vpop.f32.mrf.mxu0
  %v6961 = vadd.f32 0.0, %v6960
  %v6962 = vpop.f32.mrf.mxu0
  %6963 = vdwg.mxu0
  %v6964 = vadd.f32 %v6725, %v6886
  %v6965 = vadd.f32 %v6728, %v6889
  %v6966 = vadd.f32 %v6733, %v6894
  %v6967 = vadd.f32 %v6736, %v6897
  %v6968 = vadd.f32 %v6741, %v6902
  %v6969 = vadd.f32 %v6744, %v6905
  %v6970 = vadd.f32 %v6749, %v6910
  %v6971 = vadd.f32 %v6752, %v6913
  %v6972 = vadd.f32 %v6757, %v6918
  %v6973 = vadd.f32 %v6760, %v6921
  %v6974 = vadd.f32 %v6765, %v6926
  %v6975 = vadd.f32 %v6768, %v6929
  %v6976 = vadd.f32 %v6773, %v6934
  %v6977 = vadd.f32 %v6776, %v6937
  %v6978 = vadd.f32 %v6781, %v6942
  %v6979 = vadd.f32 %v6784, %v6945
  %v6980 = vadd.f32 %v6789, %v6950
  %v6981 = vadd.f32 %v6792, %v6953
  %v6982 = vadd.f32 %v6797, %v6958
  %v6983 = vadd.f32 %v6800, %v6961
  %s6984 = scalar_lea.vmem %s4, 352
  %v6985 = vld [vmem:[%s6984] sm:$0xf]
  %v6986 = vld [vmem:[%s6984 + $0x4] sm:$0xf]
  %v6987 = vld [vmem:[%s6984 + $0x8] sm:$0xf]
  %v6988 = vld [vmem:[%s6984 + $0xc] sm:$0xf]
  %v6989 = vld [vmem:[%s6984 + $0x10] sm:$0xf]
  %v6990 = vld [vmem:[%s6984 + $0x14] sm:$0xf]
  %v6991 = vld [vmem:[%s6984 + $0x18] sm:$0xf]
  %v6992 = vld [vmem:[%s6984 + $0x1c] sm:$0xf]
  %v6993 = vld [vmem:[%s6984 + $0x20] sm:$0xf]
  %v6994 = vld [vmem:[%s6984 + $0x24] sm:$0xf]
  %v6995 = vld [vmem:[%s6984 + $0x28] sm:$0x3]
  %v7007 = vunpack.c.l.b16 %v6985
  %v7008 = vunpack.c.l.b16 %v6986
  %v7009 = vunpack.c.l.b16 %v6987
  %v7010 = vunpack.c.l.b16 %v6988
  %v7011 = vunpack.c.l.b16 %v6989
  %v7012 = vunpack.c.l.b16 %v6990
  %v7013 = vunpack.c.l.b16 %v6991
  %v7014 = vunpack.c.l.b16 %v6992
  %v7015 = vunpack.c.l.b16 %v6993
  %v7016 = vunpack.c.l.b16 %v6994
  %v7017 = vunpack.c.l.b16 %v6995
  %v7018 = vpack.c.b16 %v7008, %v7007
  %v7019 = vpack.c.b16 %v7010, %v7009
  %v7020 = vpack.c.b16 %v7012, %v7011
  %v7021 = vpack.c.b16 %v7014, %v7013
  %v7022 = vpack.c.b16 %v7016, %v7015
  %v7023 = vpack.c.b16 %v7017, %v7017
  %v7030 = vsel %vm5544, %v7023, 0
  %7032 = vmatprep.subr.bf16.mxu0 0
  %7033 = vmatpush1.bf16.msra.mxu0 0
  %7034 = vmatprep.subr.bf16.mxu0 0
  %7035 = vmatpush1.bf16.msra.mxu0 0
  %7036 = vmatprep.subr.bf16.mxu0 0
  %7037 = vmatpush1.bf16.msra.mxu0 %v7030
  %7038 = vmatprep.subr.bf16.mxu0 0
  %7039 = vmatpush1.bf16.msra.mxu0 %v7022
  %7040 = vmatprep.subr.bf16.mxu0 0
  %7041 = vmatpush1.bf16.msra.mxu0 %v7021
  %7042 = vmatprep.subr.bf16.mxu0 0
  %7043 = vmatpush1.bf16.msra.mxu0 %v7020
  %7044 = vmatprep.subr.bf16.mxu0 0
  %7045 = vmatpush1.bf16.msra.mxu0 %v7019
  %7046 = vmatprep.subr.bf16.mxu0 0
  %7047 = vmatpush1.bf16.msra.mxu0 %v7018
  %7048 = vmatprep.subr.bf16.mxu0 0
  %7049 = vmatpush2.bf16.msra.mxu0 0
  %7050 = vmatprep.subr.bf16.mxu0 0
  %7051 = vmatpush2.bf16.msra.mxu0 0
  %7052 = vmatprep.subr.bf16.mxu0 0
  %7053 = vmatpush2.bf16.msra.mxu0 0
  %7054 = vmatprep.subr.bf16.mxu0 0
  %7055 = vmatpush2.bf16.msra.mxu0 0
  %7056 = vmatprep.subr.bf16.mxu0 0
  %7057 = vmatpush2.bf16.msra.mxu0 0
  %7058 = vmatprep.subr.bf16.mxu0 0
  %7059 = vmatpush2.bf16.msra.mxu0 0
  %7060 = vmatprep.subr.bf16.mxu0 0
  %7061 = vmatpush2.bf16.msra.mxu0 0
  %7062 = vmatprep.subr.bf16.mxu0 0
  %7063 = vmatpush2.bf16.msra.mxu0 0
  %7064 = vmatprep.mubr.bf16.mxu0 0
  %7065 = vmatmul.mubr.bf16.gmra.mxu0 %v5521
  %v7066 = vpop.f32.mrf.mxu0
  %v7067 = vadd.f32 0.0, %v7066
  %v7068 = vpop.f32.mrf.mxu0
  %v7069 = vpop.f32.mrf.mxu0
  %v7070 = vadd.f32 0.0, %v7069
  %v7071 = vpop.f32.mrf.mxu0
  %7072 = vmatprep.mubr.bf16.mxu0 0
  %7073 = vmatmul.mubr.bf16.gmra.mxu0 %v5524
  %v7074 = vpop.f32.mrf.mxu0
  %v7075 = vadd.f32 0.0, %v7074
  %v7076 = vpop.f32.mrf.mxu0
  %v7077 = vpop.f32.mrf.mxu0
  %v7078 = vadd.f32 0.0, %v7077
  %v7079 = vpop.f32.mrf.mxu0
  %7080 = vmatprep.mubr.bf16.mxu0 0
  %7081 = vmatmul.mubr.bf16.gmra.mxu0 %v5527
  %v7082 = vpop.f32.mrf.mxu0
  %v7083 = vadd.f32 0.0, %v7082
  %v7084 = vpop.f32.mrf.mxu0
  %v7085 = vpop.f32.mrf.mxu0
  %v7086 = vadd.f32 0.0, %v7085
  %v7087 = vpop.f32.mrf.mxu0
  %7088 = vmatprep.mubr.bf16.mxu0 0
  %7089 = vmatmul.mubr.bf16.gmra.mxu0 %v5530
  %v7090 = vpop.f32.mrf.mxu0
  %v7091 = vadd.f32 0.0, %v7090
  %v7092 = vpop.f32.mrf.mxu0
  %v7093 = vpop.f32.mrf.mxu0
  %v7094 = vadd.f32 0.0, %v7093
  %v7095 = vpop.f32.mrf.mxu0
  %7096 = vmatprep.mubr.bf16.mxu0 0
  %7097 = vmatmul.mubr.bf16.gmra.mxu0 %v5533
  %v7098 = vpop.f32.mrf.mxu0
  %v7099 = vadd.f32 0.0, %v7098
  %v7100 = vpop.f32.mrf.mxu0
  %v7101 = vpop.f32.mrf.mxu0
  %v7102 = vadd.f32 0.0, %v7101
  %v7103 = vpop.f32.mrf.mxu0
  %7104 = vmatprep.mubr.bf16.mxu0 0
  %7105 = vmatmul.mubr.bf16.gmra.mxu0 %v5536
  %v7106 = vpop.f32.mrf.mxu0
  %v7107 = vadd.f32 0.0, %v7106
  %v7108 = vpop.f32.mrf.mxu0
  %v7109 = vpop.f32.mrf.mxu0
  %v7110 = vadd.f32 0.0, %v7109
  %v7111 = vpop.f32.mrf.mxu0
  %7112 = vmatprep.mubr.bf16.mxu0 0
  %7113 = vmatmul.mubr.bf16.gmra.mxu0 %v5539
  %v7114 = vpop.f32.mrf.mxu0
  %v7115 = vadd.f32 0.0, %v7114
  %v7116 = vpop.f32.mrf.mxu0
  %v7117 = vpop.f32.mrf.mxu0
  %v7118 = vadd.f32 0.0, %v7117
  %v7119 = vpop.f32.mrf.mxu0
  %7120 = vmatprep.mubr.bf16.mxu0 0
  %7121 = vmatmul.mubr.bf16.gmra.mxu0 %v5542
  %v7122 = vpop.f32.mrf.mxu0
  %v7123 = vadd.f32 0.0, %v7122
  %v7124 = vpop.f32.mrf.mxu0
  %v7125 = vpop.f32.mrf.mxu0
  %v7126 = vadd.f32 0.0, %v7125
  %v7127 = vpop.f32.mrf.mxu0
  %7128 = vmatprep.mubr.bf16.mxu0 0
  %7129 = vmatmul.mubr.bf16.gmra.mxu0 %v6143
  %v7130 = vpop.f32.mrf.mxu0
  %v7131 = vadd.f32 0.0, %v7130
  %v7132 = vpop.f32.mrf.mxu0
  %v7133 = vpop.f32.mrf.mxu0
  %v7134 = vadd.f32 0.0, %v7133
  %v7135 = vpop.f32.mrf.mxu0
  %7136 = vmatprep.mubr.bf16.mxu0 0
  %7137 = vmatmul.mubr.bf16.gmra.mxu0 %v6146
  %v7138 = vpop.f32.mrf.mxu0
  %v7139 = vadd.f32 0.0, %v7138
  %v7140 = vpop.f32.mrf.mxu0
  %v7141 = vpop.f32.mrf.mxu0
  %v7142 = vadd.f32 0.0, %v7141
  %v7143 = vpop.f32.mrf.mxu0
  %7144 = vdwg.mxu0
  %v7145 = vadd.f32 %v6964, %v7067
  %v7146 = vadd.f32 %v6965, %v7070
  %v7147 = vadd.f32 %v6966, %v7075
  %v7148 = vadd.f32 %v6967, %v7078
  %v7149 = vadd.f32 %v6968, %v7083
  %v7150 = vadd.f32 %v6969, %v7086
  %v7151 = vadd.f32 %v6970, %v7091
  %v7152 = vadd.f32 %v6971, %v7094
  %v7153 = vadd.f32 %v6972, %v7099
  %v7154 = vadd.f32 %v6973, %v7102
  %v7155 = vadd.f32 %v6974, %v7107
  %v7156 = vadd.f32 %v6975, %v7110
  %v7157 = vadd.f32 %v6976, %v7115
  %v7158 = vadd.f32 %v6977, %v7118
  %v7159 = vadd.f32 %v6978, %v7123
  %v7160 = vadd.f32 %v6979, %v7126
  %v7161 = vadd.f32 %v6980, %v7131
  %v7162 = vadd.f32 %v6981, %v7134
  %v7163 = vadd.f32 %v6982, %v7139
  %v7164 = vadd.f32 %v6983, %v7142
  %s7165 = scalar_lea.vmem %s4, 396
  %v7166 = vld [vmem:[%s7165] sm:$0xf]
  %v7167 = vld [vmem:[%s7165 + $0x4] sm:$0xf]
  %v7168 = vld [vmem:[%s7165 + $0x8] sm:$0xf]
  %v7169 = vld [vmem:[%s7165 + $0xc] sm:$0xf]
  %v7170 = vld [vmem:[%s7165 + $0x10] sm:$0xf]
  %v7171 = vld [vmem:[%s7165 + $0x14] sm:$0xf]
  %v7172 = vld [vmem:[%s7165 + $0x18] sm:$0xf]
  %v7173 = vld [vmem:[%s7165 + $0x1c] sm:$0xf]
  %v7174 = vld [vmem:[%s7165 + $0x20] sm:$0xf]
  %v7175 = vld [vmem:[%s7165 + $0x24] sm:$0xf]
  %v7176 = vld [vmem:[%s7165 + $0x28] sm:$0x3]
  %v7188 = vunpack.c.l.b16 %v7166
  %v7189 = vunpack.c.l.b16 %v7167
  %v7190 = vunpack.c.l.b16 %v7168
  %v7191 = vunpack.c.l.b16 %v7169
  %v7192 = vunpack.c.l.b16 %v7170
  %v7193 = vunpack.c.l.b16 %v7171
  %v7194 = vunpack.c.l.b16 %v7172
  %v7195 = vunpack.c.l.b16 %v7173
  %v7196 = vunpack.c.l.b16 %v7174
  %v7197 = vunpack.c.l.b16 %v7175
  %v7198 = vunpack.c.l.b16 %v7176
  %v7199 = vpack.c.b16 %v7189, %v7188
  %v7200 = vpack.c.b16 %v7191, %v7190
  %v7201 = vpack.c.b16 %v7193, %v7192
  %v7202 = vpack.c.b16 %v7195, %v7194
  %v7203 = vpack.c.b16 %v7197, %v7196
  %v7204 = vpack.c.b16 %v7198, %v7198
  %v7211 = vsel %vm5544, %v7204, 0
  %7213 = vmatprep.subr.bf16.mxu0 0
  %7214 = vmatpush1.bf16.msra.mxu0 0
  %7215 = vmatprep.subr.bf16.mxu0 0
  %7216 = vmatpush1.bf16.msra.mxu0 0
  %7217 = vmatprep.subr.bf16.mxu0 0
  %7218 = vmatpush1.bf16.msra.mxu0 %v7211
  %7219 = vmatprep.subr.bf16.mxu0 0
  %7220 = vmatpush1.bf16.msra.mxu0 %v7203
  %7221 = vmatprep.subr.bf16.mxu0 0
  %7222 = vmatpush1.bf16.msra.mxu0 %v7202
  %7223 = vmatprep.subr.bf16.mxu0 0
  %7224 = vmatpush1.bf16.msra.mxu0 %v7201
  %7225 = vmatprep.subr.bf16.mxu0 0
  %7226 = vmatpush1.bf16.msra.mxu0 %v7200
  %7227 = vmatprep.subr.bf16.mxu0 0
  %7228 = vmatpush1.bf16.msra.mxu0 %v7199
  %7229 = vmatprep.subr.bf16.mxu0 0
  %7230 = vmatpush2.bf16.msra.mxu0 0
  %7231 = vmatprep.subr.bf16.mxu0 0
  %7232 = vmatpush2.bf16.msra.mxu0 0
  %7233 = vmatprep.subr.bf16.mxu0 0
  %7234 = vmatpush2.bf16.msra.mxu0 0
  %7235 = vmatprep.subr.bf16.mxu0 0
  %7236 = vmatpush2.bf16.msra.mxu0 0
  %7237 = vmatprep.subr.bf16.mxu0 0
  %7238 = vmatpush2.bf16.msra.mxu0 0
  %7239 = vmatprep.subr.bf16.mxu0 0
  %7240 = vmatpush2.bf16.msra.mxu0 0
  %7241 = vmatprep.subr.bf16.mxu0 0
  %7242 = vmatpush2.bf16.msra.mxu0 0
  %7243 = vmatprep.subr.bf16.mxu0 0
  %7244 = vmatpush2.bf16.msra.mxu0 0
  %7245 = vmatprep.mubr.bf16.mxu0 0
  %7246 = vmatmul.mubr.bf16.gmra.mxu0 %v5757
  %v7247 = vpop.f32.mrf.mxu0
  %v7248 = vadd.f32 0.0, %v7247
  %v7249 = vpop.f32.mrf.mxu0
  %v7250 = vpop.f32.mrf.mxu0
  %v7251 = vadd.f32 0.0, %v7250
  %v7252 = vpop.f32.mrf.mxu0
  %7253 = vmatprep.mubr.bf16.mxu0 0
  %7254 = vmatmul.mubr.bf16.gmra.mxu0 %v5760
  %v7255 = vpop.f32.mrf.mxu0
  %v7256 = vadd.f32 0.0, %v7255
  %v7257 = vpop.f32.mrf.mxu0
  %v7258 = vpop.f32.mrf.mxu0
  %v7259 = vadd.f32 0.0, %v7258
  %v7260 = vpop.f32.mrf.mxu0
  %7261 = vmatprep.mubr.bf16.mxu0 0
  %7262 = vmatmul.mubr.bf16.gmra.mxu0 %v5763
  %v7263 = vpop.f32.mrf.mxu0
  %v7264 = vadd.f32 0.0, %v7263
  %v7265 = vpop.f32.mrf.mxu0
  %v7266 = vpop.f32.mrf.mxu0
  %v7267 = vadd.f32 0.0, %v7266
  %v7268 = vpop.f32.mrf.mxu0
  %7269 = vmatprep.mubr.bf16.mxu0 0
  %7270 = vmatmul.mubr.bf16.gmra.mxu0 %v5766
  %v7271 = vpop.f32.mrf.mxu0
  %v7272 = vadd.f32 0.0, %v7271
  %v7273 = vpop.f32.mrf.mxu0
  %v7274 = vpop.f32.mrf.mxu0
  %v7275 = vadd.f32 0.0, %v7274
  %v7276 = vpop.f32.mrf.mxu0
  %7277 = vmatprep.mubr.bf16.mxu0 0
  %7278 = vmatmul.mubr.bf16.gmra.mxu0 %v5769
  %v7279 = vpop.f32.mrf.mxu0
  %v7280 = vadd.f32 0.0, %v7279
  %v7281 = vpop.f32.mrf.mxu0
  %v7282 = vpop.f32.mrf.mxu0
  %v7283 = vadd.f32 0.0, %v7282
  %v7284 = vpop.f32.mrf.mxu0
  %7285 = vmatprep.mubr.bf16.mxu0 0
  %7286 = vmatmul.mubr.bf16.gmra.mxu0 %v5772
  %v7287 = vpop.f32.mrf.mxu0
  %v7288 = vadd.f32 0.0, %v7287
  %v7289 = vpop.f32.mrf.mxu0
  %v7290 = vpop.f32.mrf.mxu0
  %v7291 = vadd.f32 0.0, %v7290
  %v7292 = vpop.f32.mrf.mxu0
  %7293 = vmatprep.mubr.bf16.mxu0 0
  %7294 = vmatmul.mubr.bf16.gmra.mxu0 %v5946
  %v7295 = vpop.f32.mrf.mxu0
  %v7296 = vadd.f32 0.0, %v7295
  %v7297 = vpop.f32.mrf.mxu0
  %v7298 = vpop.f32.mrf.mxu0
  %v7299 = vadd.f32 0.0, %v7298
  %v7300 = vpop.f32.mrf.mxu0
  %7301 = vmatprep.mubr.bf16.mxu0 0
  %7302 = vmatmul.mubr.bf16.gmra.mxu0 %v5949
  %v7303 = vpop.f32.mrf.mxu0
  %v7304 = vadd.f32 0.0, %v7303
  %v7305 = vpop.f32.mrf.mxu0
  %v7306 = vpop.f32.mrf.mxu0
  %v7307 = vadd.f32 0.0, %v7306
  %v7308 = vpop.f32.mrf.mxu0
  %7309 = vmatprep.mubr.bf16.mxu0 0
  %7310 = vmatmul.mubr.bf16.gmra.mxu0 %v6340
  %v7311 = vpop.f32.mrf.mxu0
  %v7312 = vadd.f32 0.0, %v7311
  %v7313 = vpop.f32.mrf.mxu0
  %v7314 = vpop.f32.mrf.mxu0
  %v7315 = vadd.f32 0.0, %v7314
  %v7316 = vpop.f32.mrf.mxu0
  %7317 = vmatprep.mubr.bf16.mxu0 0
  %7318 = vmatmul.mubr.bf16.gmra.mxu0 %v6343
  %v7319 = vpop.f32.mrf.mxu0
  %v7320 = vadd.f32 0.0, %v7319
  %v7321 = vpop.f32.mrf.mxu0
  %v7322 = vpop.f32.mrf.mxu0
  %v7323 = vadd.f32 0.0, %v7322
  %v7324 = vpop.f32.mrf.mxu0
  %7325 = vdwg.mxu0
  %v7326 = vadd.f32 %v7145, %v7248
  %v7327 = vadd.f32 %v7146, %v7251
  %v7328 = vadd.f32 %v7147, %v7256
  %v7329 = vadd.f32 %v7148, %v7259
  %v7330 = vadd.f32 %v7149, %v7264
  %v7331 = vadd.f32 %v7150, %v7267
  %v7332 = vadd.f32 %v7151, %v7272
  %v7333 = vadd.f32 %v7152, %v7275
  %v7334 = vadd.f32 %v7153, %v7280
  %v7335 = vadd.f32 %v7154, %v7283
  %v7336 = vadd.f32 %v7155, %v7288
  %v7337 = vadd.f32 %v7156, %v7291
  %v7338 = vadd.f32 %v7157, %v7296
  %v7339 = vadd.f32 %v7158, %v7299
  %v7340 = vadd.f32 %v7159, %v7304
  %v7341 = vadd.f32 %v7160, %v7307
  %v7342 = vadd.f32 %v7161, %v7312
  %v7343 = vadd.f32 %v7162, %v7315
  %v7344 = vadd.f32 %v7163, %v7320
  %v7345 = vadd.f32 %v7164, %v7323
  %v7346 = vmax.f32 %v6461, %v7326
  %v7347 = vmax.f32 %v6462, %v7327
  %v7348 = vmax.f32 %v6463, %v7328
  %v7349 = vmax.f32 %v6464, %v7329
  %v7350 = vmax.f32 %v6465, %v7330
  %v7351 = vmax.f32 %v6466, %v7331
  %v7352 = vmax.f32 %v6467, %v7332
  %v7353 = vmax.f32 %v6468, %v7333
  %v7354 = vmax.f32 %v6469, %v7334
  %v7355 = vmax.f32 %v6470, %v7335
  %v7356 = vmax.f32 %v6471, %v7336
  %v7357 = vmax.f32 %v6472, %v7337
  %v7358 = vmax.f32 %v6473, %v7338
  %v7359 = vmax.f32 %v6474, %v7339
  %v7360 = vmax.f32 %v6475, %v7340
  %v7361 = vmax.f32 %v6476, %v7341
  %v7362 = vmax.f32 %v6477, %v7342
  %v7363 = vmax.f32 %v6478, %v7343
  %v7364 = vmax.f32 %v6479, %v7344
  %v7365 = vmax.f32 %v6480, %v7345
  %v7366 = vld [vmem:[#allocation2 + $0x90] sm:$0xf]
  %v7367 = vld [vmem:[#allocation2 + $0x94] sm:$0xf]
  %v7368 = vld [vmem:[#allocation2 + $0x98] sm:$0xf]
  %v7369 = vld [vmem:[#allocation2 + $0x9c] sm:$0xf]
  %v7370 = vld [vmem:[#allocation2 + $0xa0] sm:$0xf]
  %v7371 = vld [vmem:[#allocation2 + $0xa4] sm:$0xf]
  %v7372 = vld [vmem:[#allocation2 + $0xa8] sm:$0xf]
  %v7373 = vld [vmem:[#allocation2 + $0xac] sm:$0xf]
  %v7374 = vld [vmem:[#allocation2 + $0xb0] sm:$0xf]
  %v7375 = vld [vmem:[#allocation2 + $0xb4] sm:$0xf]
  %v7376 = vld [vmem:[#allocation2 + $0xb8] sm:$0xf]
  %v7377 = vld [vmem:[#allocation2 + $0xbc] sm:$0xf]
  %v7378 = vld [vmem:[#allocation2 + $0xc0] sm:$0xf]
  %v7379 = vld [vmem:[#allocation2 + $0xc4] sm:$0xf]
  %v7380 = vld [vmem:[#allocation2 + $0xc8] sm:$0xf]
  %v7381 = vld [vmem:[#allocation2 + $0xcc] sm:$0xf]
  %v7382 = vld [vmem:[#allocation2 + $0xd0] sm:$0xf]
  %v7383 = vld [vmem:[#allocation2 + $0xd4] sm:$0xf]
  %v7384 = vld [vmem:[#allocation2 + $0xd8] sm:$0xf]
  %v7385 = vld [vmem:[#allocation2 + $0xdc] sm:$0xf]
  %7386 = vmatprep.subr.bf16.mxu0 0
  %7387 = vmatpush1.bf16.msra.mxu0 0
  %7388 = vmatprep.subr.bf16.mxu0 0
  %7389 = vmatpush1.bf16.msra.mxu0 0
  %7390 = vmatprep.subr.bf16.mxu0 0
  %7391 = vmatpush1.bf16.msra.mxu0 %v5546
  %7392 = vmatprep.subr.bf16.mxu0 0
  %7393 = vmatpush1.bf16.msra.mxu0 %v5506
  %7394 = vmatprep.subr.bf16.mxu0 0
  %7395 = vmatpush1.bf16.msra.mxu0 %v5505
  %7396 = vmatprep.subr.bf16.mxu0 0
  %7397 = vmatpush1.bf16.msra.mxu0 %v5504
  %7398 = vmatprep.subr.bf16.mxu0 0
  %7399 = vmatpush1.bf16.msra.mxu0 %v5503
  %7400 = vmatprep.subr.bf16.mxu0 0
  %7401 = vmatpush1.bf16.msra.mxu0 %v5502
  %7402 = vmatprep.subr.bf16.mxu0 0
  %7403 = vmatpush2.bf16.msra.mxu0 0
  %7404 = vmatprep.subr.bf16.mxu0 0
  %7405 = vmatpush2.bf16.msra.mxu0 0
  %7406 = vmatprep.subr.bf16.mxu0 0
  %7407 = vmatpush2.bf16.msra.mxu0 0
  %7408 = vmatprep.subr.bf16.mxu0 0
  %7409 = vmatpush2.bf16.msra.mxu0 0
  %7410 = vmatprep.subr.bf16.mxu0 0
  %7411 = vmatpush2.bf16.msra.mxu0 0
  %7412 = vmatprep.subr.bf16.mxu0 0
  %7413 = vmatpush2.bf16.msra.mxu0 0
  %7414 = vmatprep.subr.bf16.mxu0 0
  %7415 = vmatpush2.bf16.msra.mxu0 0
  %7416 = vmatprep.subr.bf16.mxu0 0
  %7417 = vmatpush2.bf16.msra.mxu0 0
  %7418 = vmatprep.mubr.bf16.mxu0 0
  %7419 = vmatmul.mubr.bf16.gmra.mxu0 %v5751
  %v7420 = vpop.f32.mrf.mxu0
  %v7421 = vadd.f32 0.0, %v7420
  %v7422 = vpop.f32.mrf.mxu0
  %v7423 = vpop.f32.mrf.mxu0
  %v7424 = vadd.f32 0.0, %v7423
  %v7425 = vpop.f32.mrf.mxu0
  %7426 = vmatprep.mubr.bf16.mxu0 0
  %7427 = vmatmul.mubr.bf16.gmra.mxu0 %v5754
  %v7428 = vpop.f32.mrf.mxu0
  %v7429 = vadd.f32 0.0, %v7428
  %v7430 = vpop.f32.mrf.mxu0
  %v7431 = vpop.f32.mrf.mxu0
  %v7432 = vadd.f32 0.0, %v7431
  %v7433 = vpop.f32.mrf.mxu0
  %7434 = vmatprep.mubr.bf16.mxu0 0
  %7435 = vmatmul.mubr.bf16.gmra.mxu0 %v5757
  %v7436 = vpop.f32.mrf.mxu0
  %v7437 = vadd.f32 0.0, %v7436
  %v7438 = vpop.f32.mrf.mxu0
  %v7439 = vpop.f32.mrf.mxu0
  %v7440 = vadd.f32 0.0, %v7439
  %v7441 = vpop.f32.mrf.mxu0
  %7442 = vmatprep.mubr.bf16.mxu0 0
  %7443 = vmatmul.mubr.bf16.gmra.mxu0 %v5760
  %v7444 = vpop.f32.mrf.mxu0
  %v7445 = vadd.f32 0.0, %v7444
  %v7446 = vpop.f32.mrf.mxu0
  %v7447 = vpop.f32.mrf.mxu0
  %v7448 = vadd.f32 0.0, %v7447
  %v7449 = vpop.f32.mrf.mxu0
  %7450 = vmatprep.mubr.bf16.mxu0 0
  %7451 = vmatmul.mubr.bf16.gmra.mxu0 %v5763
  %v7452 = vpop.f32.mrf.mxu0
  %v7453 = vadd.f32 0.0, %v7452
  %v7454 = vpop.f32.mrf.mxu0
  %v7455 = vpop.f32.mrf.mxu0
  %v7456 = vadd.f32 0.0, %v7455
  %v7457 = vpop.f32.mrf.mxu0
  %7458 = vmatprep.mubr.bf16.mxu0 0
  %7459 = vmatmul.mubr.bf16.gmra.mxu0 %v5766
  %v7460 = vpop.f32.mrf.mxu0
  %v7461 = vadd.f32 0.0, %v7460
  %v7462 = vpop.f32.mrf.mxu0
  %v7463 = vpop.f32.mrf.mxu0
  %v7464 = vadd.f32 0.0, %v7463
  %v7465 = vpop.f32.mrf.mxu0
  %7466 = vmatprep.mubr.bf16.mxu0 0
  %7467 = vmatmul.mubr.bf16.gmra.mxu0 %v5769
  %v7468 = vpop.f32.mrf.mxu0
  %v7469 = vadd.f32 0.0, %v7468
  %v7470 = vpop.f32.mrf.mxu0
  %v7471 = vpop.f32.mrf.mxu0
  %v7472 = vadd.f32 0.0, %v7471
  %v7473 = vpop.f32.mrf.mxu0
  %7474 = vmatprep.mubr.bf16.mxu0 0
  %7475 = vmatmul.mubr.bf16.gmra.mxu0 %v5772
  %v7476 = vpop.f32.mrf.mxu0
  %v7477 = vadd.f32 0.0, %v7476
  %v7478 = vpop.f32.mrf.mxu0
  %v7479 = vpop.f32.mrf.mxu0
  %v7480 = vadd.f32 0.0, %v7479
  %v7481 = vpop.f32.mrf.mxu0
  %7482 = vmatprep.mubr.bf16.mxu0 0
  %7483 = vmatmul.mubr.bf16.gmra.mxu0 %v5946
  %v7484 = vpop.f32.mrf.mxu0
  %v7485 = vadd.f32 0.0, %v7484
  %v7486 = vpop.f32.mrf.mxu0
  %v7487 = vpop.f32.mrf.mxu0
  %v7488 = vadd.f32 0.0, %v7487
  %v7489 = vpop.f32.mrf.mxu0
  %7490 = vmatprep.mubr.bf16.mxu0 0
  %7491 = vmatmul.mubr.bf16.gmra.mxu0 %v5949
  %v7492 = vpop.f32.mrf.mxu0
  %v7493 = vadd.f32 0.0, %v7492
  %v7494 = vpop.f32.mrf.mxu0
  %v7495 = vpop.f32.mrf.mxu0
  %v7496 = vadd.f32 0.0, %v7495
  %v7497 = vpop.f32.mrf.mxu0
  %7498 = vdwg.mxu0
  %7499 = vmatprep.subr.bf16.mxu0 0
  %7500 = vmatpush1.bf16.msra.mxu0 0
  %7501 = vmatprep.subr.bf16.mxu0 0
  %7502 = vmatpush1.bf16.msra.mxu0 0
  %7503 = vmatprep.subr.bf16.mxu0 0
  %7504 = vmatpush1.bf16.msra.mxu0 %v5775
  %7505 = vmatprep.subr.bf16.mxu0 0
  %7506 = vmatpush1.bf16.msra.mxu0 %v5737
  %7507 = vmatprep.subr.bf16.mxu0 0
  %7508 = vmatpush1.bf16.msra.mxu0 %v5736
  %7509 = vmatprep.subr.bf16.mxu0 0
  %7510 = vmatpush1.bf16.msra.mxu0 %v5735
  %7511 = vmatprep.subr.bf16.mxu0 0
  %7512 = vmatpush1.bf16.msra.mxu0 %v5734
  %7513 = vmatprep.subr.bf16.mxu0 0
  %7514 = vmatpush1.bf16.msra.mxu0 %v5733
  %7515 = vmatprep.subr.bf16.mxu0 0
  %7516 = vmatpush2.bf16.msra.mxu0 0
  %7517 = vmatprep.subr.bf16.mxu0 0
  %7518 = vmatpush2.bf16.msra.mxu0 0
  %7519 = vmatprep.subr.bf16.mxu0 0
  %7520 = vmatpush2.bf16.msra.mxu0 0
  %7521 = vmatprep.subr.bf16.mxu0 0
  %7522 = vmatpush2.bf16.msra.mxu0 0
  %7523 = vmatprep.subr.bf16.mxu0 0
  %7524 = vmatpush2.bf16.msra.mxu0 0
  %7525 = vmatprep.subr.bf16.mxu0 0
  %7526 = vmatpush2.bf16.msra.mxu0 0
  %7527 = vmatprep.subr.bf16.mxu0 0
  %7528 = vmatpush2.bf16.msra.mxu0 0
  %7529 = vmatprep.subr.bf16.mxu0 0
  %7530 = vmatpush2.bf16.msra.mxu0 0
  %7531 = vmatprep.mubr.bf16.mxu0 0
  %7532 = vmatmul.mubr.bf16.gmra.mxu0 %v5515
  %v7533 = vpop.f32.mrf.mxu0
  %v7534 = vadd.f32 %v7421, %v7533
  %v7535 = vpop.f32.mrf.mxu0
  %v7536 = vpop.f32.mrf.mxu0
  %v7537 = vadd.f32 %v7424, %v7536
  %v7538 = vpop.f32.mrf.mxu0
  %7539 = vmatprep.mubr.bf16.mxu0 0
  %7540 = vmatmul.mubr.bf16.gmra.mxu0 %v5518
  %v7541 = vpop.f32.mrf.mxu0
  %v7542 = vadd.f32 %v7429, %v7541
  %v7543 = vpop.f32.mrf.mxu0
  %v7544 = vpop.f32.mrf.mxu0
  %v7545 = vadd.f32 %v7432, %v7544
  %v7546 = vpop.f32.mrf.mxu0
  %7547 = vmatprep.mubr.bf16.mxu0 0
  %7548 = vmatmul.mubr.bf16.gmra.mxu0 %v5521
  %v7549 = vpop.f32.mrf.mxu0
  %v7550 = vadd.f32 %v7437, %v7549
  %v7551 = vpop.f32.mrf.mxu0
  %v7552 = vpop.f32.mrf.mxu0
  %v7553 = vadd.f32 %v7440, %v7552
  %v7554 = vpop.f32.mrf.mxu0
  %7555 = vmatprep.mubr.bf16.mxu0 0
  %7556 = vmatmul.mubr.bf16.gmra.mxu0 %v5524
  %v7557 = vpop.f32.mrf.mxu0
  %v7558 = vadd.f32 %v7445, %v7557
  %v7559 = vpop.f32.mrf.mxu0
  %v7560 = vpop.f32.mrf.mxu0
  %v7561 = vadd.f32 %v7448, %v7560
  %v7562 = vpop.f32.mrf.mxu0
  %7563 = vmatprep.mubr.bf16.mxu0 0
  %7564 = vmatmul.mubr.bf16.gmra.mxu0 %v5527
  %v7565 = vpop.f32.mrf.mxu0
  %v7566 = vadd.f32 %v7453, %v7565
  %v7567 = vpop.f32.mrf.mxu0
  %v7568 = vpop.f32.mrf.mxu0
  %v7569 = vadd.f32 %v7456, %v7568
  %v7570 = vpop.f32.mrf.mxu0
  %7571 = vmatprep.mubr.bf16.mxu0 0
  %7572 = vmatmul.mubr.bf16.gmra.mxu0 %v5530
  %v7573 = vpop.f32.mrf.mxu0
  %v7574 = vadd.f32 %v7461, %v7573
  %v7575 = vpop.f32.mrf.mxu0
  %v7576 = vpop.f32.mrf.mxu0
  %v7577 = vadd.f32 %v7464, %v7576
  %v7578 = vpop.f32.mrf.mxu0
  %7579 = vmatprep.mubr.bf16.mxu0 0
  %7580 = vmatmul.mubr.bf16.gmra.mxu0 %v5533
  %v7581 = vpop.f32.mrf.mxu0
  %v7582 = vadd.f32 %v7469, %v7581
  %v7583 = vpop.f32.mrf.mxu0
  %v7584 = vpop.f32.mrf.mxu0
  %v7585 = vadd.f32 %v7472, %v7584
  %v7586 = vpop.f32.mrf.mxu0
  %7587 = vmatprep.mubr.bf16.mxu0 0
  %7588 = vmatmul.mubr.bf16.gmra.mxu0 %v5536
  %v7589 = vpop.f32.mrf.mxu0
  %v7590 = vadd.f32 %v7477, %v7589
  %v7591 = vpop.f32.mrf.mxu0
  %v7592 = vpop.f32.mrf.mxu0
  %v7593 = vadd.f32 %v7480, %v7592
  %v7594 = vpop.f32.mrf.mxu0
  %7595 = vmatprep.mubr.bf16.mxu0 0
  %7596 = vmatmul.mubr.bf16.gmra.mxu0 %v5539
  %v7597 = vpop.f32.mrf.mxu0
  %v7598 = vadd.f32 %v7485, %v7597
  %v7599 = vpop.f32.mrf.mxu0
  %v7600 = vpop.f32.mrf.mxu0
  %v7601 = vadd.f32 %v7488, %v7600
  %v7602 = vpop.f32.mrf.mxu0
  %7603 = vmatprep.mubr.bf16.mxu0 0
  %7604 = vmatmul.mubr.bf16.gmra.mxu0 %v5542
  %v7605 = vpop.f32.mrf.mxu0
  %v7606 = vadd.f32 %v7493, %v7605
  %v7607 = vpop.f32.mrf.mxu0
  %v7608 = vpop.f32.mrf.mxu0
  %v7609 = vadd.f32 %v7496, %v7608
  %v7610 = vpop.f32.mrf.mxu0
  %7611 = vdwg.mxu0
  %7612 = vmatprep.subr.bf16.mxu0 0
  %7613 = vmatpush1.bf16.msra.mxu0 0
  %7614 = vmatprep.subr.bf16.mxu0 0
  %7615 = vmatpush1.bf16.msra.mxu0 0
  %7616 = vmatprep.subr.bf16.mxu0 0
  %7617 = vmatpush1.bf16.msra.mxu0 %v5952
  %7618 = vmatprep.subr.bf16.mxu0 0
  %7619 = vmatpush1.bf16.msra.mxu0 %v5938
  %7620 = vmatprep.subr.bf16.mxu0 0
  %7621 = vmatpush1.bf16.msra.mxu0 %v5937
  %7622 = vmatprep.subr.bf16.mxu0 0
  %7623 = vmatpush1.bf16.msra.mxu0 %v5936
  %7624 = vmatprep.subr.bf16.mxu0 0
  %7625 = vmatpush1.bf16.msra.mxu0 %v5935
  %7626 = vmatprep.subr.bf16.mxu0 0
  %7627 = vmatpush1.bf16.msra.mxu0 %v5934
  %7628 = vmatprep.subr.bf16.mxu0 0
  %7629 = vmatpush2.bf16.msra.mxu0 0
  %7630 = vmatprep.subr.bf16.mxu0 0
  %7631 = vmatpush2.bf16.msra.mxu0 0
  %7632 = vmatprep.subr.bf16.mxu0 0
  %7633 = vmatpush2.bf16.msra.mxu0 0
  %7634 = vmatprep.subr.bf16.mxu0 0
  %7635 = vmatpush2.bf16.msra.mxu0 0
  %7636 = vmatprep.subr.bf16.mxu0 0
  %7637 = vmatpush2.bf16.msra.mxu0 0
  %7638 = vmatprep.subr.bf16.mxu0 0
  %7639 = vmatpush2.bf16.msra.mxu0 0
  %7640 = vmatprep.subr.bf16.mxu0 0
  %7641 = vmatpush2.bf16.msra.mxu0 0
  %7642 = vmatprep.subr.bf16.mxu0 0
  %7643 = vmatpush2.bf16.msra.mxu0 0
  %7644 = vmatprep.mubr.bf16.mxu0 0
  %7645 = vmatmul.mubr.bf16.gmra.mxu0 %v5521
  %v7646 = vpop.f32.mrf.mxu0
  %v7647 = vadd.f32 0.0, %v7646
  %v7648 = vpop.f32.mrf.mxu0
  %v7649 = vpop.f32.mrf.mxu0
  %v7650 = vadd.f32 0.0, %v7649
  %v7651 = vpop.f32.mrf.mxu0
  %7652 = vmatprep.mubr.bf16.mxu0 0
  %7653 = vmatmul.mubr.bf16.gmra.mxu0 %v5524
  %v7654 = vpop.f32.mrf.mxu0
  %v7655 = vadd.f32 0.0, %v7654
  %v7656 = vpop.f32.mrf.mxu0
  %v7657 = vpop.f32.mrf.mxu0
  %v7658 = vadd.f32 0.0, %v7657
  %v7659 = vpop.f32.mrf.mxu0
  %7660 = vmatprep.mubr.bf16.mxu0 0
  %7661 = vmatmul.mubr.bf16.gmra.mxu0 %v5527
  %v7662 = vpop.f32.mrf.mxu0
  %v7663 = vadd.f32 0.0, %v7662
  %v7664 = vpop.f32.mrf.mxu0
  %v7665 = vpop.f32.mrf.mxu0
  %v7666 = vadd.f32 0.0, %v7665
  %v7667 = vpop.f32.mrf.mxu0
  %7668 = vmatprep.mubr.bf16.mxu0 0
  %7669 = vmatmul.mubr.bf16.gmra.mxu0 %v5530
  %v7670 = vpop.f32.mrf.mxu0
  %v7671 = vadd.f32 0.0, %v7670
  %v7672 = vpop.f32.mrf.mxu0
  %v7673 = vpop.f32.mrf.mxu0
  %v7674 = vadd.f32 0.0, %v7673
  %v7675 = vpop.f32.mrf.mxu0
  %7676 = vmatprep.mubr.bf16.mxu0 0
  %7677 = vmatmul.mubr.bf16.gmra.mxu0 %v5533
  %v7678 = vpop.f32.mrf.mxu0
  %v7679 = vadd.f32 0.0, %v7678
  %v7680 = vpop.f32.mrf.mxu0
  %v7681 = vpop.f32.mrf.mxu0
  %v7682 = vadd.f32 0.0, %v7681
  %v7683 = vpop.f32.mrf.mxu0
  %7684 = vmatprep.mubr.bf16.mxu0 0
  %7685 = vmatmul.mubr.bf16.gmra.mxu0 %v5536
  %v7686 = vpop.f32.mrf.mxu0
  %v7687 = vadd.f32 0.0, %v7686
  %v7688 = vpop.f32.mrf.mxu0
  %v7689 = vpop.f32.mrf.mxu0
  %v7690 = vadd.f32 0.0, %v7689
  %v7691 = vpop.f32.mrf.mxu0
  %7692 = vmatprep.mubr.bf16.mxu0 0
  %7693 = vmatmul.mubr.bf16.gmra.mxu0 %v5539
  %v7694 = vpop.f32.mrf.mxu0
  %v7695 = vadd.f32 0.0, %v7694
  %v7696 = vpop.f32.mrf.mxu0
  %v7697 = vpop.f32.mrf.mxu0
  %v7698 = vadd.f32 0.0, %v7697
  %v7699 = vpop.f32.mrf.mxu0
  %7700 = vmatprep.mubr.bf16.mxu0 0
  %7701 = vmatmul.mubr.bf16.gmra.mxu0 %v5542
  %v7702 = vpop.f32.mrf.mxu0
  %v7703 = vadd.f32 0.0, %v7702
  %v7704 = vpop.f32.mrf.mxu0
  %v7705 = vpop.f32.mrf.mxu0
  %v7706 = vadd.f32 0.0, %v7705
  %v7707 = vpop.f32.mrf.mxu0
  %7708 = vmatprep.mubr.bf16.mxu0 0
  %7709 = vmatmul.mubr.bf16.gmra.mxu0 %v6143
  %v7710 = vpop.f32.mrf.mxu0
  %v7711 = vadd.f32 0.0, %v7710
  %v7712 = vpop.f32.mrf.mxu0
  %v7713 = vpop.f32.mrf.mxu0
  %v7714 = vadd.f32 0.0, %v7713
  %v7715 = vpop.f32.mrf.mxu0
  %7716 = vmatprep.mubr.bf16.mxu0 0
  %7717 = vmatmul.mubr.bf16.gmra.mxu0 %v6146
  %v7718 = vpop.f32.mrf.mxu0
  %v7719 = vadd.f32 0.0, %v7718
  %v7720 = vpop.f32.mrf.mxu0
  %v7721 = vpop.f32.mrf.mxu0
  %v7722 = vadd.f32 0.0, %v7721
  %v7723 = vpop.f32.mrf.mxu0
  %7724 = vdwg.mxu0
  %v7725 = vadd.f32 %v7534, %v7647
  %v7726 = vadd.f32 %v7537, %v7650
  %v7727 = vadd.f32 %v7542, %v7655
  %v7728 = vadd.f32 %v7545, %v7658
  %v7729 = vadd.f32 %v7550, %v7663
  %v7730 = vadd.f32 %v7553, %v7666
  %v7731 = vadd.f32 %v7558, %v7671
  %v7732 = vadd.f32 %v7561, %v7674
  %v7733 = vadd.f32 %v7566, %v7679
  %v7734 = vadd.f32 %v7569, %v7682
  %v7735 = vadd.f32 %v7574, %v7687
  %v7736 = vadd.f32 %v7577, %v7690
  %v7737 = vadd.f32 %v7582, %v7695
  %v7738 = vadd.f32 %v7585, %v7698
  %v7739 = vadd.f32 %v7590, %v7703
  %v7740 = vadd.f32 %v7593, %v7706
  %v7741 = vadd.f32 %v7598, %v7711
  %v7742 = vadd.f32 %v7601, %v7714
  %v7743 = vadd.f32 %v7606, %v7719
  %v7744 = vadd.f32 %v7609, %v7722
  %7745 = vmatprep.subr.bf16.mxu0 0
  %7746 = vmatpush1.bf16.msra.mxu0 0
  %7747 = vmatprep.subr.bf16.mxu0 0
  %7748 = vmatpush1.bf16.msra.mxu0 0
  %7749 = vmatprep.subr.bf16.mxu0 0
  %7750 = vmatpush1.bf16.msra.mxu0 %v6149
  %7751 = vmatprep.subr.bf16.mxu0 0
  %7752 = vmatpush1.bf16.msra.mxu0 %v6135
  %7753 = vmatprep.subr.bf16.mxu0 0
  %7754 = vmatpush1.bf16.msra.mxu0 %v6134
  %7755 = vmatprep.subr.bf16.mxu0 0
  %7756 = vmatpush1.bf16.msra.mxu0 %v6133
  %7757 = vmatprep.subr.bf16.mxu0 0
  %7758 = vmatpush1.bf16.msra.mxu0 %v6132
  %7759 = vmatprep.subr.bf16.mxu0 0
  %7760 = vmatpush1.bf16.msra.mxu0 %v6131
  %7761 = vmatprep.subr.bf16.mxu0 0
  %7762 = vmatpush2.bf16.msra.mxu0 0
  %7763 = vmatprep.subr.bf16.mxu0 0
  %7764 = vmatpush2.bf16.msra.mxu0 0
  %7765 = vmatprep.subr.bf16.mxu0 0
  %7766 = vmatpush2.bf16.msra.mxu0 0
  %7767 = vmatprep.subr.bf16.mxu0 0
  %7768 = vmatpush2.bf16.msra.mxu0 0
  %7769 = vmatprep.subr.bf16.mxu0 0
  %7770 = vmatpush2.bf16.msra.mxu0 0
  %7771 = vmatprep.subr.bf16.mxu0 0
  %7772 = vmatpush2.bf16.msra.mxu0 0
  %7773 = vmatprep.subr.bf16.mxu0 0
  %7774 = vmatpush2.bf16.msra.mxu0 0
  %7775 = vmatprep.subr.bf16.mxu0 0
  %7776 = vmatpush2.bf16.msra.mxu0 0
  %7777 = vmatprep.mubr.bf16.mxu0 0
  %7778 = vmatmul.mubr.bf16.gmra.mxu0 %v5757
  %v7779 = vpop.f32.mrf.mxu0
  %v7780 = vadd.f32 0.0, %v7779
  %v7781 = vpop.f32.mrf.mxu0
  %v7782 = vpop.f32.mrf.mxu0
  %v7783 = vadd.f32 0.0, %v7782
  %v7784 = vpop.f32.mrf.mxu0
  %7785 = vmatprep.mubr.bf16.mxu0 0
  %7786 = vmatmul.mubr.bf16.gmra.mxu0 %v5760
  %v7787 = vpop.f32.mrf.mxu0
  %v7788 = vadd.f32 0.0, %v7787
  %v7789 = vpop.f32.mrf.mxu0
  %v7790 = vpop.f32.mrf.mxu0
  %v7791 = vadd.f32 0.0, %v7790
  %v7792 = vpop.f32.mrf.mxu0
  %7793 = vmatprep.mubr.bf16.mxu0 0
  %7794 = vmatmul.mubr.bf16.gmra.mxu0 %v5763
  %v7795 = vpop.f32.mrf.mxu0
  %v7796 = vadd.f32 0.0, %v7795
  %v7797 = vpop.f32.mrf.mxu0
  %v7798 = vpop.f32.mrf.mxu0
  %v7799 = vadd.f32 0.0, %v7798
  %v7800 = vpop.f32.mrf.mxu0
  %7801 = vmatprep.mubr.bf16.mxu0 0
  %7802 = vmatmul.mubr.bf16.gmra.mxu0 %v5766
  %v7803 = vpop.f32.mrf.mxu0
  %v7804 = vadd.f32 0.0, %v7803
  %v7805 = vpop.f32.mrf.mxu0
  %v7806 = vpop.f32.mrf.mxu0
  %v7807 = vadd.f32 0.0, %v7806
  %v7808 = vpop.f32.mrf.mxu0
  %7809 = vmatprep.mubr.bf16.mxu0 0
  %7810 = vmatmul.mubr.bf16.gmra.mxu0 %v5769
  %v7811 = vpop.f32.mrf.mxu0
  %v7812 = vadd.f32 0.0, %v7811
  %v7813 = vpop.f32.mrf.mxu0
  %v7814 = vpop.f32.mrf.mxu0
  %v7815 = vadd.f32 0.0, %v7814
  %v7816 = vpop.f32.mrf.mxu0
  %7817 = vmatprep.mubr.bf16.mxu0 0
  %7818 = vmatmul.mubr.bf16.gmra.mxu0 %v5772
  %v7819 = vpop.f32.mrf.mxu0
  %v7820 = vadd.f32 0.0, %v7819
  %v7821 = vpop.f32.mrf.mxu0
  %v7822 = vpop.f32.mrf.mxu0
  %v7823 = vadd.f32 0.0, %v7822
  %v7824 = vpop.f32.mrf.mxu0
  %7825 = vmatprep.mubr.bf16.mxu0 0
  %7826 = vmatmul.mubr.bf16.gmra.mxu0 %v5946
  %v7827 = vpop.f32.mrf.mxu0
  %v7828 = vadd.f32 0.0, %v7827
  %v7829 = vpop.f32.mrf.mxu0
  %v7830 = vpop.f32.mrf.mxu0
  %v7831 = vadd.f32 0.0, %v7830
  %v7832 = vpop.f32.mrf.mxu0
  %7833 = vmatprep.mubr.bf16.mxu0 0
  %7834 = vmatmul.mubr.bf16.gmra.mxu0 %v5949
  %v7835 = vpop.f32.mrf.mxu0
  %v7836 = vadd.f32 0.0, %v7835
  %v7837 = vpop.f32.mrf.mxu0
  %v7838 = vpop.f32.mrf.mxu0
  %v7839 = vadd.f32 0.0, %v7838
  %v7840 = vpop.f32.mrf.mxu0
  %7841 = vmatprep.mubr.bf16.mxu0 0
  %7842 = vmatmul.mubr.bf16.gmra.mxu0 %v6340
  %v7843 = vpop.f32.mrf.mxu0
  %v7844 = vadd.f32 0.0, %v7843
  %v7845 = vpop.f32.mrf.mxu0
  %v7846 = vpop.f32.mrf.mxu0
  %v7847 = vadd.f32 0.0, %v7846
  %v7848 = vpop.f32.mrf.mxu0
  %7849 = vmatprep.mubr.bf16.mxu0 0
  %7850 = vmatmul.mubr.bf16.gmra.mxu0 %v6343
  %v7851 = vpop.f32.mrf.mxu0
  %v7852 = vadd.f32 0.0, %v7851
  %v7853 = vpop.f32.mrf.mxu0
  %v7854 = vpop.f32.mrf.mxu0
  %v7855 = vadd.f32 0.0, %v7854
  %v7856 = vpop.f32.mrf.mxu0
  %7857 = vdwg.mxu0
  %v7858 = vadd.f32 %v7725, %v7780
  %v7859 = vadd.f32 %v7726, %v7783
  %v7860 = vadd.f32 %v7727, %v7788
  %v7861 = vadd.f32 %v7728, %v7791
  %v7862 = vadd.f32 %v7729, %v7796
  %v7863 = vadd.f32 %v7730, %v7799
  %v7864 = vadd.f32 %v7731, %v7804
  %v7865 = vadd.f32 %v7732, %v7807
  %v7866 = vadd.f32 %v7733, %v7812
  %v7867 = vadd.f32 %v7734, %v7815
  %v7868 = vadd.f32 %v7735, %v7820
  %v7869 = vadd.f32 %v7736, %v7823
  %v7870 = vadd.f32 %v7737, %v7828
  %v7871 = vadd.f32 %v7738, %v7831
  %v7872 = vadd.f32 %v7739, %v7836
  %v7873 = vadd.f32 %v7740, %v7839
  %v7874 = vadd.f32 %v7741, %v7844
  %v7875 = vadd.f32 %v7742, %v7847
  %v7876 = vadd.f32 %v7743, %v7852
  %v7877 = vadd.f32 %v7744, %v7855
  %v7898 = vunpack.c.l.b16 %v7366
  %v7899 = vunpack.c.l.b16 %v7367
  %v7900 = vunpack.c.l.b16 %v7368
  %v7901 = vunpack.c.l.b16 %v7369
  %v7902 = vunpack.c.l.b16 %v7370
  %v7903 = vunpack.c.l.b16 %v7371
  %v7904 = vunpack.c.l.b16 %v7372
  %v7905 = vunpack.c.l.b16 %v7373
  %v7906 = vunpack.c.l.b16 %v7374
  %v7907 = vunpack.c.l.b16 %v7375
  %v7908 = vunpack.c.l.b16 %v7376
  %v7909 = vunpack.c.l.b16 %v7377
  %v7910 = vunpack.c.l.b16 %v7378
  %v7911 = vunpack.c.l.b16 %v7379
  %v7912 = vunpack.c.l.b16 %v7380
  %v7913 = vunpack.c.l.b16 %v7381
  %v7914 = vunpack.c.l.b16 %v7382
  %v7915 = vunpack.c.l.b16 %v7383
  %v7916 = vunpack.c.l.b16 %v7384
  %v7917 = vunpack.c.l.b16 %v7385
  %v7918 = vpack.c.b16 %v7899, %v7898
  %v7919 = vpack.c.b16 %v7901, %v7900
  %v7920 = vpack.c.b16 %v7903, %v7902
  %v7921 = vpack.c.b16 %v7905, %v7904
  %v7922 = vpack.c.b16 %v7907, %v7906
  %v7923 = vpack.c.b16 %v7909, %v7908
  %v7924 = vpack.c.b16 %v7911, %v7910
  %v7925 = vpack.c.b16 %v7913, %v7912
  %v7926 = vpack.c.b16 %v7915, %v7914
  %v7927 = vpack.c.b16 %v7917, %v7916
  %v7929 = vsel %vm5513, %v7918, 0
  %v7932 = vsel %vm5513, %v7919, 0
  %v7935 = vsel %vm5513, %v7920, 0
  %v7938 = vsel %vm5513, %v7921, 0
  %v7941 = vsel %vm5513, %v7922, 0
  %v7944 = vsel %vm5513, %v7923, 0
  %v7947 = vsel %vm5513, %v7924, 0
  %v7950 = vsel %vm5513, %v7925, 0
  %v7953 = vsel %vm5513, %v7926, 0
  %v7956 = vsel %vm5513, %v7927, 0
  %7958 = vmatprep.subr.bf16.mxu0 0
  %7959 = vmatpush1.bf16.msra.mxu0 0
  %7960 = vmatprep.subr.bf16.mxu0 0
  %7961 = vmatpush1.bf16.msra.mxu0 0
  %7962 = vmatprep.subr.bf16.mxu0 0
  %7963 = vmatpush1.bf16.msra.mxu0 %v6346
  %7964 = vmatprep.subr.bf16.mxu0 0
  %7965 = vmatpush1.bf16.msra.mxu0 %v6332
  %7966 = vmatprep.subr.bf16.mxu0 0
  %7967 = vmatpush1.bf16.msra.mxu0 %v6331
  %7968 = vmatprep.subr.bf16.mxu0 0
  %7969 = vmatpush1.bf16.msra.mxu0 %v6330
  %7970 = vmatprep.subr.bf16.mxu0 0
  %7971 = vmatpush1.bf16.msra.mxu0 %v6329
  %7972 = vmatprep.subr.bf16.mxu0 0
  %7973 = vmatpush1.bf16.msra.mxu0 %v6328
  %7974 = vmatprep.subr.bf16.mxu0 0
  %7975 = vmatpush2.bf16.msra.mxu0 0
  %7976 = vmatprep.subr.bf16.mxu0 0
  %7977 = vmatpush2.bf16.msra.mxu0 0
  %7978 = vmatprep.subr.bf16.mxu0 0
  %7979 = vmatpush2.bf16.msra.mxu0 0
  %7980 = vmatprep.subr.bf16.mxu0 0
  %7981 = vmatpush2.bf16.msra.mxu0 0
  %7982 = vmatprep.subr.bf16.mxu0 0
  %7983 = vmatpush2.bf16.msra.mxu0 0
  %7984 = vmatprep.subr.bf16.mxu0 0
  %7985 = vmatpush2.bf16.msra.mxu0 0
  %7986 = vmatprep.subr.bf16.mxu0 0
  %7987 = vmatpush2.bf16.msra.mxu0 0
  %7988 = vmatprep.subr.bf16.mxu0 0
  %7989 = vmatpush2.bf16.msra.mxu0 0
  %7990 = vmatprep.mubr.bf16.mxu0 0
  %7991 = vmatmul.mubr.bf16.gmra.mxu0 %v7929
  %v7992 = vpop.f32.mrf.mxu0
  %v7993 = vadd.f32 0.0, %v7992
  %v7994 = vpop.f32.mrf.mxu0
  %v7995 = vpop.f32.mrf.mxu0
  %v7996 = vadd.f32 0.0, %v7995
  %v7997 = vpop.f32.mrf.mxu0
  %7998 = vmatprep.mubr.bf16.mxu0 0
  %7999 = vmatmul.mubr.bf16.gmra.mxu0 %v7932
  %v8000 = vpop.f32.mrf.mxu0
  %v8001 = vadd.f32 0.0, %v8000
  %v8002 = vpop.f32.mrf.mxu0
  %v8003 = vpop.f32.mrf.mxu0
  %v8004 = vadd.f32 0.0, %v8003
  %v8005 = vpop.f32.mrf.mxu0
  %8006 = vmatprep.mubr.bf16.mxu0 0
  %8007 = vmatmul.mubr.bf16.gmra.mxu0 %v7935
  %v8008 = vpop.f32.mrf.mxu0
  %v8009 = vadd.f32 0.0, %v8008
  %v8010 = vpop.f32.mrf.mxu0
  %v8011 = vpop.f32.mrf.mxu0
  %v8012 = vadd.f32 0.0, %v8011
  %v8013 = vpop.f32.mrf.mxu0
  %8014 = vmatprep.mubr.bf16.mxu0 0
  %8015 = vmatmul.mubr.bf16.gmra.mxu0 %v7938
  %v8016 = vpop.f32.mrf.mxu0
  %v8017 = vadd.f32 0.0, %v8016
  %v8018 = vpop.f32.mrf.mxu0
  %v8019 = vpop.f32.mrf.mxu0
  %v8020 = vadd.f32 0.0, %v8019
  %v8021 = vpop.f32.mrf.mxu0
  %8022 = vmatprep.mubr.bf16.mxu0 0
  %8023 = vmatmul.mubr.bf16.gmra.mxu0 %v7941
  %v8024 = vpop.f32.mrf.mxu0
  %v8025 = vadd.f32 0.0, %v8024
  %v8026 = vpop.f32.mrf.mxu0
  %v8027 = vpop.f32.mrf.mxu0
  %v8028 = vadd.f32 0.0, %v8027
  %v8029 = vpop.f32.mrf.mxu0
  %8030 = vmatprep.mubr.bf16.mxu0 0
  %8031 = vmatmul.mubr.bf16.gmra.mxu0 %v7944
  %v8032 = vpop.f32.mrf.mxu0
  %v8033 = vadd.f32 0.0, %v8032
  %v8034 = vpop.f32.mrf.mxu0
  %v8035 = vpop.f32.mrf.mxu0
  %v8036 = vadd.f32 0.0, %v8035
  %v8037 = vpop.f32.mrf.mxu0
  %8038 = vmatprep.mubr.bf16.mxu0 0
  %8039 = vmatmul.mubr.bf16.gmra.mxu0 %v7947
  %v8040 = vpop.f32.mrf.mxu0
  %v8041 = vadd.f32 0.0, %v8040
  %v8042 = vpop.f32.mrf.mxu0
  %v8043 = vpop.f32.mrf.mxu0
  %v8044 = vadd.f32 0.0, %v8043
  %v8045 = vpop.f32.mrf.mxu0
  %8046 = vmatprep.mubr.bf16.mxu0 0
  %8047 = vmatmul.mubr.bf16.gmra.mxu0 %v7950
  %v8048 = vpop.f32.mrf.mxu0
  %v8049 = vadd.f32 0.0, %v8048
  %v8050 = vpop.f32.mrf.mxu0
  %v8051 = vpop.f32.mrf.mxu0
  %v8052 = vadd.f32 0.0, %v8051
  %v8053 = vpop.f32.mrf.mxu0
  %8054 = vmatprep.mubr.bf16.mxu0 0
  %8055 = vmatmul.mubr.bf16.gmra.mxu0 %v7953
  %v8056 = vpop.f32.mrf.mxu0
  %v8057 = vadd.f32 0.0, %v8056
  %v8058 = vpop.f32.mrf.mxu0
  %v8059 = vpop.f32.mrf.mxu0
  %v8060 = vadd.f32 0.0, %v8059
  %v8061 = vpop.f32.mrf.mxu0
  %8062 = vmatprep.mubr.bf16.mxu0 0
  %8063 = vmatmul.mubr.bf16.gmra.mxu0 %v7956
  %v8064 = vpop.f32.mrf.mxu0
  %v8065 = vadd.f32 0.0, %v8064
  %v8066 = vpop.f32.mrf.mxu0
  %v8067 = vpop.f32.mrf.mxu0
  %v8068 = vadd.f32 0.0, %v8067
  %v8069 = vpop.f32.mrf.mxu0
  %8070 = vdwg.mxu0
  %v8071 = vadd.f32 %v7858, %v7993
  %v8072 = vadd.f32 %v7859, %v7996
  %v8073 = vadd.f32 %v7860, %v8001
  %v8074 = vadd.f32 %v7861, %v8004
  %v8075 = vadd.f32 %v7862, %v8009
  %v8076 = vadd.f32 %v7863, %v8012
  %v8077 = vadd.f32 %v7864, %v8017
  %v8078 = vadd.f32 %v7865, %v8020
  %v8079 = vadd.f32 %v7866, %v8025
  %v8080 = vadd.f32 %v7867, %v8028
  %v8081 = vadd.f32 %v7868, %v8033
  %v8082 = vadd.f32 %v7869, %v8036
  %v8083 = vadd.f32 %v7870, %v8041
  %v8084 = vadd.f32 %v7871, %v8044
  %v8085 = vadd.f32 %v7872, %v8049
  %v8086 = vadd.f32 %v7873, %v8052
  %v8087 = vadd.f32 %v7874, %v8057
  %v8088 = vadd.f32 %v7875, %v8060
  %v8089 = vadd.f32 %v7876, %v8065
  %v8090 = vadd.f32 %v7877, %v8068
  %v8091 = vmax.f32 %v7346, %v8071
  %v8092 = vmax.f32 %v7347, %v8072
  %v8093 = vmax.f32 %v7348, %v8073
  %v8094 = vmax.f32 %v7349, %v8074
  %v8095 = vmax.f32 %v7350, %v8075
  %v8096 = vmax.f32 %v7351, %v8076
  %v8097 = vmax.f32 %v7352, %v8077
  %v8098 = vmax.f32 %v7353, %v8078
  %v8099 = vmax.f32 %v7354, %v8079
  %v8100 = vmax.f32 %v7355, %v8080
  %v8101 = vmax.f32 %v7356, %v8081
  %v8102 = vmax.f32 %v7357, %v8082
  %v8103 = vmax.f32 %v7358, %v8083
  %v8104 = vmax.f32 %v7359, %v8084
  %v8105 = vmax.f32 %v7360, %v8085
  %v8106 = vmax.f32 %v7361, %v8086
  %v8107 = vmax.f32 %v7362, %v8087
  %v8108 = vmax.f32 %v7363, %v8088
  %v8109 = vmax.f32 %v7364, %v8089
  %v8110 = vmax.f32 %v7365, %v8090
  %8111 = vmatprep.subr.bf16.mxu0 0
  %8112 = vmatpush1.bf16.msra.mxu0 0
  %8113 = vmatprep.subr.bf16.mxu0 0
  %8114 = vmatpush1.bf16.msra.mxu0 0
  %8115 = vmatprep.subr.bf16.mxu0 0
  %8116 = vmatpush1.bf16.msra.mxu0 %v6539
  %8117 = vmatprep.subr.bf16.mxu0 0
  %8118 = vmatpush1.bf16.msra.mxu0 %v6531
  %8119 = vmatprep.subr.bf16.mxu0 0
  %8120 = vmatpush1.bf16.msra.mxu0 %v6530
  %8121 = vmatprep.subr.bf16.mxu0 0
  %8122 = vmatpush1.bf16.msra.mxu0 %v6529
  %8123 = vmatprep.subr.bf16.mxu0 0
  %8124 = vmatpush1.bf16.msra.mxu0 %v6528
  %8125 = vmatprep.subr.bf16.mxu0 0
  %8126 = vmatpush1.bf16.msra.mxu0 %v6527
  %8127 = vmatprep.subr.bf16.mxu0 0
  %8128 = vmatpush2.bf16.msra.mxu0 0
  %8129 = vmatprep.subr.bf16.mxu0 0
  %8130 = vmatpush2.bf16.msra.mxu0 0
  %8131 = vmatprep.subr.bf16.mxu0 0
  %8132 = vmatpush2.bf16.msra.mxu0 0
  %8133 = vmatprep.subr.bf16.mxu0 0
  %8134 = vmatpush2.bf16.msra.mxu0 0
  %8135 = vmatprep.subr.bf16.mxu0 0
  %8136 = vmatpush2.bf16.msra.mxu0 0
  %8137 = vmatprep.subr.bf16.mxu0 0
  %8138 = vmatpush2.bf16.msra.mxu0 0
  %8139 = vmatprep.subr.bf16.mxu0 0
  %8140 = vmatpush2.bf16.msra.mxu0 0
  %8141 = vmatprep.subr.bf16.mxu0 0
  %8142 = vmatpush2.bf16.msra.mxu0 0
  %8143 = vmatprep.mubr.bf16.mxu0 0
  %8144 = vmatmul.mubr.bf16.gmra.mxu0 %v5751
  %v8145 = vpop.f32.mrf.mxu0
  %v8146 = vadd.f32 0.0, %v8145
  %v8147 = vpop.f32.mrf.mxu0
  %v8148 = vpop.f32.mrf.mxu0
  %v8149 = vadd.f32 0.0, %v8148
  %v8150 = vpop.f32.mrf.mxu0
  %8151 = vmatprep.mubr.bf16.mxu0 0
  %8152 = vmatmul.mubr.bf16.gmra.mxu0 %v5754
  %v8153 = vpop.f32.mrf.mxu0
  %v8154 = vadd.f32 0.0, %v8153
  %v8155 = vpop.f32.mrf.mxu0
  %v8156 = vpop.f32.mrf.mxu0
  %v8157 = vadd.f32 0.0, %v8156
  %v8158 = vpop.f32.mrf.mxu0
  %8159 = vmatprep.mubr.bf16.mxu0 0
  %8160 = vmatmul.mubr.bf16.gmra.mxu0 %v5757
  %v8161 = vpop.f32.mrf.mxu0
  %v8162 = vadd.f32 0.0, %v8161
  %v8163 = vpop.f32.mrf.mxu0
  %v8164 = vpop.f32.mrf.mxu0
  %v8165 = vadd.f32 0.0, %v8164
  %v8166 = vpop.f32.mrf.mxu0
  %8167 = vmatprep.mubr.bf16.mxu0 0
  %8168 = vmatmul.mubr.bf16.gmra.mxu0 %v5760
  %v8169 = vpop.f32.mrf.mxu0
  %v8170 = vadd.f32 0.0, %v8169
  %v8171 = vpop.f32.mrf.mxu0
  %v8172 = vpop.f32.mrf.mxu0
  %v8173 = vadd.f32 0.0, %v8172
  %v8174 = vpop.f32.mrf.mxu0
  %8175 = vmatprep.mubr.bf16.mxu0 0
  %8176 = vmatmul.mubr.bf16.gmra.mxu0 %v5763
  %v8177 = vpop.f32.mrf.mxu0
  %v8178 = vadd.f32 0.0, %v8177
  %v8179 = vpop.f32.mrf.mxu0
  %v8180 = vpop.f32.mrf.mxu0
  %v8181 = vadd.f32 0.0, %v8180
  %v8182 = vpop.f32.mrf.mxu0
  %8183 = vmatprep.mubr.bf16.mxu0 0
  %8184 = vmatmul.mubr.bf16.gmra.mxu0 %v5766
  %v8185 = vpop.f32.mrf.mxu0
  %v8186 = vadd.f32 0.0, %v8185
  %v8187 = vpop.f32.mrf.mxu0
  %v8188 = vpop.f32.mrf.mxu0
  %v8189 = vadd.f32 0.0, %v8188
  %v8190 = vpop.f32.mrf.mxu0
  %8191 = vmatprep.mubr.bf16.mxu0 0
  %8192 = vmatmul.mubr.bf16.gmra.mxu0 %v5769
  %v8193 = vpop.f32.mrf.mxu0
  %v8194 = vadd.f32 0.0, %v8193
  %v8195 = vpop.f32.mrf.mxu0
  %v8196 = vpop.f32.mrf.mxu0
  %v8197 = vadd.f32 0.0, %v8196
  %v8198 = vpop.f32.mrf.mxu0
  %8199 = vmatprep.mubr.bf16.mxu0 0
  %8200 = vmatmul.mubr.bf16.gmra.mxu0 %v5772
  %v8201 = vpop.f32.mrf.mxu0
  %v8202 = vadd.f32 0.0, %v8201
  %v8203 = vpop.f32.mrf.mxu0
  %v8204 = vpop.f32.mrf.mxu0
  %v8205 = vadd.f32 0.0, %v8204
  %v8206 = vpop.f32.mrf.mxu0
  %8207 = vmatprep.mubr.bf16.mxu0 0
  %8208 = vmatmul.mubr.bf16.gmra.mxu0 %v5946
  %v8209 = vpop.f32.mrf.mxu0
  %v8210 = vadd.f32 0.0, %v8209
  %v8211 = vpop.f32.mrf.mxu0
  %v8212 = vpop.f32.mrf.mxu0
  %v8213 = vadd.f32 0.0, %v8212
  %v8214 = vpop.f32.mrf.mxu0
  %8215 = vmatprep.mubr.bf16.mxu0 0
  %8216 = vmatmul.mubr.bf16.gmra.mxu0 %v5949
  %v8217 = vpop.f32.mrf.mxu0
  %v8218 = vadd.f32 0.0, %v8217
  %v8219 = vpop.f32.mrf.mxu0
  %v8220 = vpop.f32.mrf.mxu0
  %v8221 = vadd.f32 0.0, %v8220
  %v8222 = vpop.f32.mrf.mxu0
  %8223 = vdwg.mxu0
  %8224 = vmatprep.subr.bf16.mxu0 0
  %8225 = vmatpush1.bf16.msra.mxu0 0
  %8226 = vmatprep.subr.bf16.mxu0 0
  %8227 = vmatpush1.bf16.msra.mxu0 0
  %8228 = vmatprep.subr.bf16.mxu0 0
  %8229 = vmatpush1.bf16.msra.mxu0 %v6688
  %8230 = vmatprep.subr.bf16.mxu0 0
  %8231 = vmatpush1.bf16.msra.mxu0 %v6680
  %8232 = vmatprep.subr.bf16.mxu0 0
  %8233 = vmatpush1.bf16.msra.mxu0 %v6679
  %8234 = vmatprep.subr.bf16.mxu0 0
  %8235 = vmatpush1.bf16.msra.mxu0 %v6678
  %8236 = vmatprep.subr.bf16.mxu0 0
  %8237 = vmatpush1.bf16.msra.mxu0 %v6677
  %8238 = vmatprep.subr.bf16.mxu0 0
  %8239 = vmatpush1.bf16.msra.mxu0 %v6676
  %8240 = vmatprep.subr.bf16.mxu0 0
  %8241 = vmatpush2.bf16.msra.mxu0 0
  %8242 = vmatprep.subr.bf16.mxu0 0
  %8243 = vmatpush2.bf16.msra.mxu0 0
  %8244 = vmatprep.subr.bf16.mxu0 0
  %8245 = vmatpush2.bf16.msra.mxu0 0
  %8246 = vmatprep.subr.bf16.mxu0 0
  %8247 = vmatpush2.bf16.msra.mxu0 0
  %8248 = vmatprep.subr.bf16.mxu0 0
  %8249 = vmatpush2.bf16.msra.mxu0 0
  %8250 = vmatprep.subr.bf16.mxu0 0
  %8251 = vmatpush2.bf16.msra.mxu0 0
  %8252 = vmatprep.subr.bf16.mxu0 0
  %8253 = vmatpush2.bf16.msra.mxu0 0
  %8254 = vmatprep.subr.bf16.mxu0 0
  %8255 = vmatpush2.bf16.msra.mxu0 0
  %8256 = vmatprep.mubr.bf16.mxu0 0
  %8257 = vmatmul.mubr.bf16.gmra.mxu0 %v5515
  %v8258 = vpop.f32.mrf.mxu0
  %v8259 = vadd.f32 %v8146, %v8258
  %v8260 = vpop.f32.mrf.mxu0
  %v8261 = vpop.f32.mrf.mxu0
  %v8262 = vadd.f32 %v8149, %v8261
  %v8263 = vpop.f32.mrf.mxu0
  %8264 = vmatprep.mubr.bf16.mxu0 0
  %8265 = vmatmul.mubr.bf16.gmra.mxu0 %v5518
  %v8266 = vpop.f32.mrf.mxu0
  %v8267 = vadd.f32 %v8154, %v8266
  %v8268 = vpop.f32.mrf.mxu0
  %v8269 = vpop.f32.mrf.mxu0
  %v8270 = vadd.f32 %v8157, %v8269
  %v8271 = vpop.f32.mrf.mxu0
  %8272 = vmatprep.mubr.bf16.mxu0 0
  %8273 = vmatmul.mubr.bf16.gmra.mxu0 %v5521
  %v8274 = vpop.f32.mrf.mxu0
  %v8275 = vadd.f32 %v8162, %v8274
  %v8276 = vpop.f32.mrf.mxu0
  %v8277 = vpop.f32.mrf.mxu0
  %v8278 = vadd.f32 %v8165, %v8277
  %v8279 = vpop.f32.mrf.mxu0
  %8280 = vmatprep.mubr.bf16.mxu0 0
  %8281 = vmatmul.mubr.bf16.gmra.mxu0 %v5524
  %v8282 = vpop.f32.mrf.mxu0
  %v8283 = vadd.f32 %v8170, %v8282
  %v8284 = vpop.f32.mrf.mxu0
  %v8285 = vpop.f32.mrf.mxu0
  %v8286 = vadd.f32 %v8173, %v8285
  %v8287 = vpop.f32.mrf.mxu0
  %8288 = vmatprep.mubr.bf16.mxu0 0
  %8289 = vmatmul.mubr.bf16.gmra.mxu0 %v5527
  %v8290 = vpop.f32.mrf.mxu0
  %v8291 = vadd.f32 %v8178, %v8290
  %v8292 = vpop.f32.mrf.mxu0
  %v8293 = vpop.f32.mrf.mxu0
  %v8294 = vadd.f32 %v8181, %v8293
  %v8295 = vpop.f32.mrf.mxu0
  %8296 = vmatprep.mubr.bf16.mxu0 0
  %8297 = vmatmul.mubr.bf16.gmra.mxu0 %v5530
  %v8298 = vpop.f32.mrf.mxu0
  %v8299 = vadd.f32 %v8186, %v8298
  %v8300 = vpop.f32.mrf.mxu0
  %v8301 = vpop.f32.mrf.mxu0
  %v8302 = vadd.f32 %v8189, %v8301
  %v8303 = vpop.f32.mrf.mxu0
  %8304 = vmatprep.mubr.bf16.mxu0 0
  %8305 = vmatmul.mubr.bf16.gmra.mxu0 %v5533
  %v8306 = vpop.f32.mrf.mxu0
  %v8307 = vadd.f32 %v8194, %v8306
  %v8308 = vpop.f32.mrf.mxu0
  %v8309 = vpop.f32.mrf.mxu0
  %v8310 = vadd.f32 %v8197, %v8309
  %v8311 = vpop.f32.mrf.mxu0
  %8312 = vmatprep.mubr.bf16.mxu0 0
  %8313 = vmatmul.mubr.bf16.gmra.mxu0 %v5536
  %v8314 = vpop.f32.mrf.mxu0
  %v8315 = vadd.f32 %v8202, %v8314
  %v8316 = vpop.f32.mrf.mxu0
  %v8317 = vpop.f32.mrf.mxu0
  %v8318 = vadd.f32 %v8205, %v8317
  %v8319 = vpop.f32.mrf.mxu0
  %8320 = vmatprep.mubr.bf16.mxu0 0
  %8321 = vmatmul.mubr.bf16.gmra.mxu0 %v5539
  %v8322 = vpop.f32.mrf.mxu0
  %v8323 = vadd.f32 %v8210, %v8322
  %v8324 = vpop.f32.mrf.mxu0
  %v8325 = vpop.f32.mrf.mxu0
  %v8326 = vadd.f32 %v8213, %v8325
  %v8327 = vpop.f32.mrf.mxu0
  %8328 = vmatprep.mubr.bf16.mxu0 0
  %8329 = vmatmul.mubr.bf16.gmra.mxu0 %v5542
  %v8330 = vpop.f32.mrf.mxu0
  %v8331 = vadd.f32 %v8218, %v8330
  %v8332 = vpop.f32.mrf.mxu0
  %v8333 = vpop.f32.mrf.mxu0
  %v8334 = vadd.f32 %v8221, %v8333
  %v8335 = vpop.f32.mrf.mxu0
  %8336 = vdwg.mxu0
  %8337 = vmatprep.subr.bf16.mxu0 0
  %8338 = vmatpush1.bf16.msra.mxu0 0
  %8339 = vmatprep.subr.bf16.mxu0 0
  %8340 = vmatpush1.bf16.msra.mxu0 0
  %8341 = vmatprep.subr.bf16.mxu0 0
  %8342 = vmatpush1.bf16.msra.mxu0 %v6849
  %8343 = vmatprep.subr.bf16.mxu0 0
  %8344 = vmatpush1.bf16.msra.mxu0 %v6841
  %8345 = vmatprep.subr.bf16.mxu0 0
  %8346 = vmatpush1.bf16.msra.mxu0 %v6840
  %8347 = vmatprep.subr.bf16.mxu0 0
  %8348 = vmatpush1.bf16.msra.mxu0 %v6839
  %8349 = vmatprep.subr.bf16.mxu0 0
  %8350 = vmatpush1.bf16.msra.mxu0 %v6838
  %8351 = vmatprep.subr.bf16.mxu0 0
  %8352 = vmatpush1.bf16.msra.mxu0 %v6837
  %8353 = vmatprep.subr.bf16.mxu0 0
  %8354 = vmatpush2.bf16.msra.mxu0 0
  %8355 = vmatprep.subr.bf16.mxu0 0
  %8356 = vmatpush2.bf16.msra.mxu0 0
  %8357 = vmatprep.subr.bf16.mxu0 0
  %8358 = vmatpush2.bf16.msra.mxu0 0
  %8359 = vmatprep.subr.bf16.mxu0 0
  %8360 = vmatpush2.bf16.msra.mxu0 0
  %8361 = vmatprep.subr.bf16.mxu0 0
  %8362 = vmatpush2.bf16.msra.mxu0 0
  %8363 = vmatprep.subr.bf16.mxu0 0
  %8364 = vmatpush2.bf16.msra.mxu0 0
  %8365 = vmatprep.subr.bf16.mxu0 0
  %8366 = vmatpush2.bf16.msra.mxu0 0
  %8367 = vmatprep.subr.bf16.mxu0 0
  %8368 = vmatpush2.bf16.msra.mxu0 0
  %8369 = vmatprep.mubr.bf16.mxu0 0
  %8370 = vmatmul.mubr.bf16.gmra.mxu0 %v5521
  %v8371 = vpop.f32.mrf.mxu0
  %v8372 = vadd.f32 0.0, %v8371
  %v8373 = vpop.f32.mrf.mxu0
  %v8374 = vpop.f32.mrf.mxu0
  %v8375 = vadd.f32 0.0, %v8374
  %v8376 = vpop.f32.mrf.mxu0
  %8377 = vmatprep.mubr.bf16.mxu0 0
  %8378 = vmatmul.mubr.bf16.gmra.mxu0 %v5524
  %v8379 = vpop.f32.mrf.mxu0
  %v8380 = vadd.f32 0.0, %v8379
  %v8381 = vpop.f32.mrf.mxu0
  %v8382 = vpop.f32.mrf.mxu0
  %v8383 = vadd.f32 0.0, %v8382
  %v8384 = vpop.f32.mrf.mxu0
  %8385 = vmatprep.mubr.bf16.mxu0 0
  %8386 = vmatmul.mubr.bf16.gmra.mxu0 %v5527
  %v8387 = vpop.f32.mrf.mxu0
  %v8388 = vadd.f32 0.0, %v8387
  %v8389 = vpop.f32.mrf.mxu0
  %v8390 = vpop.f32.mrf.mxu0
  %v8391 = vadd.f32 0.0, %v8390
  %v8392 = vpop.f32.mrf.mxu0
  %8393 = vmatprep.mubr.bf16.mxu0 0
  %8394 = vmatmul.mubr.bf16.gmra.mxu0 %v5530
  %v8395 = vpop.f32.mrf.mxu0
  %v8396 = vadd.f32 0.0, %v8395
  %v8397 = vpop.f32.mrf.mxu0
  %v8398 = vpop.f32.mrf.mxu0
  %v8399 = vadd.f32 0.0, %v8398
  %v8400 = vpop.f32.mrf.mxu0
  %8401 = vmatprep.mubr.bf16.mxu0 0
  %8402 = vmatmul.mubr.bf16.gmra.mxu0 %v5533
  %v8403 = vpop.f32.mrf.mxu0
  %v8404 = vadd.f32 0.0, %v8403
  %v8405 = vpop.f32.mrf.mxu0
  %v8406 = vpop.f32.mrf.mxu0
  %v8407 = vadd.f32 0.0, %v8406
  %v8408 = vpop.f32.mrf.mxu0
  %8409 = vmatprep.mubr.bf16.mxu0 0
  %8410 = vmatmul.mubr.bf16.gmra.mxu0 %v5536
  %v8411 = vpop.f32.mrf.mxu0
  %v8412 = vadd.f32 0.0, %v8411
  %v8413 = vpop.f32.mrf.mxu0
  %v8414 = vpop.f32.mrf.mxu0
  %v8415 = vadd.f32 0.0, %v8414
  %v8416 = vpop.f32.mrf.mxu0
  %8417 = vmatprep.mubr.bf16.mxu0 0
  %8418 = vmatmul.mubr.bf16.gmra.mxu0 %v5539
  %v8419 = vpop.f32.mrf.mxu0
  %v8420 = vadd.f32 0.0, %v8419
  %v8421 = vpop.f32.mrf.mxu0
  %v8422 = vpop.f32.mrf.mxu0
  %v8423 = vadd.f32 0.0, %v8422
  %v8424 = vpop.f32.mrf.mxu0
  %8425 = vmatprep.mubr.bf16.mxu0 0
  %8426 = vmatmul.mubr.bf16.gmra.mxu0 %v5542
  %v8427 = vpop.f32.mrf.mxu0
  %v8428 = vadd.f32 0.0, %v8427
  %v8429 = vpop.f32.mrf.mxu0
  %v8430 = vpop.f32.mrf.mxu0
  %v8431 = vadd.f32 0.0, %v8430
  %v8432 = vpop.f32.mrf.mxu0
  %8433 = vmatprep.mubr.bf16.mxu0 0
  %8434 = vmatmul.mubr.bf16.gmra.mxu0 %v6143
  %v8435 = vpop.f32.mrf.mxu0
  %v8436 = vadd.f32 0.0, %v8435
  %v8437 = vpop.f32.mrf.mxu0
  %v8438 = vpop.f32.mrf.mxu0
  %v8439 = vadd.f32 0.0, %v8438
  %v8440 = vpop.f32.mrf.mxu0
  %8441 = vmatprep.mubr.bf16.mxu0 0
  %8442 = vmatmul.mubr.bf16.gmra.mxu0 %v6146
  %v8443 = vpop.f32.mrf.mxu0
  %v8444 = vadd.f32 0.0, %v8443
  %v8445 = vpop.f32.mrf.mxu0
  %v8446 = vpop.f32.mrf.mxu0
  %v8447 = vadd.f32 0.0, %v8446
  %v8448 = vpop.f32.mrf.mxu0
  %8449 = vdwg.mxu0
  %v8450 = vadd.f32 %v8259, %v8372
  %v8451 = vadd.f32 %v8262, %v8375
  %v8452 = vadd.f32 %v8267, %v8380
  %v8453 = vadd.f32 %v8270, %v8383
  %v8454 = vadd.f32 %v8275, %v8388
  %v8455 = vadd.f32 %v8278, %v8391
  %v8456 = vadd.f32 %v8283, %v8396
  %v8457 = vadd.f32 %v8286, %v8399
  %v8458 = vadd.f32 %v8291, %v8404
  %v8459 = vadd.f32 %v8294, %v8407
  %v8460 = vadd.f32 %v8299, %v8412
  %v8461 = vadd.f32 %v8302, %v8415
  %v8462 = vadd.f32 %v8307, %v8420
  %v8463 = vadd.f32 %v8310, %v8423
  %v8464 = vadd.f32 %v8315, %v8428
  %v8465 = vadd.f32 %v8318, %v8431
  %v8466 = vadd.f32 %v8323, %v8436
  %v8467 = vadd.f32 %v8326, %v8439
  %v8468 = vadd.f32 %v8331, %v8444
  %v8469 = vadd.f32 %v8334, %v8447
  %8470 = vmatprep.subr.bf16.mxu0 0
  %8471 = vmatpush1.bf16.msra.mxu0 0
  %8472 = vmatprep.subr.bf16.mxu0 0
  %8473 = vmatpush1.bf16.msra.mxu0 0
  %8474 = vmatprep.subr.bf16.mxu0 0
  %8475 = vmatpush1.bf16.msra.mxu0 %v7030
  %8476 = vmatprep.subr.bf16.mxu0 0
  %8477 = vmatpush1.bf16.msra.mxu0 %v7022
  %8478 = vmatprep.subr.bf16.mxu0 0
  %8479 = vmatpush1.bf16.msra.mxu0 %v7021
  %8480 = vmatprep.subr.bf16.mxu0 0
  %8481 = vmatpush1.bf16.msra.mxu0 %v7020
  %8482 = vmatprep.subr.bf16.mxu0 0
  %8483 = vmatpush1.bf16.msra.mxu0 %v7019
  %8484 = vmatprep.subr.bf16.mxu0 0
  %8485 = vmatpush1.bf16.msra.mxu0 %v7018
  %8486 = vmatprep.subr.bf16.mxu0 0
  %8487 = vmatpush2.bf16.msra.mxu0 0
  %8488 = vmatprep.subr.bf16.mxu0 0
  %8489 = vmatpush2.bf16.msra.mxu0 0
  %8490 = vmatprep.subr.bf16.mxu0 0
  %8491 = vmatpush2.bf16.msra.mxu0 0
  %8492 = vmatprep.subr.bf16.mxu0 0
  %8493 = vmatpush2.bf16.msra.mxu0 0
  %8494 = vmatprep.subr.bf16.mxu0 0
  %8495 = vmatpush2.bf16.msra.mxu0 0
  %8496 = vmatprep.subr.bf16.mxu0 0
  %8497 = vmatpush2.bf16.msra.mxu0 0
  %8498 = vmatprep.subr.bf16.mxu0 0
  %8499 = vmatpush2.bf16.msra.mxu0 0
  %8500 = vmatprep.subr.bf16.mxu0 0
  %8501 = vmatpush2.bf16.msra.mxu0 0
  %8502 = vmatprep.mubr.bf16.mxu0 0
  %8503 = vmatmul.mubr.bf16.gmra.mxu0 %v5757
  %v8504 = vpop.f32.mrf.mxu0
  %v8505 = vadd.f32 0.0, %v8504
  %v8506 = vpop.f32.mrf.mxu0
  %v8507 = vpop.f32.mrf.mxu0
  %v8508 = vadd.f32 0.0, %v8507
  %v8509 = vpop.f32.mrf.mxu0
  %8510 = vmatprep.mubr.bf16.mxu0 0
  %8511 = vmatmul.mubr.bf16.gmra.mxu0 %v5760
  %v8512 = vpop.f32.mrf.mxu0
  %v8513 = vadd.f32 0.0, %v8512
  %v8514 = vpop.f32.mrf.mxu0
  %v8515 = vpop.f32.mrf.mxu0
  %v8516 = vadd.f32 0.0, %v8515
  %v8517 = vpop.f32.mrf.mxu0
  %8518 = vmatprep.mubr.bf16.mxu0 0
  %8519 = vmatmul.mubr.bf16.gmra.mxu0 %v5763
  %v8520 = vpop.f32.mrf.mxu0
  %v8521 = vadd.f32 0.0, %v8520
  %v8522 = vpop.f32.mrf.mxu0
  %v8523 = vpop.f32.mrf.mxu0
  %v8524 = vadd.f32 0.0, %v8523
  %v8525 = vpop.f32.mrf.mxu0
  %8526 = vmatprep.mubr.bf16.mxu0 0
  %8527 = vmatmul.mubr.bf16.gmra.mxu0 %v5766
  %v8528 = vpop.f32.mrf.mxu0
  %v8529 = vadd.f32 0.0, %v8528
  %v8530 = vpop.f32.mrf.mxu0
  %v8531 = vpop.f32.mrf.mxu0
  %v8532 = vadd.f32 0.0, %v8531
  %v8533 = vpop.f32.mrf.mxu0
  %8534 = vmatprep.mubr.bf16.mxu0 0
  %8535 = vmatmul.mubr.bf16.gmra.mxu0 %v5769
  %v8536 = vpop.f32.mrf.mxu0
  %v8537 = vadd.f32 0.0, %v8536
  %v8538 = vpop.f32.mrf.mxu0
  %v8539 = vpop.f32.mrf.mxu0
  %v8540 = vadd.f32 0.0, %v8539
  %v8541 = vpop.f32.mrf.mxu0
  %8542 = vmatprep.mubr.bf16.mxu0 0
  %8543 = vmatmul.mubr.bf16.gmra.mxu0 %v5772
  %v8544 = vpop.f32.mrf.mxu0
  %v8545 = vadd.f32 0.0, %v8544
  %v8546 = vpop.f32.mrf.mxu0
  %v8547 = vpop.f32.mrf.mxu0
  %v8548 = vadd.f32 0.0, %v8547
  %v8549 = vpop.f32.mrf.mxu0
  %8550 = vmatprep.mubr.bf16.mxu0 0
  %8551 = vmatmul.mubr.bf16.gmra.mxu0 %v5946
  %v8552 = vpop.f32.mrf.mxu0
  %v8553 = vadd.f32 0.0, %v8552
  %v8554 = vpop.f32.mrf.mxu0
  %v8555 = vpop.f32.mrf.mxu0
  %v8556 = vadd.f32 0.0, %v8555
  %v8557 = vpop.f32.mrf.mxu0
  %8558 = vmatprep.mubr.bf16.mxu0 0
  %8559 = vmatmul.mubr.bf16.gmra.mxu0 %v5949
  %v8560 = vpop.f32.mrf.mxu0
  %v8561 = vadd.f32 0.0, %v8560
  %v8562 = vpop.f32.mrf.mxu0
  %v8563 = vpop.f32.mrf.mxu0
  %v8564 = vadd.f32 0.0, %v8563
  %v8565 = vpop.f32.mrf.mxu0
  %8566 = vmatprep.mubr.bf16.mxu0 0
  %8567 = vmatmul.mubr.bf16.gmra.mxu0 %v6340
  %v8568 = vpop.f32.mrf.mxu0
  %v8569 = vadd.f32 0.0, %v8568
  %v8570 = vpop.f32.mrf.mxu0
  %v8571 = vpop.f32.mrf.mxu0
  %v8572 = vadd.f32 0.0, %v8571
  %v8573 = vpop.f32.mrf.mxu0
  %8574 = vmatprep.mubr.bf16.mxu0 0
  %8575 = vmatmul.mubr.bf16.gmra.mxu0 %v6343
  %v8576 = vpop.f32.mrf.mxu0
  %v8577 = vadd.f32 0.0, %v8576
  %v8578 = vpop.f32.mrf.mxu0
  %v8579 = vpop.f32.mrf.mxu0
  %v8580 = vadd.f32 0.0, %v8579
  %v8581 = vpop.f32.mrf.mxu0
  %8582 = vdwg.mxu0
  %v8583 = vadd.f32 %v8450, %v8505
  %v8584 = vadd.f32 %v8451, %v8508
  %v8585 = vadd.f32 %v8452, %v8513
  %v8586 = vadd.f32 %v8453, %v8516
  %v8587 = vadd.f32 %v8454, %v8521
  %v8588 = vadd.f32 %v8455, %v8524
  %v8589 = vadd.f32 %v8456, %v8529
  %v8590 = vadd.f32 %v8457, %v8532
  %v8591 = vadd.f32 %v8458, %v8537
  %v8592 = vadd.f32 %v8459, %v8540
  %v8593 = vadd.f32 %v8460, %v8545
  %v8594 = vadd.f32 %v8461, %v8548
  %v8595 = vadd.f32 %v8462, %v8553
  %v8596 = vadd.f32 %v8463, %v8556
  %v8597 = vadd.f32 %v8464, %v8561
  %v8598 = vadd.f32 %v8465, %v8564
  %v8599 = vadd.f32 %v8466, %v8569
  %v8600 = vadd.f32 %v8467, %v8572
  %v8601 = vadd.f32 %v8468, %v8577
  %v8602 = vadd.f32 %v8469, %v8580
  %8603 = vmatprep.subr.bf16.mxu0 0
  %8604 = vmatpush1.bf16.msra.mxu0 0
  %8605 = vmatprep.subr.bf16.mxu0 0
  %8606 = vmatpush1.bf16.msra.mxu0 0
  %8607 = vmatprep.subr.bf16.mxu0 0
  %8608 = vmatpush1.bf16.msra.mxu0 %v7211
  %8609 = vmatprep.subr.bf16.mxu0 0
  %8610 = vmatpush1.bf16.msra.mxu0 %v7203
  %8611 = vmatprep.subr.bf16.mxu0 0
  %8612 = vmatpush1.bf16.msra.mxu0 %v7202
  %8613 = vmatprep.subr.bf16.mxu0 0
  %8614 = vmatpush1.bf16.msra.mxu0 %v7201
  %8615 = vmatprep.subr.bf16.mxu0 0
  %8616 = vmatpush1.bf16.msra.mxu0 %v7200
  %8617 = vmatprep.subr.bf16.mxu0 0
  %8618 = vmatpush1.bf16.msra.mxu0 %v7199
  %8619 = vmatprep.subr.bf16.mxu0 0
  %8620 = vmatpush2.bf16.msra.mxu0 0
  %8621 = vmatprep.subr.bf16.mxu0 0
  %8622 = vmatpush2.bf16.msra.mxu0 0
  %8623 = vmatprep.subr.bf16.mxu0 0
  %8624 = vmatpush2.bf16.msra.mxu0 0
  %8625 = vmatprep.subr.bf16.mxu0 0
  %8626 = vmatpush2.bf16.msra.mxu0 0
  %8627 = vmatprep.subr.bf16.mxu0 0
  %8628 = vmatpush2.bf16.msra.mxu0 0
  %8629 = vmatprep.subr.bf16.mxu0 0
  %8630 = vmatpush2.bf16.msra.mxu0 0
  %8631 = vmatprep.subr.bf16.mxu0 0
  %8632 = vmatpush2.bf16.msra.mxu0 0
  %8633 = vmatprep.subr.bf16.mxu0 0
  %8634 = vmatpush2.bf16.msra.mxu0 0
  %8635 = vmatprep.mubr.bf16.mxu0 0
  %8636 = vmatmul.mubr.bf16.gmra.mxu0 %v7929
  %v8637 = vpop.f32.mrf.mxu0
  %v8638 = vadd.f32 0.0, %v8637
  %v8639 = vpop.f32.mrf.mxu0
  %v8640 = vpop.f32.mrf.mxu0
  %v8641 = vadd.f32 0.0, %v8640
  %v8642 = vpop.f32.mrf.mxu0
  %8643 = vmatprep.mubr.bf16.mxu0 0
  %8644 = vmatmul.mubr.bf16.gmra.mxu0 %v7932
  %v8645 = vpop.f32.mrf.mxu0
  %v8646 = vadd.f32 0.0, %v8645
  %v8647 = vpop.f32.mrf.mxu0
  %v8648 = vpop.f32.mrf.mxu0
  %v8649 = vadd.f32 0.0, %v8648
  %v8650 = vpop.f32.mrf.mxu0
  %8651 = vmatprep.mubr.bf16.mxu0 0
  %8652 = vmatmul.mubr.bf16.gmra.mxu0 %v7935
  %v8653 = vpop.f32.mrf.mxu0
  %v8654 = vadd.f32 0.0, %v8653
  %v8655 = vpop.f32.mrf.mxu0
  %v8656 = vpop.f32.mrf.mxu0
  %v8657 = vadd.f32 0.0, %v8656
  %v8658 = vpop.f32.mrf.mxu0
  %8659 = vmatprep.mubr.bf16.mxu0 0
  %8660 = vmatmul.mubr.bf16.gmra.mxu0 %v7938
  %v8661 = vpop.f32.mrf.mxu0
  %v8662 = vadd.f32 0.0, %v8661
  %v8663 = vpop.f32.mrf.mxu0
  %v8664 = vpop.f32.mrf.mxu0
  %v8665 = vadd.f32 0.0, %v8664
  %v8666 = vpop.f32.mrf.mxu0
  %8667 = vmatprep.mubr.bf16.mxu0 0
  %8668 = vmatmul.mubr.bf16.gmra.mxu0 %v7941
  %v8669 = vpop.f32.mrf.mxu0
  %v8670 = vadd.f32 0.0, %v8669
  %v8671 = vpop.f32.mrf.mxu0
  %v8672 = vpop.f32.mrf.mxu0
  %v8673 = vadd.f32 0.0, %v8672
  %v8674 = vpop.f32.mrf.mxu0
  %8675 = vmatprep.mubr.bf16.mxu0 0
  %8676 = vmatmul.mubr.bf16.gmra.mxu0 %v7944
  %v8677 = vpop.f32.mrf.mxu0
  %v8678 = vadd.f32 0.0, %v8677
  %v8679 = vpop.f32.mrf.mxu0
  %v8680 = vpop.f32.mrf.mxu0
  %v8681 = vadd.f32 0.0, %v8680
  %v8682 = vpop.f32.mrf.mxu0
  %8683 = vmatprep.mubr.bf16.mxu0 0
  %8684 = vmatmul.mubr.bf16.gmra.mxu0 %v7947
  %v8685 = vpop.f32.mrf.mxu0
  %v8686 = vadd.f32 0.0, %v8685
  %v8687 = vpop.f32.mrf.mxu0
  %v8688 = vpop.f32.mrf.mxu0
  %v8689 = vadd.f32 0.0, %v8688
  %v8690 = vpop.f32.mrf.mxu0
  %8691 = vmatprep.mubr.bf16.mxu0 0
  %8692 = vmatmul.mubr.bf16.gmra.mxu0 %v7950
  %v8693 = vpop.f32.mrf.mxu0
  %v8694 = vadd.f32 0.0, %v8693
  %v8695 = vpop.f32.mrf.mxu0
  %v8696 = vpop.f32.mrf.mxu0
  %v8697 = vadd.f32 0.0, %v8696
  %v8698 = vpop.f32.mrf.mxu0
  %8699 = vmatprep.mubr.bf16.mxu0 0
  %8700 = vmatmul.mubr.bf16.gmra.mxu0 %v7953
  %v8701 = vpop.f32.mrf.mxu0
  %v8702 = vadd.f32 0.0, %v8701
  %v8703 = vpop.f32.mrf.mxu0
  %v8704 = vpop.f32.mrf.mxu0
  %v8705 = vadd.f32 0.0, %v8704
  %v8706 = vpop.f32.mrf.mxu0
  %8707 = vmatprep.mubr.bf16.mxu0 0
  %8708 = vmatmul.mubr.bf16.gmra.mxu0 %v7956
  %v8709 = vpop.f32.mrf.mxu0
  %v8710 = vadd.f32 0.0, %v8709
  %v8711 = vpop.f32.mrf.mxu0
  %v8712 = vpop.f32.mrf.mxu0
  %v8713 = vadd.f32 0.0, %v8712
  %v8714 = vpop.f32.mrf.mxu0
  %8715 = vdwg.mxu0
  %v8716 = vadd.f32 %v8583, %v8638
  %v8717 = vadd.f32 %v8584, %v8641
  %v8718 = vadd.f32 %v8585, %v8646
  %v8719 = vadd.f32 %v8586, %v8649
  %v8720 = vadd.f32 %v8587, %v8654
  %v8721 = vadd.f32 %v8588, %v8657
  %v8722 = vadd.f32 %v8589, %v8662
  %v8723 = vadd.f32 %v8590, %v8665
  %v8724 = vadd.f32 %v8591, %v8670
  %v8725 = vadd.f32 %v8592, %v8673
  %v8726 = vadd.f32 %v8593, %v8678
  %v8727 = vadd.f32 %v8594, %v8681
  %v8728 = vadd.f32 %v8595, %v8686
  %v8729 = vadd.f32 %v8596, %v8689
  %v8730 = vadd.f32 %v8597, %v8694
  %v8731 = vadd.f32 %v8598, %v8697
  %v8732 = vadd.f32 %v8599, %v8702
  %v8733 = vadd.f32 %v8600, %v8705
  %v8734 = vadd.f32 %v8601, %v8710
  %v8735 = vadd.f32 %v8602, %v8713
  %v8736 = vmax.f32 %v8091, %v8716
  %v8737 = vmax.f32 %v8092, %v8717
  %v8738 = vmax.f32 %v8093, %v8718
  %v8739 = vmax.f32 %v8094, %v8719
  %v8740 = vmax.f32 %v8095, %v8720
  %v8741 = vmax.f32 %v8096, %v8721
  %v8742 = vmax.f32 %v8097, %v8722
  %v8743 = vmax.f32 %v8098, %v8723
  %v8744 = vmax.f32 %v8099, %v8724
  %v8745 = vmax.f32 %v8100, %v8725
  %v8746 = vmax.f32 %v8101, %v8726
  %v8747 = vmax.f32 %v8102, %v8727
  %v8748 = vmax.f32 %v8103, %v8728
  %v8749 = vmax.f32 %v8104, %v8729
  %v8750 = vmax.f32 %v8105, %v8730
  %v8751 = vmax.f32 %v8106, %v8731
  %v8752 = vmax.f32 %v8107, %v8732
  %v8753 = vmax.f32 %v8108, %v8733
  %v8754 = vmax.f32 %v8109, %v8734
  %v8755 = vmax.f32 %v8110, %v8735
  %v8756 = vld [vmem:[%s5] sm:$0x1]
  %v8758 = vlaneseq
  %v8759 = vshrl.u32 %v8758, 7
  %v8760 = vsub.s32 0, %v8759
  %v8761 = vrot.slane %v8756, %v8760
  %v8763 = vadd.f32 %v8736, %v8761
  %v8764 = vadd.f32 %v8737, %v8761
  %v8765 = vadd.f32 %v8738, %v8761
  %v8766 = vadd.f32 %v8739, %v8761
  %v8767 = vadd.f32 %v8740, %v8761
  %v8768 = vadd.f32 %v8741, %v8761
  %v8769 = vadd.f32 %v8742, %v8761
  %v8770 = vadd.f32 %v8743, %v8761
  %v8771 = vadd.f32 %v8744, %v8761
  %v8772 = vadd.f32 %v8745, %v8761
  %v8773 = vadd.f32 %v8746, %v8761
  %v8774 = vadd.f32 %v8747, %v8761
  %v8775 = vadd.f32 %v8748, %v8761
  %v8776 = vadd.f32 %v8749, %v8761
  %v8777 = vadd.f32 %v8750, %v8761
  %v8778 = vadd.f32 %v8751, %v8761
  %v8779 = vadd.f32 %v8752, %v8761
  %v8780 = vadd.f32 %v8753, %v8761
  %v8781 = vadd.f32 %v8754, %v8761
  %v8782 = vadd.f32 %v8755, %v8761
  %v8783 = vmax.f32 %v8763, 0.0
  %v8784 = vmax.f32 %v8764, 0.0
  %v8785 = vmax.f32 %v8765, 0.0
  %v8786 = vmax.f32 %v8766, 0.0
  %v8787 = vmax.f32 %v8767, 0.0
  %v8788 = vmax.f32 %v8768, 0.0
  %v8789 = vmax.f32 %v8769, 0.0
  %v8790 = vmax.f32 %v8770, 0.0
  %v8791 = vmax.f32 %v8771, 0.0
  %v8792 = vmax.f32 %v8772, 0.0
  %v8793 = vmax.f32 %v8773, 0.0
  %v8794 = vmax.f32 %v8774, 0.0
  %v8795 = vmax.f32 %v8775, 0.0
  %v8796 = vmax.f32 %v8776, 0.0
  %v8797 = vmax.f32 %v8777, 0.0
  %v8798 = vmax.f32 %v8778, 0.0
  %v8799 = vmax.f32 %v8779, 0.0
  %v8800 = vmax.f32 %v8780, 0.0
  %v8801 = vmax.f32 %v8781, 0.0
  %v8802 = vmax.f32 %v8782, 0.0
  %v8803 = vpack.c.bf16 %v8784, %v8783
  %v8804 = vpack.c.bf16 %v8786, %v8785
  %v8805 = vpack.c.bf16 %v8788, %v8787
  %v8806 = vpack.c.bf16 %v8790, %v8789
  %v8807 = vpack.c.bf16 %v8792, %v8791
  %v8808 = vpack.c.bf16 %v8794, %v8793
  %v8809 = vpack.c.bf16 %v8796, %v8795
  %v8810 = vpack.c.bf16 %v8798, %v8797
  %v8811 = vpack.c.bf16 %v8800, %v8799
  %v8812 = vpack.c.bf16 %v8802, %v8801
  %v8823 = vunpack.c.l.b16 %v8803
  %v8824 = vunpack.c.h.b16 %v8803
  %v8825 = vunpack.c.l.b16 %v8804
  %v8826 = vunpack.c.h.b16 %v8804
  %v8827 = vunpack.c.l.b16 %v8805
  %v8828 = vunpack.c.h.b16 %v8805
  %v8829 = vunpack.c.l.b16 %v8806
  %v8830 = vunpack.c.h.b16 %v8806
  %v8831 = vunpack.c.l.b16 %v8807
  %v8832 = vunpack.c.h.b16 %v8807
  %v8833 = vunpack.c.l.b16 %v8808
  %v8834 = vunpack.c.h.b16 %v8808
  %v8835 = vunpack.c.l.b16 %v8809
  %v8836 = vunpack.c.h.b16 %v8809
  %v8837 = vunpack.c.l.b16 %v8810
  %v8838 = vunpack.c.h.b16 %v8810
  %v8839 = vunpack.c.l.b16 %v8811
  %v8840 = vunpack.c.h.b16 %v8811
  %v8841 = vunpack.c.l.b16 %v8812
  %v8842 = vunpack.c.h.b16 %v8812
  %v8843 = vpack.c.b16 %v8823, %v8823
  %v8844 = vpack.c.b16 %v8824, %v8824
  %v8845 = vpack.c.b16 %v8825, %v8825
  %v8846 = vpack.c.b16 %v8826, %v8826
  %v8847 = vpack.c.b16 %v8827, %v8827
  %v8848 = vpack.c.b16 %v8828, %v8828
  %v8849 = vpack.c.b16 %v8829, %v8829
  %v8850 = vpack.c.b16 %v8830, %v8830
  %v8851 = vpack.c.b16 %v8831, %v8831
  %v8852 = vpack.c.b16 %v8832, %v8832
  %v8853 = vpack.c.b16 %v8833, %v8833
  %v8854 = vpack.c.b16 %v8834, %v8834
  %v8855 = vpack.c.b16 %v8835, %v8835
  %v8856 = vpack.c.b16 %v8836, %v8836
  %v8857 = vpack.c.b16 %v8837, %v8837
  %v8858 = vpack.c.b16 %v8838, %v8838
  %v8859 = vpack.c.b16 %v8839, %v8839
  %v8860 = vpack.c.b16 %v8840, %v8840
  %v8861 = vpack.c.b16 %v8841, %v8841
  %v8862 = vpack.c.b16 %v8842, %v8842
  %vm8883 = vcmask 650240
  %8884 = vst.msk [vmem:[#allocation3] sm:$0xf] %vm8883, %v8843
  %8885 = vst.msk [vmem:[#allocation3 + $0x4] sm:$0xf] %vm8883, %v8844
  %8886 = vst.msk [vmem:[#allocation3 + $0x8] sm:$0xf] %vm8883, %v8845
  %8887 = vst.msk [vmem:[#allocation3 + $0xc] sm:$0xf] %vm8883, %v8846
  %8888 = vst.msk [vmem:[#allocation3 + $0x10] sm:$0xf] %vm8883, %v8847
  %8889 = vst.msk [vmem:[#allocation3 + $0x14] sm:$0xf] %vm8883, %v8848
  %8890 = vst.msk [vmem:[#allocation3 + $0x18] sm:$0xf] %vm8883, %v8849
  %8891 = vst.msk [vmem:[#allocation3 + $0x1c] sm:$0xf] %vm8883, %v8850
  %8892 = vst.msk [vmem:[#allocation3 + $0x20] sm:$0xf] %vm8883, %v8851
  %8893 = vst.msk [vmem:[#allocation3 + $0x24] sm:$0xf] %vm8883, %v8852
  %8894 = vst.msk [vmem:[#allocation3 + $0x28] sm:$0xf] %vm8883, %v8853
  %8895 = vst.msk [vmem:[#allocation3 + $0x2c] sm:$0xf] %vm8883, %v8854
  %8896 = vst.msk [vmem:[#allocation3 + $0x30] sm:$0xf] %vm8883, %v8855
  %8897 = vst.msk [vmem:[#allocation3 + $0x34] sm:$0xf] %vm8883, %v8856
  %8898 = vst.msk [vmem:[#allocation3 + $0x38] sm:$0xf] %vm8883, %v8857
  %8899 = vst.msk [vmem:[#allocation3 + $0x3c] sm:$0xf] %vm8883, %v8858
  %8900 = vst.msk [vmem:[#allocation3 + $0x40] sm:$0xf] %vm8883, %v8859
  %8901 = vst.msk [vmem:[#allocation3 + $0x44] sm:$0xf] %vm8883, %v8860
  %8902 = vst.msk [vmem:[#allocation3 + $0x48] sm:$0xf] %vm8883, %v8861
  %8903 = vst.msk [vmem:[#allocation3 + $0x4c] sm:$0xf] %vm8883, %v8862
  %v8904 = vld [vmem:[%s7] sm:$0x1]
  %v8905 = vld [vmem:[#allocation3] sm:$0xf]
  %v8906 = vld [vmem:[#allocation3 + $0x4] sm:$0xf]
  %v8907 = vld [vmem:[#allocation3 + $0x8] sm:$0xf]
  %v8908 = vld [vmem:[#allocation3 + $0xc] sm:$0xf]
  %v8909 = vld [vmem:[%s6] sm:$0xf]
  %v8910 = vld [vmem:[%s6 + $0x4] sm:$0xf]
  %v8911 = vld [vmem:[%s6 + $0x8] sm:$0xf]
  %v8912 = vld [vmem:[%s6 + $0xc] sm:$0xf]
  %v8913 = vld [vmem:[%s6 + $0x10] sm:$0xf]
  %v8914 = vld [vmem:[%s6 + $0x14] sm:$0xf]
  %v8915 = vld [vmem:[%s6 + $0x18] sm:$0xf]
  %v8916 = vld [vmem:[%s6 + $0x1c] sm:$0xf]
  %v8917 = vld [vmem:[%s6 + $0x20] sm:$0xf]
  %v8918 = vld [vmem:[%s6 + $0x24] sm:$0xf]
  %v8923 = vunpack.c.l.b16 %v8905
  %v8924 = vunpack.c.l.b16 %v8906
  %v8925 = vunpack.c.l.b16 %v8907
  %v8926 = vunpack.c.l.b16 %v8908
  %v8927 = vpack.c.b16 %v8924, %v8923
  %v8928 = vpack.c.b16 %v8926, %v8925
  %v8939 = vunpack.c.l.b16 %v8909
  %v8940 = vunpack.c.l.b16 %v8910
  %v8941 = vunpack.c.l.b16 %v8911
  %v8942 = vunpack.c.l.b16 %v8912
  %v8943 = vunpack.c.l.b16 %v8913
  %v8944 = vunpack.c.l.b16 %v8914
  %v8945 = vunpack.c.l.b16 %v8915
  %v8946 = vunpack.c.l.b16 %v8916
  %v8947 = vunpack.c.l.b16 %v8917
  %v8948 = vunpack.c.l.b16 %v8918
  %v8949 = vpack.c.b16 %v8940, %v8939
  %v8950 = vpack.c.b16 %v8942, %v8941
  %v8951 = vpack.c.b16 %v8944, %v8943
  %v8952 = vpack.c.b16 %v8946, %v8945
  %v8953 = vpack.c.b16 %v8948, %v8947
  %vm8959 = vcmask 654336
  %v8961 = vsel %vm8959, %v8927, 0
  %v8964 = vsel %vm8959, %v8928, 0
  %8966 = vmatprep.subr.bf16.mxu0 0
  %8967 = vmatpush1.bf16.msra.mxu0 0
  %8968 = vmatprep.subr.bf16.mxu0 0
  %8969 = vmatpush1.bf16.msra.mxu0 0
  %8970 = vmatprep.subr.bf16.mxu0 0
  %8971 = vmatpush1.bf16.msra.mxu0 0
  %8972 = vmatprep.subr.bf16.mxu0 0
  %8973 = vmatpush1.bf16.msra.mxu0 %v8953
  %8974 = vmatprep.subr.bf16.mxu0 0
  %8975 = vmatpush1.bf16.msra.mxu0 %v8952
  %8976 = vmatprep.subr.bf16.mxu0 0
  %8977 = vmatpush1.bf16.msra.mxu0 %v8951
  %8978 = vmatprep.subr.bf16.mxu0 0
  %8979 = vmatpush1.bf16.msra.mxu0 %v8950
  %8980 = vmatprep.subr.bf16.mxu0 0
  %8981 = vmatpush1.bf16.msra.mxu0 %v8949
  %8982 = vmatprep.subr.bf16.mxu0 0
  %8983 = vmatpush2.bf16.msra.mxu0 0
  %8984 = vmatprep.subr.bf16.mxu0 0
  %8985 = vmatpush2.bf16.msra.mxu0 0
  %8986 = vmatprep.subr.bf16.mxu0 0
  %8987 = vmatpush2.bf16.msra.mxu0 0
  %8988 = vmatprep.subr.bf16.mxu0 0
  %8989 = vmatpush2.bf16.msra.mxu0 0
  %8990 = vmatprep.subr.bf16.mxu0 0
  %8991 = vmatpush2.bf16.msra.mxu0 0
  %8992 = vmatprep.subr.bf16.mxu0 0
  %8993 = vmatpush2.bf16.msra.mxu0 0
  %8994 = vmatprep.subr.bf16.mxu0 0
  %8995 = vmatpush2.bf16.msra.mxu0 0
  %8996 = vmatprep.subr.bf16.mxu0 0
  %8997 = vmatpush2.bf16.msra.mxu0 0
  %8998 = vmatprep.mubr.bf16.mxu0 0
  %8999 = vmatmul.mubr.bf16.gmra.mxu0 %v8961
  %v9000 = vpop.f32.mrf.mxu0
  %v9001 = vadd.f32 0.0, %v9000
  %v9002 = vpop.f32.mrf.mxu0
  %v9003 = vpop.f32.mrf.mxu0
  %v9004 = vadd.f32 0.0, %v9003
  %v9005 = vpop.f32.mrf.mxu0
  %9006 = vmatprep.mubr.bf16.mxu0 0
  %9007 = vmatmul.mubr.bf16.gmra.mxu0 %v8964
  %v9008 = vpop.f32.mrf.mxu0
  %v9009 = vadd.f32 0.0, %v9008
  %v9010 = vpop.f32.mrf.mxu0
  %v9011 = vpop.f32.mrf.mxu0
  %v9012 = vadd.f32 0.0, %v9011
  %v9013 = vpop.f32.mrf.mxu0
  %9014 = vdwg.mxu0
  %v9016 = vlaneseq
  %v9017 = vshrl.u32 %v9016, 7
  %v9018 = vsub.s32 0, %v9017
  %v9019 = vrot.slane %v8904, %v9018
  %v9021 = vadd.f32 %v9019, %v9001
  %v9022 = vadd.f32 %v9019, %v9004
  %v9023 = vadd.f32 %v9019, %v9009
  %v9024 = vadd.f32 %v9019, %v9012
  %v9025 = vld [vmem:[#allocation3 + $0x10] sm:$0xf]
  %v9026 = vld [vmem:[#allocation3 + $0x14] sm:$0xf]
  %v9027 = vld [vmem:[#allocation3 + $0x18] sm:$0xf]
  %v9028 = vld [vmem:[#allocation3 + $0x1c] sm:$0xf]
  %s9029 = scalar_lea.vmem %s6, 40
  %v9030 = vld [vmem:[%s9029] sm:$0xf]
  %v9031 = vld [vmem:[%s9029 + $0x4] sm:$0xf]
  %v9032 = vld [vmem:[%s9029 + $0x8] sm:$0xf]
  %v9033 = vld [vmem:[%s9029 + $0xc] sm:$0xf]
  %v9034 = vld [vmem:[%s9029 + $0x10] sm:$0xf]
  %v9035 = vld [vmem:[%s9029 + $0x14] sm:$0xf]
  %v9036 = vld [vmem:[%s9029 + $0x18] sm:$0xf]
  %v9037 = vld [vmem:[%s9029 + $0x1c] sm:$0xf]
  %v9038 = vld [vmem:[%s9029 + $0x20] sm:$0xf]
  %v9039 = vld [vmem:[%s9029 + $0x24] sm:$0xf]
  %v9044 = vunpack.c.l.b16 %v9025
  %v9045 = vunpack.c.l.b16 %v9026
  %v9046 = vunpack.c.l.b16 %v9027
  %v9047 = vunpack.c.l.b16 %v9028
  %v9048 = vpack.c.b16 %v9045, %v9044
  %v9049 = vpack.c.b16 %v9047, %v9046
  %v9060 = vunpack.c.l.b16 %v9030
  %v9061 = vunpack.c.l.b16 %v9031
  %v9062 = vunpack.c.l.b16 %v9032
  %v9063 = vunpack.c.l.b16 %v9033
  %v9064 = vunpack.c.l.b16 %v9034
  %v9065 = vunpack.c.l.b16 %v9035
  %v9066 = vunpack.c.l.b16 %v9036
  %v9067 = vunpack.c.l.b16 %v9037
  %v9068 = vunpack.c.l.b16 %v9038
  %v9069 = vunpack.c.l.b16 %v9039
  %v9070 = vpack.c.b16 %v9061, %v9060
  %v9071 = vpack.c.b16 %v9063, %v9062
  %v9072 = vpack.c.b16 %v9065, %v9064
  %v9073 = vpack.c.b16 %v9067, %v9066
  %v9074 = vpack.c.b16 %v9069, %v9068
  %v9081 = vsel %vm8959, %v9048, 0
  %v9084 = vsel %vm8959, %v9049, 0
  %9086 = vmatprep.subr.bf16.mxu0 0
  %9087 = vmatpush1.bf16.msra.mxu0 0
  %9088 = vmatprep.subr.bf16.mxu0 0
  %9089 = vmatpush1.bf16.msra.mxu0 0
  %9090 = vmatprep.subr.bf16.mxu0 0
  %9091 = vmatpush1.bf16.msra.mxu0 0
  %9092 = vmatprep.subr.bf16.mxu0 0
  %9093 = vmatpush1.bf16.msra.mxu0 %v9074
  %9094 = vmatprep.subr.bf16.mxu0 0
  %9095 = vmatpush1.bf16.msra.mxu0 %v9073
  %9096 = vmatprep.subr.bf16.mxu0 0
  %9097 = vmatpush1.bf16.msra.mxu0 %v9072
  %9098 = vmatprep.subr.bf16.mxu0 0
  %9099 = vmatpush1.bf16.msra.mxu0 %v9071
  %9100 = vmatprep.subr.bf16.mxu0 0
  %9101 = vmatpush1.bf16.msra.mxu0 %v9070
  %9102 = vmatprep.subr.bf16.mxu0 0
  %9103 = vmatpush2.bf16.msra.mxu0 0
  %9104 = vmatprep.subr.bf16.mxu0 0
  %9105 = vmatpush2.bf16.msra.mxu0 0
  %9106 = vmatprep.subr.bf16.mxu0 0
  %9107 = vmatpush2.bf16.msra.mxu0 0
  %9108 = vmatprep.subr.bf16.mxu0 0
  %9109 = vmatpush2.bf16.msra.mxu0 0
  %9110 = vmatprep.subr.bf16.mxu0 0
  %9111 = vmatpush2.bf16.msra.mxu0 0
  %9112 = vmatprep.subr.bf16.mxu0 0
  %9113 = vmatpush2.bf16.msra.mxu0 0
  %9114 = vmatprep.subr.bf16.mxu0 0
  %9115 = vmatpush2.bf16.msra.mxu0 0
  %9116 = vmatprep.subr.bf16.mxu0 0
  %9117 = vmatpush2.bf16.msra.mxu0 0
  %9118 = vmatprep.mubr.bf16.mxu0 0
  %9119 = vmatmul.mubr.bf16.gmra.mxu0 %v9081
  %v9120 = vpop.f32.mrf.mxu0
  %v9121 = vadd.f32 0.0, %v9120
  %v9122 = vpop.f32.mrf.mxu0
  %v9123 = vpop.f32.mrf.mxu0
  %v9124 = vadd.f32 0.0, %v9123
  %v9125 = vpop.f32.mrf.mxu0
  %9126 = vmatprep.mubr.bf16.mxu0 0
  %9127 = vmatmul.mubr.bf16.gmra.mxu0 %v9084
  %v9128 = vpop.f32.mrf.mxu0
  %v9129 = vadd.f32 0.0, %v9128
  %v9130 = vpop.f32.mrf.mxu0
  %v9131 = vpop.f32.mrf.mxu0
  %v9132 = vadd.f32 0.0, %v9131
  %v9133 = vpop.f32.mrf.mxu0
  %9134 = vdwg.mxu0
  %v9135 = vadd.f32 %v9021, %v9121
  %v9136 = vadd.f32 %v9022, %v9124
  %v9137 = vadd.f32 %v9023, %v9129
  %v9138 = vadd.f32 %v9024, %v9132
  %v9139 = vld [vmem:[#allocation3 + $0x20] sm:$0xf]
  %v9140 = vld [vmem:[#allocation3 + $0x24] sm:$0xf]
  %v9141 = vld [vmem:[#allocation3 + $0x28] sm:$0xf]
  %v9142 = vld [vmem:[#allocation3 + $0x2c] sm:$0xf]
  %s9143 = scalar_lea.vmem %s6, 80
  %v9144 = vld [vmem:[%s9143] sm:$0xf]
  %v9145 = vld [vmem:[%s9143 + $0x4] sm:$0xf]
  %v9146 = vld [vmem:[%s9143 + $0x8] sm:$0xf]
  %v9147 = vld [vmem:[%s9143 + $0xc] sm:$0xf]
  %v9148 = vld [vmem:[%s9143 + $0x10] sm:$0xf]
  %v9149 = vld [vmem:[%s9143 + $0x14] sm:$0xf]
  %v9150 = vld [vmem:[%s9143 + $0x18] sm:$0xf]
  %v9151 = vld [vmem:[%s9143 + $0x1c] sm:$0xf]
  %v9152 = vld [vmem:[%s9143 + $0x20] sm:$0xf]
  %v9153 = vld [vmem:[%s9143 + $0x24] sm:$0xf]
  %v9158 = vunpack.c.l.b16 %v9139
  %v9159 = vunpack.c.l.b16 %v9140
  %v9160 = vunpack.c.l.b16 %v9141
  %v9161 = vunpack.c.l.b16 %v9142
  %v9162 = vpack.c.b16 %v9159, %v9158
  %v9163 = vpack.c.b16 %v9161, %v9160
  %v9174 = vunpack.c.l.b16 %v9144
  %v9175 = vunpack.c.l.b16 %v9145
  %v9176 = vunpack.c.l.b16 %v9146
  %v9177 = vunpack.c.l.b16 %v9147
  %v9178 = vunpack.c.l.b16 %v9148
  %v9179 = vunpack.c.l.b16 %v9149
  %v9180 = vunpack.c.l.b16 %v9150
  %v9181 = vunpack.c.l.b16 %v9151
  %v9182 = vunpack.c.l.b16 %v9152
  %v9183 = vunpack.c.l.b16 %v9153
  %v9184 = vpack.c.b16 %v9175, %v9174
  %v9185 = vpack.c.b16 %v9177, %v9176
  %v9186 = vpack.c.b16 %v9179, %v9178
  %v9187 = vpack.c.b16 %v9181, %v9180
  %v9188 = vpack.c.b16 %v9183, %v9182
  %v9195 = vsel %vm8959, %v9162, 0
  %v9198 = vsel %vm8959, %v9163, 0
  %9200 = vmatprep.subr.bf16.mxu0 0
  %9201 = vmatpush1.bf16.msra.mxu0 0
  %9202 = vmatprep.subr.bf16.mxu0 0
  %9203 = vmatpush1.bf16.msra.mxu0 0
  %9204 = vmatprep.subr.bf16.mxu0 0
  %9205 = vmatpush1.bf16.msra.mxu0 0
  %9206 = vmatprep.subr.bf16.mxu0 0
  %9207 = vmatpush1.bf16.msra.mxu0 %v9188
  %9208 = vmatprep.subr.bf16.mxu0 0
  %9209 = vmatpush1.bf16.msra.mxu0 %v9187
  %9210 = vmatprep.subr.bf16.mxu0 0
  %9211 = vmatpush1.bf16.msra.mxu0 %v9186
  %9212 = vmatprep.subr.bf16.mxu0 0
  %9213 = vmatpush1.bf16.msra.mxu0 %v9185
  %9214 = vmatprep.subr.bf16.mxu0 0
  %9215 = vmatpush1.bf16.msra.mxu0 %v9184
  %9216 = vmatprep.subr.bf16.mxu0 0
  %9217 = vmatpush2.bf16.msra.mxu0 0
  %9218 = vmatprep.subr.bf16.mxu0 0
  %9219 = vmatpush2.bf16.msra.mxu0 0
  %9220 = vmatprep.subr.bf16.mxu0 0
  %9221 = vmatpush2.bf16.msra.mxu0 0
  %9222 = vmatprep.subr.bf16.mxu0 0
  %9223 = vmatpush2.bf16.msra.mxu0 0
  %9224 = vmatprep.subr.bf16.mxu0 0
  %9225 = vmatpush2.bf16.msra.mxu0 0
  %9226 = vmatprep.subr.bf16.mxu0 0
  %9227 = vmatpush2.bf16.msra.mxu0 0
  %9228 = vmatprep.subr.bf16.mxu0 0
  %9229 = vmatpush2.bf16.msra.mxu0 0
  %9230 = vmatprep.subr.bf16.mxu0 0
  %9231 = vmatpush2.bf16.msra.mxu0 0
  %9232 = vmatprep.mubr.bf16.mxu0 0
  %9233 = vmatmul.mubr.bf16.gmra.mxu0 %v9195
  %v9234 = vpop.f32.mrf.mxu0
  %v9235 = vadd.f32 0.0, %v9234
  %v9236 = vpop.f32.mrf.mxu0
  %v9237 = vpop.f32.mrf.mxu0
  %v9238 = vadd.f32 0.0, %v9237
  %v9239 = vpop.f32.mrf.mxu0
  %9240 = vmatprep.mubr.bf16.mxu0 0
  %9241 = vmatmul.mubr.bf16.gmra.mxu0 %v9198
  %v9242 = vpop.f32.mrf.mxu0
  %v9243 = vadd.f32 0.0, %v9242
  %v9244 = vpop.f32.mrf.mxu0
  %v9245 = vpop.f32.mrf.mxu0
  %v9246 = vadd.f32 0.0, %v9245
  %v9247 = vpop.f32.mrf.mxu0
  %9248 = vdwg.mxu0
  %v9249 = vadd.f32 %v9135, %v9235
  %v9250 = vadd.f32 %v9136, %v9238
  %v9251 = vadd.f32 %v9137, %v9243
  %v9252 = vadd.f32 %v9138, %v9246
  %v9253 = vld [vmem:[#allocation3 + $0x30] sm:$0xf]
  %v9254 = vld [vmem:[#allocation3 + $0x34] sm:$0xf]
  %v9255 = vld [vmem:[#allocation3 + $0x38] sm:$0xf]
  %v9256 = vld [vmem:[#allocation3 + $0x3c] sm:$0xf]
  %s9257 = scalar_lea.vmem %s6, 120
  %v9258 = vld [vmem:[%s9257] sm:$0xf]
  %v9259 = vld [vmem:[%s9257 + $0x4] sm:$0xf]
  %v9260 = vld [vmem:[%s9257 + $0x8] sm:$0xf]
  %v9261 = vld [vmem:[%s9257 + $0xc] sm:$0xf]
  %v9262 = vld [vmem:[%s9257 + $0x10] sm:$0xf]
  %v9263 = vld [vmem:[%s9257 + $0x14] sm:$0xf]
  %v9264 = vld [vmem:[%s9257 + $0x18] sm:$0xf]
  %v9265 = vld [vmem:[%s9257 + $0x1c] sm:$0xf]
  %v9266 = vld [vmem:[%s9257 + $0x20] sm:$0xf]
  %v9267 = vld [vmem:[%s9257 + $0x24] sm:$0xf]
  %v9272 = vunpack.c.l.b16 %v9253
  %v9273 = vunpack.c.l.b16 %v9254
  %v9274 = vunpack.c.l.b16 %v9255
  %v9275 = vunpack.c.l.b16 %v9256
  %v9276 = vpack.c.b16 %v9273, %v9272
  %v9277 = vpack.c.b16 %v9275, %v9274
  %v9288 = vunpack.c.l.b16 %v9258
  %v9289 = vunpack.c.l.b16 %v9259
  %v9290 = vunpack.c.l.b16 %v9260
  %v9291 = vunpack.c.l.b16 %v9261
  %v9292 = vunpack.c.l.b16 %v9262
  %v9293 = vunpack.c.l.b16 %v9263
  %v9294 = vunpack.c.l.b16 %v9264
  %v9295 = vunpack.c.l.b16 %v9265
  %v9296 = vunpack.c.l.b16 %v9266
  %v9297 = vunpack.c.l.b16 %v9267
  %v9298 = vpack.c.b16 %v9289, %v9288
  %v9299 = vpack.c.b16 %v9291, %v9290
  %v9300 = vpack.c.b16 %v9293, %v9292
  %v9301 = vpack.c.b16 %v9295, %v9294
  %v9302 = vpack.c.b16 %v9297, %v9296
  %v9309 = vsel %vm8959, %v9276, 0
  %v9312 = vsel %vm8959, %v9277, 0
  %9314 = vmatprep.subr.bf16.mxu0 0
  %9315 = vmatpush1.bf16.msra.mxu0 0
  %9316 = vmatprep.subr.bf16.mxu0 0
  %9317 = vmatpush1.bf16.msra.mxu0 0
  %9318 = vmatprep.subr.bf16.mxu0 0
  %9319 = vmatpush1.bf16.msra.mxu0 0
  %9320 = vmatprep.subr.bf16.mxu0 0
  %9321 = vmatpush1.bf16.msra.mxu0 %v9302
  %9322 = vmatprep.subr.bf16.mxu0 0
  %9323 = vmatpush1.bf16.msra.mxu0 %v9301
  %9324 = vmatprep.subr.bf16.mxu0 0
  %9325 = vmatpush1.bf16.msra.mxu0 %v9300
  %9326 = vmatprep.subr.bf16.mxu0 0
  %9327 = vmatpush1.bf16.msra.mxu0 %v9299
  %9328 = vmatprep.subr.bf16.mxu0 0
  %9329 = vmatpush1.bf16.msra.mxu0 %v9298
  %9330 = vmatprep.subr.bf16.mxu0 0
  %9331 = vmatpush2.bf16.msra.mxu0 0
  %9332 = vmatprep.subr.bf16.mxu0 0
  %9333 = vmatpush2.bf16.msra.mxu0 0
  %9334 = vmatprep.subr.bf16.mxu0 0
  %9335 = vmatpush2.bf16.msra.mxu0 0
  %9336 = vmatprep.subr.bf16.mxu0 0
  %9337 = vmatpush2.bf16.msra.mxu0 0
  %9338 = vmatprep.subr.bf16.mxu0 0
  %9339 = vmatpush2.bf16.msra.mxu0 0
  %9340 = vmatprep.subr.bf16.mxu0 0
  %9341 = vmatpush2.bf16.msra.mxu0 0
  %9342 = vmatprep.subr.bf16.mxu0 0
  %9343 = vmatpush2.bf16.msra.mxu0 0
  %9344 = vmatprep.subr.bf16.mxu0 0
  %9345 = vmatpush2.bf16.msra.mxu0 0
  %9346 = vmatprep.mubr.bf16.mxu0 0
  %9347 = vmatmul.mubr.bf16.gmra.mxu0 %v9309
  %v9348 = vpop.f32.mrf.mxu0
  %v9349 = vadd.f32 0.0, %v9348
  %v9350 = vpop.f32.mrf.mxu0
  %v9351 = vpop.f32.mrf.mxu0
  %v9352 = vadd.f32 0.0, %v9351
  %v9353 = vpop.f32.mrf.mxu0
  %9354 = vmatprep.mubr.bf16.mxu0 0
  %9355 = vmatmul.mubr.bf16.gmra.mxu0 %v9312
  %v9356 = vpop.f32.mrf.mxu0
  %v9357 = vadd.f32 0.0, %v9356
  %v9358 = vpop.f32.mrf.mxu0
  %v9359 = vpop.f32.mrf.mxu0
  %v9360 = vadd.f32 0.0, %v9359
  %v9361 = vpop.f32.mrf.mxu0
  %9362 = vdwg.mxu0
  %v9363 = vadd.f32 %v9249, %v9349
  %v9364 = vadd.f32 %v9250, %v9352
  %v9365 = vadd.f32 %v9251, %v9357
  %v9366 = vadd.f32 %v9252, %v9360
  %v9367 = vld [vmem:[#allocation3 + $0x40] sm:$0xf]
  %v9368 = vld [vmem:[#allocation3 + $0x44] sm:$0xf]
  %v9369 = vld [vmem:[#allocation3 + $0x48] sm:$0xf]
  %v9370 = vld [vmem:[#allocation3 + $0x4c] sm:$0xf]
  %s9371 = scalar_lea.vmem %s6, 160
  %v9372 = vld [vmem:[%s9371] sm:$0xf]
  %v9373 = vld [vmem:[%s9371 + $0x4] sm:$0xf]
  %v9374 = vld [vmem:[%s9371 + $0x8] sm:$0xf]
  %v9375 = vld [vmem:[%s9371 + $0xc] sm:$0xf]
  %v9376 = vld [vmem:[%s9371 + $0x10] sm:$0xf]
  %v9377 = vld [vmem:[%s9371 + $0x14] sm:$0xf]
  %v9378 = vld [vmem:[%s9371 + $0x18] sm:$0xf]
  %v9379 = vld [vmem:[%s9371 + $0x1c] sm:$0xf]
  %v9380 = vld [vmem:[%s9371 + $0x20] sm:$0xf]
  %v9381 = vld [vmem:[%s9371 + $0x24] sm:$0xf]
  %v9386 = vunpack.c.l.b16 %v9367
  %v9387 = vunpack.c.l.b16 %v9368
  %v9388 = vunpack.c.l.b16 %v9369
  %v9389 = vunpack.c.l.b16 %v9370
  %v9390 = vpack.c.b16 %v9387, %v9386
  %v9391 = vpack.c.b16 %v9389, %v9388
  %v9402 = vunpack.c.l.b16 %v9372
  %v9403 = vunpack.c.l.b16 %v9373
  %v9404 = vunpack.c.l.b16 %v9374
  %v9405 = vunpack.c.l.b16 %v9375
  %v9406 = vunpack.c.l.b16 %v9376
  %v9407 = vunpack.c.l.b16 %v9377
  %v9408 = vunpack.c.l.b16 %v9378
  %v9409 = vunpack.c.l.b16 %v9379
  %v9410 = vunpack.c.l.b16 %v9380
  %v9411 = vunpack.c.l.b16 %v9381
  %v9412 = vpack.c.b16 %v9403, %v9402
  %v9413 = vpack.c.b16 %v9405, %v9404
  %v9414 = vpack.c.b16 %v9407, %v9406
  %v9415 = vpack.c.b16 %v9409, %v9408
  %v9416 = vpack.c.b16 %v9411, %v9410
  %v9423 = vsel %vm8959, %v9390, 0
  %v9426 = vsel %vm8959, %v9391, 0
  %9428 = vmatprep.subr.bf16.mxu0 0
  %9429 = vmatpush1.bf16.msra.mxu0 0
  %9430 = vmatprep.subr.bf16.mxu0 0
  %9431 = vmatpush1.bf16.msra.mxu0 0
  %9432 = vmatprep.subr.bf16.mxu0 0
  %9433 = vmatpush1.bf16.msra.mxu0 0
  %9434 = vmatprep.subr.bf16.mxu0 0
  %9435 = vmatpush1.bf16.msra.mxu0 %v9416
  %9436 = vmatprep.subr.bf16.mxu0 0
  %9437 = vmatpush1.bf16.msra.mxu0 %v9415
  %9438 = vmatprep.subr.bf16.mxu0 0
  %9439 = vmatpush1.bf16.msra.mxu0 %v9414
  %9440 = vmatprep.subr.bf16.mxu0 0
  %9441 = vmatpush1.bf16.msra.mxu0 %v9413
  %9442 = vmatprep.subr.bf16.mxu0 0
  %9443 = vmatpush1.bf16.msra.mxu0 %v9412
  %9444 = vmatprep.subr.bf16.mxu0 0
  %9445 = vmatpush2.bf16.msra.mxu0 0
  %9446 = vmatprep.subr.bf16.mxu0 0
  %9447 = vmatpush2.bf16.msra.mxu0 0
  %9448 = vmatprep.subr.bf16.mxu0 0
  %9449 = vmatpush2.bf16.msra.mxu0 0
  %9450 = vmatprep.subr.bf16.mxu0 0
  %9451 = vmatpush2.bf16.msra.mxu0 0
  %9452 = vmatprep.subr.bf16.mxu0 0
  %9453 = vmatpush2.bf16.msra.mxu0 0
  %9454 = vmatprep.subr.bf16.mxu0 0
  %9455 = vmatpush2.bf16.msra.mxu0 0
  %9456 = vmatprep.subr.bf16.mxu0 0
  %9457 = vmatpush2.bf16.msra.mxu0 0
  %9458 = vmatprep.subr.bf16.mxu0 0
  %9459 = vmatpush2.bf16.msra.mxu0 0
  %9460 = vmatprep.mubr.bf16.mxu0 0
  %9461 = vmatmul.mubr.bf16.gmra.mxu0 %v9423
  %v9462 = vpop.f32.mrf.mxu0
  %v9463 = vadd.f32 0.0, %v9462
  %v9464 = vpop.f32.mrf.mxu0
  %v9465 = vpop.f32.mrf.mxu0
  %v9466 = vadd.f32 0.0, %v9465
  %v9467 = vpop.f32.mrf.mxu0
  %9468 = vmatprep.mubr.bf16.mxu0 0
  %9469 = vmatmul.mubr.bf16.gmra.mxu0 %v9426
  %v9470 = vpop.f32.mrf.mxu0
  %v9471 = vadd.f32 0.0, %v9470
  %v9472 = vpop.f32.mrf.mxu0
  %v9473 = vpop.f32.mrf.mxu0
  %v9474 = vadd.f32 0.0, %v9473
  %v9475 = vpop.f32.mrf.mxu0
  %9476 = vdwg.mxu0
  %v9477 = vadd.f32 %v9363, %v9463
  %v9478 = vadd.f32 %v9364, %v9466
  %v9479 = vadd.f32 %v9365, %v9471
  %v9480 = vadd.f32 %v9366, %v9474
  %v9481 = vmax.f32 %v9477, 0.0
  %v9482 = vmax.f32 %v9478, 0.0
  %v9483 = vmax.f32 %v9479, 0.0
  %v9484 = vmax.f32 %v9480, 0.0
  %v9485 = vpack.c.bf16 %v9482, %v9481
  %v9486 = vpack.c.bf16 %v9484, %v9483
  %v9487 = vld [vmem:[%s8] sm:$0xf]
  %v9488 = vld [vmem:[%s8 + $0x4] sm:$0xf]
  %v9489 = vld [vmem:[%s8 + $0x8] sm:$0xf]
  %v9490 = vld [vmem:[%s8 + $0xc] sm:$0xf]
  %v9491 = vld [vmem:[%s8 + $0x10] sm:$0xf]
  %v9492 = vld [vmem:[%s8 + $0x14] sm:$0xf]
  %v9493 = vld [vmem:[%s8 + $0x18] sm:$0xf]
  %v9494 = vld [vmem:[%s8 + $0x1c] sm:$0xf]
  %v9495 = vld [vmem:[%s8 + $0x20] sm:$0xf]
  %v9496 = vld [vmem:[%s8 + $0x24] sm:$0xf]
  %v9497 = vld [vmem:[%s8 + $0x28] sm:$0xf]
  %v9498 = vld [vmem:[%s8 + $0x2c] sm:$0xf]
  %v9499 = vld [vmem:[%s8 + $0x30] sm:$0xf]
  %v9500 = vld [vmem:[%s8 + $0x34] sm:$0xf]
  %v9501 = vld [vmem:[%s8 + $0x38] sm:$0xf]
  %v9502 = vld [vmem:[%s9] sm:$0x1]
  %v9504 = vlaneseq
  %v9505 = vshrl.u32 %v9504, 7
  %v9506 = vsub.s32 0, %v9505
  %v9507 = vrot.slane %v9502, %v9506
  %v9524 = vunpack.c.l.b16 %v9487
  %v9525 = vunpack.c.l.b16 %v9488
  %v9526 = vunpack.c.l.b16 %v9489
  %v9527 = vunpack.c.l.b16 %v9490
  %v9528 = vunpack.c.l.b16 %v9491
  %v9529 = vunpack.c.l.b16 %v9492
  %v9530 = vunpack.c.l.b16 %v9493
  %v9531 = vunpack.c.l.b16 %v9494
  %v9532 = vunpack.c.l.b16 %v9495
  %v9533 = vunpack.c.l.b16 %v9496
  %v9534 = vunpack.c.l.b16 %v9497
  %v9535 = vunpack.c.l.b16 %v9498
  %v9536 = vunpack.c.l.b16 %v9499
  %v9537 = vunpack.c.l.b16 %v9500
  %v9538 = vunpack.c.l.b16 %v9501
  %v9539 = vpack.c.b16 %v9525, %v9524
  %v9540 = vpack.c.b16 %v9527, %v9526
  %v9541 = vpack.c.b16 %v9529, %v9528
  %v9542 = vpack.c.b16 %v9531, %v9530
  %v9543 = vpack.c.b16 %v9533, %v9532
  %v9544 = vpack.c.b16 %v9535, %v9534
  %v9545 = vpack.c.b16 %v9537, %v9536
  %v9546 = vpack.c.b16 %v9538, %v9538
  %vm9554 = vcmask 982016
  %v9556 = vsel %vm9554, %v9485, 0
  %v9559 = vsel %vm9554, %v9486, 0
  %vm9561 = vcmask 1043456
  %v9563 = vsel %vm9561, %v9546, 0
  %9565 = vmatprep.subr.bf16.mxu0 0
  %9566 = vmatpush1.bf16.msra.mxu0 %v9563
  %9567 = vmatprep.subr.bf16.mxu0 0
  %9568 = vmatpush1.bf16.msra.mxu0 %v9545
  %9569 = vmatprep.subr.bf16.mxu0 0
  %9570 = vmatpush1.bf16.msra.mxu0 %v9544
  %9571 = vmatprep.subr.bf16.mxu0 0
  %9572 = vmatpush1.bf16.msra.mxu0 %v9543
  %9573 = vmatprep.subr.bf16.mxu0 0
  %9574 = vmatpush1.bf16.msra.mxu0 %v9542
  %9575 = vmatprep.subr.bf16.mxu0 0
  %9576 = vmatpush1.bf16.msra.mxu0 %v9541
  %9577 = vmatprep.subr.bf16.mxu0 0
  %9578 = vmatpush1.bf16.msra.mxu0 %v9540
  %9579 = vmatprep.subr.bf16.mxu0 0
  %9580 = vmatpush1.bf16.msra.mxu0 %v9539
  %9581 = vmatprep.subr.bf16.mxu0 0
  %9582 = vmatpush2.bf16.msra.mxu0 0
  %9583 = vmatprep.subr.bf16.mxu0 0
  %9584 = vmatpush2.bf16.msra.mxu0 0
  %9585 = vmatprep.subr.bf16.mxu0 0
  %9586 = vmatpush2.bf16.msra.mxu0 0
  %9587 = vmatprep.subr.bf16.mxu0 0
  %9588 = vmatpush2.bf16.msra.mxu0 0
  %9589 = vmatprep.subr.bf16.mxu0 0
  %9590 = vmatpush2.bf16.msra.mxu0 0
  %9591 = vmatprep.subr.bf16.mxu0 0
  %9592 = vmatpush2.bf16.msra.mxu0 0
  %9593 = vmatprep.subr.bf16.mxu0 0
  %9594 = vmatpush2.bf16.msra.mxu0 0
  %9595 = vmatprep.subr.bf16.mxu0 0
  %9596 = vmatpush2.bf16.msra.mxu0 0
  %9597 = vmatprep.mubr.bf16.mxu0 0
  %9598 = vmatmul.mubr.bf16.gmra.mxu0 %v9556
  %v9599 = vpop.f32.mrf.mxu0
  %v9600 = vadd.f32 %v9507, %v9599
  %v9601 = vpop.f32.mrf.mxu0
  %v9602 = vpop.f32.mrf.mxu0
  %v9603 = vadd.f32 %v9507, %v9602
  %v9604 = vpop.f32.mrf.mxu0
  %9605 = vmatprep.mubr.bf16.mxu0 0
  %9606 = vmatmul.mubr.bf16.gmra.mxu0 %v9559
  %v9607 = vpop.f32.mrf.mxu0
  %v9608 = vadd.f32 %v9507, %v9607
  %v9609 = vpop.f32.mrf.mxu0
  %v9610 = vpop.f32.mrf.mxu0
  %v9611 = vadd.f32 %v9507, %v9610
  %v9612 = vpop.f32.mrf.mxu0
  %9613 = vdwg.mxu0
  %v9614 = vmax.f32 %v9600, 0.0
  %v9615 = vmax.f32 %v9603, 0.0
  %v9616 = vmax.f32 %v9608, 0.0
  %v9617 = vmax.f32 %v9611, 0.0
  %v9618 = vpack.c.bf16 %v9615, %v9614
  %v9619 = vpack.c.bf16 %v9617, %v9616
  %v9620 = vld [vmem:[%s10] sm:$0xf]
  %v9621 = vld [vmem:[%s10 + $0x4] sm:$0xf]
  %v9622 = vld [vmem:[%s10 + $0x8] sm:$0xf]
  %v9623 = vld [vmem:[%s10 + $0xc] sm:$0xf]
  %v9624 = vld [vmem:[%s10 + $0x10] sm:$0xf]
  %v9625 = vld [vmem:[%s10 + $0x14] sm:$0xf]
  %v9626 = vld [vmem:[%s10 + $0x18] sm:$0xf]
  %v9627 = vld [vmem:[%s10 + $0x1c] sm:$0xf]
  %v9628 = vld [vmem:[%s10 + $0x20] sm:$0xf]
  %v9629 = vld [vmem:[%s10 + $0x24] sm:$0xf]
  %v9630 = vld [vmem:[%s10 + $0x28] sm:$0x3]
  %v9631 = vld [vmem:[%s11] sm:$0x1]
  %v9633 = vlaneseq
  %v9634 = vshrl.u32 %v9633, 7
  %v9635 = vsub.s32 0, %v9634
  %v9636 = vrot.slane %v9631, %v9635
  %v9649 = vunpack.c.l.b16 %v9620
  %v9650 = vunpack.c.l.b16 %v9621
  %v9651 = vunpack.c.l.b16 %v9622
  %v9652 = vunpack.c.l.b16 %v9623
  %v9653 = vunpack.c.l.b16 %v9624
  %v9654 = vunpack.c.l.b16 %v9625
  %v9655 = vunpack.c.l.b16 %v9626
  %v9656 = vunpack.c.l.b16 %v9627
  %v9657 = vunpack.c.l.b16 %v9628
  %v9658 = vunpack.c.l.b16 %v9629
  %v9659 = vunpack.c.l.b16 %v9630
  %v9660 = vpack.c.b16 %v9650, %v9649
  %v9661 = vpack.c.b16 %v9652, %v9651
  %v9662 = vpack.c.b16 %v9654, %v9653
  %v9663 = vpack.c.b16 %v9656, %v9655
  %v9664 = vpack.c.b16 %v9658, %v9657
  %v9665 = vpack.c.b16 %v9659, %v9659
  %v9672 = vsel %vm5513, %v9618, 0
  %v9675 = vsel %vm5513, %v9619, 0
  %v9678 = vsel %vm5544, %v9665, 0
  %9680 = vmatprep.subr.bf16.mxu0 0
  %9681 = vmatpush1.bf16.msra.mxu0 0
  %9682 = vmatprep.subr.bf16.mxu0 0
  %9683 = vmatpush1.bf16.msra.mxu0 0
  %9684 = vmatprep.subr.bf16.mxu0 0
  %9685 = vmatpush1.bf16.msra.mxu0 %v9678
  %9686 = vmatprep.subr.bf16.mxu0 0
  %9687 = vmatpush1.bf16.msra.mxu0 %v9664
  %9688 = vmatprep.subr.bf16.mxu0 0
  %9689 = vmatpush1.bf16.msra.mxu0 %v9663
  %9690 = vmatprep.subr.bf16.mxu0 0
  %9691 = vmatpush1.bf16.msra.mxu0 %v9662
  %9692 = vmatprep.subr.bf16.mxu0 0
  %9693 = vmatpush1.bf16.msra.mxu0 %v9661
  %9694 = vmatprep.subr.bf16.mxu0 0
  %9695 = vmatpush1.bf16.msra.mxu0 %v9660
  %9696 = vmatprep.subr.bf16.mxu0 0
  %9697 = vmatpush2.bf16.msra.mxu0 0
  %9698 = vmatprep.subr.bf16.mxu0 0
  %9699 = vmatpush2.bf16.msra.mxu0 0
  %9700 = vmatprep.subr.bf16.mxu0 0
  %9701 = vmatpush2.bf16.msra.mxu0 0
  %9702 = vmatprep.subr.bf16.mxu0 0
  %9703 = vmatpush2.bf16.msra.mxu0 0
  %9704 = vmatprep.subr.bf16.mxu0 0
  %9705 = vmatpush2.bf16.msra.mxu0 0
  %9706 = vmatprep.subr.bf16.mxu0 0
  %9707 = vmatpush2.bf16.msra.mxu0 0
  %9708 = vmatprep.subr.bf16.mxu0 0
  %9709 = vmatpush2.bf16.msra.mxu0 0
  %9710 = vmatprep.subr.bf16.mxu0 0
  %9711 = vmatpush2.bf16.msra.mxu0 0
  %9712 = vmatprep.mubr.bf16.mxu0 0
  %9713 = vmatmul.mubr.bf16.gmra.mxu0 %v9672
  %v9714 = vpop.f32.mrf.mxu0
  %v9715 = vadd.f32 %v9636, %v9714
  %v9716 = vpop.f32.mrf.mxu0
  %v9717 = vpop.f32.mrf.mxu0
  %v9718 = vadd.f32 %v9636, %v9717
  %v9719 = vpop.f32.mrf.mxu0
  %9720 = vmatprep.mubr.bf16.mxu0 0
  %9721 = vmatmul.mubr.bf16.gmra.mxu0 %v9675
  %v9722 = vpop.f32.mrf.mxu0
  %v9723 = vadd.f32 %v9636, %v9722
  %v9724 = vpop.f32.mrf.mxu0
  %v9725 = vpop.f32.mrf.mxu0
  %v9726 = vadd.f32 %v9636, %v9725
  %v9727 = vpop.f32.mrf.mxu0
  %9728 = vdwg.mxu0
  %9729 = vst [vmem:[%s12] sm:$0xff] %v9715
  %9730 = vst [vmem:[%s12 + $0x8] sm:$0xff] %v9718
  %9731 = vst [vmem:[%s12 + $0x10] sm:$0xff] %v9723
  %9732 = vst [vmem:[%s12 + $0x18] sm:$0xff] %v9726
  // Predicated region
  $region50: #{cnn_cifar_forward.1} parent=0 // pred_check
    _
  $region51: #{cnn_cifar_forward.1} parent=0 // pred_check_branch
    %9734 = sbr.rel (0) target = $region53
  $region52: #{cnn_cifar_forward.1} parent=0 // pred_region
    _
  $region53: #{cnn_cifar_forward.1} parent=0 // pred_fallthru
    _
  // Predicated region
  $region54: #{cnn_cifar_forward.1} parent=0 // pred_check
    _
  $region55: #{cnn_cifar_forward.1} parent=0 // pred_check_branch
    %9736 = sbr.rel (0) target = $region57
  $region56: #{cnn_cifar_forward.1} parent=0 // pred_region
    _
  $region57: #{cnn_cifar_forward.1} parent=0 // pred_fallthru
    _

</llo_original>
